<compile_context>
chip_gen: v6e
topology: v6e:2x2x1
jax: 0.10.0
libtpu: 0.0.40
codegen_flags: <defaults>
</compile_context>

<pallas_src>
import jax
import jax.numpy as jnp
from jax import lax
from jax.experimental import pallas as pl
from jax.experimental.pallas import tpu as pltpu

EPS = 1e-3   # AbsBatchNorm eps
SK = 3       # stack_ksize of the linear sub-convolutions


def n_subconvs(ksize, sk=SK):
    return (ksize - sk) // (sk - 1) + 1


# --------------------------------------------------------------------------
# Offline parameter preparation
# --------------------------------------------------------------------------
def _bn_affine(bn):
    a = jnp.abs(bn["scale"]) * lax.rsqrt(bn["var"] + EPS)
    c = bn["shift"] - bn["mean"] * a
    return a, c


def compose_stack(ws):
    """Compose a stack of valid 3x3 cross-correlations (no nonlinearity in
    between) into one exact equivalent (cout, cin, Keff, Keff) kernel by
    pushing delta images through the stack."""
    cin = ws[0].shape[2]
    keff = sum(w.shape[0] - 1 for w in ws) + 1
    basis = jnp.eye(cin * keff * keff, dtype=jnp.float32)
    x = basis.reshape(cin * keff * keff, cin, keff, keff).transpose(0, 2, 3, 1)
    for w in ws:
        x = lax.conv_general_dilated(
            x, w, (1, 1), "VALID",
            dimension_numbers=("NHWC", "HWIO", "NHWC"),
            precision=lax.Precision.HIGHEST)
    w_eff = x.reshape(cin, keff, keff, ws[-1].shape[3]).transpose(3, 0, 1, 2)
    return w_eff                                        # (cout, cin, k, k)


def conv_matrix(w_eff, cslab):
    """(cout, cin, k, k) -> (cout, k*k*cslab), matching the im2col row order
    (kh, kw, channel) with input channels zero-padded to cslab sublanes."""
    cout, cin, k, _ = w_eff.shape
    wp = jnp.zeros((cout, cslab, k, k), w_eff.dtype).at[:, :cin].set(w_eff)
    return wp.transpose(0, 2, 3, 1).reshape(cout, k * k * cslab)


def bn_slab(vec, C, h, w, W_img, cslab, r0):
    """PyTorch (c,h,w)-flattened per-feature vector -> (cslab, r0) slab with
    zeros at padded channels / padded w-columns / out-of-range rows so that
    garbage wrap-around positions are exactly annihilated."""
    m = vec.reshape(C, h, w)
    m = jnp.pad(m, ((0, 0), (0, 0), (0, W_img - w))).reshape(C, h * W_img)
    out = jnp.zeros((cslab, r0), vec.dtype)
    return out.at[:C, :h * W_img].set(m)


def head_tensor(fc_w, C, h, w, W_img, r0, npad):
    """FC weight (n_units, C*h*w) -> (C, r0, npad) so that
    V[c, hh*W_img + ww, n] = fc_w[n, c*h*w + hh*w + ww]; zero elsewhere."""
    n_units = fc_w.shape[0]
    v = fc_w.reshape(n_units, C, h, w).transpose(1, 2, 3, 0)      # (C,h,w,n)
    v = jnp.pad(v, ((0, 0), (0, 0), (0, W_img - w), (0, 0)))
    v = v.reshape(C, h * W_img, n_units)
    out = jnp.zeros((C, r0, npad), fc_w.dtype)
    return out.at[:, :h * W_img, :n_units].set(v)


def prep_params(raw, *, W, chans, n_units, h1, w1, h2, w2, cslab, r0, npad):
    # Compose each LinearStackedConv2d into one equivalent conv (exact in
    # eval mode: drop_p = 0 and no nonlinearity between sub-convs).
    wc1 = conv_matrix(compose_stack(raw["c1w"]), cslab)      # (8, 7*7*8)
    wc2 = conv_matrix(compose_stack(raw["c2w"]), cslab)      # (8, 5*5*8)

    a1, c1 = _bn_affine(raw["bn1"])
    c1 = c1 + jnp.repeat(raw["c1b"], h1 * w1) * a1            # fold conv-1 bias
    bn1a = bn_slab(a1, chans[0], h1, w1, W, cslab, r0)
    bn1c = bn_slab(c1, chans[0], h1, w1, W, cslab, r0)

    a2, c2 = _bn_affine(raw["bn2"])
    c2 = c2 + jnp.repeat(raw["c2b"], h2 * w2) * a2            # fold conv-2 bias
    bn2a = bn_slab(a2, chans[1], h2, w2, W, cslab, r0)
    bn2c = bn_slab(c2, chans[1], h2, w2, W, cslab, r0)

    v_head = head_tensor(raw["fc_w"], chans[1], h2, w2, W, r0, npad)

    a3, c3 = _bn_affine(raw["bn3"])
    bn3a = jnp.zeros((1, npad), jnp.float32).at[0, :n_units].set(a3)
    bn3c = jnp.zeros((1, npad), jnp.float32).at[0, :n_units].set(c3)

    return (wc1, bn1a, bn1c, wc2, bn2a, bn2c, v_head, bn3a, bn3c)


# --------------------------------------------------------------------------
# Fused forward kernel
# --------------------------------------------------------------------------
def build_fused_forward(params, *, batch, tb, in_ch, H, W, chans, n_units,
                        k1, k2, cslab, r0, npad):
    assert batch % tb == 0
    HW = H * W
    assert r0 >= HW and r0 % 128 == 0
    n_taps1, n_taps2 = k1 * k1, k2 * k2
    n_ch2 = chans[1]

    def kernel(x_ref, wc1_ref, bn1a_ref, bn1c_ref, wc2_ref, bn2a_ref,
               bn2c_ref, v_ref, bn3a_ref, bn3c_ref, o_ref, xs_ref, im_ref):

        def conv_im2col(src, w_ref, n_taps, k):
            # Composed k x k conv on the wrap-around channel-major slab:
            # write k*k lane-rolled copies of `src` into 8-sublane-aligned
            # blocks of the im2col scratch, then ONE MXU matmul with
            # K = k*k*cslab contraction and a full 256-lane N.
            for kk in range(n_taps):
                kh, kw = kk // k, kk % k
                shift = (-(kh * W + kw)) % r0          # out[r] = src[r + off]
                im_ref[pl.ds(kk * cslab, cslab), :] = pltpu.roll(src, shift,
                                                                 axis=1)
            patches = im_ref[pl.ds(0, n_taps * cslab), :]
            return jnp.dot(w_ref[...], patches,
                           preferred_element_type=jnp.float32)

        for t in range(tb):                            # batch block (static)
            # Image t -> channel-major (cslab, r0) slab; padded channels zero.
            xs_ref[...] = jnp.zeros((cslab, r0), jnp.float32)
            xs_ref[pl.ds(0, in_ch), pl.ds(0, HW)] = x_ref[t]

            # Conv stack 1 (composed 7x7) + AbsBN1d(+bias folded) + ReLU.
            # BN slabs are zero at wrap-around/garbage positions, so those
            # positions become exactly 0 after the ReLU.
            f1 = conv_im2col(xs_ref[...], wc1_ref, n_taps1, k1)
            a1 = jnp.maximum(f1 * bn1a_ref[...] + bn1c_ref[...], 0.0)

            # Conv stack 2 (composed 5x5) + AbsBN1d(+bias folded) + ReLU.
            f2 = conv_im2col(a1, wc2_ref, n_taps2, k2)
            g = jnp.maximum(f2 * bn2a_ref[...] + bn2c_ref[...], 0.0)

            # Head: Linear(bias=None) as MXU contractions over the spatial
            # lane axis.  The LHS is kept at the full 8-sublane tile (free on
            # the MXU); row c of each product is the contribution of channel c.
            z = jnp.zeros((1, npad), jnp.float32)
            for c in range(n_ch2):
                pc = jnp.dot(g, v_ref[c], preferred_element_type=jnp.float32)
                z = z + pc[c:c + 1, :]

            # AbsBatchNorm1d(n_units) + Softplus (PyTorch threshold = 20).
            y = z * bn3a_ref[...] + bn3c_ref[...]
            o_ref[pl.ds(t, 1), :] = jnp.where(
                y > 20.0, y, jnp.log1p(jnp.exp(jnp.minimum(y, 20.0))))

    def const_spec(p):
        nz = (0,) * p.ndim
        return pl.BlockSpec(p.shape, lambda b, _nz=nz: _nz)

    in_specs = [pl.BlockSpec((None, tb, in_ch, HW), lambda b: (b, 0, 0, 0))]
    in_specs += [const_spec(p) for p in params]

    fused = pl.pallas_call(
        kernel,
        out_shape=jax.ShapeDtypeStruct((batch // tb, tb, npad), jnp.float32),
        grid=(batch // tb,),
        in_specs=in_specs,
        out_specs=pl.BlockSpec((None, tb, npad), lambda b: (b, 0, 0)),
        scratch_shapes=[
            pltpu.VMEM((cslab, r0), jnp.float32),             # input slab
            pltpu.VMEM((n_taps1 * cslab, r0), jnp.float32),   # shared im2col
        ],
        compiler_params=pltpu.CompilerParams(
            dimension_semantics=("parallel",)),
    )

    def forward(x_nchw):
        # NCHW -> (B/TB, TB, C, H*W): pure metadata reshape, no HBM copy.
        xf = x_nchw.reshape(batch // tb, tb, in_ch, HW)
        out = fused(xf, *params)
        return out.reshape(batch, npad)[:, :n_units]

    return forward


# --------------------------------------------------------------------------
# Deterministic synthetic parameters in PyTorch layout.
# --------------------------------------------------------------------------
def init_raw_params(key, *, in_ch, chans, n_units, h1, w1, h2, w2,
                    n_sub1, n_sub2):
    def conv_stack(key, cin, cout, n_sub):
        ws, c = [], cin
        for _ in range(n_sub):
            key, k = jax.random.split(key)
            fan = SK * SK * c
            ws.append(jax.random.normal(k, (SK, SK, c, cout), jnp.float32)
                      / jnp.sqrt(float(fan)))
            c = cout
        key, k = jax.random.split(key)
        bias = 0.1 * jax.random.normal(k, (cout,), jnp.float32)  # last sub-conv
        return ws, bias, key

    def bn(key, f):
        key, k1, k2, k3, k4 = jax.random.split(key, 5)
        d = dict(
            scale=1.0 + 0.1 * jax.random.normal(k1, (f,), jnp.float32),
            shift=0.1 * jax.random.normal(k2, (f,), jnp.float32),
            mean=0.1 * jax.random.normal(k3, (f,), jnp.float32),
            var=1.0 + 0.1 * jnp.abs(jax.random.normal(k4, (f,), jnp.float32)),
        )
        return d, key

    c1w, c1b, key = conv_stack(key, in_ch, chans[0], n_sub1)
    c2w, c2b, key = conv_stack(key, chans[0], chans[1], n_sub2)
    bn1, key = bn(key, chans[0] * h1 * w1)
    bn2, key = bn(key, chans[1] * h2 * w2)
    key, k = jax.random.split(key)
    fc_w = jax.random.normal(k, (n_units, chans[1] * h2 * w2), jnp.float32) \
        / jnp.sqrt(float(chans[1] * h2 * w2))
    bn3, key = bn(key, n_units)
    return dict(c1w=c1w, c1b=c1b, c2w=c2w, c2b=c2b,
                bn1=bn1, bn2=bn2, fc_w=fc_w, bn3=bn3)


# Pure-JAX reference of the PyTorch module (eval mode).
def reference_forward(x_nchw, raw):
    hp = lax.Precision.HIGHEST

    def absbn(f, bn):
        return ((f - bn["mean"]) * lax.rsqrt(bn["var"] + EPS)
                * jnp.abs(bn["scale"]) + bn["shift"])

    def stack(x, ws, bias):
        for i, w in enumerate(ws):
            x = lax.conv_general_dilated(
                x, w, (1, 1), "VALID",
                dimension_numbers=("NHWC", "HWIO", "NHWC"), precision=hp)
            if i == len(ws) - 1:
                x = x + bias
        return x

    x = jnp.transpose(x_nchw, (0, 2, 3, 1))
    x = stack(x, raw["c1w"], raw["c1b"])
    B_, hh, ww, C = x.shape
    f = jnp.transpose(x, (0, 3, 1, 2)).reshape(B_, -1)     # PyTorch NCHW flatten
    f = jax.nn.relu(absbn(f, raw["bn1"]))
    x = jnp.transpose(f.reshape(B_, C, hh, ww), (0, 2, 3, 1))
    x = stack(x, raw["c2w"], raw["c2b"])
    B_, hh, ww, C = x.shape
    f = jnp.transpose(x, (0, 3, 1, 2)).reshape(B_, -1)
    f = jax.nn.relu(absbn(f, raw["bn2"]))
    z = jnp.dot(f, raw["fc_w"].T, precision=hp)
    return jax.nn.softplus(absbn(z, raw["bn3"]))


# --------------------------------------------------------------------------
if __name__ == "__main__":
    B = 4
    TB = 2                      # images per grid step (batch blocking)
    IMG = (4, 16, 16)           # (input_depth, H, W)
    KSIZES = (7, 5, 5)          # effective kernel sizes of the conv stacks
    CHANS = [8, 8]
    N_UNITS = 5

    in_ch, H, W = IMG
    k1, k2 = KSIZES[0], KSIZES[1]
    n_sub1, n_sub2 = n_subconvs(k1), n_subconvs(k2)
    h1, w1 = H - k1 + 1, W - k1 + 1
    h2, w2 = h1 - k2 + 1, w1 - k2 + 1

    CSLAB = 8                                # channel slab (8 sublanes)
    NPAD = 128                               # lane-dense head/output width
    R0 = pl.cdiv(H * W, 128) * 128           # spatial lane width of the slab
    assert CSLAB >= max(in_ch, *CHANS)

    key = jax.random.PRNGKey(0)
    key, kx = jax.random.split(key)
    x = jax.random.normal(kx, (B,) + IMG, jnp.float32)     # NCHW like PyTorch

    raw = init_raw_params(key, in_ch=in_ch, chans=CHANS, n_units=N_UNITS,
                          h1=h1, w1=w1, h2=h2, w2=w2,
                          n_sub1=n_sub1, n_sub2=n_sub2)
    params = prep_params(raw, W=W, chans=CHANS, n_units=N_UNITS,
                         h1=h1, w1=w1, h2=h2, w2=w2,
                         cslab=CSLAB, r0=R0, npad=NPAD)
    forward = build_fused_forward(params, batch=B, tb=TB, in_ch=in_ch, H=H,
                                  W=W, chans=CHANS, n_units=N_UNITS,
                                  k1=k1, k2=k2, cslab=CSLAB, r0=R0, npad=NPAD)

    out = jax.jit(forward)(x)
    jax.block_until_ready(out)

    ref = reference_forward(x, raw)
    assert out.shape == (B, N_UNITS) and out.dtype == jnp.float32
    assert bool(jnp.all(jnp.isfinite(out)))
    # 5x / 20x tighter than before: loose enough to absorb worst-case MXU
    # bf16-pass rounding of f32 operands, tight enough to catch any layout /
    # permutation / folding bug (those produce O(0.1+) errors).
    err = float(jnp.max(jnp.abs(out - ref)))
    assert bool(jnp.allclose(out, ref, rtol=1e-2, atol=1e-3)), (
        f"max abs diff {err}")
    print("KERNEL_OK")
</pallas_src>

<mosaic_0001>
module attributes {stable_mosaic.version = 11 : i64} {
  func.func @kernel(%arg0: i32, %arg1: memref<1x2x4x256xf32, #tpu.memory_space<vmem>>, %arg2: memref<8x392xf32, #tpu.memory_space<vmem>>, %arg3: memref<8x256xf32, #tpu.memory_space<vmem>>, %arg4: memref<8x256xf32, #tpu.memory_space<vmem>>, %arg5: memref<8x200xf32, #tpu.memory_space<vmem>>, %arg6: memref<8x256xf32, #tpu.memory_space<vmem>>, %arg7: memref<8x256xf32, #tpu.memory_space<vmem>>, %arg8: memref<8x256x128xf32, #tpu.memory_space<vmem>>, %arg9: memref<1x128xf32, #tpu.memory_space<vmem>>, %arg10: memref<1x128xf32, #tpu.memory_space<vmem>>, %arg11: memref<1x2x128xf32, #tpu.memory_space<vmem>>, %arg12: memref<8x256xf32, #tpu.memory_space<vmem>>, %arg13: memref<392x256xf32, #tpu.memory_space<vmem>>) attributes {dimension_semantics = [#tpu.dimension_semantics<parallel>], iteration_bounds = array<i64: 2>, scalar_prefetch = 0 : i64, scratch_operands = 2 : i64, tpu.core_type = #tpu.core_type<tc>, window_params = [{transform_indices = @transform_0, window_bounds = array<i64: 1, 2, 4, 256>}, {pipeline_mode = #tpu.pipeline_mode<synchronous>, transform_indices = @transform_1, window_bounds = array<i64: 8, 392>}, {pipeline_mode = #tpu.pipeline_mode<synchronous>, transform_indices = @transform_2, window_bounds = array<i64: 8, 256>}, {pipeline_mode = #tpu.pipeline_mode<synchronous>, transform_indices = @transform_3, window_bounds = array<i64: 8, 256>}, {pipeline_mode = #tpu.pipeline_mode<synchronous>, transform_indices = @transform_4, window_bounds = array<i64: 8, 200>}, {pipeline_mode = #tpu.pipeline_mode<synchronous>, transform_indices = @transform_5, window_bounds = array<i64: 8, 256>}, {pipeline_mode = #tpu.pipeline_mode<synchronous>, transform_indices = @transform_6, window_bounds = array<i64: 8, 256>}, {pipeline_mode = #tpu.pipeline_mode<synchronous>, transform_indices = @transform_7, window_bounds = array<i64: 8, 256, 128>}, {pipeline_mode = #tpu.pipeline_mode<synchronous>, transform_indices = @transform_8, window_bounds = array<i64: 1, 128>}, {pipeline_mode = #tpu.pipeline_mode<synchronous>, transform_indices = @transform_9, window_bounds = array<i64: 1, 128>}, {transform_indices = @transform_10, window_bounds = array<i64: 1, 2, 128>}]} {
    %cst = arith.constant 0.000000e+00 : f32
    %0 = vector.broadcast %cst : f32 to vector<8x256xf32>
    %c0 = arith.constant 0 : index
    %c0_0 = arith.constant 0 : index
    %1 = vector.load %arg12[%c0, %c0_0] : memref<8x256xf32, #tpu.memory_space<vmem>>, vector<8x256xf32>
    tpu.vector_store %arg12[%c0, %c0_0], %0 {strides = array<i32>} : memref<8x256xf32, #tpu.memory_space<vmem>>, vector<8x256xf32>,
    %c0_1 = arith.constant 0 : index
    %c0_2 = arith.constant 0 : index
    %c0_3 = arith.constant 0 : index
    %c0_4 = arith.constant 0 : index
    %2 = vector.load %arg1[%c0_1, %c0_2, %c0_3, %c0_4] : memref<1x2x4x256xf32, #tpu.memory_space<vmem>>, vector<1x1x4x256xf32>
    %3 = vector.shape_cast %2 : vector<1x1x4x256xf32> to vector<4x256xf32>
    %c0_5 = arith.constant 0 : index
    %c0_6 = arith.constant 0 : index
    %4 = vector.load %arg12[%c0_5, %c0_6] : memref<8x256xf32, #tpu.memory_space<vmem>>, vector<4x256xf32>
    tpu.vector_store %arg12[%c0_5, %c0_6], %3 {strides = array<i32>} : memref<8x256xf32, #tpu.memory_space<vmem>>, vector<4x256xf32>,
    %c0_7 = arith.constant 0 : index
    %c0_8 = arith.constant 0 : index
    %5 = vector.load %arg12[%c0_7, %c0_8] : memref<8x256xf32, #tpu.memory_space<vmem>>, vector<8x256xf32>
    %c0_i32 = arith.constant 0 : i32
    %6 = tpu.dynamic_rotate %5 by %c0_i32 dim 1 : vector<8x256xf32>, i32 -> vector<8x256xf32>
    %c0_9 = arith.constant 0 : index
    %c0_10 = arith.constant 0 : index
    %7 = vector.load %arg13[%c0_9, %c0_10] : memref<392x256xf32, #tpu.memory_space<vmem>>, vector<8x256xf32>
    tpu.vector_store %arg13[%c0_9, %c0_10], %6 {strides = array<i32>} : memref<392x256xf32, #tpu.memory_space<vmem>>, vector<8x256xf32>,
    %c255_i32 = arith.constant 255 : i32
    %8 = tpu.dynamic_rotate %5 by %c255_i32 dim 1 : vector<8x256xf32>, i32 -> vector<8x256xf32>
    %c8 = arith.constant 8 : index
    %c0_11 = arith.constant 0 : index
    %9 = vector.load %arg13[%c8, %c0_11] : memref<392x256xf32, #tpu.memory_space<vmem>>, vector<8x256xf32>
    tpu.vector_store %arg13[%c8, %c0_11], %8 {strides = array<i32>} : memref<392x256xf32, #tpu.memory_space<vmem>>, vector<8x256xf32>,
    %c254_i32 = arith.constant 254 : i32
    %10 = tpu.dynamic_rotate %5 by %c254_i32 dim 1 : vector<8x256xf32>, i32 -> vector<8x256xf32>
    %c16 = arith.constant 16 : index
    %c0_12 = arith.constant 0 : index
    %11 = vector.load %arg13[%c16, %c0_12] : memref<392x256xf32, #tpu.memory_space<vmem>>, vector<8x256xf32>
    tpu.vector_store %arg13[%c16, %c0_12], %10 {strides = array<i32>} : memref<392x256xf32, #tpu.memory_space<vmem>>, vector<8x256xf32>,
    %c253_i32 = arith.constant 253 : i32
    %12 = tpu.dynamic_rotate %5 by %c253_i32 dim 1 : vector<8x256xf32>, i32 -> vector<8x256xf32>
    %c24 = arith.constant 24 : index
    %c0_13 = arith.constant 0 : index
    %13 = vector.load %arg13[%c24, %c0_13] : memref<392x256xf32, #tpu.memory_space<vmem>>, vector<8x256xf32>
    tpu.vector_store %arg13[%c24, %c0_13], %12 {strides = array<i32>} : memref<392x256xf32, #tpu.memory_space<vmem>>, vector<8x256xf32>,
    %c252_i32 = arith.constant 252 : i32
    %14 = tpu.dynamic_rotate %5 by %c252_i32 dim 1 : vector<8x256xf32>, i32 -> vector<8x256xf32>
    %c32 = arith.constant 32 : index
    %c0_14 = arith.constant 0 : index
    %15 = vector.load %arg13[%c32, %c0_14] : memref<392x256xf32, #tpu.memory_space<vmem>>, vector<8x256xf32>
    tpu.vector_store %arg13[%c32, %c0_14], %14 {strides = array<i32>} : memref<392x256xf32, #tpu.memory_space<vmem>>, vector<8x256xf32>,
    %c251_i32 = arith.constant 251 : i32
    %16 = tpu.dynamic_rotate %5 by %c251_i32 dim 1 : vector<8x256xf32>, i32 -> vector<8x256xf32>
    %c40 = arith.constant 40 : index
    %c0_15 = arith.constant 0 : index
    %17 = vector.load %arg13[%c40, %c0_15] : memref<392x256xf32, #tpu.memory_space<vmem>>, vector<8x256xf32>
    tpu.vector_store %arg13[%c40, %c0_15], %16 {strides = array<i32>} : memref<392x256xf32, #tpu.memory_space<vmem>>, vector<8x256xf32>,
    %c250_i32 = arith.constant 250 : i32
    %18 = tpu.dynamic_rotate %5 by %c250_i32 dim 1 : vector<8x256xf32>, i32 -> vector<8x256xf32>
    %c48 = arith.constant 48 : index
    %c0_16 = arith.constant 0 : index
    %19 = vector.load %arg13[%c48, %c0_16] : memref<392x256xf32, #tpu.memory_space<vmem>>, vector<8x256xf32>
    tpu.vector_store %arg13[%c48, %c0_16], %18 {strides = array<i32>} : memref<392x256xf32, #tpu.memory_space<vmem>>, vector<8x256xf32>,
    %c240_i32 = arith.constant 240 : i32
    %20 = tpu.dynamic_rotate %5 by %c240_i32 dim 1 : vector<8x256xf32>, i32 -> vector<8x256xf32>
    %c56 = arith.constant 56 : index
    %c0_17 = arith.constant 0 : index
    %21 = vector.load %arg13[%c56, %c0_17] : memref<392x256xf32, #tpu.memory_space<vmem>>, vector<8x256xf32>
    tpu.vector_store %arg13[%c56, %c0_17], %20 {strides = array<i32>} : memref<392x256xf32, #tpu.memory_space<vmem>>, vector<8x256xf32>,
    %c239_i32 = arith.constant 239 : i32
    %22 = tpu.dynamic_rotate %5 by %c239_i32 dim 1 : vector<8x256xf32>, i32 -> vector<8x256xf32>
    %c64 = arith.constant 64 : index
    %c0_18 = arith.constant 0 : index
    %23 = vector.load %arg13[%c64, %c0_18] : memref<392x256xf32, #tpu.memory_space<vmem>>, vector<8x256xf32>
    tpu.vector_store %arg13[%c64, %c0_18], %22 {strides = array<i32>} : memref<392x256xf32, #tpu.memory_space<vmem>>, vector<8x256xf32>,
    %c238_i32 = arith.constant 238 : i32
    %24 = tpu.dynamic_rotate %5 by %c238_i32 dim 1 : vector<8x256xf32>, i32 -> vector<8x256xf32>
    %c72 = arith.constant 72 : index
    %c0_19 = arith.constant 0 : index
    %25 = vector.load %arg13[%c72, %c0_19] : memref<392x256xf32, #tpu.memory_space<vmem>>, vector<8x256xf32>
    tpu.vector_store %arg13[%c72, %c0_19], %24 {strides = array<i32>} : memref<392x256xf32, #tpu.memory_space<vmem>>, vector<8x256xf32>,
    %c237_i32 = arith.constant 237 : i32
    %26 = tpu.dynamic_rotate %5 by %c237_i32 dim 1 : vector<8x256xf32>, i32 -> vector<8x256xf32>
    %c80 = arith.constant 80 : index
    %c0_20 = arith.constant 0 : index
    %27 = vector.load %arg13[%c80, %c0_20] : memref<392x256xf32, #tpu.memory_space<vmem>>, vector<8x256xf32>
    tpu.vector_store %arg13[%c80, %c0_20], %26 {strides = array<i32>} : memref<392x256xf32, #tpu.memory_space<vmem>>, vector<8x256xf32>,
    %c236_i32 = arith.constant 236 : i32
    %28 = tpu.dynamic_rotate %5 by %c236_i32 dim 1 : vector<8x256xf32>, i32 -> vector<8x256xf32>
    %c88 = arith.constant 88 : index
    %c0_21 = arith.constant 0 : index
    %29 = vector.load %arg13[%c88, %c0_21] : memref<392x256xf32, #tpu.memory_space<vmem>>, vector<8x256xf32>
    tpu.vector_store %arg13[%c88, %c0_21], %28 {strides = array<i32>} : memref<392x256xf32, #tpu.memory_space<vmem>>, vector<8x256xf32>,
    %c235_i32 = arith.constant 235 : i32
    %30 = tpu.dynamic_rotate %5 by %c235_i32 dim 1 : vector<8x256xf32>, i32 -> vector<8x256xf32>
    %c96 = arith.constant 96 : index
    %c0_22 = arith.constant 0 : index
    %31 = vector.load %arg13[%c96, %c0_22] : memref<392x256xf32, #tpu.memory_space<vmem>>, vector<8x256xf32>
    tpu.vector_store %arg13[%c96, %c0_22], %30 {strides = array<i32>} : memref<392x256xf32, #tpu.memory_space<vmem>>, vector<8x256xf32>,
    %c234_i32 = arith.constant 234 : i32
    %32 = tpu.dynamic_rotate %5 by %c234_i32 dim 1 : vector<8x256xf32>, i32 -> vector<8x256xf32>
    %c104 = arith.constant 104 : index
    %c0_23 = arith.constant 0 : index
    %33 = vector.load %arg13[%c104, %c0_23] : memref<392x256xf32, #tpu.memory_space<vmem>>, vector<8x256xf32>
    tpu.vector_store %arg13[%c104, %c0_23], %32 {strides = array<i32>} : memref<392x256xf32, #tpu.memory_space<vmem>>, vector<8x256xf32>,
    %c224_i32 = arith.constant 224 : i32
    %34 = tpu.dynamic_rotate %5 by %c224_i32 dim 1 : vector<8x256xf32>, i32 -> vector<8x256xf32>
    %c112 = arith.constant 112 : index
    %c0_24 = arith.constant 0 : index
    %35 = vector.load %arg13[%c112, %c0_24] : memref<392x256xf32, #tpu.memory_space<vmem>>, vector<8x256xf32>
    tpu.vector_store %arg13[%c112, %c0_24], %34 {strides = array<i32>} : memref<392x256xf32, #tpu.memory_space<vmem>>, vector<8x256xf32>,
    %c223_i32 = arith.constant 223 : i32
    %36 = tpu.dynamic_rotate %5 by %c223_i32 dim 1 : vector<8x256xf32>, i32 -> vector<8x256xf32>
    %c120 = arith.constant 120 : index
    %c0_25 = arith.constant 0 : index
    %37 = vector.load %arg13[%c120, %c0_25] : memref<392x256xf32, #tpu.memory_space<vmem>>, vector<8x256xf32>
    tpu.vector_store %arg13[%c120, %c0_25], %36 {strides = array<i32>} : memref<392x256xf32, #tpu.memory_space<vmem>>, vector<8x256xf32>,
    %c222_i32 = arith.constant 222 : i32
    %38 = tpu.dynamic_rotate %5 by %c222_i32 dim 1 : vector<8x256xf32>, i32 -> vector<8x256xf32>
    %c128 = arith.constant 128 : index
    %c0_26 = arith.constant 0 : index
    %39 = vector.load %arg13[%c128, %c0_26] : memref<392x256xf32, #tpu.memory_space<vmem>>, vector<8x256xf32>
    tpu.vector_store %arg13[%c128, %c0_26], %38 {strides = array<i32>} : memref<392x256xf32, #tpu.memory_space<vmem>>, vector<8x256xf32>,
    %c221_i32 = arith.constant 221 : i32
    %40 = tpu.dynamic_rotate %5 by %c221_i32 dim 1 : vector<8x256xf32>, i32 -> vector<8x256xf32>
    %c136 = arith.constant 136 : index
    %c0_27 = arith.constant 0 : index
    %41 = vector.load %arg13[%c136, %c0_27] : memref<392x256xf32, #tpu.memory_space<vmem>>, vector<8x256xf32>
    tpu.vector_store %arg13[%c136, %c0_27], %40 {strides = array<i32>} : memref<392x256xf32, #tpu.memory_space<vmem>>, vector<8x256xf32>,
    %c220_i32 = arith.constant 220 : i32
    %42 = tpu.dynamic_rotate %5 by %c220_i32 dim 1 : vector<8x256xf32>, i32 -> vector<8x256xf32>
    %c144 = arith.constant 144 : index
    %c0_28 = arith.constant 0 : index
    %43 = vector.load %arg13[%c144, %c0_28] : memref<392x256xf32, #tpu.memory_space<vmem>>, vector<8x256xf32>
    tpu.vector_store %arg13[%c144, %c0_28], %42 {strides = array<i32>} : memref<392x256xf32, #tpu.memory_space<vmem>>, vector<8x256xf32>,
    %c219_i32 = arith.constant 219 : i32
    %44 = tpu.dynamic_rotate %5 by %c219_i32 dim 1 : vector<8x256xf32>, i32 -> vector<8x256xf32>
    %c152 = arith.constant 152 : index
    %c0_29 = arith.constant 0 : index
    %45 = vector.load %arg13[%c152, %c0_29] : memref<392x256xf32, #tpu.memory_space<vmem>>, vector<8x256xf32>
    tpu.vector_store %arg13[%c152, %c0_29], %44 {strides = array<i32>} : memref<392x256xf32, #tpu.memory_space<vmem>>, vector<8x256xf32>,
    %c218_i32 = arith.constant 218 : i32
    %46 = tpu.dynamic_rotate %5 by %c218_i32 dim 1 : vector<8x256xf32>, i32 -> vector<8x256xf32>
    %c160 = arith.constant 160 : index
    %c0_30 = arith.constant 0 : index
    %47 = vector.load %arg13[%c160, %c0_30] : memref<392x256xf32, #tpu.memory_space<vmem>>, vector<8x256xf32>
    tpu.vector_store %arg13[%c160, %c0_30], %46 {strides = array<i32>} : memref<392x256xf32, #tpu.memory_space<vmem>>, vector<8x256xf32>,
    %c208_i32 = arith.constant 208 : i32
    %48 = tpu.dynamic_rotate %5 by %c208_i32 dim 1 : vector<8x256xf32>, i32 -> vector<8x256xf32>
    %c168 = arith.constant 168 : index
    %c0_31 = arith.constant 0 : index
    %49 = vector.load %arg13[%c168, %c0_31] : memref<392x256xf32, #tpu.memory_space<vmem>>, vector<8x256xf32>
    tpu.vector_store %arg13[%c168, %c0_31], %48 {strides = array<i32>} : memref<392x256xf32, #tpu.memory_space<vmem>>, vector<8x256xf32>,
    %c207_i32 = arith.constant 207 : i32
    %50 = tpu.dynamic_rotate %5 by %c207_i32 dim 1 : vector<8x256xf32>, i32 -> vector<8x256xf32>
    %c176 = arith.constant 176 : index
    %c0_32 = arith.constant 0 : index
    %51 = vector.load %arg13[%c176, %c0_32] : memref<392x256xf32, #tpu.memory_space<vmem>>, vector<8x256xf32>
    tpu.vector_store %arg13[%c176, %c0_32], %50 {strides = array<i32>} : memref<392x256xf32, #tpu.memory_space<vmem>>, vector<8x256xf32>,
    %c206_i32 = arith.constant 206 : i32
    %52 = tpu.dynamic_rotate %5 by %c206_i32 dim 1 : vector<8x256xf32>, i32 -> vector<8x256xf32>
    %c184 = arith.constant 184 : index
    %c0_33 = arith.constant 0 : index
    %53 = vector.load %arg13[%c184, %c0_33] : memref<392x256xf32, #tpu.memory_space<vmem>>, vector<8x256xf32>
    tpu.vector_store %arg13[%c184, %c0_33], %52 {strides = array<i32>} : memref<392x256xf32, #tpu.memory_space<vmem>>, vector<8x256xf32>,
    %c205_i32 = arith.constant 205 : i32
    %54 = tpu.dynamic_rotate %5 by %c205_i32 dim 1 : vector<8x256xf32>, i32 -> vector<8x256xf32>
    %c192 = arith.constant 192 : index
    %c0_34 = arith.constant 0 : index
    %55 = vector.load %arg13[%c192, %c0_34] : memref<392x256xf32, #tpu.memory_space<vmem>>, vector<8x256xf32>
    tpu.vector_store %arg13[%c192, %c0_34], %54 {strides = array<i32>} : memref<392x256xf32, #tpu.memory_space<vmem>>, vector<8x256xf32>,
    %c204_i32 = arith.constant 204 : i32
    %56 = tpu.dynamic_rotate %5 by %c204_i32 dim 1 : vector<8x256xf32>, i32 -> vector<8x256xf32>
    %c200 = arith.constant 200 : index
    %c0_35 = arith.constant 0 : index
    %57 = vector.load %arg13[%c200, %c0_35] : memref<392x256xf32, #tpu.memory_space<vmem>>, vector<8x256xf32>
    tpu.vector_store %arg13[%c200, %c0_35], %56 {strides = array<i32>} : memref<392x256xf32, #tpu.memory_space<vmem>>, vector<8x256xf32>,
    %c203_i32 = arith.constant 203 : i32
    %58 = tpu.dynamic_rotate %5 by %c203_i32 dim 1 : vector<8x256xf32>, i32 -> vector<8x256xf32>
    %c208 = arith.constant 208 : index
    %c0_36 = arith.constant 0 : index
    %59 = vector.load %arg13[%c208, %c0_36] : memref<392x256xf32, #tpu.memory_space<vmem>>, vector<8x256xf32>
    tpu.vector_store %arg13[%c208, %c0_36], %58 {strides = array<i32>} : memref<392x256xf32, #tpu.memory_space<vmem>>, vector<8x256xf32>,
    %c202_i32 = arith.constant 202 : i32
    %60 = tpu.dynamic_rotate %5 by %c202_i32 dim 1 : vector<8x256xf32>, i32 -> vector<8x256xf32>
    %c216 = arith.constant 216 : index
    %c0_37 = arith.constant 0 : index
    %61 = vector.load %arg13[%c216, %c0_37] : memref<392x256xf32, #tpu.memory_space<vmem>>, vector<8x256xf32>
    tpu.vector_store %arg13[%c216, %c0_37], %60 {strides = array<i32>} : memref<392x256xf32, #tpu.memory_space<vmem>>, vector<8x256xf32>,
    %c192_i32 = arith.constant 192 : i32
    %62 = tpu.dynamic_rotate %5 by %c192_i32 dim 1 : vector<8x256xf32>, i32 -> vector<8x256xf32>
    %c224 = arith.constant 224 : index
    %c0_38 = arith.constant 0 : index
    %63 = vector.load %arg13[%c224, %c0_38] : memref<392x256xf32, #tpu.memory_space<vmem>>, vector<8x256xf32>
    tpu.vector_store %arg13[%c224, %c0_38], %62 {strides = array<i32>} : memref<392x256xf32, #tpu.memory_space<vmem>>, vector<8x256xf32>,
    %c191_i32 = arith.constant 191 : i32
    %64 = tpu.dynamic_rotate %5 by %c191_i32 dim 1 : vector<8x256xf32>, i32 -> vector<8x256xf32>
    %c232 = arith.constant 232 : index
    %c0_39 = arith.constant 0 : index
    %65 = vector.load %arg13[%c232, %c0_39] : memref<392x256xf32, #tpu.memory_space<vmem>>, vector<8x256xf32>
    tpu.vector_store %arg13[%c232, %c0_39], %64 {strides = array<i32>} : memref<392x256xf32, #tpu.memory_space<vmem>>, vector<8x256xf32>,
    %c190_i32 = arith.constant 190 : i32
    %66 = tpu.dynamic_rotate %5 by %c190_i32 dim 1 : vector<8x256xf32>, i32 -> vector<8x256xf32>
    %c240 = arith.constant 240 : index
    %c0_40 = arith.constant 0 : index
    %67 = vector.load %arg13[%c240, %c0_40] : memref<392x256xf32, #tpu.memory_space<vmem>>, vector<8x256xf32>
    tpu.vector_store %arg13[%c240, %c0_40], %66 {strides = array<i32>} : memref<392x256xf32, #tpu.memory_space<vmem>>, vector<8x256xf32>,
    %c189_i32 = arith.constant 189 : i32
    %68 = tpu.dynamic_rotate %5 by %c189_i32 dim 1 : vector<8x256xf32>, i32 -> vector<8x256xf32>
    %c248 = arith.constant 248 : index
    %c0_41 = arith.constant 0 : index
    %69 = vector.load %arg13[%c248, %c0_41] : memref<392x256xf32, #tpu.memory_space<vmem>>, vector<8x256xf32>
    tpu.vector_store %arg13[%c248, %c0_41], %68 {strides = array<i32>} : memref<392x256xf32, #tpu.memory_space<vmem>>, vector<8x256xf32>,
    %c188_i32 = arith.constant 188 : i32
    %70 = tpu.dynamic_rotate %5 by %c188_i32 dim 1 : vector<8x256xf32>, i32 -> vector<8x256xf32>
    %c256 = arith.constant 256 : index
    %c0_42 = arith.constant 0 : index
    %71 = vector.load %arg13[%c256, %c0_42] : memref<392x256xf32, #tpu.memory_space<vmem>>, vector<8x256xf32>
    tpu.vector_store %arg13[%c256, %c0_42], %70 {strides = array<i32>} : memref<392x256xf32, #tpu.memory_space<vmem>>, vector<8x256xf32>,
    %c187_i32 = arith.constant 187 : i32
    %72 = tpu.dynamic_rotate %5 by %c187_i32 dim 1 : vector<8x256xf32>, i32 -> vector<8x256xf32>
    %c264 = arith.constant 264 : index
    %c0_43 = arith.constant 0 : index
    %73 = vector.load %arg13[%c264, %c0_43] : memref<392x256xf32, #tpu.memory_space<vmem>>, vector<8x256xf32>
    tpu.vector_store %arg13[%c264, %c0_43], %72 {strides = array<i32>} : memref<392x256xf32, #tpu.memory_space<vmem>>, vector<8x256xf32>,
    %c186_i32 = arith.constant 186 : i32
    %74 = tpu.dynamic_rotate %5 by %c186_i32 dim 1 : vector<8x256xf32>, i32 -> vector<8x256xf32>
    %c272 = arith.constant 272 : index
    %c0_44 = arith.constant 0 : index
    %75 = vector.load %arg13[%c272, %c0_44] : memref<392x256xf32, #tpu.memory_space<vmem>>, vector<8x256xf32>
    tpu.vector_store %arg13[%c272, %c0_44], %74 {strides = array<i32>} : memref<392x256xf32, #tpu.memory_space<vmem>>, vector<8x256xf32>,
    %c176_i32 = arith.constant 176 : i32
    %76 = tpu.dynamic_rotate %5 by %c176_i32 dim 1 : vector<8x256xf32>, i32 -> vector<8x256xf32>
    %c280 = arith.constant 280 : index
    %c0_45 = arith.constant 0 : index
    %77 = vector.load %arg13[%c280, %c0_45] : memref<392x256xf32, #tpu.memory_space<vmem>>, vector<8x256xf32>
    tpu.vector_store %arg13[%c280, %c0_45], %76 {strides = array<i32>} : memref<392x256xf32, #tpu.memory_space<vmem>>, vector<8x256xf32>,
    %c175_i32 = arith.constant 175 : i32
    %78 = tpu.dynamic_rotate %5 by %c175_i32 dim 1 : vector<8x256xf32>, i32 -> vector<8x256xf32>
    %c288 = arith.constant 288 : index
    %c0_46 = arith.constant 0 : index
    %79 = vector.load %arg13[%c288, %c0_46] : memref<392x256xf32, #tpu.memory_space<vmem>>, vector<8x256xf32>
    tpu.vector_store %arg13[%c288, %c0_46], %78 {strides = array<i32>} : memref<392x256xf32, #tpu.memory_space<vmem>>, vector<8x256xf32>,
    %c174_i32 = arith.constant 174 : i32
    %80 = tpu.dynamic_rotate %5 by %c174_i32 dim 1 : vector<8x256xf32>, i32 -> vector<8x256xf32>
    %c296 = arith.constant 296 : index
    %c0_47 = arith.constant 0 : index
    %81 = vector.load %arg13[%c296, %c0_47] : memref<392x256xf32, #tpu.memory_space<vmem>>, vector<8x256xf32>
    tpu.vector_store %arg13[%c296, %c0_47], %80 {strides = array<i32>} : memref<392x256xf32, #tpu.memory_space<vmem>>, vector<8x256xf32>,
    %c173_i32 = arith.constant 173 : i32
    %82 = tpu.dynamic_rotate %5 by %c173_i32 dim 1 : vector<8x256xf32>, i32 -> vector<8x256xf32>
    %c304 = arith.constant 304 : index
    %c0_48 = arith.constant 0 : index
    %83 = vector.load %arg13[%c304, %c0_48] : memref<392x256xf32, #tpu.memory_space<vmem>>, vector<8x256xf32>
    tpu.vector_store %arg13[%c304, %c0_48], %82 {strides = array<i32>} : memref<392x256xf32, #tpu.memory_space<vmem>>, vector<8x256xf32>,
    %c172_i32 = arith.constant 172 : i32
    %84 = tpu.dynamic_rotate %5 by %c172_i32 dim 1 : vector<8x256xf32>, i32 -> vector<8x256xf32>
    %c312 = arith.constant 312 : index
    %c0_49 = arith.constant 0 : index
    %85 = vector.load %arg13[%c312, %c0_49] : memref<392x256xf32, #tpu.memory_space<vmem>>, vector<8x256xf32>
    tpu.vector_store %arg13[%c312, %c0_49], %84 {strides = array<i32>} : memref<392x256xf32, #tpu.memory_space<vmem>>, vector<8x256xf32>,
    %c171_i32 = arith.constant 171 : i32
    %86 = tpu.dynamic_rotate %5 by %c171_i32 dim 1 : vector<8x256xf32>, i32 -> vector<8x256xf32>
    %c320 = arith.constant 320 : index
    %c0_50 = arith.constant 0 : index
    %87 = vector.load %arg13[%c320, %c0_50] : memref<392x256xf32, #tpu.memory_space<vmem>>, vector<8x256xf32>
    tpu.vector_store %arg13[%c320, %c0_50], %86 {strides = array<i32>} : memref<392x256xf32, #tpu.memory_space<vmem>>, vector<8x256xf32>,
    %c170_i32 = arith.constant 170 : i32
    %88 = tpu.dynamic_rotate %5 by %c170_i32 dim 1 : vector<8x256xf32>, i32 -> vector<8x256xf32>
    %c328 = arith.constant 328 : index
    %c0_51 = arith.constant 0 : index
    %89 = vector.load %arg13[%c328, %c0_51] : memref<392x256xf32, #tpu.memory_space<vmem>>, vector<8x256xf32>
    tpu.vector_store %arg13[%c328, %c0_51], %88 {strides = array<i32>} : memref<392x256xf32, #tpu.memory_space<vmem>>, vector<8x256xf32>,
    %c160_i32 = arith.constant 160 : i32
    %90 = tpu.dynamic_rotate %5 by %c160_i32 dim 1 : vector<8x256xf32>, i32 -> vector<8x256xf32>
    %c336 = arith.constant 336 : index
    %c0_52 = arith.constant 0 : index
    %91 = vector.load %arg13[%c336, %c0_52] : memref<392x256xf32, #tpu.memory_space<vmem>>, vector<8x256xf32>
    tpu.vector_store %arg13[%c336, %c0_52], %90 {strides = array<i32>} : memref<392x256xf32, #tpu.memory_space<vmem>>, vector<8x256xf32>,
    %c159_i32 = arith.constant 159 : i32
    %92 = tpu.dynamic_rotate %5 by %c159_i32 dim 1 : vector<8x256xf32>, i32 -> vector<8x256xf32>
    %c344 = arith.constant 344 : index
    %c0_53 = arith.constant 0 : index
    %93 = vector.load %arg13[%c344, %c0_53] : memref<392x256xf32, #tpu.memory_space<vmem>>, vector<8x256xf32>
    tpu.vector_store %arg13[%c344, %c0_53], %92 {strides = array<i32>} : memref<392x256xf32, #tpu.memory_space<vmem>>, vector<8x256xf32>,
    %c158_i32 = arith.constant 158 : i32
    %94 = tpu.dynamic_rotate %5 by %c158_i32 dim 1 : vector<8x256xf32>, i32 -> vector<8x256xf32>
    %c352 = arith.constant 352 : index
    %c0_54 = arith.constant 0 : index
    %95 = vector.load %arg13[%c352, %c0_54] : memref<392x256xf32, #tpu.memory_space<vmem>>, vector<8x256xf32>
    tpu.vector_store %arg13[%c352, %c0_54], %94 {strides = array<i32>} : memref<392x256xf32, #tpu.memory_space<vmem>>, vector<8x256xf32>,
    %c157_i32 = arith.constant 157 : i32
    %96 = tpu.dynamic_rotate %5 by %c157_i32 dim 1 : vector<8x256xf32>, i32 -> vector<8x256xf32>
    %c360 = arith.constant 360 : index
    %c0_55 = arith.constant 0 : index
    %97 = vector.load %arg13[%c360, %c0_55] : memref<392x256xf32, #tpu.memory_space<vmem>>, vector<8x256xf32>
    tpu.vector_store %arg13[%c360, %c0_55], %96 {strides = array<i32>} : memref<392x256xf32, #tpu.memory_space<vmem>>, vector<8x256xf32>,
    %c156_i32 = arith.constant 156 : i32
    %98 = tpu.dynamic_rotate %5 by %c156_i32 dim 1 : vector<8x256xf32>, i32 -> vector<8x256xf32>
    %c368 = arith.constant 368 : index
    %c0_56 = arith.constant 0 : index
    %99 = vector.load %arg13[%c368, %c0_56] : memref<392x256xf32, #tpu.memory_space<vmem>>, vector<8x256xf32>
    tpu.vector_store %arg13[%c368, %c0_56], %98 {strides = array<i32>} : memref<392x256xf32, #tpu.memory_space<vmem>>, vector<8x256xf32>,
    %c155_i32 = arith.constant 155 : i32
    %100 = tpu.dynamic_rotate %5 by %c155_i32 dim 1 : vector<8x256xf32>, i32 -> vector<8x256xf32>
    %c376 = arith.constant 376 : index
    %c0_57 = arith.constant 0 : index
    %101 = vector.load %arg13[%c376, %c0_57] : memref<392x256xf32, #tpu.memory_space<vmem>>, vector<8x256xf32>
    tpu.vector_store %arg13[%c376, %c0_57], %100 {strides = array<i32>} : memref<392x256xf32, #tpu.memory_space<vmem>>, vector<8x256xf32>,
    %c154_i32 = arith.constant 154 : i32
    %102 = tpu.dynamic_rotate %5 by %c154_i32 dim 1 : vector<8x256xf32>, i32 -> vector<8x256xf32>
    %c384 = arith.constant 384 : index
    %c0_58 = arith.constant 0 : index
    %103 = vector.load %arg13[%c384, %c0_58] : memref<392x256xf32, #tpu.memory_space<vmem>>, vector<8x256xf32>
    tpu.vector_store %arg13[%c384, %c0_58], %102 {strides = array<i32>} : memref<392x256xf32, #tpu.memory_space<vmem>>, vector<8x256xf32>,
    %c0_59 = arith.constant 0 : index
    %c0_60 = arith.constant 0 : index
    %104 = vector.load %arg13[%c0_59, %c0_60] : memref<392x256xf32, #tpu.memory_space<vmem>>, vector<392x256xf32>
    %c0_61 = arith.constant 0 : index
    %c0_62 = arith.constant 0 : index
    %105 = vector.load %arg2[%c0_61, %c0_62] : memref<8x392xf32, #tpu.memory_space<vmem>>, vector<8x392xf32>
    %cst_63 = arith.constant dense<0.000000e+00> : vector<8x256xf32>
    %106 = tpu.matmul %105, %104, %cst_63 {dimension_numbers = #tpu.dot_dimension_numbers<[1], [0], [0], [1], [0, 0, 1, 1], [], []>} : vector<8x392xf32>, vector<392x256xf32>, vector<8x256xf32> -> vector<8x256xf32>
    %c0_64 = arith.constant 0 : index
    %c0_65 = arith.constant 0 : index
    %107 = vector.load %arg3[%c0_64, %c0_65] : memref<8x256xf32, #tpu.memory_space<vmem>>, vector<8x256xf32>
    %108 = arith.mulf %106, %107 : vector<8x256xf32>
    %c0_66 = arith.constant 0 : index
    %c0_67 = arith.constant 0 : index
    %109 = vector.load %arg4[%c0_66, %c0_67] : memref<8x256xf32, #tpu.memory_space<vmem>>, vector<8x256xf32>
    %110 = arith.addf %108, %109 : vector<8x256xf32>
    %cst_68 = arith.constant 0.000000e+00 : f32
    %111 = vector.broadcast %cst_68 : f32 to vector<8x256xf32>
    %112 = arith.maximumf %110, %111 : vector<8x256xf32>
    %c0_i32_69 = arith.constant 0 : i32
    %113 = tpu.dynamic_rotate %112 by %c0_i32_69 dim 1 : vector<8x256xf32>, i32 -> vector<8x256xf32>
    %c0_70 = arith.constant 0 : index
    %c0_71 = arith.constant 0 : index
    %114 = vector.load %arg13[%c0_70, %c0_71] : memref<392x256xf32, #tpu.memory_space<vmem>>, vector<8x256xf32>
    tpu.vector_store %arg13[%c0_70, %c0_71], %113 {strides = array<i32>} : memref<392x256xf32, #tpu.memory_space<vmem>>, vector<8x256xf32>,
    %c255_i32_72 = arith.constant 255 : i32
    %115 = tpu.dynamic_rotate %112 by %c255_i32_72 dim 1 : vector<8x256xf32>, i32 -> vector<8x256xf32>
    %c8_73 = arith.constant 8 : index
    %c0_74 = arith.constant 0 : index
    %116 = vector.load %arg13[%c8_73, %c0_74] : memref<392x256xf32, #tpu.memory_space<vmem>>, vector<8x256xf32>
    tpu.vector_store %arg13[%c8_73, %c0_74], %115 {strides = array<i32>} : memref<392x256xf32, #tpu.memory_space<vmem>>, vector<8x256xf32>,
    %c254_i32_75 = arith.constant 254 : i32
    %117 = tpu.dynamic_rotate %112 by %c254_i32_75 dim 1 : vector<8x256xf32>, i32 -> vector<8x256xf32>
    %c16_76 = arith.constant 16 : index
    %c0_77 = arith.constant 0 : index
    %118 = vector.load %arg13[%c16_76, %c0_77] : memref<392x256xf32, #tpu.memory_space<vmem>>, vector<8x256xf32>
    tpu.vector_store %arg13[%c16_76, %c0_77], %117 {strides = array<i32>} : memref<392x256xf32, #tpu.memory_space<vmem>>, vector<8x256xf32>,
    %c253_i32_78 = arith.constant 253 : i32
    %119 = tpu.dynamic_rotate %112 by %c253_i32_78 dim 1 : vector<8x256xf32>, i32 -> vector<8x256xf32>
    %c24_79 = arith.constant 24 : index
    %c0_80 = arith.constant 0 : index
    %120 = vector.load %arg13[%c24_79, %c0_80] : memref<392x256xf32, #tpu.memory_space<vmem>>, vector<8x256xf32>
    tpu.vector_store %arg13[%c24_79, %c0_80], %119 {strides = array<i32>} : memref<392x256xf32, #tpu.memory_space<vmem>>, vector<8x256xf32>,
    %c252_i32_81 = arith.constant 252 : i32
    %121 = tpu.dynamic_rotate %112 by %c252_i32_81 dim 1 : vector<8x256xf32>, i32 -> vector<8x256xf32>
    %c32_82 = arith.constant 32 : index
    %c0_83 = arith.constant 0 : index
    %122 = vector.load %arg13[%c32_82, %c0_83] : memref<392x256xf32, #tpu.memory_space<vmem>>, vector<8x256xf32>
    tpu.vector_store %arg13[%c32_82, %c0_83], %121 {strides = array<i32>} : memref<392x256xf32, #tpu.memory_space<vmem>>, vector<8x256xf32>,
    %c240_i32_84 = arith.constant 240 : i32
    %123 = tpu.dynamic_rotate %112 by %c240_i32_84 dim 1 : vector<8x256xf32>, i32 -> vector<8x256xf32>
    %c40_85 = arith.constant 40 : index
    %c0_86 = arith.constant 0 : index
    %124 = vector.load %arg13[%c40_85, %c0_86] : memref<392x256xf32, #tpu.memory_space<vmem>>, vector<8x256xf32>
    tpu.vector_store %arg13[%c40_85, %c0_86], %123 {strides = array<i32>} : memref<392x256xf32, #tpu.memory_space<vmem>>, vector<8x256xf32>,
    %c239_i32_87 = arith.constant 239 : i32
    %125 = tpu.dynamic_rotate %112 by %c239_i32_87 dim 1 : vector<8x256xf32>, i32 -> vector<8x256xf32>
    %c48_88 = arith.constant 48 : index
    %c0_89 = arith.constant 0 : index
    %126 = vector.load %arg13[%c48_88, %c0_89] : memref<392x256xf32, #tpu.memory_space<vmem>>, vector<8x256xf32>
    tpu.vector_store %arg13[%c48_88, %c0_89], %125 {strides = array<i32>} : memref<392x256xf32, #tpu.memory_space<vmem>>, vector<8x256xf32>,
    %c238_i32_90 = arith.constant 238 : i32
    %127 = tpu.dynamic_rotate %112 by %c238_i32_90 dim 1 : vector<8x256xf32>, i32 -> vector<8x256xf32>
    %c56_91 = arith.constant 56 : index
    %c0_92 = arith.constant 0 : index
    %128 = vector.load %arg13[%c56_91, %c0_92] : memref<392x256xf32, #tpu.memory_space<vmem>>, vector<8x256xf32>
    tpu.vector_store %arg13[%c56_91, %c0_92], %127 {strides = array<i32>} : memref<392x256xf32, #tpu.memory_space<vmem>>, vector<8x256xf32>,
    %c237_i32_93 = arith.constant 237 : i32
    %129 = tpu.dynamic_rotate %112 by %c237_i32_93 dim 1 : vector<8x256xf32>, i32 -> vector<8x256xf32>
    %c64_94 = arith.constant 64 : index
    %c0_95 = arith.constant 0 : index
    %130 = vector.load %arg13[%c64_94, %c0_95] : memref<392x256xf32, #tpu.memory_space<vmem>>, vector<8x256xf32>
    tpu.vector_store %arg13[%c64_94, %c0_95], %129 {strides = array<i32>} : memref<392x256xf32, #tpu.memory_space<vmem>>, vector<8x256xf32>,
    %c236_i32_96 = arith.constant 236 : i32
    %131 = tpu.dynamic_rotate %112 by %c236_i32_96 dim 1 : vector<8x256xf32>, i32 -> vector<8x256xf32>
    %c72_97 = arith.constant 72 : index
    %c0_98 = arith.constant 0 : index
    %132 = vector.load %arg13[%c72_97, %c0_98] : memref<392x256xf32, #tpu.memory_space<vmem>>, vector<8x256xf32>
    tpu.vector_store %arg13[%c72_97, %c0_98], %131 {strides = array<i32>} : memref<392x256xf32, #tpu.memory_space<vmem>>, vector<8x256xf32>,
    %c224_i32_99 = arith.constant 224 : i32
    %133 = tpu.dynamic_rotate %112 by %c224_i32_99 dim 1 : vector<8x256xf32>, i32 -> vector<8x256xf32>
    %c80_100 = arith.constant 80 : index
    %c0_101 = arith.constant 0 : index
    %134 = vector.load %arg13[%c80_100, %c0_101] : memref<392x256xf32, #tpu.memory_space<vmem>>, vector<8x256xf32>
    tpu.vector_store %arg13[%c80_100, %c0_101], %133 {strides = array<i32>} : memref<392x256xf32, #tpu.memory_space<vmem>>, vector<8x256xf32>,
    %c223_i32_102 = arith.constant 223 : i32
    %135 = tpu.dynamic_rotate %112 by %c223_i32_102 dim 1 : vector<8x256xf32>, i32 -> vector<8x256xf32>
    %c88_103 = arith.constant 88 : index
    %c0_104 = arith.constant 0 : index
    %136 = vector.load %arg13[%c88_103, %c0_104] : memref<392x256xf32, #tpu.memory_space<vmem>>, vector<8x256xf32>
    tpu.vector_store %arg13[%c88_103, %c0_104], %135 {strides = array<i32>} : memref<392x256xf32, #tpu.memory_space<vmem>>, vector<8x256xf32>,
    %c222_i32_105 = arith.constant 222 : i32
    %137 = tpu.dynamic_rotate %112 by %c222_i32_105 dim 1 : vector<8x256xf32>, i32 -> vector<8x256xf32>
    %c96_106 = arith.constant 96 : index
    %c0_107 = arith.constant 0 : index
    %138 = vector.load %arg13[%c96_106, %c0_107] : memref<392x256xf32, #tpu.memory_space<vmem>>, vector<8x256xf32>
    tpu.vector_store %arg13[%c96_106, %c0_107], %137 {strides = array<i32>} : memref<392x256xf32, #tpu.memory_space<vmem>>, vector<8x256xf32>,
    %c221_i32_108 = arith.constant 221 : i32
    %139 = tpu.dynamic_rotate %112 by %c221_i32_108 dim 1 : vector<8x256xf32>, i32 -> vector<8x256xf32>
    %c104_109 = arith.constant 104 : index
    %c0_110 = arith.constant 0 : index
    %140 = vector.load %arg13[%c104_109, %c0_110] : memref<392x256xf32, #tpu.memory_space<vmem>>, vector<8x256xf32>
    tpu.vector_store %arg13[%c104_109, %c0_110], %139 {strides = array<i32>} : memref<392x256xf32, #tpu.memory_space<vmem>>, vector<8x256xf32>,
    %c220_i32_111 = arith.constant 220 : i32
    %141 = tpu.dynamic_rotate %112 by %c220_i32_111 dim 1 : vector<8x256xf32>, i32 -> vector<8x256xf32>
    %c112_112 = arith.constant 112 : index
    %c0_113 = arith.constant 0 : index
    %142 = vector.load %arg13[%c112_112, %c0_113] : memref<392x256xf32, #tpu.memory_space<vmem>>, vector<8x256xf32>
    tpu.vector_store %arg13[%c112_112, %c0_113], %141 {strides = array<i32>} : memref<392x256xf32, #tpu.memory_space<vmem>>, vector<8x256xf32>,
    %c208_i32_114 = arith.constant 208 : i32
    %143 = tpu.dynamic_rotate %112 by %c208_i32_114 dim 1 : vector<8x256xf32>, i32 -> vector<8x256xf32>
    %c120_115 = arith.constant 120 : index
    %c0_116 = arith.constant 0 : index
    %144 = vector.load %arg13[%c120_115, %c0_116] : memref<392x256xf32, #tpu.memory_space<vmem>>, vector<8x256xf32>
    tpu.vector_store %arg13[%c120_115, %c0_116], %143 {strides = array<i32>} : memref<392x256xf32, #tpu.memory_space<vmem>>, vector<8x256xf32>,
    %c207_i32_117 = arith.constant 207 : i32
    %145 = tpu.dynamic_rotate %112 by %c207_i32_117 dim 1 : vector<8x256xf32>, i32 -> vector<8x256xf32>
    %c128_118 = arith.constant 128 : index
    %c0_119 = arith.constant 0 : index
    %146 = vector.load %arg13[%c128_118, %c0_119] : memref<392x256xf32, #tpu.memory_space<vmem>>, vector<8x256xf32>
    tpu.vector_store %arg13[%c128_118, %c0_119], %145 {strides = array<i32>} : memref<392x256xf32, #tpu.memory_space<vmem>>, vector<8x256xf32>,
    %c206_i32_120 = arith.constant 206 : i32
    %147 = tpu.dynamic_rotate %112 by %c206_i32_120 dim 1 : vector<8x256xf32>, i32 -> vector<8x256xf32>
    %c136_121 = arith.constant 136 : index
    %c0_122 = arith.constant 0 : index
    %148 = vector.load %arg13[%c136_121, %c0_122] : memref<392x256xf32, #tpu.memory_space<vmem>>, vector<8x256xf32>
    tpu.vector_store %arg13[%c136_121, %c0_122], %147 {strides = array<i32>} : memref<392x256xf32, #tpu.memory_space<vmem>>, vector<8x256xf32>,
    %c205_i32_123 = arith.constant 205 : i32
    %149 = tpu.dynamic_rotate %112 by %c205_i32_123 dim 1 : vector<8x256xf32>, i32 -> vector<8x256xf32>
    %c144_124 = arith.constant 144 : index
    %c0_125 = arith.constant 0 : index
    %150 = vector.load %arg13[%c144_124, %c0_125] : memref<392x256xf32, #tpu.memory_space<vmem>>, vector<8x256xf32>
    tpu.vector_store %arg13[%c144_124, %c0_125], %149 {strides = array<i32>} : memref<392x256xf32, #tpu.memory_space<vmem>>, vector<8x256xf32>,
    %c204_i32_126 = arith.constant 204 : i32
    %151 = tpu.dynamic_rotate %112 by %c204_i32_126 dim 1 : vector<8x256xf32>, i32 -> vector<8x256xf32>
    %c152_127 = arith.constant 152 : index
    %c0_128 = arith.constant 0 : index
    %152 = vector.load %arg13[%c152_127, %c0_128] : memref<392x256xf32, #tpu.memory_space<vmem>>, vector<8x256xf32>
    tpu.vector_store %arg13[%c152_127, %c0_128], %151 {strides = array<i32>} : memref<392x256xf32, #tpu.memory_space<vmem>>, vector<8x256xf32>,
    %c192_i32_129 = arith.constant 192 : i32
    %153 = tpu.dynamic_rotate %112 by %c192_i32_129 dim 1 : vector<8x256xf32>, i32 -> vector<8x256xf32>
    %c160_130 = arith.constant 160 : index
    %c0_131 = arith.constant 0 : index
    %154 = vector.load %arg13[%c160_130, %c0_131] : memref<392x256xf32, #tpu.memory_space<vmem>>, vector<8x256xf32>
    tpu.vector_store %arg13[%c160_130, %c0_131], %153 {strides = array<i32>} : memref<392x256xf32, #tpu.memory_space<vmem>>, vector<8x256xf32>,
    %c191_i32_132 = arith.constant 191 : i32
    %155 = tpu.dynamic_rotate %112 by %c191_i32_132 dim 1 : vector<8x256xf32>, i32 -> vector<8x256xf32>
    %c168_133 = arith.constant 168 : index
    %c0_134 = arith.constant 0 : index
    %156 = vector.load %arg13[%c168_133, %c0_134] : memref<392x256xf32, #tpu.memory_space<vmem>>, vector<8x256xf32>
    tpu.vector_store %arg13[%c168_133, %c0_134], %155 {strides = array<i32>} : memref<392x256xf32, #tpu.memory_space<vmem>>, vector<8x256xf32>,
    %c190_i32_135 = arith.constant 190 : i32
    %157 = tpu.dynamic_rotate %112 by %c190_i32_135 dim 1 : vector<8x256xf32>, i32 -> vector<8x256xf32>
    %c176_136 = arith.constant 176 : index
    %c0_137 = arith.constant 0 : index
    %158 = vector.load %arg13[%c176_136, %c0_137] : memref<392x256xf32, #tpu.memory_space<vmem>>, vector<8x256xf32>
    tpu.vector_store %arg13[%c176_136, %c0_137], %157 {strides = array<i32>} : memref<392x256xf32, #tpu.memory_space<vmem>>, vector<8x256xf32>,
    %c189_i32_138 = arith.constant 189 : i32
    %159 = tpu.dynamic_rotate %112 by %c189_i32_138 dim 1 : vector<8x256xf32>, i32 -> vector<8x256xf32>
    %c184_139 = arith.constant 184 : index
    %c0_140 = arith.constant 0 : index
    %160 = vector.load %arg13[%c184_139, %c0_140] : memref<392x256xf32, #tpu.memory_space<vmem>>, vector<8x256xf32>
    tpu.vector_store %arg13[%c184_139, %c0_140], %159 {strides = array<i32>} : memref<392x256xf32, #tpu.memory_space<vmem>>, vector<8x256xf32>,
    %c188_i32_141 = arith.constant 188 : i32
    %161 = tpu.dynamic_rotate %112 by %c188_i32_141 dim 1 : vector<8x256xf32>, i32 -> vector<8x256xf32>
    %c192_142 = arith.constant 192 : index
    %c0_143 = arith.constant 0 : index
    %162 = vector.load %arg13[%c192_142, %c0_143] : memref<392x256xf32, #tpu.memory_space<vmem>>, vector<8x256xf32>
    tpu.vector_store %arg13[%c192_142, %c0_143], %161 {strides = array<i32>} : memref<392x256xf32, #tpu.memory_space<vmem>>, vector<8x256xf32>,
    %c0_144 = arith.constant 0 : index
    %c0_145 = arith.constant 0 : index
    %163 = vector.load %arg13[%c0_144, %c0_145] : memref<392x256xf32, #tpu.memory_space<vmem>>, vector<200x256xf32>
    %c0_146 = arith.constant 0 : index
    %c0_147 = arith.constant 0 : index
    %164 = vector.load %arg5[%c0_146, %c0_147] : memref<8x200xf32, #tpu.memory_space<vmem>>, vector<8x200xf32>
    %cst_148 = arith.constant dense<0.000000e+00> : vector<8x256xf32>
    %165 = tpu.matmul %164, %163, %cst_148 {dimension_numbers = #tpu.dot_dimension_numbers<[1], [0], [0], [1], [0, 0, 1, 1], [], []>} : vector<8x200xf32>, vector<200x256xf32>, vector<8x256xf32> -> vector<8x256xf32>
    %c0_149 = arith.constant 0 : index
    %c0_150 = arith.constant 0 : index
    %166 = vector.load %arg6[%c0_149, %c0_150] : memref<8x256xf32, #tpu.memory_space<vmem>>, vector<8x256xf32>
    %167 = arith.mulf %165, %166 : vector<8x256xf32>
    %c0_151 = arith.constant 0 : index
    %c0_152 = arith.constant 0 : index
    %168 = vector.load %arg7[%c0_151, %c0_152] : memref<8x256xf32, #tpu.memory_space<vmem>>, vector<8x256xf32>
    %169 = arith.addf %167, %168 : vector<8x256xf32>
    %cst_153 = arith.constant 0.000000e+00 : f32
    %170 = vector.broadcast %cst_153 : f32 to vector<8x256xf32>
    %171 = arith.maximumf %169, %170 : vector<8x256xf32>
    %cst_154 = arith.constant 0.000000e+00 : f32
    %172 = vector.broadcast %cst_154 : f32 to vector<1x128xf32>
    %c0_155 = arith.constant 0 : index
    %c0_156 = arith.constant 0 : index
    %c0_157 = arith.constant 0 : index
    %173 = vector.load %arg8[%c0_155, %c0_156, %c0_157] : memref<8x256x128xf32, #tpu.memory_space<vmem>>, vector<1x256x128xf32>
    %174 = vector.shape_cast %173 : vector<1x256x128xf32> to vector<256x128xf32>
    %cst_158 = arith.constant dense<0.000000e+00> : vector<8x128xf32>
    %175 = tpu.matmul %171, %174, %cst_158 {dimension_numbers = #tpu.dot_dimension_numbers<[1], [0], [0], [1], [0, 0, 1, 1], [], []>} : vector<8x256xf32>, vector<256x128xf32>, vector<8x128xf32> -> vector<8x128xf32>
    %176 = vector.extract_strided_slice %175 {offsets = [0, 0], sizes = [1, 128], strides = [1, 1]} : vector<8x128xf32> to vector<1x128xf32>
    %177 = arith.addf %172, %176 : vector<1x128xf32>
    %c1 = arith.constant 1 : index
    %c0_159 = arith.constant 0 : index
    %c0_160 = arith.constant 0 : index
    %178 = vector.load %arg8[%c1, %c0_159, %c0_160] : memref<8x256x128xf32, #tpu.memory_space<vmem>>, vector<1x256x128xf32>
    %179 = vector.shape_cast %178 : vector<1x256x128xf32> to vector<256x128xf32>
    %cst_161 = arith.constant dense<0.000000e+00> : vector<8x128xf32>
    %180 = tpu.matmul %171, %179, %cst_161 {dimension_numbers = #tpu.dot_dimension_numbers<[1], [0], [0], [1], [0, 0, 1, 1], [], []>} : vector<8x256xf32>, vector<256x128xf32>, vector<8x128xf32> -> vector<8x128xf32>
    %181 = vector.extract_strided_slice %180 {offsets = [1, 0], sizes = [1, 128], strides = [1, 1]} : vector<8x128xf32> to vector<1x128xf32>
    %182 = arith.addf %177, %181 : vector<1x128xf32>
    %c2 = arith.constant 2 : index
    %c0_162 = arith.constant 0 : index
    %c0_163 = arith.constant 0 : index
    %183 = vector.load %arg8[%c2, %c0_162, %c0_163] : memref<8x256x128xf32, #tpu.memory_space<vmem>>, vector<1x256x128xf32>
    %184 = vector.shape_cast %183 : vector<1x256x128xf32> to vector<256x128xf32>
    %cst_164 = arith.constant dense<0.000000e+00> : vector<8x128xf32>
    %185 = tpu.matmul %171, %184, %cst_164 {dimension_numbers = #tpu.dot_dimension_numbers<[1], [0], [0], [1], [0, 0, 1, 1], [], []>} : vector<8x256xf32>, vector<256x128xf32>, vector<8x128xf32> -> vector<8x128xf32>
    %186 = vector.extract_strided_slice %185 {offsets = [2, 0], sizes = [1, 128], strides = [1, 1]} : vector<8x128xf32> to vector<1x128xf32>
    %187 = arith.addf %182, %186 : vector<1x128xf32>
    %c3 = arith.constant 3 : index
    %c0_165 = arith.constant 0 : index
    %c0_166 = arith.constant 0 : index
    %188 = vector.load %arg8[%c3, %c0_165, %c0_166] : memref<8x256x128xf32, #tpu.memory_space<vmem>>, vector<1x256x128xf32>
    %189 = vector.shape_cast %188 : vector<1x256x128xf32> to vector<256x128xf32>
    %cst_167 = arith.constant dense<0.000000e+00> : vector<8x128xf32>
    %190 = tpu.matmul %171, %189, %cst_167 {dimension_numbers = #tpu.dot_dimension_numbers<[1], [0], [0], [1], [0, 0, 1, 1], [], []>} : vector<8x256xf32>, vector<256x128xf32>, vector<8x128xf32> -> vector<8x128xf32>
    %191 = vector.extract_strided_slice %190 {offsets = [3, 0], sizes = [1, 128], strides = [1, 1]} : vector<8x128xf32> to vector<1x128xf32>
    %192 = arith.addf %187, %191 : vector<1x128xf32>
    %c4 = arith.constant 4 : index
    %c0_168 = arith.constant 0 : index
    %c0_169 = arith.constant 0 : index
    %193 = vector.load %arg8[%c4, %c0_168, %c0_169] : memref<8x256x128xf32, #tpu.memory_space<vmem>>, vector<1x256x128xf32>
    %194 = vector.shape_cast %193 : vector<1x256x128xf32> to vector<256x128xf32>
    %cst_170 = arith.constant dense<0.000000e+00> : vector<8x128xf32>
    %195 = tpu.matmul %171, %194, %cst_170 {dimension_numbers = #tpu.dot_dimension_numbers<[1], [0], [0], [1], [0, 0, 1, 1], [], []>} : vector<8x256xf32>, vector<256x128xf32>, vector<8x128xf32> -> vector<8x128xf32>
    %196 = vector.extract_strided_slice %195 {offsets = [4, 0], sizes = [1, 128], strides = [1, 1]} : vector<8x128xf32> to vector<1x128xf32>
    %197 = arith.addf %192, %196 : vector<1x128xf32>
    %c5 = arith.constant 5 : index
    %c0_171 = arith.constant 0 : index
    %c0_172 = arith.constant 0 : index
    %198 = vector.load %arg8[%c5, %c0_171, %c0_172] : memref<8x256x128xf32, #tpu.memory_space<vmem>>, vector<1x256x128xf32>
    %199 = vector.shape_cast %198 : vector<1x256x128xf32> to vector<256x128xf32>
    %cst_173 = arith.constant dense<0.000000e+00> : vector<8x128xf32>
    %200 = tpu.matmul %171, %199, %cst_173 {dimension_numbers = #tpu.dot_dimension_numbers<[1], [0], [0], [1], [0, 0, 1, 1], [], []>} : vector<8x256xf32>, vector<256x128xf32>, vector<8x128xf32> -> vector<8x128xf32>
    %201 = vector.extract_strided_slice %200 {offsets = [5, 0], sizes = [1, 128], strides = [1, 1]} : vector<8x128xf32> to vector<1x128xf32>
    %202 = arith.addf %197, %201 : vector<1x128xf32>
    %c6 = arith.constant 6 : index
    %c0_174 = arith.constant 0 : index
    %c0_175 = arith.constant 0 : index
    %203 = vector.load %arg8[%c6, %c0_174, %c0_175] : memref<8x256x128xf32, #tpu.memory_space<vmem>>, vector<1x256x128xf32>
    %204 = vector.shape_cast %203 : vector<1x256x128xf32> to vector<256x128xf32>
    %cst_176 = arith.constant dense<0.000000e+00> : vector<8x128xf32>
    %205 = tpu.matmul %171, %204, %cst_176 {dimension_numbers = #tpu.dot_dimension_numbers<[1], [0], [0], [1], [0, 0, 1, 1], [], []>} : vector<8x256xf32>, vector<256x128xf32>, vector<8x128xf32> -> vector<8x128xf32>
    %206 = vector.extract_strided_slice %205 {offsets = [6, 0], sizes = [1, 128], strides = [1, 1]} : vector<8x128xf32> to vector<1x128xf32>
    %207 = arith.addf %202, %206 : vector<1x128xf32>
    %c7 = arith.constant 7 : index
    %c0_177 = arith.constant 0 : index
    %c0_178 = arith.constant 0 : index
    %208 = vector.load %arg8[%c7, %c0_177, %c0_178] : memref<8x256x128xf32, #tpu.memory_space<vmem>>, vector<1x256x128xf32>
    %209 = vector.shape_cast %208 : vector<1x256x128xf32> to vector<256x128xf32>
    %cst_179 = arith.constant dense<0.000000e+00> : vector<8x128xf32>
    %210 = tpu.matmul %171, %209, %cst_179 {dimension_numbers = #tpu.dot_dimension_numbers<[1], [0], [0], [1], [0, 0, 1, 1], [], []>} : vector<8x256xf32>, vector<256x128xf32>, vector<8x128xf32> -> vector<8x128xf32>
    %211 = vector.extract_strided_slice %210 {offsets = [7, 0], sizes = [1, 128], strides = [1, 1]} : vector<8x128xf32> to vector<1x128xf32>
    %212 = arith.addf %207, %211 : vector<1x128xf32>
    %c0_180 = arith.constant 0 : index
    %c0_181 = arith.constant 0 : index
    %213 = vector.load %arg9[%c0_180, %c0_181] : memref<1x128xf32, #tpu.memory_space<vmem>>, vector<1x128xf32>
    %214 = arith.mulf %212, %213 : vector<1x128xf32>
    %c0_182 = arith.constant 0 : index
    %c0_183 = arith.constant 0 : index
    %215 = vector.load %arg10[%c0_182, %c0_183] : memref<1x128xf32, #tpu.memory_space<vmem>>, vector<1x128xf32>
    %216 = arith.addf %214, %215 : vector<1x128xf32>
    %cst_184 = arith.constant 2.000000e+01 : f32
    %217 = vector.broadcast %cst_184 : f32 to vector<1x128xf32>
    %218 = arith.cmpf ogt, %216, %217 : vector<1x128xf32>
    %cst_185 = arith.constant 2.000000e+01 : f32
    %219 = vector.broadcast %cst_185 : f32 to vector<1x128xf32>
    %220 = arith.minimumf %216, %219 : vector<1x128xf32>
    %221 = math.exp %220 : vector<1x128xf32>
    %222 = math.log1p %221 : vector<1x128xf32>
    %223 = arith.select %218, %216, %222 : vector<1x128xi1>, vector<1x128xf32>
    %c0_186 = arith.constant 0 : index
    %c0_187 = arith.constant 0 : index
    %c0_188 = arith.constant 0 : index
    %224 = vector.load %arg11[%c0_186, %c0_187, %c0_188] : memref<1x2x128xf32, #tpu.memory_space<vmem>>, vector<1x1x128xf32>
    %225 = vector.shape_cast %224 : vector<1x1x128xf32> to vector<1x128xf32>
    %226 = vector.shape_cast %223 : vector<1x128xf32> to vector<1x1x128xf32>
    tpu.vector_store %arg11[%c0_186, %c0_187, %c0_188], %226 {strides = array<i32>} : memref<1x2x128xf32, #tpu.memory_space<vmem>>, vector<1x1x128xf32>,
    %cst_189 = arith.constant 0.000000e+00 : f32
    %227 = vector.broadcast %cst_189 : f32 to vector<8x256xf32>
    %c0_190 = arith.constant 0 : index
    %c0_191 = arith.constant 0 : index
    %228 = vector.load %arg12[%c0_190, %c0_191] : memref<8x256xf32, #tpu.memory_space<vmem>>, vector<8x256xf32>
    tpu.vector_store %arg12[%c0_190, %c0_191], %227 {strides = array<i32>} : memref<8x256xf32, #tpu.memory_space<vmem>>, vector<8x256xf32>,
    %c0_192 = arith.constant 0 : index
    %c1_193 = arith.constant 1 : index
    %c0_194 = arith.constant 0 : index
    %c0_195 = arith.constant 0 : index
    %229 = vector.load %arg1[%c0_192, %c1_193, %c0_194, %c0_195] : memref<1x2x4x256xf32, #tpu.memory_space<vmem>>, vector<1x1x4x256xf32>
    %230 = vector.shape_cast %229 : vector<1x1x4x256xf32> to vector<4x256xf32>
    %c0_196 = arith.constant 0 : index
    %c0_197 = arith.constant 0 : index
    %231 = vector.load %arg12[%c0_196, %c0_197] : memref<8x256xf32, #tpu.memory_space<vmem>>, vector<4x256xf32>
    tpu.vector_store %arg12[%c0_196, %c0_197], %230 {strides = array<i32>} : memref<8x256xf32, #tpu.memory_space<vmem>>, vector<4x256xf32>,
    %c0_198 = arith.constant 0 : index
    %c0_199 = arith.constant 0 : index
    %232 = vector.load %arg12[%c0_198, %c0_199] : memref<8x256xf32, #tpu.memory_space<vmem>>, vector<8x256xf32>
    %c0_i32_200 = arith.constant 0 : i32
    %233 = tpu.dynamic_rotate %232 by %c0_i32_200 dim 1 : vector<8x256xf32>, i32 -> vector<8x256xf32>
    %c0_201 = arith.constant 0 : index
    %c0_202 = arith.constant 0 : index
    %234 = vector.load %arg13[%c0_201, %c0_202] : memref<392x256xf32, #tpu.memory_space<vmem>>, vector<8x256xf32>
    tpu.vector_store %arg13[%c0_201, %c0_202], %233 {strides = array<i32>} : memref<392x256xf32, #tpu.memory_space<vmem>>, vector<8x256xf32>,
    %c255_i32_203 = arith.constant 255 : i32
    %235 = tpu.dynamic_rotate %232 by %c255_i32_203 dim 1 : vector<8x256xf32>, i32 -> vector<8x256xf32>
    %c8_204 = arith.constant 8 : index
    %c0_205 = arith.constant 0 : index
    %236 = vector.load %arg13[%c8_204, %c0_205] : memref<392x256xf32, #tpu.memory_space<vmem>>, vector<8x256xf32>
    tpu.vector_store %arg13[%c8_204, %c0_205], %235 {strides = array<i32>} : memref<392x256xf32, #tpu.memory_space<vmem>>, vector<8x256xf32>,
    %c254_i32_206 = arith.constant 254 : i32
    %237 = tpu.dynamic_rotate %232 by %c254_i32_206 dim 1 : vector<8x256xf32>, i32 -> vector<8x256xf32>
    %c16_207 = arith.constant 16 : index
    %c0_208 = arith.constant 0 : index
    %238 = vector.load %arg13[%c16_207, %c0_208] : memref<392x256xf32, #tpu.memory_space<vmem>>, vector<8x256xf32>
    tpu.vector_store %arg13[%c16_207, %c0_208], %237 {strides = array<i32>} : memref<392x256xf32, #tpu.memory_space<vmem>>, vector<8x256xf32>,
    %c253_i32_209 = arith.constant 253 : i32
    %239 = tpu.dynamic_rotate %232 by %c253_i32_209 dim 1 : vector<8x256xf32>, i32 -> vector<8x256xf32>
    %c24_210 = arith.constant 24 : index
    %c0_211 = arith.constant 0 : index
    %240 = vector.load %arg13[%c24_210, %c0_211] : memref<392x256xf32, #tpu.memory_space<vmem>>, vector<8x256xf32>
    tpu.vector_store %arg13[%c24_210, %c0_211], %239 {strides = array<i32>} : memref<392x256xf32, #tpu.memory_space<vmem>>, vector<8x256xf32>,
    %c252_i32_212 = arith.constant 252 : i32
    %241 = tpu.dynamic_rotate %232 by %c252_i32_212 dim 1 : vector<8x256xf32>, i32 -> vector<8x256xf32>
    %c32_213 = arith.constant 32 : index
    %c0_214 = arith.constant 0 : index
    %242 = vector.load %arg13[%c32_213, %c0_214] : memref<392x256xf32, #tpu.memory_space<vmem>>, vector<8x256xf32>
    tpu.vector_store %arg13[%c32_213, %c0_214], %241 {strides = array<i32>} : memref<392x256xf32, #tpu.memory_space<vmem>>, vector<8x256xf32>,
    %c251_i32_215 = arith.constant 251 : i32
    %243 = tpu.dynamic_rotate %232 by %c251_i32_215 dim 1 : vector<8x256xf32>, i32 -> vector<8x256xf32>
    %c40_216 = arith.constant 40 : index
    %c0_217 = arith.constant 0 : index
    %244 = vector.load %arg13[%c40_216, %c0_217] : memref<392x256xf32, #tpu.memory_space<vmem>>, vector<8x256xf32>
    tpu.vector_store %arg13[%c40_216, %c0_217], %243 {strides = array<i32>} : memref<392x256xf32, #tpu.memory_space<vmem>>, vector<8x256xf32>,
    %c250_i32_218 = arith.constant 250 : i32
    %245 = tpu.dynamic_rotate %232 by %c250_i32_218 dim 1 : vector<8x256xf32>, i32 -> vector<8x256xf32>
    %c48_219 = arith.constant 48 : index
    %c0_220 = arith.constant 0 : index
    %246 = vector.load %arg13[%c48_219, %c0_220] : memref<392x256xf32, #tpu.memory_space<vmem>>, vector<8x256xf32>
    tpu.vector_store %arg13[%c48_219, %c0_220], %245 {strides = array<i32>} : memref<392x256xf32, #tpu.memory_space<vmem>>, vector<8x256xf32>,
    %c240_i32_221 = arith.constant 240 : i32
    %247 = tpu.dynamic_rotate %232 by %c240_i32_221 dim 1 : vector<8x256xf32>, i32 -> vector<8x256xf32>
    %c56_222 = arith.constant 56 : index
    %c0_223 = arith.constant 0 : index
    %248 = vector.load %arg13[%c56_222, %c0_223] : memref<392x256xf32, #tpu.memory_space<vmem>>, vector<8x256xf32>
    tpu.vector_store %arg13[%c56_222, %c0_223], %247 {strides = array<i32>} : memref<392x256xf32, #tpu.memory_space<vmem>>, vector<8x256xf32>,
    %c239_i32_224 = arith.constant 239 : i32
    %249 = tpu.dynamic_rotate %232 by %c239_i32_224 dim 1 : vector<8x256xf32>, i32 -> vector<8x256xf32>
    %c64_225 = arith.constant 64 : index
    %c0_226 = arith.constant 0 : index
    %250 = vector.load %arg13[%c64_225, %c0_226] : memref<392x256xf32, #tpu.memory_space<vmem>>, vector<8x256xf32>
    tpu.vector_store %arg13[%c64_225, %c0_226], %249 {strides = array<i32>} : memref<392x256xf32, #tpu.memory_space<vmem>>, vector<8x256xf32>,
    %c238_i32_227 = arith.constant 238 : i32
    %251 = tpu.dynamic_rotate %232 by %c238_i32_227 dim 1 : vector<8x256xf32>, i32 -> vector<8x256xf32>
    %c72_228 = arith.constant 72 : index
    %c0_229 = arith.constant 0 : index
    %252 = vector.load %arg13[%c72_228, %c0_229] : memref<392x256xf32, #tpu.memory_space<vmem>>, vector<8x256xf32>
    tpu.vector_store %arg13[%c72_228, %c0_229], %251 {strides = array<i32>} : memref<392x256xf32, #tpu.memory_space<vmem>>, vector<8x256xf32>,
    %c237_i32_230 = arith.constant 237 : i32
    %253 = tpu.dynamic_rotate %232 by %c237_i32_230 dim 1 : vector<8x256xf32>, i32 -> vector<8x256xf32>
    %c80_231 = arith.constant 80 : index
    %c0_232 = arith.constant 0 : index
    %254 = vector.load %arg13[%c80_231, %c0_232] : memref<392x256xf32, #tpu.memory_space<vmem>>, vector<8x256xf32>
    tpu.vector_store %arg13[%c80_231, %c0_232], %253 {strides = array<i32>} : memref<392x256xf32, #tpu.memory_space<vmem>>, vector<8x256xf32>,
    %c236_i32_233 = arith.constant 236 : i32
    %255 = tpu.dynamic_rotate %232 by %c236_i32_233 dim 1 : vector<8x256xf32>, i32 -> vector<8x256xf32>
    %c88_234 = arith.constant 88 : index
    %c0_235 = arith.constant 0 : index
    %256 = vector.load %arg13[%c88_234, %c0_235] : memref<392x256xf32, #tpu.memory_space<vmem>>, vector<8x256xf32>
    tpu.vector_store %arg13[%c88_234, %c0_235], %255 {strides = array<i32>} : memref<392x256xf32, #tpu.memory_space<vmem>>, vector<8x256xf32>,
    %c235_i32_236 = arith.constant 235 : i32
    %257 = tpu.dynamic_rotate %232 by %c235_i32_236 dim 1 : vector<8x256xf32>, i32 -> vector<8x256xf32>
    %c96_237 = arith.constant 96 : index
    %c0_238 = arith.constant 0 : index
    %258 = vector.load %arg13[%c96_237, %c0_238] : memref<392x256xf32, #tpu.memory_space<vmem>>, vector<8x256xf32>
    tpu.vector_store %arg13[%c96_237, %c0_238], %257 {strides = array<i32>} : memref<392x256xf32, #tpu.memory_space<vmem>>, vector<8x256xf32>,
    %c234_i32_239 = arith.constant 234 : i32
    %259 = tpu.dynamic_rotate %232 by %c234_i32_239 dim 1 : vector<8x256xf32>, i32 -> vector<8x256xf32>
    %c104_240 = arith.constant 104 : index
    %c0_241 = arith.constant 0 : index
    %260 = vector.load %arg13[%c104_240, %c0_241] : memref<392x256xf32, #tpu.memory_space<vmem>>, vector<8x256xf32>
    tpu.vector_store %arg13[%c104_240, %c0_241], %259 {strides = array<i32>} : memref<392x256xf32, #tpu.memory_space<vmem>>, vector<8x256xf32>,
    %c224_i32_242 = arith.constant 224 : i32
    %261 = tpu.dynamic_rotate %232 by %c224_i32_242 dim 1 : vector<8x256xf32>, i32 -> vector<8x256xf32>
    %c112_243 = arith.constant 112 : index
    %c0_244 = arith.constant 0 : index
    %262 = vector.load %arg13[%c112_243, %c0_244] : memref<392x256xf32, #tpu.memory_space<vmem>>, vector<8x256xf32>
    tpu.vector_store %arg13[%c112_243, %c0_244], %261 {strides = array<i32>} : memref<392x256xf32, #tpu.memory_space<vmem>>, vector<8x256xf32>,
    %c223_i32_245 = arith.constant 223 : i32
    %263 = tpu.dynamic_rotate %232 by %c223_i32_245 dim 1 : vector<8x256xf32>, i32 -> vector<8x256xf32>
    %c120_246 = arith.constant 120 : index
    %c0_247 = arith.constant 0 : index
    %264 = vector.load %arg13[%c120_246, %c0_247] : memref<392x256xf32, #tpu.memory_space<vmem>>, vector<8x256xf32>
    tpu.vector_store %arg13[%c120_246, %c0_247], %263 {strides = array<i32>} : memref<392x256xf32, #tpu.memory_space<vmem>>, vector<8x256xf32>,
    %c222_i32_248 = arith.constant 222 : i32
    %265 = tpu.dynamic_rotate %232 by %c222_i32_248 dim 1 : vector<8x256xf32>, i32 -> vector<8x256xf32>
    %c128_249 = arith.constant 128 : index
    %c0_250 = arith.constant 0 : index
    %266 = vector.load %arg13[%c128_249, %c0_250] : memref<392x256xf32, #tpu.memory_space<vmem>>, vector<8x256xf32>
    tpu.vector_store %arg13[%c128_249, %c0_250], %265 {strides = array<i32>} : memref<392x256xf32, #tpu.memory_space<vmem>>, vector<8x256xf32>,
    %c221_i32_251 = arith.constant 221 : i32
    %267 = tpu.dynamic_rotate %232 by %c221_i32_251 dim 1 : vector<8x256xf32>, i32 -> vector<8x256xf32>
    %c136_252 = arith.constant 136 : index
    %c0_253 = arith.constant 0 : index
    %268 = vector.load %arg13[%c136_252, %c0_253] : memref<392x256xf32, #tpu.memory_space<vmem>>, vector<8x256xf32>
    tpu.vector_store %arg13[%c136_252, %c0_253], %267 {strides = array<i32>} : memref<392x256xf32, #tpu.memory_space<vmem>>, vector<8x256xf32>,
    %c220_i32_254 = arith.constant 220 : i32
    %269 = tpu.dynamic_rotate %232 by %c220_i32_254 dim 1 : vector<8x256xf32>, i32 -> vector<8x256xf32>
    %c144_255 = arith.constant 144 : index
    %c0_256 = arith.constant 0 : index
    %270 = vector.load %arg13[%c144_255, %c0_256] : memref<392x256xf32, #tpu.memory_space<vmem>>, vector<8x256xf32>
    tpu.vector_store %arg13[%c144_255, %c0_256], %269 {strides = array<i32>} : memref<392x256xf32, #tpu.memory_space<vmem>>, vector<8x256xf32>,
    %c219_i32_257 = arith.constant 219 : i32
    %271 = tpu.dynamic_rotate %232 by %c219_i32_257 dim 1 : vector<8x256xf32>, i32 -> vector<8x256xf32>
    %c152_258 = arith.constant 152 : index
    %c0_259 = arith.constant 0 : index
    %272 = vector.load %arg13[%c152_258, %c0_259] : memref<392x256xf32, #tpu.memory_space<vmem>>, vector<8x256xf32>
    tpu.vector_store %arg13[%c152_258, %c0_259], %271 {strides = array<i32>} : memref<392x256xf32, #tpu.memory_space<vmem>>, vector<8x256xf32>,
    %c218_i32_260 = arith.constant 218 : i32
    %273 = tpu.dynamic_rotate %232 by %c218_i32_260 dim 1 : vector<8x256xf32>, i32 -> vector<8x256xf32>
    %c160_261 = arith.constant 160 : index
    %c0_262 = arith.constant 0 : index
    %274 = vector.load %arg13[%c160_261, %c0_262] : memref<392x256xf32, #tpu.memory_space<vmem>>, vector<8x256xf32>
    tpu.vector_store %arg13[%c160_261, %c0_262], %273 {strides = array<i32>} : memref<392x256xf32, #tpu.memory_space<vmem>>, vector<8x256xf32>,
    %c208_i32_263 = arith.constant 208 : i32
    %275 = tpu.dynamic_rotate %232 by %c208_i32_263 dim 1 : vector<8x256xf32>, i32 -> vector<8x256xf32>
    %c168_264 = arith.constant 168 : index
    %c0_265 = arith.constant 0 : index
    %276 = vector.load %arg13[%c168_264, %c0_265] : memref<392x256xf32, #tpu.memory_space<vmem>>, vector<8x256xf32>
    tpu.vector_store %arg13[%c168_264, %c0_265], %275 {strides = array<i32>} : memref<392x256xf32, #tpu.memory_space<vmem>>, vector<8x256xf32>,
    %c207_i32_266 = arith.constant 207 : i32
    %277 = tpu.dynamic_rotate %232 by %c207_i32_266 dim 1 : vector<8x256xf32>, i32 -> vector<8x256xf32>
    %c176_267 = arith.constant 176 : index
    %c0_268 = arith.constant 0 : index
    %278 = vector.load %arg13[%c176_267, %c0_268] : memref<392x256xf32, #tpu.memory_space<vmem>>, vector<8x256xf32>
    tpu.vector_store %arg13[%c176_267, %c0_268], %277 {strides = array<i32>} : memref<392x256xf32, #tpu.memory_space<vmem>>, vector<8x256xf32>,
    %c206_i32_269 = arith.constant 206 : i32
    %279 = tpu.dynamic_rotate %232 by %c206_i32_269 dim 1 : vector<8x256xf32>, i32 -> vector<8x256xf32>
    %c184_270 = arith.constant 184 : index
    %c0_271 = arith.constant 0 : index
    %280 = vector.load %arg13[%c184_270, %c0_271] : memref<392x256xf32, #tpu.memory_space<vmem>>, vector<8x256xf32>
    tpu.vector_store %arg13[%c184_270, %c0_271], %279 {strides = array<i32>} : memref<392x256xf32, #tpu.memory_space<vmem>>, vector<8x256xf32>,
    %c205_i32_272 = arith.constant 205 : i32
    %281 = tpu.dynamic_rotate %232 by %c205_i32_272 dim 1 : vector<8x256xf32>, i32 -> vector<8x256xf32>
    %c192_273 = arith.constant 192 : index
    %c0_274 = arith.constant 0 : index
    %282 = vector.load %arg13[%c192_273, %c0_274] : memref<392x256xf32, #tpu.memory_space<vmem>>, vector<8x256xf32>
    tpu.vector_store %arg13[%c192_273, %c0_274], %281 {strides = array<i32>} : memref<392x256xf32, #tpu.memory_space<vmem>>, vector<8x256xf32>,
    %c204_i32_275 = arith.constant 204 : i32
    %283 = tpu.dynamic_rotate %232 by %c204_i32_275 dim 1 : vector<8x256xf32>, i32 -> vector<8x256xf32>
    %c200_276 = arith.constant 200 : index
    %c0_277 = arith.constant 0 : index
    %284 = vector.load %arg13[%c200_276, %c0_277] : memref<392x256xf32, #tpu.memory_space<vmem>>, vector<8x256xf32>
    tpu.vector_store %arg13[%c200_276, %c0_277], %283 {strides = array<i32>} : memref<392x256xf32, #tpu.memory_space<vmem>>, vector<8x256xf32>,
    %c203_i32_278 = arith.constant 203 : i32
    %285 = tpu.dynamic_rotate %232 by %c203_i32_278 dim 1 : vector<8x256xf32>, i32 -> vector<8x256xf32>
    %c208_279 = arith.constant 208 : index
    %c0_280 = arith.constant 0 : index
    %286 = vector.load %arg13[%c208_279, %c0_280] : memref<392x256xf32, #tpu.memory_space<vmem>>, vector<8x256xf32>
    tpu.vector_store %arg13[%c208_279, %c0_280], %285 {strides = array<i32>} : memref<392x256xf32, #tpu.memory_space<vmem>>, vector<8x256xf32>,
    %c202_i32_281 = arith.constant 202 : i32
    %287 = tpu.dynamic_rotate %232 by %c202_i32_281 dim 1 : vector<8x256xf32>, i32 -> vector<8x256xf32>
    %c216_282 = arith.constant 216 : index
    %c0_283 = arith.constant 0 : index
    %288 = vector.load %arg13[%c216_282, %c0_283] : memref<392x256xf32, #tpu.memory_space<vmem>>, vector<8x256xf32>
    tpu.vector_store %arg13[%c216_282, %c0_283], %287 {strides = array<i32>} : memref<392x256xf32, #tpu.memory_space<vmem>>, vector<8x256xf32>,
    %c192_i32_284 = arith.constant 192 : i32
    %289 = tpu.dynamic_rotate %232 by %c192_i32_284 dim 1 : vector<8x256xf32>, i32 -> vector<8x256xf32>
    %c224_285 = arith.constant 224 : index
    %c0_286 = arith.constant 0 : index
    %290 = vector.load %arg13[%c224_285, %c0_286] : memref<392x256xf32, #tpu.memory_space<vmem>>, vector<8x256xf32>
    tpu.vector_store %arg13[%c224_285, %c0_286], %289 {strides = array<i32>} : memref<392x256xf32, #tpu.memory_space<vmem>>, vector<8x256xf32>,
    %c191_i32_287 = arith.constant 191 : i32
    %291 = tpu.dynamic_rotate %232 by %c191_i32_287 dim 1 : vector<8x256xf32>, i32 -> vector<8x256xf32>
    %c232_288 = arith.constant 232 : index
    %c0_289 = arith.constant 0 : index
    %292 = vector.load %arg13[%c232_288, %c0_289] : memref<392x256xf32, #tpu.memory_space<vmem>>, vector<8x256xf32>
    tpu.vector_store %arg13[%c232_288, %c0_289], %291 {strides = array<i32>} : memref<392x256xf32, #tpu.memory_space<vmem>>, vector<8x256xf32>,
    %c190_i32_290 = arith.constant 190 : i32
    %293 = tpu.dynamic_rotate %232 by %c190_i32_290 dim 1 : vector<8x256xf32>, i32 -> vector<8x256xf32>
    %c240_291 = arith.constant 240 : index
    %c0_292 = arith.constant 0 : index
    %294 = vector.load %arg13[%c240_291, %c0_292] : memref<392x256xf32, #tpu.memory_space<vmem>>, vector<8x256xf32>
    tpu.vector_store %arg13[%c240_291, %c0_292], %293 {strides = array<i32>} : memref<392x256xf32, #tpu.memory_space<vmem>>, vector<8x256xf32>,
    %c189_i32_293 = arith.constant 189 : i32
    %295 = tpu.dynamic_rotate %232 by %c189_i32_293 dim 1 : vector<8x256xf32>, i32 -> vector<8x256xf32>
    %c248_294 = arith.constant 248 : index
    %c0_295 = arith.constant 0 : index
    %296 = vector.load %arg13[%c248_294, %c0_295] : memref<392x256xf32, #tpu.memory_space<vmem>>, vector<8x256xf32>
    tpu.vector_store %arg13[%c248_294, %c0_295], %295 {strides = array<i32>} : memref<392x256xf32, #tpu.memory_space<vmem>>, vector<8x256xf32>,
    %c188_i32_296 = arith.constant 188 : i32
    %297 = tpu.dynamic_rotate %232 by %c188_i32_296 dim 1 : vector<8x256xf32>, i32 -> vector<8x256xf32>
    %c256_297 = arith.constant 256 : index
    %c0_298 = arith.constant 0 : index
    %298 = vector.load %arg13[%c256_297, %c0_298] : memref<392x256xf32, #tpu.memory_space<vmem>>, vector<8x256xf32>
    tpu.vector_store %arg13[%c256_297, %c0_298], %297 {strides = array<i32>} : memref<392x256xf32, #tpu.memory_space<vmem>>, vector<8x256xf32>,
    %c187_i32_299 = arith.constant 187 : i32
    %299 = tpu.dynamic_rotate %232 by %c187_i32_299 dim 1 : vector<8x256xf32>, i32 -> vector<8x256xf32>
    %c264_300 = arith.constant 264 : index
    %c0_301 = arith.constant 0 : index
    %300 = vector.load %arg13[%c264_300, %c0_301] : memref<392x256xf32, #tpu.memory_space<vmem>>, vector<8x256xf32>
    tpu.vector_store %arg13[%c264_300, %c0_301], %299 {strides = array<i32>} : memref<392x256xf32, #tpu.memory_space<vmem>>, vector<8x256xf32>,
    %c186_i32_302 = arith.constant 186 : i32
    %301 = tpu.dynamic_rotate %232 by %c186_i32_302 dim 1 : vector<8x256xf32>, i32 -> vector<8x256xf32>
    %c272_303 = arith.constant 272 : index
    %c0_304 = arith.constant 0 : index
    %302 = vector.load %arg13[%c272_303, %c0_304] : memref<392x256xf32, #tpu.memory_space<vmem>>, vector<8x256xf32>
    tpu.vector_store %arg13[%c272_303, %c0_304], %301 {strides = array<i32>} : memref<392x256xf32, #tpu.memory_space<vmem>>, vector<8x256xf32>,
    %c176_i32_305 = arith.constant 176 : i32
    %303 = tpu.dynamic_rotate %232 by %c176_i32_305 dim 1 : vector<8x256xf32>, i32 -> vector<8x256xf32>
    %c280_306 = arith.constant 280 : index
    %c0_307 = arith.constant 0 : index
    %304 = vector.load %arg13[%c280_306, %c0_307] : memref<392x256xf32, #tpu.memory_space<vmem>>, vector<8x256xf32>
    tpu.vector_store %arg13[%c280_306, %c0_307], %303 {strides = array<i32>} : memref<392x256xf32, #tpu.memory_space<vmem>>, vector<8x256xf32>,
    %c175_i32_308 = arith.constant 175 : i32
    %305 = tpu.dynamic_rotate %232 by %c175_i32_308 dim 1 : vector<8x256xf32>, i32 -> vector<8x256xf32>
    %c288_309 = arith.constant 288 : index
    %c0_310 = arith.constant 0 : index
    %306 = vector.load %arg13[%c288_309, %c0_310] : memref<392x256xf32, #tpu.memory_space<vmem>>, vector<8x256xf32>
    tpu.vector_store %arg13[%c288_309, %c0_310], %305 {strides = array<i32>} : memref<392x256xf32, #tpu.memory_space<vmem>>, vector<8x256xf32>,
    %c174_i32_311 = arith.constant 174 : i32
    %307 = tpu.dynamic_rotate %232 by %c174_i32_311 dim 1 : vector<8x256xf32>, i32 -> vector<8x256xf32>
    %c296_312 = arith.constant 296 : index
    %c0_313 = arith.constant 0 : index
    %308 = vector.load %arg13[%c296_312, %c0_313] : memref<392x256xf32, #tpu.memory_space<vmem>>, vector<8x256xf32>
    tpu.vector_store %arg13[%c296_312, %c0_313], %307 {strides = array<i32>} : memref<392x256xf32, #tpu.memory_space<vmem>>, vector<8x256xf32>,
    %c173_i32_314 = arith.constant 173 : i32
    %309 = tpu.dynamic_rotate %232 by %c173_i32_314 dim 1 : vector<8x256xf32>, i32 -> vector<8x256xf32>
    %c304_315 = arith.constant 304 : index
    %c0_316 = arith.constant 0 : index
    %310 = vector.load %arg13[%c304_315, %c0_316] : memref<392x256xf32, #tpu.memory_space<vmem>>, vector<8x256xf32>
    tpu.vector_store %arg13[%c304_315, %c0_316], %309 {strides = array<i32>} : memref<392x256xf32, #tpu.memory_space<vmem>>, vector<8x256xf32>,
    %c172_i32_317 = arith.constant 172 : i32
    %311 = tpu.dynamic_rotate %232 by %c172_i32_317 dim 1 : vector<8x256xf32>, i32 -> vector<8x256xf32>
    %c312_318 = arith.constant 312 : index
    %c0_319 = arith.constant 0 : index
    %312 = vector.load %arg13[%c312_318, %c0_319] : memref<392x256xf32, #tpu.memory_space<vmem>>, vector<8x256xf32>
    tpu.vector_store %arg13[%c312_318, %c0_319], %311 {strides = array<i32>} : memref<392x256xf32, #tpu.memory_space<vmem>>, vector<8x256xf32>,
    %c171_i32_320 = arith.constant 171 : i32
    %313 = tpu.dynamic_rotate %232 by %c171_i32_320 dim 1 : vector<8x256xf32>, i32 -> vector<8x256xf32>
    %c320_321 = arith.constant 320 : index
    %c0_322 = arith.constant 0 : index
    %314 = vector.load %arg13[%c320_321, %c0_322] : memref<392x256xf32, #tpu.memory_space<vmem>>, vector<8x256xf32>
    tpu.vector_store %arg13[%c320_321, %c0_322], %313 {strides = array<i32>} : memref<392x256xf32, #tpu.memory_space<vmem>>, vector<8x256xf32>,
    %c170_i32_323 = arith.constant 170 : i32
    %315 = tpu.dynamic_rotate %232 by %c170_i32_323 dim 1 : vector<8x256xf32>, i32 -> vector<8x256xf32>
    %c328_324 = arith.constant 328 : index
    %c0_325 = arith.constant 0 : index
    %316 = vector.load %arg13[%c328_324, %c0_325] : memref<392x256xf32, #tpu.memory_space<vmem>>, vector<8x256xf32>
    tpu.vector_store %arg13[%c328_324, %c0_325], %315 {strides = array<i32>} : memref<392x256xf32, #tpu.memory_space<vmem>>, vector<8x256xf32>,
    %c160_i32_326 = arith.constant 160 : i32
    %317 = tpu.dynamic_rotate %232 by %c160_i32_326 dim 1 : vector<8x256xf32>, i32 -> vector<8x256xf32>
    %c336_327 = arith.constant 336 : index
    %c0_328 = arith.constant 0 : index
    %318 = vector.load %arg13[%c336_327, %c0_328] : memref<392x256xf32, #tpu.memory_space<vmem>>, vector<8x256xf32>
    tpu.vector_store %arg13[%c336_327, %c0_328], %317 {strides = array<i32>} : memref<392x256xf32, #tpu.memory_space<vmem>>, vector<8x256xf32>,
    %c159_i32_329 = arith.constant 159 : i32
    %319 = tpu.dynamic_rotate %232 by %c159_i32_329 dim 1 : vector<8x256xf32>, i32 -> vector<8x256xf32>
    %c344_330 = arith.constant 344 : index
    %c0_331 = arith.constant 0 : index
    %320 = vector.load %arg13[%c344_330, %c0_331] : memref<392x256xf32, #tpu.memory_space<vmem>>, vector<8x256xf32>
    tpu.vector_store %arg13[%c344_330, %c0_331], %319 {strides = array<i32>} : memref<392x256xf32, #tpu.memory_space<vmem>>, vector<8x256xf32>,
    %c158_i32_332 = arith.constant 158 : i32
    %321 = tpu.dynamic_rotate %232 by %c158_i32_332 dim 1 : vector<8x256xf32>, i32 -> vector<8x256xf32>
    %c352_333 = arith.constant 352 : index
    %c0_334 = arith.constant 0 : index
    %322 = vector.load %arg13[%c352_333, %c0_334] : memref<392x256xf32, #tpu.memory_space<vmem>>, vector<8x256xf32>
    tpu.vector_store %arg13[%c352_333, %c0_334], %321 {strides = array<i32>} : memref<392x256xf32, #tpu.memory_space<vmem>>, vector<8x256xf32>,
    %c157_i32_335 = arith.constant 157 : i32
    %323 = tpu.dynamic_rotate %232 by %c157_i32_335 dim 1 : vector<8x256xf32>, i32 -> vector<8x256xf32>
    %c360_336 = arith.constant 360 : index
    %c0_337 = arith.constant 0 : index
    %324 = vector.load %arg13[%c360_336, %c0_337] : memref<392x256xf32, #tpu.memory_space<vmem>>, vector<8x256xf32>
    tpu.vector_store %arg13[%c360_336, %c0_337], %323 {strides = array<i32>} : memref<392x256xf32, #tpu.memory_space<vmem>>, vector<8x256xf32>,
    %c156_i32_338 = arith.constant 156 : i32
    %325 = tpu.dynamic_rotate %232 by %c156_i32_338 dim 1 : vector<8x256xf32>, i32 -> vector<8x256xf32>
    %c368_339 = arith.constant 368 : index
    %c0_340 = arith.constant 0 : index
    %326 = vector.load %arg13[%c368_339, %c0_340] : memref<392x256xf32, #tpu.memory_space<vmem>>, vector<8x256xf32>
    tpu.vector_store %arg13[%c368_339, %c0_340], %325 {strides = array<i32>} : memref<392x256xf32, #tpu.memory_space<vmem>>, vector<8x256xf32>,
    %c155_i32_341 = arith.constant 155 : i32
    %327 = tpu.dynamic_rotate %232 by %c155_i32_341 dim 1 : vector<8x256xf32>, i32 -> vector<8x256xf32>
    %c376_342 = arith.constant 376 : index
    %c0_343 = arith.constant 0 : index
    %328 = vector.load %arg13[%c376_342, %c0_343] : memref<392x256xf32, #tpu.memory_space<vmem>>, vector<8x256xf32>
    tpu.vector_store %arg13[%c376_342, %c0_343], %327 {strides = array<i32>} : memref<392x256xf32, #tpu.memory_space<vmem>>, vector<8x256xf32>,
    %c154_i32_344 = arith.constant 154 : i32
    %329 = tpu.dynamic_rotate %232 by %c154_i32_344 dim 1 : vector<8x256xf32>, i32 -> vector<8x256xf32>
    %c384_345 = arith.constant 384 : index
    %c0_346 = arith.constant 0 : index
    %330 = vector.load %arg13[%c384_345, %c0_346] : memref<392x256xf32, #tpu.memory_space<vmem>>, vector<8x256xf32>
    tpu.vector_store %arg13[%c384_345, %c0_346], %329 {strides = array<i32>} : memref<392x256xf32, #tpu.memory_space<vmem>>, vector<8x256xf32>,
    %c0_347 = arith.constant 0 : index
    %c0_348 = arith.constant 0 : index
    %331 = vector.load %arg13[%c0_347, %c0_348] : memref<392x256xf32, #tpu.memory_space<vmem>>, vector<392x256xf32>
    %c0_349 = arith.constant 0 : index
    %c0_350 = arith.constant 0 : index
    %332 = vector.load %arg2[%c0_349, %c0_350] : memref<8x392xf32, #tpu.memory_space<vmem>>, vector<8x392xf32>
    %cst_351 = arith.constant dense<0.000000e+00> : vector<8x256xf32>
    %333 = tpu.matmul %332, %331, %cst_351 {dimension_numbers = #tpu.dot_dimension_numbers<[1], [0], [0], [1], [0, 0, 1, 1], [], []>} : vector<8x392xf32>, vector<392x256xf32>, vector<8x256xf32> -> vector<8x256xf32>
    %c0_352 = arith.constant 0 : index
    %c0_353 = arith.constant 0 : index
    %334 = vector.load %arg3[%c0_352, %c0_353] : memref<8x256xf32, #tpu.memory_space<vmem>>, vector<8x256xf32>
    %335 = arith.mulf %333, %334 : vector<8x256xf32>
    %c0_354 = arith.constant 0 : index
    %c0_355 = arith.constant 0 : index
    %336 = vector.load %arg4[%c0_354, %c0_355] : memref<8x256xf32, #tpu.memory_space<vmem>>, vector<8x256xf32>
    %337 = arith.addf %335, %336 : vector<8x256xf32>
    %cst_356 = arith.constant 0.000000e+00 : f32
    %338 = vector.broadcast %cst_356 : f32 to vector<8x256xf32>
    %339 = arith.maximumf %337, %338 : vector<8x256xf32>
    %c0_i32_357 = arith.constant 0 : i32
    %340 = tpu.dynamic_rotate %339 by %c0_i32_357 dim 1 : vector<8x256xf32>, i32 -> vector<8x256xf32>
    %c0_358 = arith.constant 0 : index
    %c0_359 = arith.constant 0 : index
    %341 = vector.load %arg13[%c0_358, %c0_359] : memref<392x256xf32, #tpu.memory_space<vmem>>, vector<8x256xf32>
    tpu.vector_store %arg13[%c0_358, %c0_359], %340 {strides = array<i32>} : memref<392x256xf32, #tpu.memory_space<vmem>>, vector<8x256xf32>,
    %c255_i32_360 = arith.constant 255 : i32
    %342 = tpu.dynamic_rotate %339 by %c255_i32_360 dim 1 : vector<8x256xf32>, i32 -> vector<8x256xf32>
    %c8_361 = arith.constant 8 : index
    %c0_362 = arith.constant 0 : index
    %343 = vector.load %arg13[%c8_361, %c0_362] : memref<392x256xf32, #tpu.memory_space<vmem>>, vector<8x256xf32>
    tpu.vector_store %arg13[%c8_361, %c0_362], %342 {strides = array<i32>} : memref<392x256xf32, #tpu.memory_space<vmem>>, vector<8x256xf32>,
    %c254_i32_363 = arith.constant 254 : i32
    %344 = tpu.dynamic_rotate %339 by %c254_i32_363 dim 1 : vector<8x256xf32>, i32 -> vector<8x256xf32>
    %c16_364 = arith.constant 16 : index
    %c0_365 = arith.constant 0 : index
    %345 = vector.load %arg13[%c16_364, %c0_365] : memref<392x256xf32, #tpu.memory_space<vmem>>, vector<8x256xf32>
    tpu.vector_store %arg13[%c16_364, %c0_365], %344 {strides = array<i32>} : memref<392x256xf32, #tpu.memory_space<vmem>>, vector<8x256xf32>,
    %c253_i32_366 = arith.constant 253 : i32
    %346 = tpu.dynamic_rotate %339 by %c253_i32_366 dim 1 : vector<8x256xf32>, i32 -> vector<8x256xf32>
    %c24_367 = arith.constant 24 : index
    %c0_368 = arith.constant 0 : index
    %347 = vector.load %arg13[%c24_367, %c0_368] : memref<392x256xf32, #tpu.memory_space<vmem>>, vector<8x256xf32>
    tpu.vector_store %arg13[%c24_367, %c0_368], %346 {strides = array<i32>} : memref<392x256xf32, #tpu.memory_space<vmem>>, vector<8x256xf32>,
    %c252_i32_369 = arith.constant 252 : i32
    %348 = tpu.dynamic_rotate %339 by %c252_i32_369 dim 1 : vector<8x256xf32>, i32 -> vector<8x256xf32>
    %c32_370 = arith.constant 32 : index
    %c0_371 = arith.constant 0 : index
    %349 = vector.load %arg13[%c32_370, %c0_371] : memref<392x256xf32, #tpu.memory_space<vmem>>, vector<8x256xf32>
    tpu.vector_store %arg13[%c32_370, %c0_371], %348 {strides = array<i32>} : memref<392x256xf32, #tpu.memory_space<vmem>>, vector<8x256xf32>,
    %c240_i32_372 = arith.constant 240 : i32
    %350 = tpu.dynamic_rotate %339 by %c240_i32_372 dim 1 : vector<8x256xf32>, i32 -> vector<8x256xf32>
    %c40_373 = arith.constant 40 : index
    %c0_374 = arith.constant 0 : index
    %351 = vector.load %arg13[%c40_373, %c0_374] : memref<392x256xf32, #tpu.memory_space<vmem>>, vector<8x256xf32>
    tpu.vector_store %arg13[%c40_373, %c0_374], %350 {strides = array<i32>} : memref<392x256xf32, #tpu.memory_space<vmem>>, vector<8x256xf32>,
    %c239_i32_375 = arith.constant 239 : i32
    %352 = tpu.dynamic_rotate %339 by %c239_i32_375 dim 1 : vector<8x256xf32>, i32 -> vector<8x256xf32>
    %c48_376 = arith.constant 48 : index
    %c0_377 = arith.constant 0 : index
    %353 = vector.load %arg13[%c48_376, %c0_377] : memref<392x256xf32, #tpu.memory_space<vmem>>, vector<8x256xf32>
    tpu.vector_store %arg13[%c48_376, %c0_377], %352 {strides = array<i32>} : memref<392x256xf32, #tpu.memory_space<vmem>>, vector<8x256xf32>,
    %c238_i32_378 = arith.constant 238 : i32
    %354 = tpu.dynamic_rotate %339 by %c238_i32_378 dim 1 : vector<8x256xf32>, i32 -> vector<8x256xf32>
    %c56_379 = arith.constant 56 : index
    %c0_380 = arith.constant 0 : index
    %355 = vector.load %arg13[%c56_379, %c0_380] : memref<392x256xf32, #tpu.memory_space<vmem>>, vector<8x256xf32>
    tpu.vector_store %arg13[%c56_379, %c0_380], %354 {strides = array<i32>} : memref<392x256xf32, #tpu.memory_space<vmem>>, vector<8x256xf32>,
    %c237_i32_381 = arith.constant 237 : i32
    %356 = tpu.dynamic_rotate %339 by %c237_i32_381 dim 1 : vector<8x256xf32>, i32 -> vector<8x256xf32>
    %c64_382 = arith.constant 64 : index
    %c0_383 = arith.constant 0 : index
    %357 = vector.load %arg13[%c64_382, %c0_383] : memref<392x256xf32, #tpu.memory_space<vmem>>, vector<8x256xf32>
    tpu.vector_store %arg13[%c64_382, %c0_383], %356 {strides = array<i32>} : memref<392x256xf32, #tpu.memory_space<vmem>>, vector<8x256xf32>,
    %c236_i32_384 = arith.constant 236 : i32
    %358 = tpu.dynamic_rotate %339 by %c236_i32_384 dim 1 : vector<8x256xf32>, i32 -> vector<8x256xf32>
    %c72_385 = arith.constant 72 : index
    %c0_386 = arith.constant 0 : index
    %359 = vector.load %arg13[%c72_385, %c0_386] : memref<392x256xf32, #tpu.memory_space<vmem>>, vector<8x256xf32>
    tpu.vector_store %arg13[%c72_385, %c0_386], %358 {strides = array<i32>} : memref<392x256xf32, #tpu.memory_space<vmem>>, vector<8x256xf32>,
    %c224_i32_387 = arith.constant 224 : i32
    %360 = tpu.dynamic_rotate %339 by %c224_i32_387 dim 1 : vector<8x256xf32>, i32 -> vector<8x256xf32>
    %c80_388 = arith.constant 80 : index
    %c0_389 = arith.constant 0 : index
    %361 = vector.load %arg13[%c80_388, %c0_389] : memref<392x256xf32, #tpu.memory_space<vmem>>, vector<8x256xf32>
    tpu.vector_store %arg13[%c80_388, %c0_389], %360 {strides = array<i32>} : memref<392x256xf32, #tpu.memory_space<vmem>>, vector<8x256xf32>,
    %c223_i32_390 = arith.constant 223 : i32
    %362 = tpu.dynamic_rotate %339 by %c223_i32_390 dim 1 : vector<8x256xf32>, i32 -> vector<8x256xf32>
    %c88_391 = arith.constant 88 : index
    %c0_392 = arith.constant 0 : index
    %363 = vector.load %arg13[%c88_391, %c0_392] : memref<392x256xf32, #tpu.memory_space<vmem>>, vector<8x256xf32>
    tpu.vector_store %arg13[%c88_391, %c0_392], %362 {strides = array<i32>} : memref<392x256xf32, #tpu.memory_space<vmem>>, vector<8x256xf32>,
    %c222_i32_393 = arith.constant 222 : i32
    %364 = tpu.dynamic_rotate %339 by %c222_i32_393 dim 1 : vector<8x256xf32>, i32 -> vector<8x256xf32>
    %c96_394 = arith.constant 96 : index
    %c0_395 = arith.constant 0 : index
    %365 = vector.load %arg13[%c96_394, %c0_395] : memref<392x256xf32, #tpu.memory_space<vmem>>, vector<8x256xf32>
    tpu.vector_store %arg13[%c96_394, %c0_395], %364 {strides = array<i32>} : memref<392x256xf32, #tpu.memory_space<vmem>>, vector<8x256xf32>,
    %c221_i32_396 = arith.constant 221 : i32
    %366 = tpu.dynamic_rotate %339 by %c221_i32_396 dim 1 : vector<8x256xf32>, i32 -> vector<8x256xf32>
    %c104_397 = arith.constant 104 : index
    %c0_398 = arith.constant 0 : index
    %367 = vector.load %arg13[%c104_397, %c0_398] : memref<392x256xf32, #tpu.memory_space<vmem>>, vector<8x256xf32>
    tpu.vector_store %arg13[%c104_397, %c0_398], %366 {strides = array<i32>} : memref<392x256xf32, #tpu.memory_space<vmem>>, vector<8x256xf32>,
    %c220_i32_399 = arith.constant 220 : i32
    %368 = tpu.dynamic_rotate %339 by %c220_i32_399 dim 1 : vector<8x256xf32>, i32 -> vector<8x256xf32>
    %c112_400 = arith.constant 112 : index
    %c0_401 = arith.constant 0 : index
    %369 = vector.load %arg13[%c112_400, %c0_401] : memref<392x256xf32, #tpu.memory_space<vmem>>, vector<8x256xf32>
    tpu.vector_store %arg13[%c112_400, %c0_401], %368 {strides = array<i32>} : memref<392x256xf32, #tpu.memory_space<vmem>>, vector<8x256xf32>,
    %c208_i32_402 = arith.constant 208 : i32
    %370 = tpu.dynamic_rotate %339 by %c208_i32_402 dim 1 : vector<8x256xf32>, i32 -> vector<8x256xf32>
    %c120_403 = arith.constant 120 : index
    %c0_404 = arith.constant 0 : index
    %371 = vector.load %arg13[%c120_403, %c0_404] : memref<392x256xf32, #tpu.memory_space<vmem>>, vector<8x256xf32>
    tpu.vector_store %arg13[%c120_403, %c0_404], %370 {strides = array<i32>} : memref<392x256xf32, #tpu.memory_space<vmem>>, vector<8x256xf32>,
    %c207_i32_405 = arith.constant 207 : i32
    %372 = tpu.dynamic_rotate %339 by %c207_i32_405 dim 1 : vector<8x256xf32>, i32 -> vector<8x256xf32>
    %c128_406 = arith.constant 128 : index
    %c0_407 = arith.constant 0 : index
    %373 = vector.load %arg13[%c128_406, %c0_407] : memref<392x256xf32, #tpu.memory_space<vmem>>, vector<8x256xf32>
    tpu.vector_store %arg13[%c128_406, %c0_407], %372 {strides = array<i32>} : memref<392x256xf32, #tpu.memory_space<vmem>>, vector<8x256xf32>,
    %c206_i32_408 = arith.constant 206 : i32
    %374 = tpu.dynamic_rotate %339 by %c206_i32_408 dim 1 : vector<8x256xf32>, i32 -> vector<8x256xf32>
    %c136_409 = arith.constant 136 : index
    %c0_410 = arith.constant 0 : index
    %375 = vector.load %arg13[%c136_409, %c0_410] : memref<392x256xf32, #tpu.memory_space<vmem>>, vector<8x256xf32>
    tpu.vector_store %arg13[%c136_409, %c0_410], %374 {strides = array<i32>} : memref<392x256xf32, #tpu.memory_space<vmem>>, vector<8x256xf32>,
    %c205_i32_411 = arith.constant 205 : i32
    %376 = tpu.dynamic_rotate %339 by %c205_i32_411 dim 1 : vector<8x256xf32>, i32 -> vector<8x256xf32>
    %c144_412 = arith.constant 144 : index
    %c0_413 = arith.constant 0 : index
    %377 = vector.load %arg13[%c144_412, %c0_413] : memref<392x256xf32, #tpu.memory_space<vmem>>, vector<8x256xf32>
    tpu.vector_store %arg13[%c144_412, %c0_413], %376 {strides = array<i32>} : memref<392x256xf32, #tpu.memory_space<vmem>>, vector<8x256xf32>,
    %c204_i32_414 = arith.constant 204 : i32
    %378 = tpu.dynamic_rotate %339 by %c204_i32_414 dim 1 : vector<8x256xf32>, i32 -> vector<8x256xf32>
    %c152_415 = arith.constant 152 : index
    %c0_416 = arith.constant 0 : index
    %379 = vector.load %arg13[%c152_415, %c0_416] : memref<392x256xf32, #tpu.memory_space<vmem>>, vector<8x256xf32>
    tpu.vector_store %arg13[%c152_415, %c0_416], %378 {strides = array<i32>} : memref<392x256xf32, #tpu.memory_space<vmem>>, vector<8x256xf32>,
    %c192_i32_417 = arith.constant 192 : i32
    %380 = tpu.dynamic_rotate %339 by %c192_i32_417 dim 1 : vector<8x256xf32>, i32 -> vector<8x256xf32>
    %c160_418 = arith.constant 160 : index
    %c0_419 = arith.constant 0 : index
    %381 = vector.load %arg13[%c160_418, %c0_419] : memref<392x256xf32, #tpu.memory_space<vmem>>, vector<8x256xf32>
    tpu.vector_store %arg13[%c160_418, %c0_419], %380 {strides = array<i32>} : memref<392x256xf32, #tpu.memory_space<vmem>>, vector<8x256xf32>,
    %c191_i32_420 = arith.constant 191 : i32
    %382 = tpu.dynamic_rotate %339 by %c191_i32_420 dim 1 : vector<8x256xf32>, i32 -> vector<8x256xf32>
    %c168_421 = arith.constant 168 : index
    %c0_422 = arith.constant 0 : index
    %383 = vector.load %arg13[%c168_421, %c0_422] : memref<392x256xf32, #tpu.memory_space<vmem>>, vector<8x256xf32>
    tpu.vector_store %arg13[%c168_421, %c0_422], %382 {strides = array<i32>} : memref<392x256xf32, #tpu.memory_space<vmem>>, vector<8x256xf32>,
    %c190_i32_423 = arith.constant 190 : i32
    %384 = tpu.dynamic_rotate %339 by %c190_i32_423 dim 1 : vector<8x256xf32>, i32 -> vector<8x256xf32>
    %c176_424 = arith.constant 176 : index
    %c0_425 = arith.constant 0 : index
    %385 = vector.load %arg13[%c176_424, %c0_425] : memref<392x256xf32, #tpu.memory_space<vmem>>, vector<8x256xf32>
    tpu.vector_store %arg13[%c176_424, %c0_425], %384 {strides = array<i32>} : memref<392x256xf32, #tpu.memory_space<vmem>>, vector<8x256xf32>,
    %c189_i32_426 = arith.constant 189 : i32
    %386 = tpu.dynamic_rotate %339 by %c189_i32_426 dim 1 : vector<8x256xf32>, i32 -> vector<8x256xf32>
    %c184_427 = arith.constant 184 : index
    %c0_428 = arith.constant 0 : index
    %387 = vector.load %arg13[%c184_427, %c0_428] : memref<392x256xf32, #tpu.memory_space<vmem>>, vector<8x256xf32>
    tpu.vector_store %arg13[%c184_427, %c0_428], %386 {strides = array<i32>} : memref<392x256xf32, #tpu.memory_space<vmem>>, vector<8x256xf32>,
    %c188_i32_429 = arith.constant 188 : i32
    %388 = tpu.dynamic_rotate %339 by %c188_i32_429 dim 1 : vector<8x256xf32>, i32 -> vector<8x256xf32>
    %c192_430 = arith.constant 192 : index
    %c0_431 = arith.constant 0 : index
    %389 = vector.load %arg13[%c192_430, %c0_431] : memref<392x256xf32, #tpu.memory_space<vmem>>, vector<8x256xf32>
    tpu.vector_store %arg13[%c192_430, %c0_431], %388 {strides = array<i32>} : memref<392x256xf32, #tpu.memory_space<vmem>>, vector<8x256xf32>,
    %c0_432 = arith.constant 0 : index
    %c0_433 = arith.constant 0 : index
    %390 = vector.load %arg13[%c0_432, %c0_433] : memref<392x256xf32, #tpu.memory_space<vmem>>, vector<200x256xf32>
    %c0_434 = arith.constant 0 : index
    %c0_435 = arith.constant 0 : index
    %391 = vector.load %arg5[%c0_434, %c0_435] : memref<8x200xf32, #tpu.memory_space<vmem>>, vector<8x200xf32>
    %cst_436 = arith.constant dense<0.000000e+00> : vector<8x256xf32>
    %392 = tpu.matmul %391, %390, %cst_436 {dimension_numbers = #tpu.dot_dimension_numbers<[1], [0], [0], [1], [0, 0, 1, 1], [], []>} : vector<8x200xf32>, vector<200x256xf32>, vector<8x256xf32> -> vector<8x256xf32>
    %c0_437 = arith.constant 0 : index
    %c0_438 = arith.constant 0 : index
    %393 = vector.load %arg6[%c0_437, %c0_438] : memref<8x256xf32, #tpu.memory_space<vmem>>, vector<8x256xf32>
    %394 = arith.mulf %392, %393 : vector<8x256xf32>
    %c0_439 = arith.constant 0 : index
    %c0_440 = arith.constant 0 : index
    %395 = vector.load %arg7[%c0_439, %c0_440] : memref<8x256xf32, #tpu.memory_space<vmem>>, vector<8x256xf32>
    %396 = arith.addf %394, %395 : vector<8x256xf32>
    %cst_441 = arith.constant 0.000000e+00 : f32
    %397 = vector.broadcast %cst_441 : f32 to vector<8x256xf32>
    %398 = arith.maximumf %396, %397 : vector<8x256xf32>
    %cst_442 = arith.constant 0.000000e+00 : f32
    %399 = vector.broadcast %cst_442 : f32 to vector<1x128xf32>
    %c0_443 = arith.constant 0 : index
    %c0_444 = arith.constant 0 : index
    %c0_445 = arith.constant 0 : index
    %400 = vector.load %arg8[%c0_443, %c0_444, %c0_445] : memref<8x256x128xf32, #tpu.memory_space<vmem>>, vector<1x256x128xf32>
    %401 = vector.shape_cast %400 : vector<1x256x128xf32> to vector<256x128xf32>
    %cst_446 = arith.constant dense<0.000000e+00> : vector<8x128xf32>
    %402 = tpu.matmul %398, %401, %cst_446 {dimension_numbers = #tpu.dot_dimension_numbers<[1], [0], [0], [1], [0, 0, 1, 1], [], []>} : vector<8x256xf32>, vector<256x128xf32>, vector<8x128xf32> -> vector<8x128xf32>
    %403 = vector.extract_strided_slice %402 {offsets = [0, 0], sizes = [1, 128], strides = [1, 1]} : vector<8x128xf32> to vector<1x128xf32>
    %404 = arith.addf %399, %403 : vector<1x128xf32>
    %c1_447 = arith.constant 1 : index
    %c0_448 = arith.constant 0 : index
    %c0_449 = arith.constant 0 : index
    %405 = vector.load %arg8[%c1_447, %c0_448, %c0_449] : memref<8x256x128xf32, #tpu.memory_space<vmem>>, vector<1x256x128xf32>
    %406 = vector.shape_cast %405 : vector<1x256x128xf32> to vector<256x128xf32>
    %cst_450 = arith.constant dense<0.000000e+00> : vector<8x128xf32>
    %407 = tpu.matmul %398, %406, %cst_450 {dimension_numbers = #tpu.dot_dimension_numbers<[1], [0], [0], [1], [0, 0, 1, 1], [], []>} : vector<8x256xf32>, vector<256x128xf32>, vector<8x128xf32> -> vector<8x128xf32>
    %408 = vector.extract_strided_slice %407 {offsets = [1, 0], sizes = [1, 128], strides = [1, 1]} : vector<8x128xf32> to vector<1x128xf32>
    %409 = arith.addf %404, %408 : vector<1x128xf32>
    %c2_451 = arith.constant 2 : index
    %c0_452 = arith.constant 0 : index
    %c0_453 = arith.constant 0 : index
    %410 = vector.load %arg8[%c2_451, %c0_452, %c0_453] : memref<8x256x128xf32, #tpu.memory_space<vmem>>, vector<1x256x128xf32>
    %411 = vector.shape_cast %410 : vector<1x256x128xf32> to vector<256x128xf32>
    %cst_454 = arith.constant dense<0.000000e+00> : vector<8x128xf32>
    %412 = tpu.matmul %398, %411, %cst_454 {dimension_numbers = #tpu.dot_dimension_numbers<[1], [0], [0], [1], [0, 0, 1, 1], [], []>} : vector<8x256xf32>, vector<256x128xf32>, vector<8x128xf32> -> vector<8x128xf32>
    %413 = vector.extract_strided_slice %412 {offsets = [2, 0], sizes = [1, 128], strides = [1, 1]} : vector<8x128xf32> to vector<1x128xf32>
    %414 = arith.addf %409, %413 : vector<1x128xf32>
    %c3_455 = arith.constant 3 : index
    %c0_456 = arith.constant 0 : index
    %c0_457 = arith.constant 0 : index
    %415 = vector.load %arg8[%c3_455, %c0_456, %c0_457] : memref<8x256x128xf32, #tpu.memory_space<vmem>>, vector<1x256x128xf32>
    %416 = vector.shape_cast %415 : vector<1x256x128xf32> to vector<256x128xf32>
    %cst_458 = arith.constant dense<0.000000e+00> : vector<8x128xf32>
    %417 = tpu.matmul %398, %416, %cst_458 {dimension_numbers = #tpu.dot_dimension_numbers<[1], [0], [0], [1], [0, 0, 1, 1], [], []>} : vector<8x256xf32>, vector<256x128xf32>, vector<8x128xf32> -> vector<8x128xf32>
    %418 = vector.extract_strided_slice %417 {offsets = [3, 0], sizes = [1, 128], strides = [1, 1]} : vector<8x128xf32> to vector<1x128xf32>
    %419 = arith.addf %414, %418 : vector<1x128xf32>
    %c4_459 = arith.constant 4 : index
    %c0_460 = arith.constant 0 : index
    %c0_461 = arith.constant 0 : index
    %420 = vector.load %arg8[%c4_459, %c0_460, %c0_461] : memref<8x256x128xf32, #tpu.memory_space<vmem>>, vector<1x256x128xf32>
    %421 = vector.shape_cast %420 : vector<1x256x128xf32> to vector<256x128xf32>
    %cst_462 = arith.constant dense<0.000000e+00> : vector<8x128xf32>
    %422 = tpu.matmul %398, %421, %cst_462 {dimension_numbers = #tpu.dot_dimension_numbers<[1], [0], [0], [1], [0, 0, 1, 1], [], []>} : vector<8x256xf32>, vector<256x128xf32>, vector<8x128xf32> -> vector<8x128xf32>
    %423 = vector.extract_strided_slice %422 {offsets = [4, 0], sizes = [1, 128], strides = [1, 1]} : vector<8x128xf32> to vector<1x128xf32>
    %424 = arith.addf %419, %423 : vector<1x128xf32>
    %c5_463 = arith.constant 5 : index
    %c0_464 = arith.constant 0 : index
    %c0_465 = arith.constant 0 : index
    %425 = vector.load %arg8[%c5_463, %c0_464, %c0_465] : memref<8x256x128xf32, #tpu.memory_space<vmem>>, vector<1x256x128xf32>
    %426 = vector.shape_cast %425 : vector<1x256x128xf32> to vector<256x128xf32>
    %cst_466 = arith.constant dense<0.000000e+00> : vector<8x128xf32>
    %427 = tpu.matmul %398, %426, %cst_466 {dimension_numbers = #tpu.dot_dimension_numbers<[1], [0], [0], [1], [0, 0, 1, 1], [], []>} : vector<8x256xf32>, vector<256x128xf32>, vector<8x128xf32> -> vector<8x128xf32>
    %428 = vector.extract_strided_slice %427 {offsets = [5, 0], sizes = [1, 128], strides = [1, 1]} : vector<8x128xf32> to vector<1x128xf32>
    %429 = arith.addf %424, %428 : vector<1x128xf32>
    %c6_467 = arith.constant 6 : index
    %c0_468 = arith.constant 0 : index
    %c0_469 = arith.constant 0 : index
    %430 = vector.load %arg8[%c6_467, %c0_468, %c0_469] : memref<8x256x128xf32, #tpu.memory_space<vmem>>, vector<1x256x128xf32>
    %431 = vector.shape_cast %430 : vector<1x256x128xf32> to vector<256x128xf32>
    %cst_470 = arith.constant dense<0.000000e+00> : vector<8x128xf32>
    %432 = tpu.matmul %398, %431, %cst_470 {dimension_numbers = #tpu.dot_dimension_numbers<[1], [0], [0], [1], [0, 0, 1, 1], [], []>} : vector<8x256xf32>, vector<256x128xf32>, vector<8x128xf32> -> vector<8x128xf32>
    %433 = vector.extract_strided_slice %432 {offsets = [6, 0], sizes = [1, 128], strides = [1, 1]} : vector<8x128xf32> to vector<1x128xf32>
    %434 = arith.addf %429, %433 : vector<1x128xf32>
    %c7_471 = arith.constant 7 : index
    %c0_472 = arith.constant 0 : index
    %c0_473 = arith.constant 0 : index
    %435 = vector.load %arg8[%c7_471, %c0_472, %c0_473] : memref<8x256x128xf32, #tpu.memory_space<vmem>>, vector<1x256x128xf32>
    %436 = vector.shape_cast %435 : vector<1x256x128xf32> to vector<256x128xf32>
    %cst_474 = arith.constant dense<0.000000e+00> : vector<8x128xf32>
    %437 = tpu.matmul %398, %436, %cst_474 {dimension_numbers = #tpu.dot_dimension_numbers<[1], [0], [0], [1], [0, 0, 1, 1], [], []>} : vector<8x256xf32>, vector<256x128xf32>, vector<8x128xf32> -> vector<8x128xf32>
    %438 = vector.extract_strided_slice %437 {offsets = [7, 0], sizes = [1, 128], strides = [1, 1]} : vector<8x128xf32> to vector<1x128xf32>
    %439 = arith.addf %434, %438 : vector<1x128xf32>
    %c0_475 = arith.constant 0 : index
    %c0_476 = arith.constant 0 : index
    %440 = vector.load %arg9[%c0_475, %c0_476] : memref<1x128xf32, #tpu.memory_space<vmem>>, vector<1x128xf32>
    %441 = arith.mulf %439, %440 : vector<1x128xf32>
    %c0_477 = arith.constant 0 : index
    %c0_478 = arith.constant 0 : index
    %442 = vector.load %arg10[%c0_477, %c0_478] : memref<1x128xf32, #tpu.memory_space<vmem>>, vector<1x128xf32>
    %443 = arith.addf %441, %442 : vector<1x128xf32>
    %cst_479 = arith.constant 2.000000e+01 : f32
    %444 = vector.broadcast %cst_479 : f32 to vector<1x128xf32>
    %445 = arith.cmpf ogt, %443, %444 : vector<1x128xf32>
    %cst_480 = arith.constant 2.000000e+01 : f32
    %446 = vector.broadcast %cst_480 : f32 to vector<1x128xf32>
    %447 = arith.minimumf %443, %446 : vector<1x128xf32>
    %448 = math.exp %447 : vector<1x128xf32>
    %449 = math.log1p %448 : vector<1x128xf32>
    %450 = arith.select %445, %443, %449 : vector<1x128xi1>, vector<1x128xf32>
    %c0_481 = arith.constant 0 : index
    %c1_482 = arith.constant 1 : index
    %c0_483 = arith.constant 0 : index
    %451 = vector.load %arg11[%c0_481, %c1_482, %c0_483] : memref<1x2x128xf32, #tpu.memory_space<vmem>>, vector<1x1x128xf32>
    %452 = vector.shape_cast %451 : vector<1x1x128xf32> to vector<1x128xf32>
    %453 = vector.shape_cast %450 : vector<1x128xf32> to vector<1x1x128xf32>
    tpu.vector_store %arg11[%c0_481, %c1_482, %c0_483], %453 {strides = array<i32>} : memref<1x2x128xf32, #tpu.memory_space<vmem>>, vector<1x1x128xf32>,
    return
  }
  func.func @transform_0(%arg0: i32) -> (i32, i32, i32, i32) {
    %c0_i32 = arith.constant 0 : i32
    %c0_i32_0 = arith.constant 0 : i32
    %c0_i32_1 = arith.constant 0 : i32
    %c0_i32_2 = arith.constant 0 : i32
    return %arg0, %c0_i32, %c0_i32_0, %c0_i32_1 : i32, i32, i32, i32
  }
  func.func @transform_1(%arg0: i32) -> (i32, i32) {
    %c0_i32 = arith.constant 0 : i32
    %c0_i32_0 = arith.constant 0 : i32
    %c0_i32_1 = arith.constant 0 : i32
    return %c0_i32, %c0_i32_0 : i32, i32
  }
  func.func @transform_2(%arg0: i32) -> (i32, i32) {
    %c0_i32 = arith.constant 0 : i32
    %c0_i32_0 = arith.constant 0 : i32
    %c0_i32_1 = arith.constant 0 : i32
    return %c0_i32, %c0_i32_0 : i32, i32
  }
  func.func @transform_3(%arg0: i32) -> (i32, i32) {
    %c0_i32 = arith.constant 0 : i32
    %c0_i32_0 = arith.constant 0 : i32
    %c0_i32_1 = arith.constant 0 : i32
    return %c0_i32, %c0_i32_0 : i32, i32
  }
  func.func @transform_4(%arg0: i32) -> (i32, i32) {
    %c0_i32 = arith.constant 0 : i32
    %c0_i32_0 = arith.constant 0 : i32
    %c0_i32_1 = arith.constant 0 : i32
    return %c0_i32, %c0_i32_0 : i32, i32
  }
  func.func @transform_5(%arg0: i32) -> (i32, i32) {
    %c0_i32 = arith.constant 0 : i32
    %c0_i32_0 = arith.constant 0 : i32
    %c0_i32_1 = arith.constant 0 : i32
    return %c0_i32, %c0_i32_0 : i32, i32
  }
  func.func @transform_6(%arg0: i32) -> (i32, i32) {
    %c0_i32 = arith.constant 0 : i32
    %c0_i32_0 = arith.constant 0 : i32
    %c0_i32_1 = arith.constant 0 : i32
    return %c0_i32, %c0_i32_0 : i32, i32
  }
  func.func @transform_7(%arg0: i32) -> (i32, i32, i32) {
    %c0_i32 = arith.constant 0 : i32
    %c0_i32_0 = arith.constant 0 : i32
    %c0_i32_1 = arith.constant 0 : i32
    %c0_i32_2 = arith.constant 0 : i32
    return %c0_i32, %c0_i32_0, %c0_i32_1 : i32, i32, i32
  }
  func.func @transform_8(%arg0: i32) -> (i32, i32) {
    %c0_i32 = arith.constant 0 : i32
    %c0_i32_0 = arith.constant 0 : i32
    %c0_i32_1 = arith.constant 0 : i32
    return %c0_i32, %c0_i32_0 : i32, i32
  }
  func.func @transform_9(%arg0: i32) -> (i32, i32) {
    %c0_i32 = arith.constant 0 : i32
    %c0_i32_0 = arith.constant 0 : i32
    %c0_i32_1 = arith.constant 0 : i32
    return %c0_i32, %c0_i32_0 : i32, i32
  }
  func.func @transform_10(%arg0: i32) -> (i32, i32, i32) {
    %c0_i32 = arith.constant 0 : i32
    %c0_i32_0 = arith.constant 0 : i32
    %c0_i32_1 = arith.constant 0 : i32
    return %arg0, %c0_i32, %c0_i32_0 : i32, i32, i32
  }
}

</mosaic_0001>

<llo_original>
// kernel: forward.1
$region0: #{forward.1}
  #allocation0 [shape = 'u32[]', space=smem, size = 0x4, offset = 0x4, fixed_abs, tag = 'smem constant byte address 0x4 - core index']
  #allocation1 [shape = 'u32[144,128]{1,0:T(1,128)}', space=vmem, size = 0x12000, scoped, tag = 'internal scratch']
  #allocation2 [shape = 'f32[8,256]{1,0:T(8,128)}', space=vmem, size = 0x2000, scoped, tag = 'scratch operand']
  #allocation3 [shape = 'f32[392,256]{1,0:T(8,128)}', space=vmem, size = 0x62000, scoped, tag = 'scratch operand']
  %s0 = inlined_call_operand.vmem [shape: f32[2,2,4,256], index: 0, kind: input, shape index: {}]
  %s1 = inlined_call_operand.vmem [shape: f32[8,392], index: 1, kind: input, shape index: {}]
  %s2 = inlined_call_operand.vmem [shape: f32[8,256], index: 2, kind: input, shape index: {}]
  %s3 = inlined_call_operand.vmem [shape: f32[8,256], index: 3, kind: input, shape index: {}]
  %s4 = inlined_call_operand.vmem [shape: f32[8,200], index: 4, kind: input, shape index: {}]
  %s5 = inlined_call_operand.vmem [shape: f32[8,256], index: 5, kind: input, shape index: {}]
  %s6 = inlined_call_operand.vmem [shape: f32[8,256], index: 6, kind: input, shape index: {}]
  %s7 = inlined_call_operand.hbm [shape: f32[8,256,128], index: 7, kind: input, shape index: {}]
  %s8 = inlined_call_operand.vmem [shape: f32[1,128], index: 8, kind: input, shape index: {}]
  %s9 = inlined_call_operand.vmem [shape: f32[1,128], index: 9, kind: input, shape index: {}]
  %s10 = inlined_call_operand.hbm [shape: f32[2,2,128], index: 10, kind: output, shape index: {}]
  %s11 = sld [smem:[#allocation0]]
  $region77: #{forward.1} parent=0
    _
  %s13 = ssub.s32 1, %s11
  %s14 = scalar_select 0, %s13, %s11
  $region1: #{forward.1} parent=0
    #allocation4 [shape = 'u8[1048576]{0}', space=vmem, size = 0x100000, scoped, tag = 'input window, operand 7, single buffered']
    #allocation5 [shape = 's32[2]{0}', space=sflag, size = 0x8, scoped, tag = 'scoped memory for forward.1']
    #allocation6 [shape = 's32[2]{0}', space=sflag, size = 0x8, scoped, tag = 'scoped memory for forward.1']
    #allocation7 [shape = 'u8[2048]{0}', space=vmem, size = 0x800, scoped, tag = 'output window, operand 0']
    %15 = vsyncpa [#allocation5], 0
    %16 = vsyncpa [#allocation6], 0
    %s17 = scalar_lea.sflag [#allocation6], 1
    %18 = vsyncpa %s17, 0
    loop: start=0, step=1, limit=4
    $region2: #{forward.1} parent=1 // loop_pre_header
      _
    $region3: #{forward.1} parent=1 // loop_header
      %s20 = sphi 0, %s24
      %p21 = scmp.ge.s32.totalorder %s20, 4
      %s30 = sphi 0, %s32
      %s33 = sphi 0, %s30
      %s34 = sphi 0, %s33
      %s50 = sphi 0, %s34
      %s54 = sphi 0, %s54
      %s56 = sphi 0, %s54
      %s57 = sphi 0, %s56
      %s71 = sphi 0, %s57
      %s75 = sphi 0, %s75
      %s77 = sphi 0, %s75
      %s78 = sphi 0, %s77
      %s92 = sphi 0, %s78
      %s96 = sphi 0, %s96
      %s98 = sphi 0, %s96
      %s99 = sphi 0, %s98
      %s113 = sphi 0, %s99
      %s117 = sphi 0, %s117
      %s119 = sphi 0, %s117
      %s120 = sphi 0, %s119
      %s134 = sphi 0, %s120
      %s138 = sphi 0, %s138
      %s140 = sphi 0, %s138
      %s141 = sphi 0, %s140
      %s155 = sphi 0, %s141
      %s159 = sphi 0, %s159
      %s161 = sphi 0, %s159
      %s162 = sphi 0, %s161
      %s176 = sphi 0, %s162
      %s180 = sphi 0, %s180
      %s182 = sphi 0, %s180
      %s183 = sphi 0, %s182
      %s197 = sphi 0, %s183
      %s201 = sphi 0, %s201
      %s203 = sphi 0, %s201
      %s204 = sphi 0, %s203
      %s218 = sphi 0, %s204
      %s222 = sphi 0, %s222
      %s224 = sphi 0, %s222
      %s225 = sphi 0, %s224
      %s239 = sphi 0, %s225
      %s245 = sphi 0, %s247
      %s248 = sphi 0, %s245
      %s249 = sphi 0, %s248
      %s265 = sphi 0, %s249
    $region4: #{forward.1} parent=1 // loop_header_branch
      %23 = sbr.rel (%p21) target = $region8
    $region5: #{forward.1} parent=1 // loop_body
      %s25 = ssub.s32 %s20, 1
      %s26 = ssub.s32 %s20, 2
      %s27 = sadd.s32 %s20, 1
      %s28 = ssub.s32 %s20, %s27
      %p29 = scmp.eq.s32.totalorder %s28, 0
      %s31 = sadd.s32 %s30, 1
      %s32 = scalar_select %p29, %s30, %s31
      %p35 = pneg %p29
      %p36 = scmp.eq.s32.totalorder %s20, 1
      %p37 = por %p35, %p36
      %p38 = scmp.ne.s32.totalorder %s30, %s33
      %p39 = scmp.eq.s32.totalorder %s20, 0
      %p40 = por %p38, %p39
      %p41 = scmp.ne.s32.totalorder %s30, %s33
      %p42 = scmp.eq.s32.totalorder %s25, 1
      %p43 = por %p41, %p42
      %p44 = scmp.ne.s32.totalorder %s33, %s34
      %p45 = scmp.eq.s32.totalorder %s25, 0
      %p46 = por %p44, %p45
      %p47 = scmp.ne.s32.totalorder %s33, %s34
      %p48 = scmp.eq.s32.totalorder %s26, 1
      %p49 = por %p47, %p48
      %p51 = scmp.ne.s32.totalorder %s34, %s50
      %p52 = scmp.eq.s32.totalorder %s26, 0
      %p53 = por %p51, %p52
      %s55 = sadd.s32 %s54, 1
      %p58 = scmp.eq.s32.totalorder %s20, 1
      %p59 = scmp.ne.s32.totalorder %s54, %s56
      %p60 = scmp.eq.s32.totalorder %s20, 0
      %p61 = por %p59, %p60
      %p62 = scmp.ne.s32.totalorder %s54, %s56
      %p63 = scmp.eq.s32.totalorder %s25, 1
      %p64 = por %p62, %p63
      %p65 = scmp.ne.s32.totalorder %s56, %s57
      %p66 = scmp.eq.s32.totalorder %s25, 0
      %p67 = por %p65, %p66
      %p68 = scmp.ne.s32.totalorder %s56, %s57
      %p69 = scmp.eq.s32.totalorder %s26, 1
      %p70 = por %p68, %p69
      %p72 = scmp.ne.s32.totalorder %s57, %s71
      %p73 = scmp.eq.s32.totalorder %s26, 0
      %p74 = por %p72, %p73
      %s76 = sadd.s32 %s75, 1
      %p79 = scmp.eq.s32.totalorder %s20, 1
      %p80 = scmp.ne.s32.totalorder %s75, %s77
      %p81 = scmp.eq.s32.totalorder %s20, 0
      %p82 = por %p80, %p81
      %p83 = scmp.ne.s32.totalorder %s75, %s77
      %p84 = scmp.eq.s32.totalorder %s25, 1
      %p85 = por %p83, %p84
      %p86 = scmp.ne.s32.totalorder %s77, %s78
      %p87 = scmp.eq.s32.totalorder %s25, 0
      %p88 = por %p86, %p87
      %p89 = scmp.ne.s32.totalorder %s77, %s78
      %p90 = scmp.eq.s32.totalorder %s26, 1
      %p91 = por %p89, %p90
      %p93 = scmp.ne.s32.totalorder %s78, %s92
      %p94 = scmp.eq.s32.totalorder %s26, 0
      %p95 = por %p93, %p94
      %s97 = sadd.s32 %s96, 1
      %p100 = scmp.eq.s32.totalorder %s20, 1
      %p101 = scmp.ne.s32.totalorder %s96, %s98
      %p102 = scmp.eq.s32.totalorder %s20, 0
      %p103 = por %p101, %p102
      %p104 = scmp.ne.s32.totalorder %s96, %s98
      %p105 = scmp.eq.s32.totalorder %s25, 1
      %p106 = por %p104, %p105
      %p107 = scmp.ne.s32.totalorder %s98, %s99
      %p108 = scmp.eq.s32.totalorder %s25, 0
      %p109 = por %p107, %p108
      %p110 = scmp.ne.s32.totalorder %s98, %s99
      %p111 = scmp.eq.s32.totalorder %s26, 1
      %p112 = por %p110, %p111
      %p114 = scmp.ne.s32.totalorder %s99, %s113
      %p115 = scmp.eq.s32.totalorder %s26, 0
      %p116 = por %p114, %p115
      %s118 = sadd.s32 %s117, 1
      %p121 = scmp.eq.s32.totalorder %s20, 1
      %p122 = scmp.ne.s32.totalorder %s117, %s119
      %p123 = scmp.eq.s32.totalorder %s20, 0
      %p124 = por %p122, %p123
      %p125 = scmp.ne.s32.totalorder %s117, %s119
      %p126 = scmp.eq.s32.totalorder %s25, 1
      %p127 = por %p125, %p126
      %p128 = scmp.ne.s32.totalorder %s119, %s120
      %p129 = scmp.eq.s32.totalorder %s25, 0
      %p130 = por %p128, %p129
      %p131 = scmp.ne.s32.totalorder %s119, %s120
      %p132 = scmp.eq.s32.totalorder %s26, 1
      %p133 = por %p131, %p132
      %p135 = scmp.ne.s32.totalorder %s120, %s134
      %p136 = scmp.eq.s32.totalorder %s26, 0
      %p137 = por %p135, %p136
      %s139 = sadd.s32 %s138, 1
      %p142 = scmp.eq.s32.totalorder %s20, 1
      %p143 = scmp.ne.s32.totalorder %s138, %s140
      %p144 = scmp.eq.s32.totalorder %s20, 0
      %p145 = por %p143, %p144
      %p146 = scmp.ne.s32.totalorder %s138, %s140
      %p147 = scmp.eq.s32.totalorder %s25, 1
      %p148 = por %p146, %p147
      %p149 = scmp.ne.s32.totalorder %s140, %s141
      %p150 = scmp.eq.s32.totalorder %s25, 0
      %p151 = por %p149, %p150
      %p152 = scmp.ne.s32.totalorder %s140, %s141
      %p153 = scmp.eq.s32.totalorder %s26, 1
      %p154 = por %p152, %p153
      %p156 = scmp.ne.s32.totalorder %s141, %s155
      %p157 = scmp.eq.s32.totalorder %s26, 0
      %p158 = por %p156, %p157
      %s160 = sadd.s32 %s159, 1
      %p163 = scmp.eq.s32.totalorder %s20, 1
      %p164 = scmp.ne.s32.totalorder %s159, %s161
      %p165 = scmp.eq.s32.totalorder %s20, 0
      %p166 = por %p164, %p165
      %p167 = scmp.ne.s32.totalorder %s159, %s161
      %p168 = scmp.eq.s32.totalorder %s25, 1
      %p169 = por %p167, %p168
      %p170 = scmp.ne.s32.totalorder %s161, %s162
      %p171 = scmp.eq.s32.totalorder %s25, 0
      %p172 = por %p170, %p171
      %p173 = scmp.ne.s32.totalorder %s161, %s162
      %p174 = scmp.eq.s32.totalorder %s26, 1
      %p175 = por %p173, %p174
      %p177 = scmp.ne.s32.totalorder %s162, %s176
      %p178 = scmp.eq.s32.totalorder %s26, 0
      %p179 = por %p177, %p178
      %s181 = sadd.s32 %s180, 1
      %p184 = scmp.eq.s32.totalorder %s20, 1
      %p185 = scmp.ne.s32.totalorder %s180, %s182
      %p186 = scmp.eq.s32.totalorder %s20, 0
      %p187 = por %p185, %p186
      %p188 = scmp.ne.s32.totalorder %s180, %s182
      %p189 = scmp.eq.s32.totalorder %s25, 1
      %p190 = por %p188, %p189
      %p191 = scmp.ne.s32.totalorder %s182, %s183
      %p192 = scmp.eq.s32.totalorder %s25, 0
      %p193 = por %p191, %p192
      %p194 = scmp.ne.s32.totalorder %s182, %s183
      %p195 = scmp.eq.s32.totalorder %s26, 1
      %p196 = por %p194, %p195
      %p198 = scmp.ne.s32.totalorder %s183, %s197
      %p199 = scmp.eq.s32.totalorder %s26, 0
      %p200 = por %p198, %p199
      %s202 = sadd.s32 %s201, 1
      %p205 = scmp.eq.s32.totalorder %s20, 1
      %p206 = scmp.ne.s32.totalorder %s201, %s203
      %p207 = scmp.eq.s32.totalorder %s20, 0
      %p208 = por %p206, %p207
      %p209 = scmp.ne.s32.totalorder %s201, %s203
      %p210 = scmp.eq.s32.totalorder %s25, 1
      %p211 = por %p209, %p210
      %p212 = scmp.ne.s32.totalorder %s203, %s204
      %p213 = scmp.eq.s32.totalorder %s25, 0
      %p214 = por %p212, %p213
      %p215 = scmp.ne.s32.totalorder %s203, %s204
      %p216 = scmp.eq.s32.totalorder %s26, 1
      %p217 = por %p215, %p216
      %p219 = scmp.ne.s32.totalorder %s204, %s218
      %p220 = scmp.eq.s32.totalorder %s26, 0
      %p221 = por %p219, %p220
      %s223 = sadd.s32 %s222, 1
      %p226 = scmp.eq.s32.totalorder %s20, 1
      %p227 = scmp.ne.s32.totalorder %s222, %s224
      %p228 = scmp.eq.s32.totalorder %s20, 0
      %p229 = por %p227, %p228
      %p230 = scmp.ne.s32.totalorder %s222, %s224
      %p231 = scmp.eq.s32.totalorder %s25, 1
      %p232 = por %p230, %p231
      %p233 = scmp.ne.s32.totalorder %s224, %s225
      %p234 = scmp.eq.s32.totalorder %s25, 0
      %p235 = por %p233, %p234
      %p236 = scmp.ne.s32.totalorder %s224, %s225
      %p237 = scmp.eq.s32.totalorder %s26, 1
      %p238 = por %p236, %p237
      %p240 = scmp.ne.s32.totalorder %s225, %s239
      %p241 = scmp.eq.s32.totalorder %s26, 0
      %p242 = por %p240, %p241
      %s243 = ssub.s32 %s20, %s27
      %p244 = scmp.eq.s32.totalorder %s243, 0
      %s246 = sadd.s32 %s245, 1
      %s247 = scalar_select %p244, %s245, %s246
      %p250 = pneg %p244
      %p251 = scmp.eq.s32.totalorder %s20, 1
      %p252 = por %p250, %p251
      %p253 = scmp.ne.s32.totalorder %s245, %s248
      %p254 = scmp.eq.s32.totalorder %s20, 0
      %p255 = por %p253, %p254
      %p256 = scmp.ne.s32.totalorder %s245, %s248
      %p257 = scmp.eq.s32.totalorder %s25, 1
      %p258 = por %p256, %p257
      %p259 = scmp.ne.s32.totalorder %s248, %s249
      %p260 = scmp.eq.s32.totalorder %s25, 0
      %p261 = por %p259, %p260
      %p262 = scmp.ne.s32.totalorder %s248, %s249
      %p263 = scmp.eq.s32.totalorder %s26, 1
      %p264 = por %p262, %p263
      %p266 = scmp.ne.s32.totalorder %s249, %s265
      %p267 = scmp.eq.s32.totalorder %s26, 0
      %p268 = por %p266, %p267
      %p269 = scmp.le.s32.totalorder 1, %s20
      %p270 = scmp.lt.s32.totalorder %s20, 3
      %p271 = pnand %p269, %p270
      %p272 = pneg %p271
      // Predicated region
      $region9: #{forward.1} parent=5 // pred_check
        _
      $region10: #{forward.1} parent=5 // pred_check_branch
        %274 = sbr.rel (%p271) target = $region12
      $region11: #{forward.1} parent=5 // pred_region
        %s275 = ssub.s32 %s20, 1
        // Predicated region
        $region13: #{forward.1} parent=11 // pred_check
          %p276 = pneg %p67
        $region14: #{forward.1} parent=11 // pred_check_branch
          %278 = sbr.rel (%p276) target = $region16
        $region15: #{forward.1} parent=11 // pred_region
          _
        $region16: #{forward.1} parent=11 // pred_fallthru
          _
        // Predicated region
        $region17: #{forward.1} parent=11 // pred_check
          %p279 = pneg %p88
        $region18: #{forward.1} parent=11 // pred_check_branch
          %281 = sbr.rel (%p279) target = $region20
        $region19: #{forward.1} parent=11 // pred_region
          _
        $region20: #{forward.1} parent=11 // pred_fallthru
          _
        // Predicated region
        $region21: #{forward.1} parent=11 // pred_check
          %p282 = pneg %p109
        $region22: #{forward.1} parent=11 // pred_check_branch
          %284 = sbr.rel (%p282) target = $region24
        $region23: #{forward.1} parent=11 // pred_region
          _
        $region24: #{forward.1} parent=11 // pred_fallthru
          _
        // Predicated region
        $region25: #{forward.1} parent=11 // pred_check
          %p285 = pneg %p130
        $region26: #{forward.1} parent=11 // pred_check_branch
          %287 = sbr.rel (%p285) target = $region28
        $region27: #{forward.1} parent=11 // pred_region
          _
        $region28: #{forward.1} parent=11 // pred_fallthru
          _
        // Predicated region
        $region29: #{forward.1} parent=11 // pred_check
          %p288 = pneg %p151
        $region30: #{forward.1} parent=11 // pred_check_branch
          %290 = sbr.rel (%p288) target = $region32
        $region31: #{forward.1} parent=11 // pred_region
          _
        $region32: #{forward.1} parent=11 // pred_fallthru
          _
        // Predicated region
        $region33: #{forward.1} parent=11 // pred_check
          %p291 = pneg %p172
        $region34: #{forward.1} parent=11 // pred_check_branch
          %293 = sbr.rel (%p291) target = $region36
        $region35: #{forward.1} parent=11 // pred_region
          _
        $region36: #{forward.1} parent=11 // pred_fallthru
          _
        // Predicated region
        $region37: #{forward.1} parent=11 // pred_check
          %p294 = pneg %p193
        $region38: #{forward.1} parent=11 // pred_check_branch
          %296 = sbr.rel (%p294) target = $region40
        $region39: #{forward.1} parent=11 // pred_region
          %s298 = ssub.s32 32768, 32768
          %299 = vsyncadd [#allocation5], %s298
          %s300 = sshll.u32 [#allocation4], 4
          %s301 = int_to_ptr.vmem [resolvable:$true] %s300
          %306 = dma.hbm_to_vmem [thread:$0]  %s7, 32768, %s301, [#allocation5], 128, 128, 8
        $region40: #{forward.1} parent=11 // pred_fallthru
          _
        // Predicated region
        $region41: #{forward.1} parent=11 // pred_check
          %p307 = pneg %p214
        $region42: #{forward.1} parent=11 // pred_check_branch
          %309 = sbr.rel (%p307) target = $region44
        $region43: #{forward.1} parent=11 // pred_region
          _
        $region44: #{forward.1} parent=11 // pred_fallthru
          _
        // Predicated region
        $region45: #{forward.1} parent=11 // pred_check
          %p310 = pneg %p235
        $region46: #{forward.1} parent=11 // pred_check_branch
          %312 = sbr.rel (%p310) target = $region48
        $region47: #{forward.1} parent=11 // pred_region
          _
        $region48: #{forward.1} parent=11 // pred_fallthru
          _
      $region12: #{forward.1} parent=5 // pred_fallthru
        _
      %p313 = scmp.lt.s32.totalorder %s20, 2
      // Predicated region
      $region49: #{forward.1} parent=5 // pred_check
        %p314 = pneg %p313
      $region50: #{forward.1} parent=5 // pred_check_branch
        %316 = sbr.rel (%p314) target = $region52
      $region51: #{forward.1} parent=5 // pred_region
        // Predicated region
        $region53: #{forward.1} parent=51 // pred_check
          %p317 = pneg %p40
        $region54: #{forward.1} parent=51 // pred_check_branch
          %319 = sbr.rel (%p317) target = $region56
        $region55: #{forward.1} parent=51 // pred_region
          %p320 = scmp.lt.s32.totalorder %s20, 1
          %s321 = scalar_select %p320, %s20, 1
          %s322 = smul.addr %s321, 4
          %s323 = smul.addr %s322, 4
          %s324 = scalar_lea.vmem %s0, %s323
        $region56: #{forward.1} parent=51 // pred_fallthru
          _
      $region52: #{forward.1} parent=5 // pred_fallthru
        _
      %p325 = scmp.le.s32.totalorder 1, %s20
      %p326 = scmp.lt.s32.totalorder %s20, 3
      %p327 = pnand %p325, %p326
      %p328 = pneg %p327
      // Predicated region
      $region57: #{forward.1} parent=5 // pred_check
        _
      $region58: #{forward.1} parent=5 // pred_check_branch
        %330 = sbr.rel (%p327) target = $region60
      $region59: #{forward.1} parent=5 // pred_region
        %s331 = ssub.s32 %s20, 1
        // Predicated region
        $region61: #{forward.1} parent=59 // pred_check
          %p332 = pneg %p193
        $region62: #{forward.1} parent=59 // pred_check_branch
          %334 = sbr.rel (%p332) target = $region64
        $region63: #{forward.1} parent=59 // pred_region
          %335 = dma.done [#allocation5], 32768
        $region64: #{forward.1} parent=59 // pred_fallthru
          _
        %p336 = scmp.lt.s32.totalorder %s25, 1
        %s337 = scalar_select %p336, %s25, 1
        %s338 = smul.addr %s337, 4
        %s339 = smul.addr %s338, 4
        %s340 = scalar_lea.vmem %s0, %s339
        %p341 = pneg %p46
        %p342 = pneg %p43
        %p343 = pneg %p67
        %p344 = pneg %p64
        %p345 = pneg %p88
        %p346 = pneg %p85
        %p347 = pneg %p109
        %p348 = pneg %p106
        %p349 = pneg %p130
        %p350 = pneg %p127
        %p351 = pneg %p151
        %p352 = pneg %p148
        %p353 = pneg %p172
        %p354 = pneg %p169
        %p355 = pneg %p193
        %p356 = pneg %p190
        %p357 = pneg %p214
        %p358 = pneg %p211
        %p359 = pneg %p235
        %p360 = pneg %p232
        %p361 = pneg %p261
        %p362 = pneg %p258
        %s363 = sand.u32 %s248, 1
        %s364 = scalar_lea.sflag [#allocation6], %s363
        %s365 = sand.u32 %s248, 1
        %s366 = smul.addr %s365, 2
        %s367 = scalar_lea.vmem [#allocation7], %s366
        %p368 = scmp.lt.s32.totalorder %s25, 1
        %s369 = scalar_select %p368, %s25, 1
        %s370 = smul.addr %s369, 4
        %s371 = smul.addr %s370, 4
        %s372 = scalar_lea.vmem %s0, %s371
        %373 = vst [vmem:[#allocation2] sm:$0xff] 0.0
        %374 = vst [vmem:[#allocation2 + $0x8] sm:$0xff] 0.0
        %v375 = vld [vmem:[%s372] sm:$0xff]
        %v377 = vcombine.high %v375, %v375
        %379 = vst [vmem:[#allocation2] sm:$0xf] %v375
        %380 = vst [vmem:[#allocation2 + $0x8] sm:$0xf] %v377
        %v381 = vld [vmem:[#allocation2] sm:$0xff]
        %v382 = vld [vmem:[#allocation2 + $0x8] sm:$0xff]
        %383 = vst [vmem:[#allocation3] sm:$0xff] %v381
        %384 = vst [vmem:[#allocation3 + $0x8] sm:$0xff] %v382
        %385 = vrot.lane.b32.xlu0 %v381, 127
        %v386 = vpop.permute.xlu0 %385
        %387 = vrot.lane.b32.xlu0 %v382, 127
        %v388 = vpop.permute.xlu0 %387
        %v389 = vlaneseq
        %v390 = vand.u32 %v389, 127
        %vm391 = vcmp.lt.s32.totalorder %v390, 127
        %v392 = vsel %vm391, %v386, %v388
        %v393 = vsel %vm391, %v388, %v386
        %394 = vst [vmem:[#allocation3 + $0x10] sm:$0xff] %v392
        %395 = vst [vmem:[#allocation3 + $0x18] sm:$0xff] %v393
        %396 = vrot.lane.b32.xlu0 %v381, 126
        %v397 = vpop.permute.xlu0 %396
        %398 = vrot.lane.b32.xlu0 %v382, 126
        %v399 = vpop.permute.xlu0 %398
        %vm400 = vcmp.lt.s32.totalorder %v390, 126
        %v401 = vsel %vm400, %v397, %v399
        %v402 = vsel %vm400, %v399, %v397
        %403 = vst [vmem:[#allocation3 + $0x20] sm:$0xff] %v401
        %404 = vst [vmem:[#allocation3 + $0x28] sm:$0xff] %v402
        %405 = vrot.lane.b32.xlu0 %v381, 125
        %v406 = vpop.permute.xlu0 %405
        %407 = vrot.lane.b32.xlu0 %v382, 125
        %v408 = vpop.permute.xlu0 %407
        %vm409 = vcmp.lt.s32.totalorder %v390, 125
        %v410 = vsel %vm409, %v406, %v408
        %v411 = vsel %vm409, %v408, %v406
        %412 = vst [vmem:[#allocation3 + $0x30] sm:$0xff] %v410
        %413 = vst [vmem:[#allocation3 + $0x38] sm:$0xff] %v411
        %414 = vrot.lane.b32.xlu0 %v381, 124
        %v415 = vpop.permute.xlu0 %414
        %416 = vrot.lane.b32.xlu0 %v382, 124
        %v417 = vpop.permute.xlu0 %416
        %vm418 = vcmp.lt.s32.totalorder %v390, 124
        %v419 = vsel %vm418, %v415, %v417
        %v420 = vsel %vm418, %v417, %v415
        %421 = vst [vmem:[#allocation3 + $0x40] sm:$0xff] %v419
        %422 = vst [vmem:[#allocation3 + $0x48] sm:$0xff] %v420
        %423 = vrot.lane.b32.xlu0 %v381, 123
        %v424 = vpop.permute.xlu0 %423
        %425 = vrot.lane.b32.xlu0 %v382, 123
        %v426 = vpop.permute.xlu0 %425
        %vm427 = vcmp.lt.s32.totalorder %v390, 123
        %v428 = vsel %vm427, %v424, %v426
        %v429 = vsel %vm427, %v426, %v424
        %430 = vst [vmem:[#allocation3 + $0x50] sm:$0xff] %v428
        %431 = vst [vmem:[#allocation3 + $0x58] sm:$0xff] %v429
        %432 = vrot.lane.b32.xlu0 %v381, 122
        %v433 = vpop.permute.xlu0 %432
        %434 = vrot.lane.b32.xlu0 %v382, 122
        %v435 = vpop.permute.xlu0 %434
        %vm436 = vcmp.lt.s32.totalorder %v390, 122
        %v437 = vsel %vm436, %v433, %v435
        %v438 = vsel %vm436, %v435, %v433
        %439 = vst [vmem:[#allocation3 + $0x60] sm:$0xff] %v437
        %440 = vst [vmem:[#allocation3 + $0x68] sm:$0xff] %v438
        %441 = vrot.lane.b32.xlu0 %v381, 112
        %v442 = vpop.permute.xlu0 %441
        %443 = vrot.lane.b32.xlu0 %v382, 112
        %v444 = vpop.permute.xlu0 %443
        %vm445 = vcmp.lt.s32.totalorder %v390, 112
        %v446 = vsel %vm445, %v442, %v444
        %v447 = vsel %vm445, %v444, %v442
        %448 = vst [vmem:[#allocation3 + $0x70] sm:$0xff] %v446
        %449 = vst [vmem:[#allocation3 + $0x78] sm:$0xff] %v447
        %450 = vrot.lane.b32.xlu0 %v381, 111
        %v451 = vpop.permute.xlu0 %450
        %452 = vrot.lane.b32.xlu0 %v382, 111
        %v453 = vpop.permute.xlu0 %452
        %vm454 = vcmp.lt.s32.totalorder %v390, 111
        %v455 = vsel %vm454, %v451, %v453
        %v456 = vsel %vm454, %v453, %v451
        %457 = vst [vmem:[#allocation3 + $0x80] sm:$0xff] %v455
        %458 = vst [vmem:[#allocation3 + $0x88] sm:$0xff] %v456
        %459 = vrot.lane.b32.xlu0 %v381, 110
        %v460 = vpop.permute.xlu0 %459
        %461 = vrot.lane.b32.xlu0 %v382, 110
        %v462 = vpop.permute.xlu0 %461
        %vm463 = vcmp.lt.s32.totalorder %v390, 110
        %v464 = vsel %vm463, %v460, %v462
        %v465 = vsel %vm463, %v462, %v460
        %466 = vst [vmem:[#allocation3 + $0x90] sm:$0xff] %v464
        %467 = vst [vmem:[#allocation3 + $0x98] sm:$0xff] %v465
        %468 = vrot.lane.b32.xlu0 %v381, 109
        %v469 = vpop.permute.xlu0 %468
        %470 = vrot.lane.b32.xlu0 %v382, 109
        %v471 = vpop.permute.xlu0 %470
        %vm472 = vcmp.lt.s32.totalorder %v390, 109
        %v473 = vsel %vm472, %v469, %v471
        %v474 = vsel %vm472, %v471, %v469
        %475 = vst [vmem:[#allocation3 + $0xa0] sm:$0xff] %v473
        %476 = vst [vmem:[#allocation3 + $0xa8] sm:$0xff] %v474
        %477 = vrot.lane.b32.xlu0 %v381, 108
        %v478 = vpop.permute.xlu0 %477
        %479 = vrot.lane.b32.xlu0 %v382, 108
        %v480 = vpop.permute.xlu0 %479
        %vm481 = vcmp.lt.s32.totalorder %v390, 108
        %v482 = vsel %vm481, %v478, %v480
        %v483 = vsel %vm481, %v480, %v478
        %484 = vst [vmem:[#allocation3 + $0xb0] sm:$0xff] %v482
        %485 = vst [vmem:[#allocation3 + $0xb8] sm:$0xff] %v483
        %486 = vrot.lane.b32.xlu0 %v381, 107
        %v487 = vpop.permute.xlu0 %486
        %488 = vrot.lane.b32.xlu0 %v382, 107
        %v489 = vpop.permute.xlu0 %488
        %vm490 = vcmp.lt.s32.totalorder %v390, 107
        %v491 = vsel %vm490, %v487, %v489
        %v492 = vsel %vm490, %v489, %v487
        %493 = vst [vmem:[#allocation3 + $0xc0] sm:$0xff] %v491
        %494 = vst [vmem:[#allocation3 + $0xc8] sm:$0xff] %v492
        %495 = vrot.lane.b32.xlu0 %v381, 106
        %v496 = vpop.permute.xlu0 %495
        %497 = vrot.lane.b32.xlu0 %v382, 106
        %v498 = vpop.permute.xlu0 %497
        %vm499 = vcmp.lt.s32.totalorder %v390, 106
        %v500 = vsel %vm499, %v496, %v498
        %v501 = vsel %vm499, %v498, %v496
        %502 = vst [vmem:[#allocation3 + $0xd0] sm:$0xff] %v500
        %503 = vst [vmem:[#allocation3 + $0xd8] sm:$0xff] %v501
        %504 = vrot.lane.b32.xlu0 %v381, 96
        %v505 = vpop.permute.xlu0 %504
        %506 = vrot.lane.b32.xlu0 %v382, 96
        %v507 = vpop.permute.xlu0 %506
        %vm508 = vcmp.lt.s32.totalorder %v390, 96
        %v509 = vsel %vm508, %v505, %v507
        %v510 = vsel %vm508, %v507, %v505
        %511 = vst [vmem:[#allocation3 + $0xe0] sm:$0xff] %v509
        %512 = vst [vmem:[#allocation3 + $0xe8] sm:$0xff] %v510
        %513 = vrot.lane.b32.xlu0 %v381, 95
        %v514 = vpop.permute.xlu0 %513
        %515 = vrot.lane.b32.xlu0 %v382, 95
        %v516 = vpop.permute.xlu0 %515
        %vm517 = vcmp.lt.s32.totalorder %v390, 95
        %v518 = vsel %vm517, %v514, %v516
        %v519 = vsel %vm517, %v516, %v514
        %520 = vst [vmem:[#allocation3 + $0xf0] sm:$0xff] %v518
        %521 = vst [vmem:[#allocation3 + $0xf8] sm:$0xff] %v519
        %522 = vrot.lane.b32.xlu0 %v381, 94
        %v523 = vpop.permute.xlu0 %522
        %524 = vrot.lane.b32.xlu0 %v382, 94
        %v525 = vpop.permute.xlu0 %524
        %vm526 = vcmp.lt.s32.totalorder %v390, 94
        %v527 = vsel %vm526, %v523, %v525
        %v528 = vsel %vm526, %v525, %v523
        %529 = vst [vmem:[#allocation3 + $0x100] sm:$0xff] %v527
        %530 = vst [vmem:[#allocation3 + $0x108] sm:$0xff] %v528
        %531 = vrot.lane.b32.xlu0 %v381, 93
        %v532 = vpop.permute.xlu0 %531
        %533 = vrot.lane.b32.xlu0 %v382, 93
        %v534 = vpop.permute.xlu0 %533
        %vm535 = vcmp.lt.s32.totalorder %v390, 93
        %v536 = vsel %vm535, %v532, %v534
        %v537 = vsel %vm535, %v534, %v532
        %538 = vst [vmem:[#allocation3 + $0x110] sm:$0xff] %v536
        %539 = vst [vmem:[#allocation3 + $0x118] sm:$0xff] %v537
        %540 = vrot.lane.b32.xlu0 %v381, 92
        %v541 = vpop.permute.xlu0 %540
        %542 = vrot.lane.b32.xlu0 %v382, 92
        %v543 = vpop.permute.xlu0 %542
        %vm544 = vcmp.lt.s32.totalorder %v390, 92
        %v545 = vsel %vm544, %v541, %v543
        %v546 = vsel %vm544, %v543, %v541
        %547 = vst [vmem:[#allocation3 + $0x120] sm:$0xff] %v545
        %548 = vst [vmem:[#allocation3 + $0x128] sm:$0xff] %v546
        %549 = vrot.lane.b32.xlu0 %v381, 91
        %v550 = vpop.permute.xlu0 %549
        %551 = vrot.lane.b32.xlu0 %v382, 91
        %v552 = vpop.permute.xlu0 %551
        %vm553 = vcmp.lt.s32.totalorder %v390, 91
        %v554 = vsel %vm553, %v550, %v552
        %v555 = vsel %vm553, %v552, %v550
        %556 = vst [vmem:[#allocation3 + $0x130] sm:$0xff] %v554
        %557 = vst [vmem:[#allocation3 + $0x138] sm:$0xff] %v555
        %558 = vrot.lane.b32.xlu0 %v381, 90
        %v559 = vpop.permute.xlu0 %558
        %560 = vrot.lane.b32.xlu0 %v382, 90
        %v561 = vpop.permute.xlu0 %560
        %vm562 = vcmp.lt.s32.totalorder %v390, 90
        %v563 = vsel %vm562, %v559, %v561
        %v564 = vsel %vm562, %v561, %v559
        %565 = vst [vmem:[#allocation3 + $0x140] sm:$0xff] %v563
        %566 = vst [vmem:[#allocation3 + $0x148] sm:$0xff] %v564
        %567 = vrot.lane.b32.xlu0 %v381, 80
        %v568 = vpop.permute.xlu0 %567
        %569 = vrot.lane.b32.xlu0 %v382, 80
        %v570 = vpop.permute.xlu0 %569
        %vm571 = vcmp.lt.s32.totalorder %v390, 80
        %v572 = vsel %vm571, %v568, %v570
        %v573 = vsel %vm571, %v570, %v568
        %574 = vst [vmem:[#allocation3 + $0x150] sm:$0xff] %v572
        %575 = vst [vmem:[#allocation3 + $0x158] sm:$0xff] %v573
        %576 = vrot.lane.b32.xlu0 %v381, 79
        %v577 = vpop.permute.xlu0 %576
        %578 = vrot.lane.b32.xlu0 %v382, 79
        %v579 = vpop.permute.xlu0 %578
        %vm580 = vcmp.lt.s32.totalorder %v390, 79
        %v581 = vsel %vm580, %v577, %v579
        %v582 = vsel %vm580, %v579, %v577
        %583 = vst [vmem:[#allocation3 + $0x160] sm:$0xff] %v581
        %584 = vst [vmem:[#allocation3 + $0x168] sm:$0xff] %v582
        %585 = vrot.lane.b32.xlu0 %v381, 78
        %v586 = vpop.permute.xlu0 %585
        %587 = vrot.lane.b32.xlu0 %v382, 78
        %v588 = vpop.permute.xlu0 %587
        %vm589 = vcmp.lt.s32.totalorder %v390, 78
        %v590 = vsel %vm589, %v586, %v588
        %v591 = vsel %vm589, %v588, %v586
        %592 = vst [vmem:[#allocation3 + $0x170] sm:$0xff] %v590
        %593 = vst [vmem:[#allocation3 + $0x178] sm:$0xff] %v591
        %594 = vrot.lane.b32.xlu0 %v381, 77
        %v595 = vpop.permute.xlu0 %594
        %596 = vrot.lane.b32.xlu0 %v382, 77
        %v597 = vpop.permute.xlu0 %596
        %vm598 = vcmp.lt.s32.totalorder %v390, 77
        %v599 = vsel %vm598, %v595, %v597
        %v600 = vsel %vm598, %v597, %v595
        %601 = vst [vmem:[#allocation3 + $0x180] sm:$0xff] %v599
        %602 = vst [vmem:[#allocation3 + $0x188] sm:$0xff] %v600
        %603 = vrot.lane.b32.xlu0 %v381, 76
        %v604 = vpop.permute.xlu0 %603
        %605 = vrot.lane.b32.xlu0 %v382, 76
        %v606 = vpop.permute.xlu0 %605
        %vm607 = vcmp.lt.s32.totalorder %v390, 76
        %v608 = vsel %vm607, %v604, %v606
        %v609 = vsel %vm607, %v606, %v604
        %610 = vst [vmem:[#allocation3 + $0x190] sm:$0xff] %v608
        %611 = vst [vmem:[#allocation3 + $0x198] sm:$0xff] %v609
        %612 = vrot.lane.b32.xlu0 %v381, 75
        %v613 = vpop.permute.xlu0 %612
        %614 = vrot.lane.b32.xlu0 %v382, 75
        %v615 = vpop.permute.xlu0 %614
        %vm616 = vcmp.lt.s32.totalorder %v390, 75
        %v617 = vsel %vm616, %v613, %v615
        %v618 = vsel %vm616, %v615, %v613
        %619 = vst [vmem:[#allocation3 + $0x1a0] sm:$0xff] %v617
        %620 = vst [vmem:[#allocation3 + $0x1a8] sm:$0xff] %v618
        %621 = vrot.lane.b32.xlu0 %v381, 74
        %v622 = vpop.permute.xlu0 %621
        %623 = vrot.lane.b32.xlu0 %v382, 74
        %v624 = vpop.permute.xlu0 %623
        %vm625 = vcmp.lt.s32.totalorder %v390, 74
        %v626 = vsel %vm625, %v622, %v624
        %v627 = vsel %vm625, %v624, %v622
        %628 = vst [vmem:[#allocation3 + $0x1b0] sm:$0xff] %v626
        %629 = vst [vmem:[#allocation3 + $0x1b8] sm:$0xff] %v627
        %630 = vrot.lane.b32.xlu0 %v381, 64
        %v631 = vpop.permute.xlu0 %630
        %632 = vrot.lane.b32.xlu0 %v382, 64
        %v633 = vpop.permute.xlu0 %632
        %vm634 = vcmp.lt.s32.totalorder %v390, 64
        %v635 = vsel %vm634, %v631, %v633
        %v636 = vsel %vm634, %v633, %v631
        %637 = vst [vmem:[#allocation3 + $0x1c0] sm:$0xff] %v635
        %638 = vst [vmem:[#allocation3 + $0x1c8] sm:$0xff] %v636
        %639 = vrot.lane.b32.xlu0 %v381, 63
        %v640 = vpop.permute.xlu0 %639
        %641 = vrot.lane.b32.xlu0 %v382, 63
        %v642 = vpop.permute.xlu0 %641
        %vm643 = vcmp.lt.s32.totalorder %v390, 63
        %v644 = vsel %vm643, %v640, %v642
        %v645 = vsel %vm643, %v642, %v640
        %646 = vst [vmem:[#allocation3 + $0x1d0] sm:$0xff] %v644
        %647 = vst [vmem:[#allocation3 + $0x1d8] sm:$0xff] %v645
        %648 = vrot.lane.b32.xlu0 %v381, 62
        %v649 = vpop.permute.xlu0 %648
        %650 = vrot.lane.b32.xlu0 %v382, 62
        %v651 = vpop.permute.xlu0 %650
        %vm652 = vcmp.lt.s32.totalorder %v390, 62
        %v653 = vsel %vm652, %v649, %v651
        %v654 = vsel %vm652, %v651, %v649
        %655 = vst [vmem:[#allocation3 + $0x1e0] sm:$0xff] %v653
        %656 = vst [vmem:[#allocation3 + $0x1e8] sm:$0xff] %v654
        %657 = vrot.lane.b32.xlu0 %v381, 61
        %v658 = vpop.permute.xlu0 %657
        %659 = vrot.lane.b32.xlu0 %v382, 61
        %v660 = vpop.permute.xlu0 %659
        %vm661 = vcmp.lt.s32.totalorder %v390, 61
        %v662 = vsel %vm661, %v658, %v660
        %v663 = vsel %vm661, %v660, %v658
        %664 = vst [vmem:[#allocation3 + $0x1f0] sm:$0xff] %v662
        %665 = vst [vmem:[#allocation3 + $0x1f8] sm:$0xff] %v663
        %666 = vrot.lane.b32.xlu0 %v381, 60
        %v667 = vpop.permute.xlu0 %666
        %668 = vrot.lane.b32.xlu0 %v382, 60
        %v669 = vpop.permute.xlu0 %668
        %vm670 = vcmp.lt.s32.totalorder %v390, 60
        %v671 = vsel %vm670, %v667, %v669
        %v672 = vsel %vm670, %v669, %v667
        %673 = vst [vmem:[#allocation3 + $0x200] sm:$0xff] %v671
        %674 = vst [vmem:[#allocation3 + $0x208] sm:$0xff] %v672
        %675 = vrot.lane.b32.xlu0 %v381, 59
        %v676 = vpop.permute.xlu0 %675
        %677 = vrot.lane.b32.xlu0 %v382, 59
        %v678 = vpop.permute.xlu0 %677
        %vm679 = vcmp.lt.s32.totalorder %v390, 59
        %v680 = vsel %vm679, %v676, %v678
        %v681 = vsel %vm679, %v678, %v676
        %682 = vst [vmem:[#allocation3 + $0x210] sm:$0xff] %v680
        %683 = vst [vmem:[#allocation3 + $0x218] sm:$0xff] %v681
        %684 = vrot.lane.b32.xlu0 %v381, 58
        %v685 = vpop.permute.xlu0 %684
        %686 = vrot.lane.b32.xlu0 %v382, 58
        %v687 = vpop.permute.xlu0 %686
        %vm688 = vcmp.lt.s32.totalorder %v390, 58
        %v689 = vsel %vm688, %v685, %v687
        %v690 = vsel %vm688, %v687, %v685
        %691 = vst [vmem:[#allocation3 + $0x220] sm:$0xff] %v689
        %692 = vst [vmem:[#allocation3 + $0x228] sm:$0xff] %v690
        %693 = vrot.lane.b32.xlu0 %v381, 48
        %v694 = vpop.permute.xlu0 %693
        %695 = vrot.lane.b32.xlu0 %v382, 48
        %v696 = vpop.permute.xlu0 %695
        %vm697 = vcmp.lt.s32.totalorder %v390, 48
        %v698 = vsel %vm697, %v694, %v696
        %v699 = vsel %vm697, %v696, %v694
        %700 = vst [vmem:[#allocation3 + $0x230] sm:$0xff] %v698
        %701 = vst [vmem:[#allocation3 + $0x238] sm:$0xff] %v699
        %702 = vrot.lane.b32.xlu0 %v381, 47
        %v703 = vpop.permute.xlu0 %702
        %704 = vrot.lane.b32.xlu0 %v382, 47
        %v705 = vpop.permute.xlu0 %704
        %vm706 = vcmp.lt.s32.totalorder %v390, 47
        %v707 = vsel %vm706, %v703, %v705
        %v708 = vsel %vm706, %v705, %v703
        %709 = vst [vmem:[#allocation3 + $0x240] sm:$0xff] %v707
        %710 = vst [vmem:[#allocation3 + $0x248] sm:$0xff] %v708
        %711 = vrot.lane.b32.xlu0 %v381, 46
        %v712 = vpop.permute.xlu0 %711
        %713 = vrot.lane.b32.xlu0 %v382, 46
        %v714 = vpop.permute.xlu0 %713
        %vm715 = vcmp.lt.s32.totalorder %v390, 46
        %v716 = vsel %vm715, %v712, %v714
        %v717 = vsel %vm715, %v714, %v712
        %718 = vst [vmem:[#allocation3 + $0x250] sm:$0xff] %v716
        %719 = vst [vmem:[#allocation3 + $0x258] sm:$0xff] %v717
        %720 = vrot.lane.b32.xlu0 %v381, 45
        %v721 = vpop.permute.xlu0 %720
        %722 = vrot.lane.b32.xlu0 %v382, 45
        %v723 = vpop.permute.xlu0 %722
        %vm724 = vcmp.lt.s32.totalorder %v390, 45
        %v725 = vsel %vm724, %v721, %v723
        %v726 = vsel %vm724, %v723, %v721
        %727 = vst [vmem:[#allocation3 + $0x260] sm:$0xff] %v725
        %728 = vst [vmem:[#allocation3 + $0x268] sm:$0xff] %v726
        %729 = vrot.lane.b32.xlu0 %v381, 44
        %v730 = vpop.permute.xlu0 %729
        %731 = vrot.lane.b32.xlu0 %v382, 44
        %v732 = vpop.permute.xlu0 %731
        %vm733 = vcmp.lt.s32.totalorder %v390, 44
        %v734 = vsel %vm733, %v730, %v732
        %v735 = vsel %vm733, %v732, %v730
        %736 = vst [vmem:[#allocation3 + $0x270] sm:$0xff] %v734
        %737 = vst [vmem:[#allocation3 + $0x278] sm:$0xff] %v735
        %738 = vrot.lane.b32.xlu0 %v381, 43
        %v739 = vpop.permute.xlu0 %738
        %740 = vrot.lane.b32.xlu0 %v382, 43
        %v741 = vpop.permute.xlu0 %740
        %vm742 = vcmp.lt.s32.totalorder %v390, 43
        %v743 = vsel %vm742, %v739, %v741
        %v744 = vsel %vm742, %v741, %v739
        %745 = vst [vmem:[#allocation3 + $0x280] sm:$0xff] %v743
        %746 = vst [vmem:[#allocation3 + $0x288] sm:$0xff] %v744
        %747 = vrot.lane.b32.xlu0 %v381, 42
        %v748 = vpop.permute.xlu0 %747
        %749 = vrot.lane.b32.xlu0 %v382, 42
        %v750 = vpop.permute.xlu0 %749
        %vm751 = vcmp.lt.s32.totalorder %v390, 42
        %v752 = vsel %vm751, %v748, %v750
        %v753 = vsel %vm751, %v750, %v748
        %754 = vst [vmem:[#allocation3 + $0x290] sm:$0xff] %v752
        %755 = vst [vmem:[#allocation3 + $0x298] sm:$0xff] %v753
        %756 = vrot.lane.b32.xlu0 %v381, 32
        %v757 = vpop.permute.xlu0 %756
        %758 = vrot.lane.b32.xlu0 %v382, 32
        %v759 = vpop.permute.xlu0 %758
        %vm760 = vcmp.lt.s32.totalorder %v390, 32
        %v761 = vsel %vm760, %v757, %v759
        %v762 = vsel %vm760, %v759, %v757
        %763 = vst [vmem:[#allocation3 + $0x2a0] sm:$0xff] %v761
        %764 = vst [vmem:[#allocation3 + $0x2a8] sm:$0xff] %v762
        %765 = vrot.lane.b32.xlu0 %v381, 31
        %v766 = vpop.permute.xlu0 %765
        %767 = vrot.lane.b32.xlu0 %v382, 31
        %v768 = vpop.permute.xlu0 %767
        %vm769 = vcmp.lt.s32.totalorder %v390, 31
        %v770 = vsel %vm769, %v766, %v768
        %v771 = vsel %vm769, %v768, %v766
        %772 = vst [vmem:[#allocation3 + $0x2b0] sm:$0xff] %v770
        %773 = vst [vmem:[#allocation3 + $0x2b8] sm:$0xff] %v771
        %774 = vrot.lane.b32.xlu0 %v381, 30
        %v775 = vpop.permute.xlu0 %774
        %776 = vrot.lane.b32.xlu0 %v382, 30
        %v777 = vpop.permute.xlu0 %776
        %vm778 = vcmp.lt.s32.totalorder %v390, 30
        %v779 = vsel %vm778, %v775, %v777
        %v780 = vsel %vm778, %v777, %v775
        %781 = vst [vmem:[#allocation3 + $0x2c0] sm:$0xff] %v779
        %782 = vst [vmem:[#allocation3 + $0x2c8] sm:$0xff] %v780
        %783 = vrot.lane.b32.xlu0 %v381, 29
        %v784 = vpop.permute.xlu0 %783
        %785 = vrot.lane.b32.xlu0 %v382, 29
        %v786 = vpop.permute.xlu0 %785
        %vm787 = vcmp.lt.s32.totalorder %v390, 29
        %v788 = vsel %vm787, %v784, %v786
        %v789 = vsel %vm787, %v786, %v784
        %790 = vst [vmem:[#allocation3 + $0x2d0] sm:$0xff] %v788
        %791 = vst [vmem:[#allocation3 + $0x2d8] sm:$0xff] %v789
        %792 = vrot.lane.b32.xlu0 %v381, 28
        %v793 = vpop.permute.xlu0 %792
        %794 = vrot.lane.b32.xlu0 %v382, 28
        %v795 = vpop.permute.xlu0 %794
        %vm796 = vcmp.lt.s32.totalorder %v390, 28
        %v797 = vsel %vm796, %v793, %v795
        %v798 = vsel %vm796, %v795, %v793
        %799 = vst [vmem:[#allocation3 + $0x2e0] sm:$0xff] %v797
        %800 = vst [vmem:[#allocation3 + $0x2e8] sm:$0xff] %v798
        %801 = vrot.lane.b32.xlu0 %v381, 27
        %v802 = vpop.permute.xlu0 %801
        %803 = vrot.lane.b32.xlu0 %v382, 27
        %v804 = vpop.permute.xlu0 %803
        %vm805 = vcmp.lt.s32.totalorder %v390, 27
        %v806 = vsel %vm805, %v802, %v804
        %v807 = vsel %vm805, %v804, %v802
        %808 = vst [vmem:[#allocation3 + $0x2f0] sm:$0xff] %v806
        %809 = vst [vmem:[#allocation3 + $0x2f8] sm:$0xff] %v807
        %810 = vrot.lane.b32.xlu0 %v381, 26
        %v811 = vpop.permute.xlu0 %810
        %812 = vrot.lane.b32.xlu0 %v382, 26
        %v813 = vpop.permute.xlu0 %812
        %vm814 = vcmp.lt.s32.totalorder %v390, 26
        %v815 = vsel %vm814, %v811, %v813
        %v816 = vsel %vm814, %v813, %v811
        %817 = vst [vmem:[#allocation3 + $0x300] sm:$0xff] %v815
        %818 = vst [vmem:[#allocation3 + $0x308] sm:$0xff] %v816
        %v819 = vld [vmem:[#allocation3] sm:$0xff]
        %v820 = vld [vmem:[#allocation3 + $0x8] sm:$0xff]
        %v821 = vld [vmem:[#allocation3 + $0x10] sm:$0xff]
        %v822 = vld [vmem:[#allocation3 + $0x18] sm:$0xff]
        %v823 = vld [vmem:[#allocation3 + $0x20] sm:$0xff]
        %v824 = vld [vmem:[#allocation3 + $0x28] sm:$0xff]
        %v825 = vld [vmem:[#allocation3 + $0x30] sm:$0xff]
        %v826 = vld [vmem:[#allocation3 + $0x38] sm:$0xff]
        %v827 = vld [vmem:[#allocation3 + $0x40] sm:$0xff]
        %v828 = vld [vmem:[#allocation3 + $0x48] sm:$0xff]
        %v829 = vld [vmem:[#allocation3 + $0x50] sm:$0xff]
        %v830 = vld [vmem:[#allocation3 + $0x58] sm:$0xff]
        %v831 = vld [vmem:[#allocation3 + $0x60] sm:$0xff]
        %v832 = vld [vmem:[#allocation3 + $0x68] sm:$0xff]
        %v833 = vld [vmem:[#allocation3 + $0x70] sm:$0xff]
        %v834 = vld [vmem:[#allocation3 + $0x78] sm:$0xff]
        %v835 = vld [vmem:[#allocation3 + $0x80] sm:$0xff]
        %v836 = vld [vmem:[#allocation3 + $0x88] sm:$0xff]
        %v837 = vld [vmem:[#allocation3 + $0x90] sm:$0xff]
        %v838 = vld [vmem:[#allocation3 + $0x98] sm:$0xff]
        %v839 = vld [vmem:[#allocation3 + $0xa0] sm:$0xff]
        %v840 = vld [vmem:[#allocation3 + $0xa8] sm:$0xff]
        %v841 = vld [vmem:[#allocation3 + $0xb0] sm:$0xff]
        %v842 = vld [vmem:[#allocation3 + $0xb8] sm:$0xff]
        %v843 = vld [vmem:[#allocation3 + $0xc0] sm:$0xff]
        %v844 = vld [vmem:[#allocation3 + $0xc8] sm:$0xff]
        %v845 = vld [vmem:[#allocation3 + $0xd0] sm:$0xff]
        %v846 = vld [vmem:[#allocation3 + $0xd8] sm:$0xff]
        %v847 = vld [vmem:[#allocation3 + $0xe0] sm:$0xff]
        %v848 = vld [vmem:[#allocation3 + $0xe8] sm:$0xff]
        %v849 = vld [vmem:[#allocation3 + $0xf0] sm:$0xff]
        %v850 = vld [vmem:[#allocation3 + $0xf8] sm:$0xff]
        %v851 = vld [vmem:[#allocation3 + $0x100] sm:$0xff]
        %v852 = vld [vmem:[#allocation3 + $0x108] sm:$0xff]
        %v853 = vld [vmem:[#allocation3 + $0x110] sm:$0xff]
        %v854 = vld [vmem:[#allocation3 + $0x118] sm:$0xff]
        %v855 = vld [vmem:[#allocation3 + $0x120] sm:$0xff]
        %v856 = vld [vmem:[#allocation3 + $0x128] sm:$0xff]
        %v857 = vld [vmem:[#allocation3 + $0x130] sm:$0xff]
        %v858 = vld [vmem:[#allocation3 + $0x138] sm:$0xff]
        %v859 = vld [vmem:[#allocation3 + $0x140] sm:$0xff]
        %v860 = vld [vmem:[#allocation3 + $0x148] sm:$0xff]
        %v861 = vld [vmem:[#allocation3 + $0x150] sm:$0xff]
        %v862 = vld [vmem:[#allocation3 + $0x158] sm:$0xff]
        %v863 = vld [vmem:[#allocation3 + $0x160] sm:$0xff]
        %v864 = vld [vmem:[#allocation3 + $0x168] sm:$0xff]
        %v865 = vld [vmem:[#allocation3 + $0x170] sm:$0xff]
        %v866 = vld [vmem:[#allocation3 + $0x178] sm:$0xff]
        %v867 = vld [vmem:[#allocation3 + $0x180] sm:$0xff]
        %v868 = vld [vmem:[#allocation3 + $0x188] sm:$0xff]
        %v869 = vld [vmem:[#allocation3 + $0x190] sm:$0xff]
        %v870 = vld [vmem:[#allocation3 + $0x198] sm:$0xff]
        %v871 = vld [vmem:[#allocation3 + $0x1a0] sm:$0xff]
        %v872 = vld [vmem:[#allocation3 + $0x1a8] sm:$0xff]
        %v873 = vld [vmem:[#allocation3 + $0x1b0] sm:$0xff]
        %v874 = vld [vmem:[#allocation3 + $0x1b8] sm:$0xff]
        %v875 = vld [vmem:[#allocation3 + $0x1c0] sm:$0xff]
        %v876 = vld [vmem:[#allocation3 + $0x1c8] sm:$0xff]
        %v877 = vld [vmem:[#allocation3 + $0x1d0] sm:$0xff]
        %v878 = vld [vmem:[#allocation3 + $0x1d8] sm:$0xff]
        %v879 = vld [vmem:[#allocation3 + $0x1e0] sm:$0xff]
        %v880 = vld [vmem:[#allocation3 + $0x1e8] sm:$0xff]
        %v881 = vld [vmem:[#allocation3 + $0x1f0] sm:$0xff]
        %v882 = vld [vmem:[#allocation3 + $0x1f8] sm:$0xff]
        %v883 = vld [vmem:[#allocation3 + $0x200] sm:$0xff]
        %v884 = vld [vmem:[#allocation3 + $0x208] sm:$0xff]
        %v885 = vld [vmem:[#allocation3 + $0x210] sm:$0xff]
        %v886 = vld [vmem:[#allocation3 + $0x218] sm:$0xff]
        %v887 = vld [vmem:[#allocation3 + $0x220] sm:$0xff]
        %v888 = vld [vmem:[#allocation3 + $0x228] sm:$0xff]
        %v889 = vld [vmem:[#allocation3 + $0x230] sm:$0xff]
        %v890 = vld [vmem:[#allocation3 + $0x238] sm:$0xff]
        %v891 = vld [vmem:[#allocation3 + $0x240] sm:$0xff]
        %v892 = vld [vmem:[#allocation3 + $0x248] sm:$0xff]
        %v893 = vld [vmem:[#allocation3 + $0x250] sm:$0xff]
        %v894 = vld [vmem:[#allocation3 + $0x258] sm:$0xff]
        %v895 = vld [vmem:[#allocation3 + $0x260] sm:$0xff]
        %v896 = vld [vmem:[#allocation3 + $0x268] sm:$0xff]
        %v897 = vld [vmem:[#allocation3 + $0x270] sm:$0xff]
        %v898 = vld [vmem:[#allocation3 + $0x278] sm:$0xff]
        %v899 = vld [vmem:[#allocation3 + $0x280] sm:$0xff]
        %v900 = vld [vmem:[#allocation3 + $0x288] sm:$0xff]
        %v901 = vld [vmem:[#allocation3 + $0x290] sm:$0xff]
        %v902 = vld [vmem:[#allocation3 + $0x298] sm:$0xff]
        %v903 = vld [vmem:[#allocation3 + $0x2a0] sm:$0xff]
        %v904 = vld [vmem:[#allocation3 + $0x2a8] sm:$0xff]
        %v905 = vld [vmem:[#allocation3 + $0x2b0] sm:$0xff]
        %v906 = vld [vmem:[#allocation3 + $0x2b8] sm:$0xff]
        %v907 = vld [vmem:[#allocation3 + $0x2c0] sm:$0xff]
        %v908 = vld [vmem:[#allocation3 + $0x2c8] sm:$0xff]
        %v909 = vld [vmem:[#allocation3 + $0x2d0] sm:$0xff]
        %v910 = vld [vmem:[#allocation3 + $0x2d8] sm:$0xff]
        %v911 = vld [vmem:[#allocation3 + $0x2e0] sm:$0xff]
        %v912 = vld [vmem:[#allocation3 + $0x2e8] sm:$0xff]
        %v913 = vld [vmem:[#allocation3 + $0x2f0] sm:$0xff]
        %v914 = vld [vmem:[#allocation3 + $0x2f8] sm:$0xff]
        %v915 = vld [vmem:[#allocation3 + $0x300] sm:$0xff]
        %v916 = vld [vmem:[#allocation3 + $0x308] sm:$0xff]
        %v917 = vld [vmem:[%s1] sm:$0xff]
        %v918 = vld [vmem:[%s1 + $0x8] sm:$0xff]
        %v919 = vld [vmem:[%s1 + $0x10] sm:$0xff]
        %v920 = vld [vmem:[%s1 + $0x18] sm:$0xff]
        %vm921 = vcmask 64512
        %v923 = vsel %vm921, %v920, 0
        %925 = vmatprep.subr.mxu0 %v850
        %926 = vmatpush1.msra.mxu0 %v849
        %927 = vmatprep.subr.mxu0 %v848
        %928 = vmatpush1.msra.mxu0 %v847
        %929 = vmatprep.subr.mxu0 %v846
        %930 = vmatpush1.msra.mxu0 %v845
        %931 = vmatprep.subr.mxu0 %v844
        %932 = vmatpush1.msra.mxu0 %v843
        %933 = vmatprep.subr.mxu0 %v842
        %934 = vmatpush1.msra.mxu0 %v841
        %935 = vmatprep.subr.mxu0 %v840
        %936 = vmatpush1.msra.mxu0 %v839
        %937 = vmatprep.subr.mxu0 %v838
        %938 = vmatpush1.msra.mxu0 %v837
        %939 = vmatprep.subr.mxu0 %v836
        %940 = vmatpush1.msra.mxu0 %v835
        %941 = vmatprep.subr.mxu0 %v834
        %942 = vmatpush1.msra.mxu0 %v833
        %943 = vmatprep.subr.mxu0 %v832
        %944 = vmatpush1.msra.mxu0 %v831
        %945 = vmatprep.subr.mxu0 %v830
        %946 = vmatpush1.msra.mxu0 %v829
        %947 = vmatprep.subr.mxu0 %v828
        %948 = vmatpush1.msra.mxu0 %v827
        %949 = vmatprep.subr.mxu0 %v826
        %950 = vmatpush1.msra.mxu0 %v825
        %951 = vmatprep.subr.mxu0 %v824
        %952 = vmatpush1.msra.mxu0 %v823
        %953 = vmatprep.subr.mxu0 %v822
        %954 = vmatpush1.msra.mxu0 %v821
        %955 = vmatprep.subr.mxu0 %v820
        %956 = vmatpush1.msra.mxu0 %v819
        %957 = vmatprep.subr.mxu0 %v882
        %958 = vmatpush2.msra.mxu0 %v881
        %959 = vmatprep.subr.mxu0 %v880
        %960 = vmatpush2.msra.mxu0 %v879
        %961 = vmatprep.subr.mxu0 %v878
        %962 = vmatpush2.msra.mxu0 %v877
        %963 = vmatprep.subr.mxu0 %v876
        %964 = vmatpush2.msra.mxu0 %v875
        %965 = vmatprep.subr.mxu0 %v874
        %966 = vmatpush2.msra.mxu0 %v873
        %967 = vmatprep.subr.mxu0 %v872
        %968 = vmatpush2.msra.mxu0 %v871
        %969 = vmatprep.subr.mxu0 %v870
        %970 = vmatpush2.msra.mxu0 %v869
        %971 = vmatprep.subr.mxu0 %v868
        %972 = vmatpush2.msra.mxu0 %v867
        %973 = vmatprep.subr.mxu0 %v866
        %974 = vmatpush2.msra.mxu0 %v865
        %975 = vmatprep.subr.mxu0 %v864
        %976 = vmatpush2.msra.mxu0 %v863
        %977 = vmatprep.subr.mxu0 %v862
        %978 = vmatpush2.msra.mxu0 %v861
        %979 = vmatprep.subr.mxu0 %v860
        %980 = vmatpush2.msra.mxu0 %v859
        %981 = vmatprep.subr.mxu0 %v858
        %982 = vmatpush2.msra.mxu0 %v857
        %983 = vmatprep.subr.mxu0 %v856
        %984 = vmatpush2.msra.mxu0 %v855
        %985 = vmatprep.subr.mxu0 %v854
        %986 = vmatpush2.msra.mxu0 %v853
        %987 = vmatprep.subr.mxu0 %v852
        %988 = vmatpush2.msra.mxu0 %v851
        %989 = vmatprep.mubr.f32.mxu0 %v918
        %990 = vmatmul.mubr.f32.gmra.mxu0 %v917
        %v991 = vpop.f32.mrf.mxu0
        %v992 = vadd.f32 0.0, %v991
        %v993 = vpop.f32.mrf.mxu0
        %v994 = vadd.f32 0.0, %v993
        %995 = vdwg.mxu0
        %996 = vmatprep.subr.mxu0 %v914
        %997 = vmatpush1.msra.mxu0 %v913
        %998 = vmatprep.subr.mxu0 %v912
        %999 = vmatpush1.msra.mxu0 %v911
        %1000 = vmatprep.subr.mxu0 %v910
        %1001 = vmatpush1.msra.mxu0 %v909
        %1002 = vmatprep.subr.mxu0 %v908
        %1003 = vmatpush1.msra.mxu0 %v907
        %1004 = vmatprep.subr.mxu0 %v906
        %1005 = vmatpush1.msra.mxu0 %v905
        %1006 = vmatprep.subr.mxu0 %v904
        %1007 = vmatpush1.msra.mxu0 %v903
        %1008 = vmatprep.subr.mxu0 %v902
        %1009 = vmatpush1.msra.mxu0 %v901
        %1010 = vmatprep.subr.mxu0 %v900
        %1011 = vmatpush1.msra.mxu0 %v899
        %1012 = vmatprep.subr.mxu0 %v898
        %1013 = vmatpush1.msra.mxu0 %v897
        %1014 = vmatprep.subr.mxu0 %v896
        %1015 = vmatpush1.msra.mxu0 %v895
        %1016 = vmatprep.subr.mxu0 %v894
        %1017 = vmatpush1.msra.mxu0 %v893
        %1018 = vmatprep.subr.mxu0 %v892
        %1019 = vmatpush1.msra.mxu0 %v891
        %1020 = vmatprep.subr.mxu0 %v890
        %1021 = vmatpush1.msra.mxu0 %v889
        %1022 = vmatprep.subr.mxu0 %v888
        %1023 = vmatpush1.msra.mxu0 %v887
        %1024 = vmatprep.subr.mxu0 %v886
        %1025 = vmatpush1.msra.mxu0 %v885
        %1026 = vmatprep.subr.mxu0 %v884
        %1027 = vmatpush1.msra.mxu0 %v883
        %1028 = vmatprep.subr.mxu0 0.0
        %1029 = vmatpush2.msra.mxu0 0.0
        %1030 = vmatprep.subr.mxu0 0.0
        %1031 = vmatpush2.msra.mxu0 0.0
        %1032 = vmatprep.subr.mxu0 0.0
        %1033 = vmatpush2.msra.mxu0 0.0
        %1034 = vmatprep.subr.mxu0 0.0
        %1035 = vmatpush2.msra.mxu0 0.0
        %1036 = vmatprep.subr.mxu0 0.0
        %1037 = vmatpush2.msra.mxu0 0.0
        %1038 = vmatprep.subr.mxu0 0.0
        %1039 = vmatpush2.msra.mxu0 0.0
        %1040 = vmatprep.subr.mxu0 0.0
        %1041 = vmatpush2.msra.mxu0 0.0
        %1042 = vmatprep.subr.mxu0 0.0
        %1043 = vmatpush2.msra.mxu0 0.0
        %1044 = vmatprep.subr.mxu0 0.0
        %1045 = vmatpush2.msra.mxu0 0.0
        %1046 = vmatprep.subr.mxu0 0.0
        %1047 = vmatpush2.msra.mxu0 0.0
        %1048 = vmatprep.subr.mxu0 0.0
        %1049 = vmatpush2.msra.mxu0 0.0
        %1050 = vmatprep.subr.mxu0 0.0
        %1051 = vmatpush2.msra.mxu0 0.0
        %1052 = vmatprep.subr.mxu0 0.0
        %1053 = vmatpush2.msra.mxu0 0.0
        %1054 = vmatprep.subr.mxu0 0.0
        %1055 = vmatpush2.msra.mxu0 0.0
        %1056 = vmatprep.subr.mxu0 0.0
        %1057 = vmatpush2.msra.mxu0 0.0
        %1058 = vmatprep.subr.mxu0 %v916
        %1059 = vmatpush2.msra.mxu0 %v915
        %1060 = vmatprep.mubr.f32.mxu0 %v923
        %1061 = vmatmul.mubr.f32.gmra.mxu0 %v919
        %v1062 = vpop.f32.mrf.mxu0
        %v1063 = vadd.f32 %v992, %v1062
        %v1064 = vpop.f32.mrf.mxu0
        %v1065 = vadd.f32 %v994, %v1064
        %1066 = vdwg.mxu0
        %v1067 = vld [vmem:[%s2] sm:$0xff]
        %v1068 = vld [vmem:[%s2 + $0x8] sm:$0xff]
        %v1069 = vmul.f32 %v1063, %v1067
        %v1070 = vmul.f32 %v1065, %v1068
        %v1071 = vld [vmem:[%s3] sm:$0xff]
        %v1072 = vld [vmem:[%s3 + $0x8] sm:$0xff]
        %v1073 = vadd.f32 %v1069, %v1071
        %v1074 = vadd.f32 %v1070, %v1072
        %v1075 = vmax.f32 %v1073, 0.0
        %v1076 = vmax.f32 %v1074, 0.0
        %1077 = vst [vmem:[#allocation3] sm:$0xff] %v1075
        %1078 = vst [vmem:[#allocation3 + $0x8] sm:$0xff] %v1076
        %1079 = vrot.lane.b32.xlu0 %v1075, 127
        %v1080 = vpop.permute.xlu0 %1079
        %1081 = vrot.lane.b32.xlu0 %v1076, 127
        %v1082 = vpop.permute.xlu0 %1081
        %v1083 = vsel %vm391, %v1080, %v1082
        %v1084 = vsel %vm391, %v1082, %v1080
        %1085 = vst [vmem:[#allocation3 + $0x10] sm:$0xff] %v1083
        %1086 = vst [vmem:[#allocation3 + $0x18] sm:$0xff] %v1084
        %1087 = vrot.lane.b32.xlu0 %v1075, 126
        %v1088 = vpop.permute.xlu0 %1087
        %1089 = vrot.lane.b32.xlu0 %v1076, 126
        %v1090 = vpop.permute.xlu0 %1089
        %v1091 = vsel %vm400, %v1088, %v1090
        %v1092 = vsel %vm400, %v1090, %v1088
        %1093 = vst [vmem:[#allocation3 + $0x20] sm:$0xff] %v1091
        %1094 = vst [vmem:[#allocation3 + $0x28] sm:$0xff] %v1092
        %1095 = vrot.lane.b32.xlu0 %v1075, 125
        %v1096 = vpop.permute.xlu0 %1095
        %1097 = vrot.lane.b32.xlu0 %v1076, 125
        %v1098 = vpop.permute.xlu0 %1097
        %v1099 = vsel %vm409, %v1096, %v1098
        %v1100 = vsel %vm409, %v1098, %v1096
        %1101 = vst [vmem:[#allocation3 + $0x30] sm:$0xff] %v1099
        %1102 = vst [vmem:[#allocation3 + $0x38] sm:$0xff] %v1100
        %1103 = vrot.lane.b32.xlu0 %v1075, 124
        %v1104 = vpop.permute.xlu0 %1103
        %1105 = vrot.lane.b32.xlu0 %v1076, 124
        %v1106 = vpop.permute.xlu0 %1105
        %v1107 = vsel %vm418, %v1104, %v1106
        %v1108 = vsel %vm418, %v1106, %v1104
        %1109 = vst [vmem:[#allocation3 + $0x40] sm:$0xff] %v1107
        %1110 = vst [vmem:[#allocation3 + $0x48] sm:$0xff] %v1108
        %1111 = vrot.lane.b32.xlu0 %v1075, 112
        %v1112 = vpop.permute.xlu0 %1111
        %1113 = vrot.lane.b32.xlu0 %v1076, 112
        %v1114 = vpop.permute.xlu0 %1113
        %v1115 = vsel %vm445, %v1112, %v1114
        %v1116 = vsel %vm445, %v1114, %v1112
        %1117 = vst [vmem:[#allocation3 + $0x50] sm:$0xff] %v1115
        %1118 = vst [vmem:[#allocation3 + $0x58] sm:$0xff] %v1116
        %1119 = vrot.lane.b32.xlu0 %v1075, 111
        %v1120 = vpop.permute.xlu0 %1119
        %1121 = vrot.lane.b32.xlu0 %v1076, 111
        %v1122 = vpop.permute.xlu0 %1121
        %v1123 = vsel %vm454, %v1120, %v1122
        %v1124 = vsel %vm454, %v1122, %v1120
        %1125 = vst [vmem:[#allocation3 + $0x60] sm:$0xff] %v1123
        %1126 = vst [vmem:[#allocation3 + $0x68] sm:$0xff] %v1124
        %1127 = vrot.lane.b32.xlu0 %v1075, 110
        %v1128 = vpop.permute.xlu0 %1127
        %1129 = vrot.lane.b32.xlu0 %v1076, 110
        %v1130 = vpop.permute.xlu0 %1129
        %v1131 = vsel %vm463, %v1128, %v1130
        %v1132 = vsel %vm463, %v1130, %v1128
        %1133 = vst [vmem:[#allocation3 + $0x70] sm:$0xff] %v1131
        %1134 = vst [vmem:[#allocation3 + $0x78] sm:$0xff] %v1132
        %1135 = vrot.lane.b32.xlu0 %v1075, 109
        %v1136 = vpop.permute.xlu0 %1135
        %1137 = vrot.lane.b32.xlu0 %v1076, 109
        %v1138 = vpop.permute.xlu0 %1137
        %v1139 = vsel %vm472, %v1136, %v1138
        %v1140 = vsel %vm472, %v1138, %v1136
        %1141 = vst [vmem:[#allocation3 + $0x80] sm:$0xff] %v1139
        %1142 = vst [vmem:[#allocation3 + $0x88] sm:$0xff] %v1140
        %1143 = vrot.lane.b32.xlu0 %v1075, 108
        %v1144 = vpop.permute.xlu0 %1143
        %1145 = vrot.lane.b32.xlu0 %v1076, 108
        %v1146 = vpop.permute.xlu0 %1145
        %v1147 = vsel %vm481, %v1144, %v1146
        %v1148 = vsel %vm481, %v1146, %v1144
        %1149 = vst [vmem:[#allocation3 + $0x90] sm:$0xff] %v1147
        %1150 = vst [vmem:[#allocation3 + $0x98] sm:$0xff] %v1148
        %1151 = vrot.lane.b32.xlu0 %v1075, 96
        %v1152 = vpop.permute.xlu0 %1151
        %1153 = vrot.lane.b32.xlu0 %v1076, 96
        %v1154 = vpop.permute.xlu0 %1153
        %v1155 = vsel %vm508, %v1152, %v1154
        %v1156 = vsel %vm508, %v1154, %v1152
        %1157 = vst [vmem:[#allocation3 + $0xa0] sm:$0xff] %v1155
        %1158 = vst [vmem:[#allocation3 + $0xa8] sm:$0xff] %v1156
        %1159 = vrot.lane.b32.xlu0 %v1075, 95
        %v1160 = vpop.permute.xlu0 %1159
        %1161 = vrot.lane.b32.xlu0 %v1076, 95
        %v1162 = vpop.permute.xlu0 %1161
        %v1163 = vsel %vm517, %v1160, %v1162
        %v1164 = vsel %vm517, %v1162, %v1160
        %1165 = vst [vmem:[#allocation3 + $0xb0] sm:$0xff] %v1163
        %1166 = vst [vmem:[#allocation3 + $0xb8] sm:$0xff] %v1164
        %1167 = vrot.lane.b32.xlu0 %v1075, 94
        %v1168 = vpop.permute.xlu0 %1167
        %1169 = vrot.lane.b32.xlu0 %v1076, 94
        %v1170 = vpop.permute.xlu0 %1169
        %v1171 = vsel %vm526, %v1168, %v1170
        %v1172 = vsel %vm526, %v1170, %v1168
        %1173 = vst [vmem:[#allocation3 + $0xc0] sm:$0xff] %v1171
        %1174 = vst [vmem:[#allocation3 + $0xc8] sm:$0xff] %v1172
        %1175 = vrot.lane.b32.xlu0 %v1075, 93
        %v1176 = vpop.permute.xlu0 %1175
        %1177 = vrot.lane.b32.xlu0 %v1076, 93
        %v1178 = vpop.permute.xlu0 %1177
        %v1179 = vsel %vm535, %v1176, %v1178
        %v1180 = vsel %vm535, %v1178, %v1176
        %1181 = vst [vmem:[#allocation3 + $0xd0] sm:$0xff] %v1179
        %1182 = vst [vmem:[#allocation3 + $0xd8] sm:$0xff] %v1180
        %1183 = vrot.lane.b32.xlu0 %v1075, 92
        %v1184 = vpop.permute.xlu0 %1183
        %1185 = vrot.lane.b32.xlu0 %v1076, 92
        %v1186 = vpop.permute.xlu0 %1185
        %v1187 = vsel %vm544, %v1184, %v1186
        %v1188 = vsel %vm544, %v1186, %v1184
        %1189 = vst [vmem:[#allocation3 + $0xe0] sm:$0xff] %v1187
        %1190 = vst [vmem:[#allocation3 + $0xe8] sm:$0xff] %v1188
        %1191 = vrot.lane.b32.xlu0 %v1075, 80
        %v1192 = vpop.permute.xlu0 %1191
        %1193 = vrot.lane.b32.xlu0 %v1076, 80
        %v1194 = vpop.permute.xlu0 %1193
        %v1195 = vsel %vm571, %v1192, %v1194
        %v1196 = vsel %vm571, %v1194, %v1192
        %1197 = vst [vmem:[#allocation3 + $0xf0] sm:$0xff] %v1195
        %1198 = vst [vmem:[#allocation3 + $0xf8] sm:$0xff] %v1196
        %1199 = vrot.lane.b32.xlu0 %v1075, 79
        %v1200 = vpop.permute.xlu0 %1199
        %1201 = vrot.lane.b32.xlu0 %v1076, 79
        %v1202 = vpop.permute.xlu0 %1201
        %v1203 = vsel %vm580, %v1200, %v1202
        %v1204 = vsel %vm580, %v1202, %v1200
        %1205 = vst [vmem:[#allocation3 + $0x100] sm:$0xff] %v1203
        %1206 = vst [vmem:[#allocation3 + $0x108] sm:$0xff] %v1204
        %1207 = vrot.lane.b32.xlu0 %v1075, 78
        %v1208 = vpop.permute.xlu0 %1207
        %1209 = vrot.lane.b32.xlu0 %v1076, 78
        %v1210 = vpop.permute.xlu0 %1209
        %v1211 = vsel %vm589, %v1208, %v1210
        %v1212 = vsel %vm589, %v1210, %v1208
        %1213 = vst [vmem:[#allocation3 + $0x110] sm:$0xff] %v1211
        %1214 = vst [vmem:[#allocation3 + $0x118] sm:$0xff] %v1212
        %1215 = vrot.lane.b32.xlu0 %v1075, 77
        %v1216 = vpop.permute.xlu0 %1215
        %1217 = vrot.lane.b32.xlu0 %v1076, 77
        %v1218 = vpop.permute.xlu0 %1217
        %v1219 = vsel %vm598, %v1216, %v1218
        %v1220 = vsel %vm598, %v1218, %v1216
        %1221 = vst [vmem:[#allocation3 + $0x120] sm:$0xff] %v1219
        %1222 = vst [vmem:[#allocation3 + $0x128] sm:$0xff] %v1220
        %1223 = vrot.lane.b32.xlu0 %v1075, 76
        %v1224 = vpop.permute.xlu0 %1223
        %1225 = vrot.lane.b32.xlu0 %v1076, 76
        %v1226 = vpop.permute.xlu0 %1225
        %v1227 = vsel %vm607, %v1224, %v1226
        %v1228 = vsel %vm607, %v1226, %v1224
        %1229 = vst [vmem:[#allocation3 + $0x130] sm:$0xff] %v1227
        %1230 = vst [vmem:[#allocation3 + $0x138] sm:$0xff] %v1228
        %1231 = vrot.lane.b32.xlu0 %v1075, 64
        %v1232 = vpop.permute.xlu0 %1231
        %1233 = vrot.lane.b32.xlu0 %v1076, 64
        %v1234 = vpop.permute.xlu0 %1233
        %v1235 = vsel %vm634, %v1232, %v1234
        %v1236 = vsel %vm634, %v1234, %v1232
        %1237 = vst [vmem:[#allocation3 + $0x140] sm:$0xff] %v1235
        %1238 = vst [vmem:[#allocation3 + $0x148] sm:$0xff] %v1236
        %1239 = vrot.lane.b32.xlu0 %v1075, 63
        %v1240 = vpop.permute.xlu0 %1239
        %1241 = vrot.lane.b32.xlu0 %v1076, 63
        %v1242 = vpop.permute.xlu0 %1241
        %v1243 = vsel %vm643, %v1240, %v1242
        %v1244 = vsel %vm643, %v1242, %v1240
        %1245 = vst [vmem:[#allocation3 + $0x150] sm:$0xff] %v1243
        %1246 = vst [vmem:[#allocation3 + $0x158] sm:$0xff] %v1244
        %1247 = vrot.lane.b32.xlu0 %v1075, 62
        %v1248 = vpop.permute.xlu0 %1247
        %1249 = vrot.lane.b32.xlu0 %v1076, 62
        %v1250 = vpop.permute.xlu0 %1249
        %v1251 = vsel %vm652, %v1248, %v1250
        %v1252 = vsel %vm652, %v1250, %v1248
        %1253 = vst [vmem:[#allocation3 + $0x160] sm:$0xff] %v1251
        %1254 = vst [vmem:[#allocation3 + $0x168] sm:$0xff] %v1252
        %1255 = vrot.lane.b32.xlu0 %v1075, 61
        %v1256 = vpop.permute.xlu0 %1255
        %1257 = vrot.lane.b32.xlu0 %v1076, 61
        %v1258 = vpop.permute.xlu0 %1257
        %v1259 = vsel %vm661, %v1256, %v1258
        %v1260 = vsel %vm661, %v1258, %v1256
        %1261 = vst [vmem:[#allocation3 + $0x170] sm:$0xff] %v1259
        %1262 = vst [vmem:[#allocation3 + $0x178] sm:$0xff] %v1260
        %1263 = vrot.lane.b32.xlu0 %v1075, 60
        %v1264 = vpop.permute.xlu0 %1263
        %1265 = vrot.lane.b32.xlu0 %v1076, 60
        %v1266 = vpop.permute.xlu0 %1265
        %v1267 = vsel %vm670, %v1264, %v1266
        %v1268 = vsel %vm670, %v1266, %v1264
        %1269 = vst [vmem:[#allocation3 + $0x180] sm:$0xff] %v1267
        %1270 = vst [vmem:[#allocation3 + $0x188] sm:$0xff] %v1268
        %v1271 = vld [vmem:[#allocation3] sm:$0xff]
        %v1272 = vld [vmem:[#allocation3 + $0x8] sm:$0xff]
        %v1273 = vld [vmem:[#allocation3 + $0x10] sm:$0xff]
        %v1274 = vld [vmem:[#allocation3 + $0x18] sm:$0xff]
        %v1275 = vld [vmem:[#allocation3 + $0x20] sm:$0xff]
        %v1276 = vld [vmem:[#allocation3 + $0x28] sm:$0xff]
        %v1277 = vld [vmem:[#allocation3 + $0x30] sm:$0xff]
        %v1278 = vld [vmem:[#allocation3 + $0x38] sm:$0xff]
        %v1279 = vld [vmem:[#allocation3 + $0x40] sm:$0xff]
        %v1280 = vld [vmem:[#allocation3 + $0x48] sm:$0xff]
        %v1281 = vld [vmem:[#allocation3 + $0x50] sm:$0xff]
        %v1282 = vld [vmem:[#allocation3 + $0x58] sm:$0xff]
        %v1283 = vld [vmem:[#allocation3 + $0x60] sm:$0xff]
        %v1284 = vld [vmem:[#allocation3 + $0x68] sm:$0xff]
        %v1285 = vld [vmem:[#allocation3 + $0x70] sm:$0xff]
        %v1286 = vld [vmem:[#allocation3 + $0x78] sm:$0xff]
        %v1287 = vld [vmem:[#allocation3 + $0x80] sm:$0xff]
        %v1288 = vld [vmem:[#allocation3 + $0x88] sm:$0xff]
        %v1289 = vld [vmem:[#allocation3 + $0x90] sm:$0xff]
        %v1290 = vld [vmem:[#allocation3 + $0x98] sm:$0xff]
        %v1291 = vld [vmem:[#allocation3 + $0xa0] sm:$0xff]
        %v1292 = vld [vmem:[#allocation3 + $0xa8] sm:$0xff]
        %v1293 = vld [vmem:[#allocation3 + $0xb0] sm:$0xff]
        %v1294 = vld [vmem:[#allocation3 + $0xb8] sm:$0xff]
        %v1295 = vld [vmem:[#allocation3 + $0xc0] sm:$0xff]
        %v1296 = vld [vmem:[#allocation3 + $0xc8] sm:$0xff]
        %v1297 = vld [vmem:[#allocation3 + $0xd0] sm:$0xff]
        %v1298 = vld [vmem:[#allocation3 + $0xd8] sm:$0xff]
        %v1299 = vld [vmem:[#allocation3 + $0xe0] sm:$0xff]
        %v1300 = vld [vmem:[#allocation3 + $0xe8] sm:$0xff]
        %v1301 = vld [vmem:[#allocation3 + $0xf0] sm:$0xff]
        %v1302 = vld [vmem:[#allocation3 + $0xf8] sm:$0xff]
        %v1303 = vld [vmem:[#allocation3 + $0x100] sm:$0xff]
        %v1304 = vld [vmem:[#allocation3 + $0x108] sm:$0xff]
        %v1305 = vld [vmem:[#allocation3 + $0x110] sm:$0xff]
        %v1306 = vld [vmem:[#allocation3 + $0x118] sm:$0xff]
        %v1307 = vld [vmem:[#allocation3 + $0x120] sm:$0xff]
        %v1308 = vld [vmem:[#allocation3 + $0x128] sm:$0xff]
        %v1309 = vld [vmem:[#allocation3 + $0x130] sm:$0xff]
        %v1310 = vld [vmem:[#allocation3 + $0x138] sm:$0xff]
        %v1311 = vld [vmem:[#allocation3 + $0x140] sm:$0xff]
        %v1312 = vld [vmem:[#allocation3 + $0x148] sm:$0xff]
        %v1313 = vld [vmem:[#allocation3 + $0x150] sm:$0xff]
        %v1314 = vld [vmem:[#allocation3 + $0x158] sm:$0xff]
        %v1315 = vld [vmem:[#allocation3 + $0x160] sm:$0xff]
        %v1316 = vld [vmem:[#allocation3 + $0x168] sm:$0xff]
        %v1317 = vld [vmem:[#allocation3 + $0x170] sm:$0xff]
        %v1318 = vld [vmem:[#allocation3 + $0x178] sm:$0xff]
        %v1319 = vld [vmem:[#allocation3 + $0x180] sm:$0xff]
        %v1320 = vld [vmem:[#allocation3 + $0x188] sm:$0xff]
        %v1321 = vld [vmem:[%s4] sm:$0xff]
        %v1322 = vld [vmem:[%s4 + $0x8] sm:$0xff]
        %vm1323 = vcmask 588800
        %v1325 = vsel %vm1323, %v1322, 0
        %1327 = vmatprep.subr.mxu0 %v1302
        %1328 = vmatpush1.msra.mxu0 %v1301
        %1329 = vmatprep.subr.mxu0 %v1300
        %1330 = vmatpush1.msra.mxu0 %v1299
        %1331 = vmatprep.subr.mxu0 %v1298
        %1332 = vmatpush1.msra.mxu0 %v1297
        %1333 = vmatprep.subr.mxu0 %v1296
        %1334 = vmatpush1.msra.mxu0 %v1295
        %1335 = vmatprep.subr.mxu0 %v1294
        %1336 = vmatpush1.msra.mxu0 %v1293
        %1337 = vmatprep.subr.mxu0 %v1292
        %1338 = vmatpush1.msra.mxu0 %v1291
        %1339 = vmatprep.subr.mxu0 %v1290
        %1340 = vmatpush1.msra.mxu0 %v1289
        %1341 = vmatprep.subr.mxu0 %v1288
        %1342 = vmatpush1.msra.mxu0 %v1287
        %1343 = vmatprep.subr.mxu0 %v1286
        %1344 = vmatpush1.msra.mxu0 %v1285
        %1345 = vmatprep.subr.mxu0 %v1284
        %1346 = vmatpush1.msra.mxu0 %v1283
        %1347 = vmatprep.subr.mxu0 %v1282
        %1348 = vmatpush1.msra.mxu0 %v1281
        %1349 = vmatprep.subr.mxu0 %v1280
        %1350 = vmatpush1.msra.mxu0 %v1279
        %1351 = vmatprep.subr.mxu0 %v1278
        %1352 = vmatpush1.msra.mxu0 %v1277
        %1353 = vmatprep.subr.mxu0 %v1276
        %1354 = vmatpush1.msra.mxu0 %v1275
        %1355 = vmatprep.subr.mxu0 %v1274
        %1356 = vmatpush1.msra.mxu0 %v1273
        %1357 = vmatprep.subr.mxu0 %v1272
        %1358 = vmatpush1.msra.mxu0 %v1271
        %1359 = vmatprep.subr.mxu0 0.0
        %1360 = vmatpush2.msra.mxu0 0.0
        %1361 = vmatprep.subr.mxu0 0.0
        %1362 = vmatpush2.msra.mxu0 0.0
        %1363 = vmatprep.subr.mxu0 0.0
        %1364 = vmatpush2.msra.mxu0 0.0
        %1365 = vmatprep.subr.mxu0 0.0
        %1366 = vmatpush2.msra.mxu0 0.0
        %1367 = vmatprep.subr.mxu0 0.0
        %1368 = vmatpush2.msra.mxu0 0.0
        %1369 = vmatprep.subr.mxu0 0.0
        %1370 = vmatpush2.msra.mxu0 0.0
        %1371 = vmatprep.subr.mxu0 0.0
        %1372 = vmatpush2.msra.mxu0 0.0
        %1373 = vmatprep.subr.mxu0 %v1320
        %1374 = vmatpush2.msra.mxu0 %v1319
        %1375 = vmatprep.subr.mxu0 %v1318
        %1376 = vmatpush2.msra.mxu0 %v1317
        %1377 = vmatprep.subr.mxu0 %v1316
        %1378 = vmatpush2.msra.mxu0 %v1315
        %1379 = vmatprep.subr.mxu0 %v1314
        %1380 = vmatpush2.msra.mxu0 %v1313
        %1381 = vmatprep.subr.mxu0 %v1312
        %1382 = vmatpush2.msra.mxu0 %v1311
        %1383 = vmatprep.subr.mxu0 %v1310
        %1384 = vmatpush2.msra.mxu0 %v1309
        %1385 = vmatprep.subr.mxu0 %v1308
        %1386 = vmatpush2.msra.mxu0 %v1307
        %1387 = vmatprep.subr.mxu0 %v1306
        %1388 = vmatpush2.msra.mxu0 %v1305
        %1389 = vmatprep.subr.mxu0 %v1304
        %1390 = vmatpush2.msra.mxu0 %v1303
        %1391 = vmatprep.mubr.f32.mxu0 %v1325
        %1392 = vmatmul.mubr.f32.gmra.mxu0 %v1321
        %v1393 = vpop.f32.mrf.mxu0
        %v1394 = vadd.f32 0.0, %v1393
        %v1395 = vpop.f32.mrf.mxu0
        %v1396 = vadd.f32 0.0, %v1395
        %1397 = vdwg.mxu0
        %v1398 = vld [vmem:[%s5] sm:$0xff]
        %v1399 = vld [vmem:[%s5 + $0x8] sm:$0xff]
        %v1400 = vmul.f32 %v1394, %v1398
        %v1401 = vmul.f32 %v1396, %v1399
        %v1402 = vld [vmem:[%s6] sm:$0xff]
        %v1403 = vld [vmem:[%s6 + $0x8] sm:$0xff]
        %v1404 = vadd.f32 %v1400, %v1402
        %v1405 = vadd.f32 %v1401, %v1403
        %v1406 = vmax.f32 %v1404, 0.0
        %v1407 = vmax.f32 %v1405, 0.0
        %v1408 = vld [vmem:[#allocation4] sm:$0xff]
        %v1409 = vld [vmem:[#allocation4 + $0x8] sm:$0xff]
        %v1410 = vld [vmem:[#allocation4 + $0x10] sm:$0xff]
        %v1411 = vld [vmem:[#allocation4 + $0x18] sm:$0xff]
        %v1412 = vld [vmem:[#allocation4 + $0x20] sm:$0xff]
        %v1413 = vld [vmem:[#allocation4 + $0x28] sm:$0xff]
        %v1414 = vld [vmem:[#allocation4 + $0x30] sm:$0xff]
        %v1415 = vld [vmem:[#allocation4 + $0x38] sm:$0xff]
        %v1416 = vld [vmem:[#allocation4 + $0x40] sm:$0xff]
        %v1417 = vld [vmem:[#allocation4 + $0x48] sm:$0xff]
        %v1418 = vld [vmem:[#allocation4 + $0x50] sm:$0xff]
        %v1419 = vld [vmem:[#allocation4 + $0x58] sm:$0xff]
        %v1420 = vld [vmem:[#allocation4 + $0x60] sm:$0xff]
        %v1421 = vld [vmem:[#allocation4 + $0x68] sm:$0xff]
        %v1422 = vld [vmem:[#allocation4 + $0x70] sm:$0xff]
        %v1423 = vld [vmem:[#allocation4 + $0x78] sm:$0xff]
        %v1424 = vld [vmem:[#allocation4 + $0x80] sm:$0xff]
        %v1425 = vld [vmem:[#allocation4 + $0x88] sm:$0xff]
        %v1426 = vld [vmem:[#allocation4 + $0x90] sm:$0xff]
        %v1427 = vld [vmem:[#allocation4 + $0x98] sm:$0xff]
        %v1428 = vld [vmem:[#allocation4 + $0xa0] sm:$0xff]
        %v1429 = vld [vmem:[#allocation4 + $0xa8] sm:$0xff]
        %v1430 = vld [vmem:[#allocation4 + $0xb0] sm:$0xff]
        %v1431 = vld [vmem:[#allocation4 + $0xb8] sm:$0xff]
        %v1432 = vld [vmem:[#allocation4 + $0xc0] sm:$0xff]
        %v1433 = vld [vmem:[#allocation4 + $0xc8] sm:$0xff]
        %v1434 = vld [vmem:[#allocation4 + $0xd0] sm:$0xff]
        %v1435 = vld [vmem:[#allocation4 + $0xd8] sm:$0xff]
        %v1436 = vld [vmem:[#allocation4 + $0xe0] sm:$0xff]
        %v1437 = vld [vmem:[#allocation4 + $0xe8] sm:$0xff]
        %v1438 = vld [vmem:[#allocation4 + $0xf0] sm:$0xff]
        %v1439 = vld [vmem:[#allocation4 + $0xf8] sm:$0xff]
        %1440 = vmatprep.subr.mxu0 0.0
        %1441 = vmatpush1.msra.mxu0 %v1423
        %1442 = vmatprep.subr.mxu0 0.0
        %1443 = vmatpush1.msra.mxu0 %v1422
        %1444 = vmatprep.subr.mxu0 0.0
        %1445 = vmatpush1.msra.mxu0 %v1421
        %1446 = vmatprep.subr.mxu0 0.0
        %1447 = vmatpush1.msra.mxu0 %v1420
        %1448 = vmatprep.subr.mxu0 0.0
        %1449 = vmatpush1.msra.mxu0 %v1419
        %1450 = vmatprep.subr.mxu0 0.0
        %1451 = vmatpush1.msra.mxu0 %v1418
        %1452 = vmatprep.subr.mxu0 0.0
        %1453 = vmatpush1.msra.mxu0 %v1417
        %1454 = vmatprep.subr.mxu0 0.0
        %1455 = vmatpush1.msra.mxu0 %v1416
        %1456 = vmatprep.subr.mxu0 0.0
        %1457 = vmatpush1.msra.mxu0 %v1415
        %1458 = vmatprep.subr.mxu0 0.0
        %1459 = vmatpush1.msra.mxu0 %v1414
        %1460 = vmatprep.subr.mxu0 0.0
        %1461 = vmatpush1.msra.mxu0 %v1413
        %1462 = vmatprep.subr.mxu0 0.0
        %1463 = vmatpush1.msra.mxu0 %v1412
        %1464 = vmatprep.subr.mxu0 0.0
        %1465 = vmatpush1.msra.mxu0 %v1411
        %1466 = vmatprep.subr.mxu0 0.0
        %1467 = vmatpush1.msra.mxu0 %v1410
        %1468 = vmatprep.subr.mxu0 0.0
        %1469 = vmatpush1.msra.mxu0 %v1409
        %1470 = vmatprep.subr.mxu0 0.0
        %1471 = vmatpush1.msra.mxu0 %v1408
        %1472 = vmatprep.subr.mxu0 0.0
        %1473 = vmatpush2.msra.mxu0 %v1439
        %1474 = vmatprep.subr.mxu0 0.0
        %1475 = vmatpush2.msra.mxu0 %v1438
        %1476 = vmatprep.subr.mxu0 0.0
        %1477 = vmatpush2.msra.mxu0 %v1437
        %1478 = vmatprep.subr.mxu0 0.0
        %1479 = vmatpush2.msra.mxu0 %v1436
        %1480 = vmatprep.subr.mxu0 0.0
        %1481 = vmatpush2.msra.mxu0 %v1435
        %1482 = vmatprep.subr.mxu0 0.0
        %1483 = vmatpush2.msra.mxu0 %v1434
        %1484 = vmatprep.subr.mxu0 0.0
        %1485 = vmatpush2.msra.mxu0 %v1433
        %1486 = vmatprep.subr.mxu0 0.0
        %1487 = vmatpush2.msra.mxu0 %v1432
        %1488 = vmatprep.subr.mxu0 0.0
        %1489 = vmatpush2.msra.mxu0 %v1431
        %1490 = vmatprep.subr.mxu0 0.0
        %1491 = vmatpush2.msra.mxu0 %v1430
        %1492 = vmatprep.subr.mxu0 0.0
        %1493 = vmatpush2.msra.mxu0 %v1429
        %1494 = vmatprep.subr.mxu0 0.0
        %1495 = vmatpush2.msra.mxu0 %v1428
        %1496 = vmatprep.subr.mxu0 0.0
        %1497 = vmatpush2.msra.mxu0 %v1427
        %1498 = vmatprep.subr.mxu0 0.0
        %1499 = vmatpush2.msra.mxu0 %v1426
        %1500 = vmatprep.subr.mxu0 0.0
        %1501 = vmatpush2.msra.mxu0 %v1425
        %1502 = vmatprep.subr.mxu0 0.0
        %1503 = vmatpush2.msra.mxu0 %v1424
        %1504 = vmatprep.mubr.f32.mxu0 %v1407
        %1505 = vmatmul.mubr.f32.gmra.mxu0 %v1406
        %v1506 = vpop.f32.mrf.mxu0
        %v1507 = vadd.f32 0.0, %v1506
        %v1508 = vpop.f32.mrf.mxu0
        %1509 = vdwg.mxu0
        %v1510 = vadd.f32 %v1507, 0.0
        %s1511 = scalar_lea.vmem [#allocation4], 256
        %v1512 = vld [vmem:[%s1511] sm:$0xff]
        %v1513 = vld [vmem:[%s1511 + $0x8] sm:$0xff]
        %v1514 = vld [vmem:[%s1511 + $0x10] sm:$0xff]
        %v1515 = vld [vmem:[%s1511 + $0x18] sm:$0xff]
        %v1516 = vld [vmem:[%s1511 + $0x20] sm:$0xff]
        %v1517 = vld [vmem:[%s1511 + $0x28] sm:$0xff]
        %v1518 = vld [vmem:[%s1511 + $0x30] sm:$0xff]
        %v1519 = vld [vmem:[%s1511 + $0x38] sm:$0xff]
        %v1520 = vld [vmem:[%s1511 + $0x40] sm:$0xff]
        %v1521 = vld [vmem:[%s1511 + $0x48] sm:$0xff]
        %v1522 = vld [vmem:[%s1511 + $0x50] sm:$0xff]
        %v1523 = vld [vmem:[%s1511 + $0x58] sm:$0xff]
        %v1524 = vld [vmem:[%s1511 + $0x60] sm:$0xff]
        %v1525 = vld [vmem:[%s1511 + $0x68] sm:$0xff]
        %v1526 = vld [vmem:[%s1511 + $0x70] sm:$0xff]
        %v1527 = vld [vmem:[%s1511 + $0x78] sm:$0xff]
        %v1528 = vld [vmem:[%s1511 + $0x80] sm:$0xff]
        %v1529 = vld [vmem:[%s1511 + $0x88] sm:$0xff]
        %v1530 = vld [vmem:[%s1511 + $0x90] sm:$0xff]
        %v1531 = vld [vmem:[%s1511 + $0x98] sm:$0xff]
        %v1532 = vld [vmem:[%s1511 + $0xa0] sm:$0xff]
        %v1533 = vld [vmem:[%s1511 + $0xa8] sm:$0xff]
        %v1534 = vld [vmem:[%s1511 + $0xb0] sm:$0xff]
        %v1535 = vld [vmem:[%s1511 + $0xb8] sm:$0xff]
        %v1536 = vld [vmem:[%s1511 + $0xc0] sm:$0xff]
        %v1537 = vld [vmem:[%s1511 + $0xc8] sm:$0xff]
        %v1538 = vld [vmem:[%s1511 + $0xd0] sm:$0xff]
        %v1539 = vld [vmem:[%s1511 + $0xd8] sm:$0xff]
        %v1540 = vld [vmem:[%s1511 + $0xe0] sm:$0xff]
        %v1541 = vld [vmem:[%s1511 + $0xe8] sm:$0xff]
        %v1542 = vld [vmem:[%s1511 + $0xf0] sm:$0xff]
        %v1543 = vld [vmem:[%s1511 + $0xf8] sm:$0xff]
        %1544 = vmatprep.subr.mxu0 0.0
        %1545 = vmatpush1.msra.mxu0 %v1527
        %1546 = vmatprep.subr.mxu0 0.0
        %1547 = vmatpush1.msra.mxu0 %v1526
        %1548 = vmatprep.subr.mxu0 0.0
        %1549 = vmatpush1.msra.mxu0 %v1525
        %1550 = vmatprep.subr.mxu0 0.0
        %1551 = vmatpush1.msra.mxu0 %v1524
        %1552 = vmatprep.subr.mxu0 0.0
        %1553 = vmatpush1.msra.mxu0 %v1523
        %1554 = vmatprep.subr.mxu0 0.0
        %1555 = vmatpush1.msra.mxu0 %v1522
        %1556 = vmatprep.subr.mxu0 0.0
        %1557 = vmatpush1.msra.mxu0 %v1521
        %1558 = vmatprep.subr.mxu0 0.0
        %1559 = vmatpush1.msra.mxu0 %v1520
        %1560 = vmatprep.subr.mxu0 0.0
        %1561 = vmatpush1.msra.mxu0 %v1519
        %1562 = vmatprep.subr.mxu0 0.0
        %1563 = vmatpush1.msra.mxu0 %v1518
        %1564 = vmatprep.subr.mxu0 0.0
        %1565 = vmatpush1.msra.mxu0 %v1517
        %1566 = vmatprep.subr.mxu0 0.0
        %1567 = vmatpush1.msra.mxu0 %v1516
        %1568 = vmatprep.subr.mxu0 0.0
        %1569 = vmatpush1.msra.mxu0 %v1515
        %1570 = vmatprep.subr.mxu0 0.0
        %1571 = vmatpush1.msra.mxu0 %v1514
        %1572 = vmatprep.subr.mxu0 0.0
        %1573 = vmatpush1.msra.mxu0 %v1513
        %1574 = vmatprep.subr.mxu0 0.0
        %1575 = vmatpush1.msra.mxu0 %v1512
        %1576 = vmatprep.subr.mxu0 0.0
        %1577 = vmatpush2.msra.mxu0 %v1543
        %1578 = vmatprep.subr.mxu0 0.0
        %1579 = vmatpush2.msra.mxu0 %v1542
        %1580 = vmatprep.subr.mxu0 0.0
        %1581 = vmatpush2.msra.mxu0 %v1541
        %1582 = vmatprep.subr.mxu0 0.0
        %1583 = vmatpush2.msra.mxu0 %v1540
        %1584 = vmatprep.subr.mxu0 0.0
        %1585 = vmatpush2.msra.mxu0 %v1539
        %1586 = vmatprep.subr.mxu0 0.0
        %1587 = vmatpush2.msra.mxu0 %v1538
        %1588 = vmatprep.subr.mxu0 0.0
        %1589 = vmatpush2.msra.mxu0 %v1537
        %1590 = vmatprep.subr.mxu0 0.0
        %1591 = vmatpush2.msra.mxu0 %v1536
        %1592 = vmatprep.subr.mxu0 0.0
        %1593 = vmatpush2.msra.mxu0 %v1535
        %1594 = vmatprep.subr.mxu0 0.0
        %1595 = vmatpush2.msra.mxu0 %v1534
        %1596 = vmatprep.subr.mxu0 0.0
        %1597 = vmatpush2.msra.mxu0 %v1533
        %1598 = vmatprep.subr.mxu0 0.0
        %1599 = vmatpush2.msra.mxu0 %v1532
        %1600 = vmatprep.subr.mxu0 0.0
        %1601 = vmatpush2.msra.mxu0 %v1531
        %1602 = vmatprep.subr.mxu0 0.0
        %1603 = vmatpush2.msra.mxu0 %v1530
        %1604 = vmatprep.subr.mxu0 0.0
        %1605 = vmatpush2.msra.mxu0 %v1529
        %1606 = vmatprep.subr.mxu0 0.0
        %1607 = vmatpush2.msra.mxu0 %v1528
        %1608 = vmatprep.mubr.f32.mxu0 %v1407
        %1609 = vmatmul.mubr.f32.gmra.mxu0 %v1406
        %v1610 = vpop.f32.mrf.mxu0
        %v1611 = vadd.f32 0.0, %v1610
        %v1612 = vpop.f32.mrf.mxu0
        %1613 = vdwg.mxu0
        %v1615 = vrot.slane %v1611, 1
        %v1617 = vadd.f32 %v1510, %v1615
        %s1618 = scalar_lea.vmem [#allocation4], 512
        %v1619 = vld [vmem:[%s1618] sm:$0xff]
        %v1620 = vld [vmem:[%s1618 + $0x8] sm:$0xff]
        %v1621 = vld [vmem:[%s1618 + $0x10] sm:$0xff]
        %v1622 = vld [vmem:[%s1618 + $0x18] sm:$0xff]
        %v1623 = vld [vmem:[%s1618 + $0x20] sm:$0xff]
        %v1624 = vld [vmem:[%s1618 + $0x28] sm:$0xff]
        %v1625 = vld [vmem:[%s1618 + $0x30] sm:$0xff]
        %v1626 = vld [vmem:[%s1618 + $0x38] sm:$0xff]
        %v1627 = vld [vmem:[%s1618 + $0x40] sm:$0xff]
        %v1628 = vld [vmem:[%s1618 + $0x48] sm:$0xff]
        %v1629 = vld [vmem:[%s1618 + $0x50] sm:$0xff]
        %v1630 = vld [vmem:[%s1618 + $0x58] sm:$0xff]
        %v1631 = vld [vmem:[%s1618 + $0x60] sm:$0xff]
        %v1632 = vld [vmem:[%s1618 + $0x68] sm:$0xff]
        %v1633 = vld [vmem:[%s1618 + $0x70] sm:$0xff]
        %v1634 = vld [vmem:[%s1618 + $0x78] sm:$0xff]
        %v1635 = vld [vmem:[%s1618 + $0x80] sm:$0xff]
        %v1636 = vld [vmem:[%s1618 + $0x88] sm:$0xff]
        %v1637 = vld [vmem:[%s1618 + $0x90] sm:$0xff]
        %v1638 = vld [vmem:[%s1618 + $0x98] sm:$0xff]
        %v1639 = vld [vmem:[%s1618 + $0xa0] sm:$0xff]
        %v1640 = vld [vmem:[%s1618 + $0xa8] sm:$0xff]
        %v1641 = vld [vmem:[%s1618 + $0xb0] sm:$0xff]
        %v1642 = vld [vmem:[%s1618 + $0xb8] sm:$0xff]
        %v1643 = vld [vmem:[%s1618 + $0xc0] sm:$0xff]
        %v1644 = vld [vmem:[%s1618 + $0xc8] sm:$0xff]
        %v1645 = vld [vmem:[%s1618 + $0xd0] sm:$0xff]
        %v1646 = vld [vmem:[%s1618 + $0xd8] sm:$0xff]
        %v1647 = vld [vmem:[%s1618 + $0xe0] sm:$0xff]
        %v1648 = vld [vmem:[%s1618 + $0xe8] sm:$0xff]
        %v1649 = vld [vmem:[%s1618 + $0xf0] sm:$0xff]
        %v1650 = vld [vmem:[%s1618 + $0xf8] sm:$0xff]
        %1651 = vmatprep.subr.mxu0 0.0
        %1652 = vmatpush1.msra.mxu0 %v1634
        %1653 = vmatprep.subr.mxu0 0.0
        %1654 = vmatpush1.msra.mxu0 %v1633
        %1655 = vmatprep.subr.mxu0 0.0
        %1656 = vmatpush1.msra.mxu0 %v1632
        %1657 = vmatprep.subr.mxu0 0.0
        %1658 = vmatpush1.msra.mxu0 %v1631
        %1659 = vmatprep.subr.mxu0 0.0
        %1660 = vmatpush1.msra.mxu0 %v1630
        %1661 = vmatprep.subr.mxu0 0.0
        %1662 = vmatpush1.msra.mxu0 %v1629
        %1663 = vmatprep.subr.mxu0 0.0
        %1664 = vmatpush1.msra.mxu0 %v1628
        %1665 = vmatprep.subr.mxu0 0.0
        %1666 = vmatpush1.msra.mxu0 %v1627
        %1667 = vmatprep.subr.mxu0 0.0
        %1668 = vmatpush1.msra.mxu0 %v1626
        %1669 = vmatprep.subr.mxu0 0.0
        %1670 = vmatpush1.msra.mxu0 %v1625
        %1671 = vmatprep.subr.mxu0 0.0
        %1672 = vmatpush1.msra.mxu0 %v1624
        %1673 = vmatprep.subr.mxu0 0.0
        %1674 = vmatpush1.msra.mxu0 %v1623
        %1675 = vmatprep.subr.mxu0 0.0
        %1676 = vmatpush1.msra.mxu0 %v1622
        %1677 = vmatprep.subr.mxu0 0.0
        %1678 = vmatpush1.msra.mxu0 %v1621
        %1679 = vmatprep.subr.mxu0 0.0
        %1680 = vmatpush1.msra.mxu0 %v1620
        %1681 = vmatprep.subr.mxu0 0.0
        %1682 = vmatpush1.msra.mxu0 %v1619
        %1683 = vmatprep.subr.mxu0 0.0
        %1684 = vmatpush2.msra.mxu0 %v1650
        %1685 = vmatprep.subr.mxu0 0.0
        %1686 = vmatpush2.msra.mxu0 %v1649
        %1687 = vmatprep.subr.mxu0 0.0
        %1688 = vmatpush2.msra.mxu0 %v1648
        %1689 = vmatprep.subr.mxu0 0.0
        %1690 = vmatpush2.msra.mxu0 %v1647
        %1691 = vmatprep.subr.mxu0 0.0
        %1692 = vmatpush2.msra.mxu0 %v1646
        %1693 = vmatprep.subr.mxu0 0.0
        %1694 = vmatpush2.msra.mxu0 %v1645
        %1695 = vmatprep.subr.mxu0 0.0
        %1696 = vmatpush2.msra.mxu0 %v1644
        %1697 = vmatprep.subr.mxu0 0.0
        %1698 = vmatpush2.msra.mxu0 %v1643
        %1699 = vmatprep.subr.mxu0 0.0
        %1700 = vmatpush2.msra.mxu0 %v1642
        %1701 = vmatprep.subr.mxu0 0.0
        %1702 = vmatpush2.msra.mxu0 %v1641
        %1703 = vmatprep.subr.mxu0 0.0
        %1704 = vmatpush2.msra.mxu0 %v1640
        %1705 = vmatprep.subr.mxu0 0.0
        %1706 = vmatpush2.msra.mxu0 %v1639
        %1707 = vmatprep.subr.mxu0 0.0
        %1708 = vmatpush2.msra.mxu0 %v1638
        %1709 = vmatprep.subr.mxu0 0.0
        %1710 = vmatpush2.msra.mxu0 %v1637
        %1711 = vmatprep.subr.mxu0 0.0
        %1712 = vmatpush2.msra.mxu0 %v1636
        %1713 = vmatprep.subr.mxu0 0.0
        %1714 = vmatpush2.msra.mxu0 %v1635
        %1715 = vmatprep.mubr.f32.mxu0 %v1407
        %1716 = vmatmul.mubr.f32.gmra.mxu0 %v1406
        %v1717 = vpop.f32.mrf.mxu0
        %v1718 = vadd.f32 0.0, %v1717
        %v1719 = vpop.f32.mrf.mxu0
        %1720 = vdwg.mxu0
        %v1722 = vrot.slane %v1718, 2
        %v1724 = vadd.f32 %v1617, %v1722
        %s1725 = scalar_lea.vmem [#allocation4], 768
        %v1726 = vld [vmem:[%s1725] sm:$0xff]
        %v1727 = vld [vmem:[%s1725 + $0x8] sm:$0xff]
        %v1728 = vld [vmem:[%s1725 + $0x10] sm:$0xff]
        %v1729 = vld [vmem:[%s1725 + $0x18] sm:$0xff]
        %v1730 = vld [vmem:[%s1725 + $0x20] sm:$0xff]
        %v1731 = vld [vmem:[%s1725 + $0x28] sm:$0xff]
        %v1732 = vld [vmem:[%s1725 + $0x30] sm:$0xff]
        %v1733 = vld [vmem:[%s1725 + $0x38] sm:$0xff]
        %v1734 = vld [vmem:[%s1725 + $0x40] sm:$0xff]
        %v1735 = vld [vmem:[%s1725 + $0x48] sm:$0xff]
        %v1736 = vld [vmem:[%s1725 + $0x50] sm:$0xff]
        %v1737 = vld [vmem:[%s1725 + $0x58] sm:$0xff]
        %v1738 = vld [vmem:[%s1725 + $0x60] sm:$0xff]
        %v1739 = vld [vmem:[%s1725 + $0x68] sm:$0xff]
        %v1740 = vld [vmem:[%s1725 + $0x70] sm:$0xff]
        %v1741 = vld [vmem:[%s1725 + $0x78] sm:$0xff]
        %v1742 = vld [vmem:[%s1725 + $0x80] sm:$0xff]
        %v1743 = vld [vmem:[%s1725 + $0x88] sm:$0xff]
        %v1744 = vld [vmem:[%s1725 + $0x90] sm:$0xff]
        %v1745 = vld [vmem:[%s1725 + $0x98] sm:$0xff]
        %v1746 = vld [vmem:[%s1725 + $0xa0] sm:$0xff]
        %v1747 = vld [vmem:[%s1725 + $0xa8] sm:$0xff]
        %v1748 = vld [vmem:[%s1725 + $0xb0] sm:$0xff]
        %v1749 = vld [vmem:[%s1725 + $0xb8] sm:$0xff]
        %v1750 = vld [vmem:[%s1725 + $0xc0] sm:$0xff]
        %v1751 = vld [vmem:[%s1725 + $0xc8] sm:$0xff]
        %v1752 = vld [vmem:[%s1725 + $0xd0] sm:$0xff]
        %v1753 = vld [vmem:[%s1725 + $0xd8] sm:$0xff]
        %v1754 = vld [vmem:[%s1725 + $0xe0] sm:$0xff]
        %v1755 = vld [vmem:[%s1725 + $0xe8] sm:$0xff]
        %v1756 = vld [vmem:[%s1725 + $0xf0] sm:$0xff]
        %v1757 = vld [vmem:[%s1725 + $0xf8] sm:$0xff]
        %1758 = vmatprep.subr.mxu0 0.0
        %1759 = vmatpush1.msra.mxu0 %v1741
        %1760 = vmatprep.subr.mxu0 0.0
        %1761 = vmatpush1.msra.mxu0 %v1740
        %1762 = vmatprep.subr.mxu0 0.0
        %1763 = vmatpush1.msra.mxu0 %v1739
        %1764 = vmatprep.subr.mxu0 0.0
        %1765 = vmatpush1.msra.mxu0 %v1738
        %1766 = vmatprep.subr.mxu0 0.0
        %1767 = vmatpush1.msra.mxu0 %v1737
        %1768 = vmatprep.subr.mxu0 0.0
        %1769 = vmatpush1.msra.mxu0 %v1736
        %1770 = vmatprep.subr.mxu0 0.0
        %1771 = vmatpush1.msra.mxu0 %v1735
        %1772 = vmatprep.subr.mxu0 0.0
        %1773 = vmatpush1.msra.mxu0 %v1734
        %1774 = vmatprep.subr.mxu0 0.0
        %1775 = vmatpush1.msra.mxu0 %v1733
        %1776 = vmatprep.subr.mxu0 0.0
        %1777 = vmatpush1.msra.mxu0 %v1732
        %1778 = vmatprep.subr.mxu0 0.0
        %1779 = vmatpush1.msra.mxu0 %v1731
        %1780 = vmatprep.subr.mxu0 0.0
        %1781 = vmatpush1.msra.mxu0 %v1730
        %1782 = vmatprep.subr.mxu0 0.0
        %1783 = vmatpush1.msra.mxu0 %v1729
        %1784 = vmatprep.subr.mxu0 0.0
        %1785 = vmatpush1.msra.mxu0 %v1728
        %1786 = vmatprep.subr.mxu0 0.0
        %1787 = vmatpush1.msra.mxu0 %v1727
        %1788 = vmatprep.subr.mxu0 0.0
        %1789 = vmatpush1.msra.mxu0 %v1726
        %1790 = vmatprep.subr.mxu0 0.0
        %1791 = vmatpush2.msra.mxu0 %v1757
        %1792 = vmatprep.subr.mxu0 0.0
        %1793 = vmatpush2.msra.mxu0 %v1756
        %1794 = vmatprep.subr.mxu0 0.0
        %1795 = vmatpush2.msra.mxu0 %v1755
        %1796 = vmatprep.subr.mxu0 0.0
        %1797 = vmatpush2.msra.mxu0 %v1754
        %1798 = vmatprep.subr.mxu0 0.0
        %1799 = vmatpush2.msra.mxu0 %v1753
        %1800 = vmatprep.subr.mxu0 0.0
        %1801 = vmatpush2.msra.mxu0 %v1752
        %1802 = vmatprep.subr.mxu0 0.0
        %1803 = vmatpush2.msra.mxu0 %v1751
        %1804 = vmatprep.subr.mxu0 0.0
        %1805 = vmatpush2.msra.mxu0 %v1750
        %1806 = vmatprep.subr.mxu0 0.0
        %1807 = vmatpush2.msra.mxu0 %v1749
        %1808 = vmatprep.subr.mxu0 0.0
        %1809 = vmatpush2.msra.mxu0 %v1748
        %1810 = vmatprep.subr.mxu0 0.0
        %1811 = vmatpush2.msra.mxu0 %v1747
        %1812 = vmatprep.subr.mxu0 0.0
        %1813 = vmatpush2.msra.mxu0 %v1746
        %1814 = vmatprep.subr.mxu0 0.0
        %1815 = vmatpush2.msra.mxu0 %v1745
        %1816 = vmatprep.subr.mxu0 0.0
        %1817 = vmatpush2.msra.mxu0 %v1744
        %1818 = vmatprep.subr.mxu0 0.0
        %1819 = vmatpush2.msra.mxu0 %v1743
        %1820 = vmatprep.subr.mxu0 0.0
        %1821 = vmatpush2.msra.mxu0 %v1742
        %1822 = vmatprep.mubr.f32.mxu0 %v1407
        %1823 = vmatmul.mubr.f32.gmra.mxu0 %v1406
        %v1824 = vpop.f32.mrf.mxu0
        %v1825 = vadd.f32 0.0, %v1824
        %v1826 = vpop.f32.mrf.mxu0
        %1827 = vdwg.mxu0
        %v1829 = vrot.slane %v1825, 3
        %v1831 = vadd.f32 %v1724, %v1829
        %s1832 = scalar_lea.vmem [#allocation4], 1024
        %v1833 = vld [vmem:[%s1832] sm:$0xff]
        %v1834 = vld [vmem:[%s1832 + $0x8] sm:$0xff]
        %v1835 = vld [vmem:[%s1832 + $0x10] sm:$0xff]
        %v1836 = vld [vmem:[%s1832 + $0x18] sm:$0xff]
        %v1837 = vld [vmem:[%s1832 + $0x20] sm:$0xff]
        %v1838 = vld [vmem:[%s1832 + $0x28] sm:$0xff]
        %v1839 = vld [vmem:[%s1832 + $0x30] sm:$0xff]
        %v1840 = vld [vmem:[%s1832 + $0x38] sm:$0xff]
        %v1841 = vld [vmem:[%s1832 + $0x40] sm:$0xff]
        %v1842 = vld [vmem:[%s1832 + $0x48] sm:$0xff]
        %v1843 = vld [vmem:[%s1832 + $0x50] sm:$0xff]
        %v1844 = vld [vmem:[%s1832 + $0x58] sm:$0xff]
        %v1845 = vld [vmem:[%s1832 + $0x60] sm:$0xff]
        %v1846 = vld [vmem:[%s1832 + $0x68] sm:$0xff]
        %v1847 = vld [vmem:[%s1832 + $0x70] sm:$0xff]
        %v1848 = vld [vmem:[%s1832 + $0x78] sm:$0xff]
        %v1849 = vld [vmem:[%s1832 + $0x80] sm:$0xff]
        %v1850 = vld [vmem:[%s1832 + $0x88] sm:$0xff]
        %v1851 = vld [vmem:[%s1832 + $0x90] sm:$0xff]
        %v1852 = vld [vmem:[%s1832 + $0x98] sm:$0xff]
        %v1853 = vld [vmem:[%s1832 + $0xa0] sm:$0xff]
        %v1854 = vld [vmem:[%s1832 + $0xa8] sm:$0xff]
        %v1855 = vld [vmem:[%s1832 + $0xb0] sm:$0xff]
        %v1856 = vld [vmem:[%s1832 + $0xb8] sm:$0xff]
        %v1857 = vld [vmem:[%s1832 + $0xc0] sm:$0xff]
        %v1858 = vld [vmem:[%s1832 + $0xc8] sm:$0xff]
        %v1859 = vld [vmem:[%s1832 + $0xd0] sm:$0xff]
        %v1860 = vld [vmem:[%s1832 + $0xd8] sm:$0xff]
        %v1861 = vld [vmem:[%s1832 + $0xe0] sm:$0xff]
        %v1862 = vld [vmem:[%s1832 + $0xe8] sm:$0xff]
        %v1863 = vld [vmem:[%s1832 + $0xf0] sm:$0xff]
        %v1864 = vld [vmem:[%s1832 + $0xf8] sm:$0xff]
        %1865 = vmatprep.subr.mxu0 0.0
        %1866 = vmatpush1.msra.mxu0 %v1848
        %1867 = vmatprep.subr.mxu0 0.0
        %1868 = vmatpush1.msra.mxu0 %v1847
        %1869 = vmatprep.subr.mxu0 0.0
        %1870 = vmatpush1.msra.mxu0 %v1846
        %1871 = vmatprep.subr.mxu0 0.0
        %1872 = vmatpush1.msra.mxu0 %v1845
        %1873 = vmatprep.subr.mxu0 0.0
        %1874 = vmatpush1.msra.mxu0 %v1844
        %1875 = vmatprep.subr.mxu0 0.0
        %1876 = vmatpush1.msra.mxu0 %v1843
        %1877 = vmatprep.subr.mxu0 0.0
        %1878 = vmatpush1.msra.mxu0 %v1842
        %1879 = vmatprep.subr.mxu0 0.0
        %1880 = vmatpush1.msra.mxu0 %v1841
        %1881 = vmatprep.subr.mxu0 0.0
        %1882 = vmatpush1.msra.mxu0 %v1840
        %1883 = vmatprep.subr.mxu0 0.0
        %1884 = vmatpush1.msra.mxu0 %v1839
        %1885 = vmatprep.subr.mxu0 0.0
        %1886 = vmatpush1.msra.mxu0 %v1838
        %1887 = vmatprep.subr.mxu0 0.0
        %1888 = vmatpush1.msra.mxu0 %v1837
        %1889 = vmatprep.subr.mxu0 0.0
        %1890 = vmatpush1.msra.mxu0 %v1836
        %1891 = vmatprep.subr.mxu0 0.0
        %1892 = vmatpush1.msra.mxu0 %v1835
        %1893 = vmatprep.subr.mxu0 0.0
        %1894 = vmatpush1.msra.mxu0 %v1834
        %1895 = vmatprep.subr.mxu0 0.0
        %1896 = vmatpush1.msra.mxu0 %v1833
        %1897 = vmatprep.subr.mxu0 0.0
        %1898 = vmatpush2.msra.mxu0 %v1864
        %1899 = vmatprep.subr.mxu0 0.0
        %1900 = vmatpush2.msra.mxu0 %v1863
        %1901 = vmatprep.subr.mxu0 0.0
        %1902 = vmatpush2.msra.mxu0 %v1862
        %1903 = vmatprep.subr.mxu0 0.0
        %1904 = vmatpush2.msra.mxu0 %v1861
        %1905 = vmatprep.subr.mxu0 0.0
        %1906 = vmatpush2.msra.mxu0 %v1860
        %1907 = vmatprep.subr.mxu0 0.0
        %1908 = vmatpush2.msra.mxu0 %v1859
        %1909 = vmatprep.subr.mxu0 0.0
        %1910 = vmatpush2.msra.mxu0 %v1858
        %1911 = vmatprep.subr.mxu0 0.0
        %1912 = vmatpush2.msra.mxu0 %v1857
        %1913 = vmatprep.subr.mxu0 0.0
        %1914 = vmatpush2.msra.mxu0 %v1856
        %1915 = vmatprep.subr.mxu0 0.0
        %1916 = vmatpush2.msra.mxu0 %v1855
        %1917 = vmatprep.subr.mxu0 0.0
        %1918 = vmatpush2.msra.mxu0 %v1854
        %1919 = vmatprep.subr.mxu0 0.0
        %1920 = vmatpush2.msra.mxu0 %v1853
        %1921 = vmatprep.subr.mxu0 0.0
        %1922 = vmatpush2.msra.mxu0 %v1852
        %1923 = vmatprep.subr.mxu0 0.0
        %1924 = vmatpush2.msra.mxu0 %v1851
        %1925 = vmatprep.subr.mxu0 0.0
        %1926 = vmatpush2.msra.mxu0 %v1850
        %1927 = vmatprep.subr.mxu0 0.0
        %1928 = vmatpush2.msra.mxu0 %v1849
        %1929 = vmatprep.mubr.f32.mxu0 %v1407
        %1930 = vmatmul.mubr.f32.gmra.mxu0 %v1406
        %v1931 = vpop.f32.mrf.mxu0
        %v1932 = vadd.f32 0.0, %v1931
        %v1933 = vpop.f32.mrf.mxu0
        %1934 = vdwg.mxu0
        %v1936 = vrot.slane %v1932, 4
        %v1938 = vadd.f32 %v1831, %v1936
        %s1939 = scalar_lea.vmem [#allocation4], 1280
        %v1940 = vld [vmem:[%s1939] sm:$0xff]
        %v1941 = vld [vmem:[%s1939 + $0x8] sm:$0xff]
        %v1942 = vld [vmem:[%s1939 + $0x10] sm:$0xff]
        %v1943 = vld [vmem:[%s1939 + $0x18] sm:$0xff]
        %v1944 = vld [vmem:[%s1939 + $0x20] sm:$0xff]
        %v1945 = vld [vmem:[%s1939 + $0x28] sm:$0xff]
        %v1946 = vld [vmem:[%s1939 + $0x30] sm:$0xff]
        %v1947 = vld [vmem:[%s1939 + $0x38] sm:$0xff]
        %v1948 = vld [vmem:[%s1939 + $0x40] sm:$0xff]
        %v1949 = vld [vmem:[%s1939 + $0x48] sm:$0xff]
        %v1950 = vld [vmem:[%s1939 + $0x50] sm:$0xff]
        %v1951 = vld [vmem:[%s1939 + $0x58] sm:$0xff]
        %v1952 = vld [vmem:[%s1939 + $0x60] sm:$0xff]
        %v1953 = vld [vmem:[%s1939 + $0x68] sm:$0xff]
        %v1954 = vld [vmem:[%s1939 + $0x70] sm:$0xff]
        %v1955 = vld [vmem:[%s1939 + $0x78] sm:$0xff]
        %v1956 = vld [vmem:[%s1939 + $0x80] sm:$0xff]
        %v1957 = vld [vmem:[%s1939 + $0x88] sm:$0xff]
        %v1958 = vld [vmem:[%s1939 + $0x90] sm:$0xff]
        %v1959 = vld [vmem:[%s1939 + $0x98] sm:$0xff]
        %v1960 = vld [vmem:[%s1939 + $0xa0] sm:$0xff]
        %v1961 = vld [vmem:[%s1939 + $0xa8] sm:$0xff]
        %v1962 = vld [vmem:[%s1939 + $0xb0] sm:$0xff]
        %v1963 = vld [vmem:[%s1939 + $0xb8] sm:$0xff]
        %v1964 = vld [vmem:[%s1939 + $0xc0] sm:$0xff]
        %v1965 = vld [vmem:[%s1939 + $0xc8] sm:$0xff]
        %v1966 = vld [vmem:[%s1939 + $0xd0] sm:$0xff]
        %v1967 = vld [vmem:[%s1939 + $0xd8] sm:$0xff]
        %v1968 = vld [vmem:[%s1939 + $0xe0] sm:$0xff]
        %v1969 = vld [vmem:[%s1939 + $0xe8] sm:$0xff]
        %v1970 = vld [vmem:[%s1939 + $0xf0] sm:$0xff]
        %v1971 = vld [vmem:[%s1939 + $0xf8] sm:$0xff]
        %1972 = vmatprep.subr.mxu0 0.0
        %1973 = vmatpush1.msra.mxu0 %v1955
        %1974 = vmatprep.subr.mxu0 0.0
        %1975 = vmatpush1.msra.mxu0 %v1954
        %1976 = vmatprep.subr.mxu0 0.0
        %1977 = vmatpush1.msra.mxu0 %v1953
        %1978 = vmatprep.subr.mxu0 0.0
        %1979 = vmatpush1.msra.mxu0 %v1952
        %1980 = vmatprep.subr.mxu0 0.0
        %1981 = vmatpush1.msra.mxu0 %v1951
        %1982 = vmatprep.subr.mxu0 0.0
        %1983 = vmatpush1.msra.mxu0 %v1950
        %1984 = vmatprep.subr.mxu0 0.0
        %1985 = vmatpush1.msra.mxu0 %v1949
        %1986 = vmatprep.subr.mxu0 0.0
        %1987 = vmatpush1.msra.mxu0 %v1948
        %1988 = vmatprep.subr.mxu0 0.0
        %1989 = vmatpush1.msra.mxu0 %v1947
        %1990 = vmatprep.subr.mxu0 0.0
        %1991 = vmatpush1.msra.mxu0 %v1946
        %1992 = vmatprep.subr.mxu0 0.0
        %1993 = vmatpush1.msra.mxu0 %v1945
        %1994 = vmatprep.subr.mxu0 0.0
        %1995 = vmatpush1.msra.mxu0 %v1944
        %1996 = vmatprep.subr.mxu0 0.0
        %1997 = vmatpush1.msra.mxu0 %v1943
        %1998 = vmatprep.subr.mxu0 0.0
        %1999 = vmatpush1.msra.mxu0 %v1942
        %2000 = vmatprep.subr.mxu0 0.0
        %2001 = vmatpush1.msra.mxu0 %v1941
        %2002 = vmatprep.subr.mxu0 0.0
        %2003 = vmatpush1.msra.mxu0 %v1940
        %2004 = vmatprep.subr.mxu0 0.0
        %2005 = vmatpush2.msra.mxu0 %v1971
        %2006 = vmatprep.subr.mxu0 0.0
        %2007 = vmatpush2.msra.mxu0 %v1970
        %2008 = vmatprep.subr.mxu0 0.0
        %2009 = vmatpush2.msra.mxu0 %v1969
        %2010 = vmatprep.subr.mxu0 0.0
        %2011 = vmatpush2.msra.mxu0 %v1968
        %2012 = vmatprep.subr.mxu0 0.0
        %2013 = vmatpush2.msra.mxu0 %v1967
        %2014 = vmatprep.subr.mxu0 0.0
        %2015 = vmatpush2.msra.mxu0 %v1966
        %2016 = vmatprep.subr.mxu0 0.0
        %2017 = vmatpush2.msra.mxu0 %v1965
        %2018 = vmatprep.subr.mxu0 0.0
        %2019 = vmatpush2.msra.mxu0 %v1964
        %2020 = vmatprep.subr.mxu0 0.0
        %2021 = vmatpush2.msra.mxu0 %v1963
        %2022 = vmatprep.subr.mxu0 0.0
        %2023 = vmatpush2.msra.mxu0 %v1962
        %2024 = vmatprep.subr.mxu0 0.0
        %2025 = vmatpush2.msra.mxu0 %v1961
        %2026 = vmatprep.subr.mxu0 0.0
        %2027 = vmatpush2.msra.mxu0 %v1960
        %2028 = vmatprep.subr.mxu0 0.0
        %2029 = vmatpush2.msra.mxu0 %v1959
        %2030 = vmatprep.subr.mxu0 0.0
        %2031 = vmatpush2.msra.mxu0 %v1958
        %2032 = vmatprep.subr.mxu0 0.0
        %2033 = vmatpush2.msra.mxu0 %v1957
        %2034 = vmatprep.subr.mxu0 0.0
        %2035 = vmatpush2.msra.mxu0 %v1956
        %2036 = vmatprep.mubr.f32.mxu0 %v1407
        %2037 = vmatmul.mubr.f32.gmra.mxu0 %v1406
        %v2038 = vpop.f32.mrf.mxu0
        %v2039 = vadd.f32 0.0, %v2038
        %v2040 = vpop.f32.mrf.mxu0
        %2041 = vdwg.mxu0
        %v2043 = vrot.slane %v2039, 5
        %v2045 = vadd.f32 %v1938, %v2043
        %s2046 = scalar_lea.vmem [#allocation4], 1536
        %v2047 = vld [vmem:[%s2046] sm:$0xff]
        %v2048 = vld [vmem:[%s2046 + $0x8] sm:$0xff]
        %v2049 = vld [vmem:[%s2046 + $0x10] sm:$0xff]
        %v2050 = vld [vmem:[%s2046 + $0x18] sm:$0xff]
        %v2051 = vld [vmem:[%s2046 + $0x20] sm:$0xff]
        %v2052 = vld [vmem:[%s2046 + $0x28] sm:$0xff]
        %v2053 = vld [vmem:[%s2046 + $0x30] sm:$0xff]
        %v2054 = vld [vmem:[%s2046 + $0x38] sm:$0xff]
        %v2055 = vld [vmem:[%s2046 + $0x40] sm:$0xff]
        %v2056 = vld [vmem:[%s2046 + $0x48] sm:$0xff]
        %v2057 = vld [vmem:[%s2046 + $0x50] sm:$0xff]
        %v2058 = vld [vmem:[%s2046 + $0x58] sm:$0xff]
        %v2059 = vld [vmem:[%s2046 + $0x60] sm:$0xff]
        %v2060 = vld [vmem:[%s2046 + $0x68] sm:$0xff]
        %v2061 = vld [vmem:[%s2046 + $0x70] sm:$0xff]
        %v2062 = vld [vmem:[%s2046 + $0x78] sm:$0xff]
        %v2063 = vld [vmem:[%s2046 + $0x80] sm:$0xff]
        %v2064 = vld [vmem:[%s2046 + $0x88] sm:$0xff]
        %v2065 = vld [vmem:[%s2046 + $0x90] sm:$0xff]
        %v2066 = vld [vmem:[%s2046 + $0x98] sm:$0xff]
        %v2067 = vld [vmem:[%s2046 + $0xa0] sm:$0xff]
        %v2068 = vld [vmem:[%s2046 + $0xa8] sm:$0xff]
        %v2069 = vld [vmem:[%s2046 + $0xb0] sm:$0xff]
        %v2070 = vld [vmem:[%s2046 + $0xb8] sm:$0xff]
        %v2071 = vld [vmem:[%s2046 + $0xc0] sm:$0xff]
        %v2072 = vld [vmem:[%s2046 + $0xc8] sm:$0xff]
        %v2073 = vld [vmem:[%s2046 + $0xd0] sm:$0xff]
        %v2074 = vld [vmem:[%s2046 + $0xd8] sm:$0xff]
        %v2075 = vld [vmem:[%s2046 + $0xe0] sm:$0xff]
        %v2076 = vld [vmem:[%s2046 + $0xe8] sm:$0xff]
        %v2077 = vld [vmem:[%s2046 + $0xf0] sm:$0xff]
        %v2078 = vld [vmem:[%s2046 + $0xf8] sm:$0xff]
        %2079 = vmatprep.subr.mxu0 0.0
        %2080 = vmatpush1.msra.mxu0 %v2062
        %2081 = vmatprep.subr.mxu0 0.0
        %2082 = vmatpush1.msra.mxu0 %v2061
        %2083 = vmatprep.subr.mxu0 0.0
        %2084 = vmatpush1.msra.mxu0 %v2060
        %2085 = vmatprep.subr.mxu0 0.0
        %2086 = vmatpush1.msra.mxu0 %v2059
        %2087 = vmatprep.subr.mxu0 0.0
        %2088 = vmatpush1.msra.mxu0 %v2058
        %2089 = vmatprep.subr.mxu0 0.0
        %2090 = vmatpush1.msra.mxu0 %v2057
        %2091 = vmatprep.subr.mxu0 0.0
        %2092 = vmatpush1.msra.mxu0 %v2056
        %2093 = vmatprep.subr.mxu0 0.0
        %2094 = vmatpush1.msra.mxu0 %v2055
        %2095 = vmatprep.subr.mxu0 0.0
        %2096 = vmatpush1.msra.mxu0 %v2054
        %2097 = vmatprep.subr.mxu0 0.0
        %2098 = vmatpush1.msra.mxu0 %v2053
        %2099 = vmatprep.subr.mxu0 0.0
        %2100 = vmatpush1.msra.mxu0 %v2052
        %2101 = vmatprep.subr.mxu0 0.0
        %2102 = vmatpush1.msra.mxu0 %v2051
        %2103 = vmatprep.subr.mxu0 0.0
        %2104 = vmatpush1.msra.mxu0 %v2050
        %2105 = vmatprep.subr.mxu0 0.0
        %2106 = vmatpush1.msra.mxu0 %v2049
        %2107 = vmatprep.subr.mxu0 0.0
        %2108 = vmatpush1.msra.mxu0 %v2048
        %2109 = vmatprep.subr.mxu0 0.0
        %2110 = vmatpush1.msra.mxu0 %v2047
        %2111 = vmatprep.subr.mxu0 0.0
        %2112 = vmatpush2.msra.mxu0 %v2078
        %2113 = vmatprep.subr.mxu0 0.0
        %2114 = vmatpush2.msra.mxu0 %v2077
        %2115 = vmatprep.subr.mxu0 0.0
        %2116 = vmatpush2.msra.mxu0 %v2076
        %2117 = vmatprep.subr.mxu0 0.0
        %2118 = vmatpush2.msra.mxu0 %v2075
        %2119 = vmatprep.subr.mxu0 0.0
        %2120 = vmatpush2.msra.mxu0 %v2074
        %2121 = vmatprep.subr.mxu0 0.0
        %2122 = vmatpush2.msra.mxu0 %v2073
        %2123 = vmatprep.subr.mxu0 0.0
        %2124 = vmatpush2.msra.mxu0 %v2072
        %2125 = vmatprep.subr.mxu0 0.0
        %2126 = vmatpush2.msra.mxu0 %v2071
        %2127 = vmatprep.subr.mxu0 0.0
        %2128 = vmatpush2.msra.mxu0 %v2070
        %2129 = vmatprep.subr.mxu0 0.0
        %2130 = vmatpush2.msra.mxu0 %v2069
        %2131 = vmatprep.subr.mxu0 0.0
        %2132 = vmatpush2.msra.mxu0 %v2068
        %2133 = vmatprep.subr.mxu0 0.0
        %2134 = vmatpush2.msra.mxu0 %v2067
        %2135 = vmatprep.subr.mxu0 0.0
        %2136 = vmatpush2.msra.mxu0 %v2066
        %2137 = vmatprep.subr.mxu0 0.0
        %2138 = vmatpush2.msra.mxu0 %v2065
        %2139 = vmatprep.subr.mxu0 0.0
        %2140 = vmatpush2.msra.mxu0 %v2064
        %2141 = vmatprep.subr.mxu0 0.0
        %2142 = vmatpush2.msra.mxu0 %v2063
        %2143 = vmatprep.mubr.f32.mxu0 %v1407
        %2144 = vmatmul.mubr.f32.gmra.mxu0 %v1406
        %v2145 = vpop.f32.mrf.mxu0
        %v2146 = vadd.f32 0.0, %v2145
        %v2147 = vpop.f32.mrf.mxu0
        %2148 = vdwg.mxu0
        %v2150 = vrot.slane %v2146, 6
        %v2152 = vadd.f32 %v2045, %v2150
        %s2153 = scalar_lea.vmem [#allocation4], 1792
        %v2154 = vld [vmem:[%s2153] sm:$0xff]
        %v2155 = vld [vmem:[%s2153 + $0x8] sm:$0xff]
        %v2156 = vld [vmem:[%s2153 + $0x10] sm:$0xff]
        %v2157 = vld [vmem:[%s2153 + $0x18] sm:$0xff]
        %v2158 = vld [vmem:[%s2153 + $0x20] sm:$0xff]
        %v2159 = vld [vmem:[%s2153 + $0x28] sm:$0xff]
        %v2160 = vld [vmem:[%s2153 + $0x30] sm:$0xff]
        %v2161 = vld [vmem:[%s2153 + $0x38] sm:$0xff]
        %v2162 = vld [vmem:[%s2153 + $0x40] sm:$0xff]
        %v2163 = vld [vmem:[%s2153 + $0x48] sm:$0xff]
        %v2164 = vld [vmem:[%s2153 + $0x50] sm:$0xff]
        %v2165 = vld [vmem:[%s2153 + $0x58] sm:$0xff]
        %v2166 = vld [vmem:[%s2153 + $0x60] sm:$0xff]
        %v2167 = vld [vmem:[%s2153 + $0x68] sm:$0xff]
        %v2168 = vld [vmem:[%s2153 + $0x70] sm:$0xff]
        %v2169 = vld [vmem:[%s2153 + $0x78] sm:$0xff]
        %v2170 = vld [vmem:[%s2153 + $0x80] sm:$0xff]
        %v2171 = vld [vmem:[%s2153 + $0x88] sm:$0xff]
        %v2172 = vld [vmem:[%s2153 + $0x90] sm:$0xff]
        %v2173 = vld [vmem:[%s2153 + $0x98] sm:$0xff]
        %v2174 = vld [vmem:[%s2153 + $0xa0] sm:$0xff]
        %v2175 = vld [vmem:[%s2153 + $0xa8] sm:$0xff]
        %v2176 = vld [vmem:[%s2153 + $0xb0] sm:$0xff]
        %v2177 = vld [vmem:[%s2153 + $0xb8] sm:$0xff]
        %v2178 = vld [vmem:[%s2153 + $0xc0] sm:$0xff]
        %v2179 = vld [vmem:[%s2153 + $0xc8] sm:$0xff]
        %v2180 = vld [vmem:[%s2153 + $0xd0] sm:$0xff]
        %v2181 = vld [vmem:[%s2153 + $0xd8] sm:$0xff]
        %v2182 = vld [vmem:[%s2153 + $0xe0] sm:$0xff]
        %v2183 = vld [vmem:[%s2153 + $0xe8] sm:$0xff]
        %v2184 = vld [vmem:[%s2153 + $0xf0] sm:$0xff]
        %v2185 = vld [vmem:[%s2153 + $0xf8] sm:$0xff]
        %2186 = vmatprep.subr.mxu0 0.0
        %2187 = vmatpush1.msra.mxu0 %v2169
        %2188 = vmatprep.subr.mxu0 0.0
        %2189 = vmatpush1.msra.mxu0 %v2168
        %2190 = vmatprep.subr.mxu0 0.0
        %2191 = vmatpush1.msra.mxu0 %v2167
        %2192 = vmatprep.subr.mxu0 0.0
        %2193 = vmatpush1.msra.mxu0 %v2166
        %2194 = vmatprep.subr.mxu0 0.0
        %2195 = vmatpush1.msra.mxu0 %v2165
        %2196 = vmatprep.subr.mxu0 0.0
        %2197 = vmatpush1.msra.mxu0 %v2164
        %2198 = vmatprep.subr.mxu0 0.0
        %2199 = vmatpush1.msra.mxu0 %v2163
        %2200 = vmatprep.subr.mxu0 0.0
        %2201 = vmatpush1.msra.mxu0 %v2162
        %2202 = vmatprep.subr.mxu0 0.0
        %2203 = vmatpush1.msra.mxu0 %v2161
        %2204 = vmatprep.subr.mxu0 0.0
        %2205 = vmatpush1.msra.mxu0 %v2160
        %2206 = vmatprep.subr.mxu0 0.0
        %2207 = vmatpush1.msra.mxu0 %v2159
        %2208 = vmatprep.subr.mxu0 0.0
        %2209 = vmatpush1.msra.mxu0 %v2158
        %2210 = vmatprep.subr.mxu0 0.0
        %2211 = vmatpush1.msra.mxu0 %v2157
        %2212 = vmatprep.subr.mxu0 0.0
        %2213 = vmatpush1.msra.mxu0 %v2156
        %2214 = vmatprep.subr.mxu0 0.0
        %2215 = vmatpush1.msra.mxu0 %v2155
        %2216 = vmatprep.subr.mxu0 0.0
        %2217 = vmatpush1.msra.mxu0 %v2154
        %2218 = vmatprep.subr.mxu0 0.0
        %2219 = vmatpush2.msra.mxu0 %v2185
        %2220 = vmatprep.subr.mxu0 0.0
        %2221 = vmatpush2.msra.mxu0 %v2184
        %2222 = vmatprep.subr.mxu0 0.0
        %2223 = vmatpush2.msra.mxu0 %v2183
        %2224 = vmatprep.subr.mxu0 0.0
        %2225 = vmatpush2.msra.mxu0 %v2182
        %2226 = vmatprep.subr.mxu0 0.0
        %2227 = vmatpush2.msra.mxu0 %v2181
        %2228 = vmatprep.subr.mxu0 0.0
        %2229 = vmatpush2.msra.mxu0 %v2180
        %2230 = vmatprep.subr.mxu0 0.0
        %2231 = vmatpush2.msra.mxu0 %v2179
        %2232 = vmatprep.subr.mxu0 0.0
        %2233 = vmatpush2.msra.mxu0 %v2178
        %2234 = vmatprep.subr.mxu0 0.0
        %2235 = vmatpush2.msra.mxu0 %v2177
        %2236 = vmatprep.subr.mxu0 0.0
        %2237 = vmatpush2.msra.mxu0 %v2176
        %2238 = vmatprep.subr.mxu0 0.0
        %2239 = vmatpush2.msra.mxu0 %v2175
        %2240 = vmatprep.subr.mxu0 0.0
        %2241 = vmatpush2.msra.mxu0 %v2174
        %2242 = vmatprep.subr.mxu0 0.0
        %2243 = vmatpush2.msra.mxu0 %v2173
        %2244 = vmatprep.subr.mxu0 0.0
        %2245 = vmatpush2.msra.mxu0 %v2172
        %2246 = vmatprep.subr.mxu0 0.0
        %2247 = vmatpush2.msra.mxu0 %v2171
        %2248 = vmatprep.subr.mxu0 0.0
        %2249 = vmatpush2.msra.mxu0 %v2170
        %2250 = vmatprep.mubr.f32.mxu0 %v1407
        %2251 = vmatmul.mubr.f32.gmra.mxu0 %v1406
        %v2252 = vpop.f32.mrf.mxu0
        %v2253 = vadd.f32 0.0, %v2252
        %v2254 = vpop.f32.mrf.mxu0
        %2255 = vdwg.mxu0
        %v2257 = vrot.slane %v2253, 7
        %v2259 = vadd.f32 %v2152, %v2257
        %v2260 = vld [vmem:[%s8] sm:$0x1]
        %v2261 = vmul.f32 %v2259, %v2260
        %v2262 = vld [vmem:[%s9] sm:$0x1]
        %v2263 = vadd.f32 %v2261, %v2262
        %vm2264 = vcmp.gt.f32.partialorder %v2263, 20.0
        %v2265 = vmin.f32 %v2263, 20.0
        %v2266 = vmul.f32 %v2265, 1.442695
        %v2267 = vpow.pop %v2266
        %v2268 = vadd.f32 %v2267, 1.0
        %v2269 = vlog2.pop %v2268
        %v2270 = vmul.f32 %v2269, 0.6931472
        %v2271 = vmul.f32 -0.5, %v2267
        %v2272 = vadd.f32 %v2271, 1.0
        %v2273 = vmul.f32 %v2272, %v2267
        %v2274 = vand.u32 2147483647, %v2267
        %vm2275 = vcmp.lt.f32.partialorder %v2274, 0.0004427343
        %v2276 = vsel %vm2275, %v2273, %v2270
        %v2277 = vsel %vm2264, %v2263, %v2276
        %2278 = vst [vmem:[%s367] sm:$0x1] %v2277
        %2279 = vst [vmem:[#allocation2] sm:$0xff] 0.0
        %2280 = vst [vmem:[#allocation2 + $0x8] sm:$0xff] 0.0
        %s2281 = scalar_lea.vmem %s372, 8
        %v2282 = vld [vmem:[%s2281] sm:$0xff]
        %v2284 = vcombine.high %v2282, %v2282
        %2286 = vst [vmem:[#allocation2] sm:$0xf] %v2282
        %2287 = vst [vmem:[#allocation2 + $0x8] sm:$0xf] %v2284
        %v2288 = vld [vmem:[#allocation2] sm:$0xff]
        %v2289 = vld [vmem:[#allocation2 + $0x8] sm:$0xff]
        %2290 = vst [vmem:[#allocation3] sm:$0xff] %v2288
        %2291 = vst [vmem:[#allocation3 + $0x8] sm:$0xff] %v2289
        %2292 = vrot.lane.b32.xlu0 %v2288, 127
        %v2293 = vpop.permute.xlu0 %2292
        %2294 = vrot.lane.b32.xlu0 %v2289, 127
        %v2295 = vpop.permute.xlu0 %2294
        %v2296 = vsel %vm391, %v2293, %v2295
        %v2297 = vsel %vm391, %v2295, %v2293
        %2298 = vst [vmem:[#allocation3 + $0x10] sm:$0xff] %v2296
        %2299 = vst [vmem:[#allocation3 + $0x18] sm:$0xff] %v2297
        %2300 = vrot.lane.b32.xlu0 %v2288, 126
        %v2301 = vpop.permute.xlu0 %2300
        %2302 = vrot.lane.b32.xlu0 %v2289, 126
        %v2303 = vpop.permute.xlu0 %2302
        %v2304 = vsel %vm400, %v2301, %v2303
        %v2305 = vsel %vm400, %v2303, %v2301
        %2306 = vst [vmem:[#allocation3 + $0x20] sm:$0xff] %v2304
        %2307 = vst [vmem:[#allocation3 + $0x28] sm:$0xff] %v2305
        %2308 = vrot.lane.b32.xlu0 %v2288, 125
        %v2309 = vpop.permute.xlu0 %2308
        %2310 = vrot.lane.b32.xlu0 %v2289, 125
        %v2311 = vpop.permute.xlu0 %2310
        %v2312 = vsel %vm409, %v2309, %v2311
        %v2313 = vsel %vm409, %v2311, %v2309
        %2314 = vst [vmem:[#allocation3 + $0x30] sm:$0xff] %v2312
        %2315 = vst [vmem:[#allocation3 + $0x38] sm:$0xff] %v2313
        %2316 = vrot.lane.b32.xlu0 %v2288, 124
        %v2317 = vpop.permute.xlu0 %2316
        %2318 = vrot.lane.b32.xlu0 %v2289, 124
        %v2319 = vpop.permute.xlu0 %2318
        %v2320 = vsel %vm418, %v2317, %v2319
        %v2321 = vsel %vm418, %v2319, %v2317
        %2322 = vst [vmem:[#allocation3 + $0x40] sm:$0xff] %v2320
        %2323 = vst [vmem:[#allocation3 + $0x48] sm:$0xff] %v2321
        %2324 = vrot.lane.b32.xlu0 %v2288, 123
        %v2325 = vpop.permute.xlu0 %2324
        %2326 = vrot.lane.b32.xlu0 %v2289, 123
        %v2327 = vpop.permute.xlu0 %2326
        %v2328 = vsel %vm427, %v2325, %v2327
        %v2329 = vsel %vm427, %v2327, %v2325
        %2330 = vst [vmem:[#allocation3 + $0x50] sm:$0xff] %v2328
        %2331 = vst [vmem:[#allocation3 + $0x58] sm:$0xff] %v2329
        %2332 = vrot.lane.b32.xlu0 %v2288, 122
        %v2333 = vpop.permute.xlu0 %2332
        %2334 = vrot.lane.b32.xlu0 %v2289, 122
        %v2335 = vpop.permute.xlu0 %2334
        %v2336 = vsel %vm436, %v2333, %v2335
        %v2337 = vsel %vm436, %v2335, %v2333
        %2338 = vst [vmem:[#allocation3 + $0x60] sm:$0xff] %v2336
        %2339 = vst [vmem:[#allocation3 + $0x68] sm:$0xff] %v2337
        %2340 = vrot.lane.b32.xlu0 %v2288, 112
        %v2341 = vpop.permute.xlu0 %2340
        %2342 = vrot.lane.b32.xlu0 %v2289, 112
        %v2343 = vpop.permute.xlu0 %2342
        %v2344 = vsel %vm445, %v2341, %v2343
        %v2345 = vsel %vm445, %v2343, %v2341
        %2346 = vst [vmem:[#allocation3 + $0x70] sm:$0xff] %v2344
        %2347 = vst [vmem:[#allocation3 + $0x78] sm:$0xff] %v2345
        %2348 = vrot.lane.b32.xlu0 %v2288, 111
        %v2349 = vpop.permute.xlu0 %2348
        %2350 = vrot.lane.b32.xlu0 %v2289, 111
        %v2351 = vpop.permute.xlu0 %2350
        %v2352 = vsel %vm454, %v2349, %v2351
        %v2353 = vsel %vm454, %v2351, %v2349
        %2354 = vst [vmem:[#allocation3 + $0x80] sm:$0xff] %v2352
        %2355 = vst [vmem:[#allocation3 + $0x88] sm:$0xff] %v2353
        %2356 = vrot.lane.b32.xlu0 %v2288, 110
        %v2357 = vpop.permute.xlu0 %2356
        %2358 = vrot.lane.b32.xlu0 %v2289, 110
        %v2359 = vpop.permute.xlu0 %2358
        %v2360 = vsel %vm463, %v2357, %v2359
        %v2361 = vsel %vm463, %v2359, %v2357
        %2362 = vst [vmem:[#allocation3 + $0x90] sm:$0xff] %v2360
        %2363 = vst [vmem:[#allocation3 + $0x98] sm:$0xff] %v2361
        %2364 = vrot.lane.b32.xlu0 %v2288, 109
        %v2365 = vpop.permute.xlu0 %2364
        %2366 = vrot.lane.b32.xlu0 %v2289, 109
        %v2367 = vpop.permute.xlu0 %2366
        %v2368 = vsel %vm472, %v2365, %v2367
        %v2369 = vsel %vm472, %v2367, %v2365
        %2370 = vst [vmem:[#allocation3 + $0xa0] sm:$0xff] %v2368
        %2371 = vst [vmem:[#allocation3 + $0xa8] sm:$0xff] %v2369
        %2372 = vrot.lane.b32.xlu0 %v2288, 108
        %v2373 = vpop.permute.xlu0 %2372
        %2374 = vrot.lane.b32.xlu0 %v2289, 108
        %v2375 = vpop.permute.xlu0 %2374
        %v2376 = vsel %vm481, %v2373, %v2375
        %v2377 = vsel %vm481, %v2375, %v2373
        %2378 = vst [vmem:[#allocation3 + $0xb0] sm:$0xff] %v2376
        %2379 = vst [vmem:[#allocation3 + $0xb8] sm:$0xff] %v2377
        %2380 = vrot.lane.b32.xlu0 %v2288, 107
        %v2381 = vpop.permute.xlu0 %2380
        %2382 = vrot.lane.b32.xlu0 %v2289, 107
        %v2383 = vpop.permute.xlu0 %2382
        %v2384 = vsel %vm490, %v2381, %v2383
        %v2385 = vsel %vm490, %v2383, %v2381
        %2386 = vst [vmem:[#allocation3 + $0xc0] sm:$0xff] %v2384
        %2387 = vst [vmem:[#allocation3 + $0xc8] sm:$0xff] %v2385
        %2388 = vrot.lane.b32.xlu0 %v2288, 106
        %v2389 = vpop.permute.xlu0 %2388
        %2390 = vrot.lane.b32.xlu0 %v2289, 106
        %v2391 = vpop.permute.xlu0 %2390
        %v2392 = vsel %vm499, %v2389, %v2391
        %v2393 = vsel %vm499, %v2391, %v2389
        %2394 = vst [vmem:[#allocation3 + $0xd0] sm:$0xff] %v2392
        %2395 = vst [vmem:[#allocation3 + $0xd8] sm:$0xff] %v2393
        %2396 = vrot.lane.b32.xlu0 %v2288, 96
        %v2397 = vpop.permute.xlu0 %2396
        %2398 = vrot.lane.b32.xlu0 %v2289, 96
        %v2399 = vpop.permute.xlu0 %2398
        %v2400 = vsel %vm508, %v2397, %v2399
        %v2401 = vsel %vm508, %v2399, %v2397
        %2402 = vst [vmem:[#allocation3 + $0xe0] sm:$0xff] %v2400
        %2403 = vst [vmem:[#allocation3 + $0xe8] sm:$0xff] %v2401
        %2404 = vrot.lane.b32.xlu0 %v2288, 95
        %v2405 = vpop.permute.xlu0 %2404
        %2406 = vrot.lane.b32.xlu0 %v2289, 95
        %v2407 = vpop.permute.xlu0 %2406
        %v2408 = vsel %vm517, %v2405, %v2407
        %v2409 = vsel %vm517, %v2407, %v2405
        %2410 = vst [vmem:[#allocation3 + $0xf0] sm:$0xff] %v2408
        %2411 = vst [vmem:[#allocation3 + $0xf8] sm:$0xff] %v2409
        %2412 = vrot.lane.b32.xlu0 %v2288, 94
        %v2413 = vpop.permute.xlu0 %2412
        %2414 = vrot.lane.b32.xlu0 %v2289, 94
        %v2415 = vpop.permute.xlu0 %2414
        %v2416 = vsel %vm526, %v2413, %v2415
        %v2417 = vsel %vm526, %v2415, %v2413
        %2418 = vst [vmem:[#allocation3 + $0x100] sm:$0xff] %v2416
        %2419 = vst [vmem:[#allocation3 + $0x108] sm:$0xff] %v2417
        %2420 = vrot.lane.b32.xlu0 %v2288, 93
        %v2421 = vpop.permute.xlu0 %2420
        %2422 = vrot.lane.b32.xlu0 %v2289, 93
        %v2423 = vpop.permute.xlu0 %2422
        %v2424 = vsel %vm535, %v2421, %v2423
        %v2425 = vsel %vm535, %v2423, %v2421
        %2426 = vst [vmem:[#allocation3 + $0x110] sm:$0xff] %v2424
        %2427 = vst [vmem:[#allocation3 + $0x118] sm:$0xff] %v2425
        %2428 = vrot.lane.b32.xlu0 %v2288, 92
        %v2429 = vpop.permute.xlu0 %2428
        %2430 = vrot.lane.b32.xlu0 %v2289, 92
        %v2431 = vpop.permute.xlu0 %2430
        %v2432 = vsel %vm544, %v2429, %v2431
        %v2433 = vsel %vm544, %v2431, %v2429
        %2434 = vst [vmem:[#allocation3 + $0x120] sm:$0xff] %v2432
        %2435 = vst [vmem:[#allocation3 + $0x128] sm:$0xff] %v2433
        %2436 = vrot.lane.b32.xlu0 %v2288, 91
        %v2437 = vpop.permute.xlu0 %2436
        %2438 = vrot.lane.b32.xlu0 %v2289, 91
        %v2439 = vpop.permute.xlu0 %2438
        %v2440 = vsel %vm553, %v2437, %v2439
        %v2441 = vsel %vm553, %v2439, %v2437
        %2442 = vst [vmem:[#allocation3 + $0x130] sm:$0xff] %v2440
        %2443 = vst [vmem:[#allocation3 + $0x138] sm:$0xff] %v2441
        %2444 = vrot.lane.b32.xlu0 %v2288, 90
        %v2445 = vpop.permute.xlu0 %2444
        %2446 = vrot.lane.b32.xlu0 %v2289, 90
        %v2447 = vpop.permute.xlu0 %2446
        %v2448 = vsel %vm562, %v2445, %v2447
        %v2449 = vsel %vm562, %v2447, %v2445
        %2450 = vst [vmem:[#allocation3 + $0x140] sm:$0xff] %v2448
        %2451 = vst [vmem:[#allocation3 + $0x148] sm:$0xff] %v2449
        %2452 = vrot.lane.b32.xlu0 %v2288, 80
        %v2453 = vpop.permute.xlu0 %2452
        %2454 = vrot.lane.b32.xlu0 %v2289, 80
        %v2455 = vpop.permute.xlu0 %2454
        %v2456 = vsel %vm571, %v2453, %v2455
        %v2457 = vsel %vm571, %v2455, %v2453
        %2458 = vst [vmem:[#allocation3 + $0x150] sm:$0xff] %v2456
        %2459 = vst [vmem:[#allocation3 + $0x158] sm:$0xff] %v2457
        %2460 = vrot.lane.b32.xlu0 %v2288, 79
        %v2461 = vpop.permute.xlu0 %2460
        %2462 = vrot.lane.b32.xlu0 %v2289, 79
        %v2463 = vpop.permute.xlu0 %2462
        %v2464 = vsel %vm580, %v2461, %v2463
        %v2465 = vsel %vm580, %v2463, %v2461
        %2466 = vst [vmem:[#allocation3 + $0x160] sm:$0xff] %v2464
        %2467 = vst [vmem:[#allocation3 + $0x168] sm:$0xff] %v2465
        %2468 = vrot.lane.b32.xlu0 %v2288, 78
        %v2469 = vpop.permute.xlu0 %2468
        %2470 = vrot.lane.b32.xlu0 %v2289, 78
        %v2471 = vpop.permute.xlu0 %2470
        %v2472 = vsel %vm589, %v2469, %v2471
        %v2473 = vsel %vm589, %v2471, %v2469
        %2474 = vst [vmem:[#allocation3 + $0x170] sm:$0xff] %v2472
        %2475 = vst [vmem:[#allocation3 + $0x178] sm:$0xff] %v2473
        %2476 = vrot.lane.b32.xlu0 %v2288, 77
        %v2477 = vpop.permute.xlu0 %2476
        %2478 = vrot.lane.b32.xlu0 %v2289, 77
        %v2479 = vpop.permute.xlu0 %2478
        %v2480 = vsel %vm598, %v2477, %v2479
        %v2481 = vsel %vm598, %v2479, %v2477
        %2482 = vst [vmem:[#allocation3 + $0x180] sm:$0xff] %v2480
        %2483 = vst [vmem:[#allocation3 + $0x188] sm:$0xff] %v2481
        %2484 = vrot.lane.b32.xlu0 %v2288, 76
        %v2485 = vpop.permute.xlu0 %2484
        %2486 = vrot.lane.b32.xlu0 %v2289, 76
        %v2487 = vpop.permute.xlu0 %2486
        %v2488 = vsel %vm607, %v2485, %v2487
        %v2489 = vsel %vm607, %v2487, %v2485
        %2490 = vst [vmem:[#allocation3 + $0x190] sm:$0xff] %v2488
        %2491 = vst [vmem:[#allocation3 + $0x198] sm:$0xff] %v2489
        %2492 = vrot.lane.b32.xlu0 %v2288, 75
        %v2493 = vpop.permute.xlu0 %2492
        %2494 = vrot.lane.b32.xlu0 %v2289, 75
        %v2495 = vpop.permute.xlu0 %2494
        %v2496 = vsel %vm616, %v2493, %v2495
        %v2497 = vsel %vm616, %v2495, %v2493
        %2498 = vst [vmem:[#allocation3 + $0x1a0] sm:$0xff] %v2496
        %2499 = vst [vmem:[#allocation3 + $0x1a8] sm:$0xff] %v2497
        %2500 = vrot.lane.b32.xlu0 %v2288, 74
        %v2501 = vpop.permute.xlu0 %2500
        %2502 = vrot.lane.b32.xlu0 %v2289, 74
        %v2503 = vpop.permute.xlu0 %2502
        %v2504 = vsel %vm625, %v2501, %v2503
        %v2505 = vsel %vm625, %v2503, %v2501
        %2506 = vst [vmem:[#allocation3 + $0x1b0] sm:$0xff] %v2504
        %2507 = vst [vmem:[#allocation3 + $0x1b8] sm:$0xff] %v2505
        %2508 = vrot.lane.b32.xlu0 %v2288, 64
        %v2509 = vpop.permute.xlu0 %2508
        %2510 = vrot.lane.b32.xlu0 %v2289, 64
        %v2511 = vpop.permute.xlu0 %2510
        %v2512 = vsel %vm634, %v2509, %v2511
        %v2513 = vsel %vm634, %v2511, %v2509
        %2514 = vst [vmem:[#allocation3 + $0x1c0] sm:$0xff] %v2512
        %2515 = vst [vmem:[#allocation3 + $0x1c8] sm:$0xff] %v2513
        %2516 = vrot.lane.b32.xlu0 %v2288, 63
        %v2517 = vpop.permute.xlu0 %2516
        %2518 = vrot.lane.b32.xlu0 %v2289, 63
        %v2519 = vpop.permute.xlu0 %2518
        %v2520 = vsel %vm643, %v2517, %v2519
        %v2521 = vsel %vm643, %v2519, %v2517
        %2522 = vst [vmem:[#allocation3 + $0x1d0] sm:$0xff] %v2520
        %2523 = vst [vmem:[#allocation3 + $0x1d8] sm:$0xff] %v2521
        %2524 = vrot.lane.b32.xlu0 %v2288, 62
        %v2525 = vpop.permute.xlu0 %2524
        %2526 = vrot.lane.b32.xlu0 %v2289, 62
        %v2527 = vpop.permute.xlu0 %2526
        %v2528 = vsel %vm652, %v2525, %v2527
        %v2529 = vsel %vm652, %v2527, %v2525
        %2530 = vst [vmem:[#allocation3 + $0x1e0] sm:$0xff] %v2528
        %2531 = vst [vmem:[#allocation3 + $0x1e8] sm:$0xff] %v2529
        %2532 = vrot.lane.b32.xlu0 %v2288, 61
        %v2533 = vpop.permute.xlu0 %2532
        %2534 = vrot.lane.b32.xlu0 %v2289, 61
        %v2535 = vpop.permute.xlu0 %2534
        %v2536 = vsel %vm661, %v2533, %v2535
        %v2537 = vsel %vm661, %v2535, %v2533
        %2538 = vst [vmem:[#allocation3 + $0x1f0] sm:$0xff] %v2536
        %2539 = vst [vmem:[#allocation3 + $0x1f8] sm:$0xff] %v2537
        %2540 = vrot.lane.b32.xlu0 %v2288, 60
        %v2541 = vpop.permute.xlu0 %2540
        %2542 = vrot.lane.b32.xlu0 %v2289, 60
        %v2543 = vpop.permute.xlu0 %2542
        %v2544 = vsel %vm670, %v2541, %v2543
        %v2545 = vsel %vm670, %v2543, %v2541
        %2546 = vst [vmem:[#allocation3 + $0x200] sm:$0xff] %v2544
        %2547 = vst [vmem:[#allocation3 + $0x208] sm:$0xff] %v2545
        %2548 = vrot.lane.b32.xlu0 %v2288, 59
        %v2549 = vpop.permute.xlu0 %2548
        %2550 = vrot.lane.b32.xlu0 %v2289, 59
        %v2551 = vpop.permute.xlu0 %2550
        %v2552 = vsel %vm679, %v2549, %v2551
        %v2553 = vsel %vm679, %v2551, %v2549
        %2554 = vst [vmem:[#allocation3 + $0x210] sm:$0xff] %v2552
        %2555 = vst [vmem:[#allocation3 + $0x218] sm:$0xff] %v2553
        %2556 = vrot.lane.b32.xlu0 %v2288, 58
        %v2557 = vpop.permute.xlu0 %2556
        %2558 = vrot.lane.b32.xlu0 %v2289, 58
        %v2559 = vpop.permute.xlu0 %2558
        %v2560 = vsel %vm688, %v2557, %v2559
        %v2561 = vsel %vm688, %v2559, %v2557
        %2562 = vst [vmem:[#allocation3 + $0x220] sm:$0xff] %v2560
        %2563 = vst [vmem:[#allocation3 + $0x228] sm:$0xff] %v2561
        %2564 = vrot.lane.b32.xlu0 %v2288, 48
        %v2565 = vpop.permute.xlu0 %2564
        %2566 = vrot.lane.b32.xlu0 %v2289, 48
        %v2567 = vpop.permute.xlu0 %2566
        %v2568 = vsel %vm697, %v2565, %v2567
        %v2569 = vsel %vm697, %v2567, %v2565
        %2570 = vst [vmem:[#allocation3 + $0x230] sm:$0xff] %v2568
        %2571 = vst [vmem:[#allocation3 + $0x238] sm:$0xff] %v2569
        %2572 = vrot.lane.b32.xlu0 %v2288, 47
        %v2573 = vpop.permute.xlu0 %2572
        %2574 = vrot.lane.b32.xlu0 %v2289, 47
        %v2575 = vpop.permute.xlu0 %2574
        %v2576 = vsel %vm706, %v2573, %v2575
        %v2577 = vsel %vm706, %v2575, %v2573
        %2578 = vst [vmem:[#allocation3 + $0x240] sm:$0xff] %v2576
        %2579 = vst [vmem:[#allocation3 + $0x248] sm:$0xff] %v2577
        %2580 = vrot.lane.b32.xlu0 %v2288, 46
        %v2581 = vpop.permute.xlu0 %2580
        %2582 = vrot.lane.b32.xlu0 %v2289, 46
        %v2583 = vpop.permute.xlu0 %2582
        %v2584 = vsel %vm715, %v2581, %v2583
        %v2585 = vsel %vm715, %v2583, %v2581
        %2586 = vst [vmem:[#allocation3 + $0x250] sm:$0xff] %v2584
        %2587 = vst [vmem:[#allocation3 + $0x258] sm:$0xff] %v2585
        %2588 = vrot.lane.b32.xlu0 %v2288, 45
        %v2589 = vpop.permute.xlu0 %2588
        %2590 = vrot.lane.b32.xlu0 %v2289, 45
        %v2591 = vpop.permute.xlu0 %2590
        %v2592 = vsel %vm724, %v2589, %v2591
        %v2593 = vsel %vm724, %v2591, %v2589
        %2594 = vst [vmem:[#allocation3 + $0x260] sm:$0xff] %v2592
        %2595 = vst [vmem:[#allocation3 + $0x268] sm:$0xff] %v2593
        %2596 = vrot.lane.b32.xlu0 %v2288, 44
        %v2597 = vpop.permute.xlu0 %2596
        %2598 = vrot.lane.b32.xlu0 %v2289, 44
        %v2599 = vpop.permute.xlu0 %2598
        %v2600 = vsel %vm733, %v2597, %v2599
        %v2601 = vsel %vm733, %v2599, %v2597
        %2602 = vst [vmem:[#allocation3 + $0x270] sm:$0xff] %v2600
        %2603 = vst [vmem:[#allocation3 + $0x278] sm:$0xff] %v2601
        %2604 = vrot.lane.b32.xlu0 %v2288, 43
        %v2605 = vpop.permute.xlu0 %2604
        %2606 = vrot.lane.b32.xlu0 %v2289, 43
        %v2607 = vpop.permute.xlu0 %2606
        %v2608 = vsel %vm742, %v2605, %v2607
        %v2609 = vsel %vm742, %v2607, %v2605
        %2610 = vst [vmem:[#allocation3 + $0x280] sm:$0xff] %v2608
        %2611 = vst [vmem:[#allocation3 + $0x288] sm:$0xff] %v2609
        %2612 = vrot.lane.b32.xlu0 %v2288, 42
        %v2613 = vpop.permute.xlu0 %2612
        %2614 = vrot.lane.b32.xlu0 %v2289, 42
        %v2615 = vpop.permute.xlu0 %2614
        %v2616 = vsel %vm751, %v2613, %v2615
        %v2617 = vsel %vm751, %v2615, %v2613
        %2618 = vst [vmem:[#allocation3 + $0x290] sm:$0xff] %v2616
        %2619 = vst [vmem:[#allocation3 + $0x298] sm:$0xff] %v2617
        %2620 = vrot.lane.b32.xlu0 %v2288, 32
        %v2621 = vpop.permute.xlu0 %2620
        %2622 = vrot.lane.b32.xlu0 %v2289, 32
        %v2623 = vpop.permute.xlu0 %2622
        %v2624 = vsel %vm760, %v2621, %v2623
        %v2625 = vsel %vm760, %v2623, %v2621
        %2626 = vst [vmem:[#allocation3 + $0x2a0] sm:$0xff] %v2624
        %2627 = vst [vmem:[#allocation3 + $0x2a8] sm:$0xff] %v2625
        %2628 = vrot.lane.b32.xlu0 %v2288, 31
        %v2629 = vpop.permute.xlu0 %2628
        %2630 = vrot.lane.b32.xlu0 %v2289, 31
        %v2631 = vpop.permute.xlu0 %2630
        %v2632 = vsel %vm769, %v2629, %v2631
        %v2633 = vsel %vm769, %v2631, %v2629
        %2634 = vst [vmem:[#allocation3 + $0x2b0] sm:$0xff] %v2632
        %2635 = vst [vmem:[#allocation3 + $0x2b8] sm:$0xff] %v2633
        %2636 = vrot.lane.b32.xlu0 %v2288, 30
        %v2637 = vpop.permute.xlu0 %2636
        %2638 = vrot.lane.b32.xlu0 %v2289, 30
        %v2639 = vpop.permute.xlu0 %2638
        %v2640 = vsel %vm778, %v2637, %v2639
        %v2641 = vsel %vm778, %v2639, %v2637
        %2642 = vst [vmem:[#allocation3 + $0x2c0] sm:$0xff] %v2640
        %2643 = vst [vmem:[#allocation3 + $0x2c8] sm:$0xff] %v2641
        %2644 = vrot.lane.b32.xlu0 %v2288, 29
        %v2645 = vpop.permute.xlu0 %2644
        %2646 = vrot.lane.b32.xlu0 %v2289, 29
        %v2647 = vpop.permute.xlu0 %2646
        %v2648 = vsel %vm787, %v2645, %v2647
        %v2649 = vsel %vm787, %v2647, %v2645
        %2650 = vst [vmem:[#allocation3 + $0x2d0] sm:$0xff] %v2648
        %2651 = vst [vmem:[#allocation3 + $0x2d8] sm:$0xff] %v2649
        %2652 = vrot.lane.b32.xlu0 %v2288, 28
        %v2653 = vpop.permute.xlu0 %2652
        %2654 = vrot.lane.b32.xlu0 %v2289, 28
        %v2655 = vpop.permute.xlu0 %2654
        %v2656 = vsel %vm796, %v2653, %v2655
        %v2657 = vsel %vm796, %v2655, %v2653
        %2658 = vst [vmem:[#allocation3 + $0x2e0] sm:$0xff] %v2656
        %2659 = vst [vmem:[#allocation3 + $0x2e8] sm:$0xff] %v2657
        %2660 = vrot.lane.b32.xlu0 %v2288, 27
        %v2661 = vpop.permute.xlu0 %2660
        %2662 = vrot.lane.b32.xlu0 %v2289, 27
        %v2663 = vpop.permute.xlu0 %2662
        %v2664 = vsel %vm805, %v2661, %v2663
        %v2665 = vsel %vm805, %v2663, %v2661
        %2666 = vst [vmem:[#allocation3 + $0x2f0] sm:$0xff] %v2664
        %2667 = vst [vmem:[#allocation3 + $0x2f8] sm:$0xff] %v2665
        %2668 = vrot.lane.b32.xlu0 %v2288, 26
        %v2669 = vpop.permute.xlu0 %2668
        %2670 = vrot.lane.b32.xlu0 %v2289, 26
        %v2671 = vpop.permute.xlu0 %2670
        %v2672 = vsel %vm814, %v2669, %v2671
        %v2673 = vsel %vm814, %v2671, %v2669
        %2674 = vst [vmem:[#allocation3 + $0x300] sm:$0xff] %v2672
        %2675 = vst [vmem:[#allocation3 + $0x308] sm:$0xff] %v2673
        %v2676 = vld [vmem:[#allocation3] sm:$0xff]
        %v2677 = vld [vmem:[#allocation3 + $0x8] sm:$0xff]
        %v2678 = vld [vmem:[#allocation3 + $0x10] sm:$0xff]
        %v2679 = vld [vmem:[#allocation3 + $0x18] sm:$0xff]
        %v2680 = vld [vmem:[#allocation3 + $0x20] sm:$0xff]
        %v2681 = vld [vmem:[#allocation3 + $0x28] sm:$0xff]
        %v2682 = vld [vmem:[#allocation3 + $0x30] sm:$0xff]
        %v2683 = vld [vmem:[#allocation3 + $0x38] sm:$0xff]
        %v2684 = vld [vmem:[#allocation3 + $0x40] sm:$0xff]
        %v2685 = vld [vmem:[#allocation3 + $0x48] sm:$0xff]
        %v2686 = vld [vmem:[#allocation3 + $0x50] sm:$0xff]
        %v2687 = vld [vmem:[#allocation3 + $0x58] sm:$0xff]
        %v2688 = vld [vmem:[#allocation3 + $0x60] sm:$0xff]
        %v2689 = vld [vmem:[#allocation3 + $0x68] sm:$0xff]
        %v2690 = vld [vmem:[#allocation3 + $0x70] sm:$0xff]
        %v2691 = vld [vmem:[#allocation3 + $0x78] sm:$0xff]
        %v2692 = vld [vmem:[#allocation3 + $0x80] sm:$0xff]
        %v2693 = vld [vmem:[#allocation3 + $0x88] sm:$0xff]
        %v2694 = vld [vmem:[#allocation3 + $0x90] sm:$0xff]
        %v2695 = vld [vmem:[#allocation3 + $0x98] sm:$0xff]
        %v2696 = vld [vmem:[#allocation3 + $0xa0] sm:$0xff]
        %v2697 = vld [vmem:[#allocation3 + $0xa8] sm:$0xff]
        %v2698 = vld [vmem:[#allocation3 + $0xb0] sm:$0xff]
        %v2699 = vld [vmem:[#allocation3 + $0xb8] sm:$0xff]
        %v2700 = vld [vmem:[#allocation3 + $0xc0] sm:$0xff]
        %v2701 = vld [vmem:[#allocation3 + $0xc8] sm:$0xff]
        %v2702 = vld [vmem:[#allocation3 + $0xd0] sm:$0xff]
        %v2703 = vld [vmem:[#allocation3 + $0xd8] sm:$0xff]
        %v2704 = vld [vmem:[#allocation3 + $0xe0] sm:$0xff]
        %v2705 = vld [vmem:[#allocation3 + $0xe8] sm:$0xff]
        %v2706 = vld [vmem:[#allocation3 + $0xf0] sm:$0xff]
        %v2707 = vld [vmem:[#allocation3 + $0xf8] sm:$0xff]
        %v2708 = vld [vmem:[#allocation3 + $0x100] sm:$0xff]
        %v2709 = vld [vmem:[#allocation3 + $0x108] sm:$0xff]
        %v2710 = vld [vmem:[#allocation3 + $0x110] sm:$0xff]
        %v2711 = vld [vmem:[#allocation3 + $0x118] sm:$0xff]
        %v2712 = vld [vmem:[#allocation3 + $0x120] sm:$0xff]
        %v2713 = vld [vmem:[#allocation3 + $0x128] sm:$0xff]
        %v2714 = vld [vmem:[#allocation3 + $0x130] sm:$0xff]
        %v2715 = vld [vmem:[#allocation3 + $0x138] sm:$0xff]
        %v2716 = vld [vmem:[#allocation3 + $0x140] sm:$0xff]
        %v2717 = vld [vmem:[#allocation3 + $0x148] sm:$0xff]
        %v2718 = vld [vmem:[#allocation3 + $0x150] sm:$0xff]
        %v2719 = vld [vmem:[#allocation3 + $0x158] sm:$0xff]
        %v2720 = vld [vmem:[#allocation3 + $0x160] sm:$0xff]
        %v2721 = vld [vmem:[#allocation3 + $0x168] sm:$0xff]
        %v2722 = vld [vmem:[#allocation3 + $0x170] sm:$0xff]
        %v2723 = vld [vmem:[#allocation3 + $0x178] sm:$0xff]
        %v2724 = vld [vmem:[#allocation3 + $0x180] sm:$0xff]
        %v2725 = vld [vmem:[#allocation3 + $0x188] sm:$0xff]
        %v2726 = vld [vmem:[#allocation3 + $0x190] sm:$0xff]
        %v2727 = vld [vmem:[#allocation3 + $0x198] sm:$0xff]
        %v2728 = vld [vmem:[#allocation3 + $0x1a0] sm:$0xff]
        %v2729 = vld [vmem:[#allocation3 + $0x1a8] sm:$0xff]
        %v2730 = vld [vmem:[#allocation3 + $0x1b0] sm:$0xff]
        %v2731 = vld [vmem:[#allocation3 + $0x1b8] sm:$0xff]
        %v2732 = vld [vmem:[#allocation3 + $0x1c0] sm:$0xff]
        %v2733 = vld [vmem:[#allocation3 + $0x1c8] sm:$0xff]
        %v2734 = vld [vmem:[#allocation3 + $0x1d0] sm:$0xff]
        %v2735 = vld [vmem:[#allocation3 + $0x1d8] sm:$0xff]
        %v2736 = vld [vmem:[#allocation3 + $0x1e0] sm:$0xff]
        %v2737 = vld [vmem:[#allocation3 + $0x1e8] sm:$0xff]
        %v2738 = vld [vmem:[#allocation3 + $0x1f0] sm:$0xff]
        %v2739 = vld [vmem:[#allocation3 + $0x1f8] sm:$0xff]
        %v2740 = vld [vmem:[#allocation3 + $0x200] sm:$0xff]
        %v2741 = vld [vmem:[#allocation3 + $0x208] sm:$0xff]
        %v2742 = vld [vmem:[#allocation3 + $0x210] sm:$0xff]
        %v2743 = vld [vmem:[#allocation3 + $0x218] sm:$0xff]
        %v2744 = vld [vmem:[#allocation3 + $0x220] sm:$0xff]
        %v2745 = vld [vmem:[#allocation3 + $0x228] sm:$0xff]
        %v2746 = vld [vmem:[#allocation3 + $0x230] sm:$0xff]
        %v2747 = vld [vmem:[#allocation3 + $0x238] sm:$0xff]
        %v2748 = vld [vmem:[#allocation3 + $0x240] sm:$0xff]
        %v2749 = vld [vmem:[#allocation3 + $0x248] sm:$0xff]
        %v2750 = vld [vmem:[#allocation3 + $0x250] sm:$0xff]
        %v2751 = vld [vmem:[#allocation3 + $0x258] sm:$0xff]
        %v2752 = vld [vmem:[#allocation3 + $0x260] sm:$0xff]
        %v2753 = vld [vmem:[#allocation3 + $0x268] sm:$0xff]
        %v2754 = vld [vmem:[#allocation3 + $0x270] sm:$0xff]
        %v2755 = vld [vmem:[#allocation3 + $0x278] sm:$0xff]
        %v2756 = vld [vmem:[#allocation3 + $0x280] sm:$0xff]
        %v2757 = vld [vmem:[#allocation3 + $0x288] sm:$0xff]
        %v2758 = vld [vmem:[#allocation3 + $0x290] sm:$0xff]
        %v2759 = vld [vmem:[#allocation3 + $0x298] sm:$0xff]
        %v2760 = vld [vmem:[#allocation3 + $0x2a0] sm:$0xff]
        %v2761 = vld [vmem:[#allocation3 + $0x2a8] sm:$0xff]
        %v2762 = vld [vmem:[#allocation3 + $0x2b0] sm:$0xff]
        %v2763 = vld [vmem:[#allocation3 + $0x2b8] sm:$0xff]
        %v2764 = vld [vmem:[#allocation3 + $0x2c0] sm:$0xff]
        %v2765 = vld [vmem:[#allocation3 + $0x2c8] sm:$0xff]
        %v2766 = vld [vmem:[#allocation3 + $0x2d0] sm:$0xff]
        %v2767 = vld [vmem:[#allocation3 + $0x2d8] sm:$0xff]
        %v2768 = vld [vmem:[#allocation3 + $0x2e0] sm:$0xff]
        %v2769 = vld [vmem:[#allocation3 + $0x2e8] sm:$0xff]
        %v2770 = vld [vmem:[#allocation3 + $0x2f0] sm:$0xff]
        %v2771 = vld [vmem:[#allocation3 + $0x2f8] sm:$0xff]
        %v2772 = vld [vmem:[#allocation3 + $0x300] sm:$0xff]
        %v2773 = vld [vmem:[#allocation3 + $0x308] sm:$0xff]
        %v2774 = vld [vmem:[%s1] sm:$0xff]
        %v2775 = vld [vmem:[%s1 + $0x8] sm:$0xff]
        %v2776 = vld [vmem:[%s1 + $0x10] sm:$0xff]
        %v2777 = vld [vmem:[%s1 + $0x18] sm:$0xff]
        %v2779 = vsel %vm921, %v2777, 0
        %2781 = vmatprep.subr.mxu0 %v2707
        %2782 = vmatpush1.msra.mxu0 %v2706
        %2783 = vmatprep.subr.mxu0 %v2705
        %2784 = vmatpush1.msra.mxu0 %v2704
        %2785 = vmatprep.subr.mxu0 %v2703
        %2786 = vmatpush1.msra.mxu0 %v2702
        %2787 = vmatprep.subr.mxu0 %v2701
        %2788 = vmatpush1.msra.mxu0 %v2700
        %2789 = vmatprep.subr.mxu0 %v2699
        %2790 = vmatpush1.msra.mxu0 %v2698
        %2791 = vmatprep.subr.mxu0 %v2697
        %2792 = vmatpush1.msra.mxu0 %v2696
        %2793 = vmatprep.subr.mxu0 %v2695
        %2794 = vmatpush1.msra.mxu0 %v2694
        %2795 = vmatprep.subr.mxu0 %v2693
        %2796 = vmatpush1.msra.mxu0 %v2692
        %2797 = vmatprep.subr.mxu0 %v2691
        %2798 = vmatpush1.msra.mxu0 %v2690
        %2799 = vmatprep.subr.mxu0 %v2689
        %2800 = vmatpush1.msra.mxu0 %v2688
        %2801 = vmatprep.subr.mxu0 %v2687
        %2802 = vmatpush1.msra.mxu0 %v2686
        %2803 = vmatprep.subr.mxu0 %v2685
        %2804 = vmatpush1.msra.mxu0 %v2684
        %2805 = vmatprep.subr.mxu0 %v2683
        %2806 = vmatpush1.msra.mxu0 %v2682
        %2807 = vmatprep.subr.mxu0 %v2681
        %2808 = vmatpush1.msra.mxu0 %v2680
        %2809 = vmatprep.subr.mxu0 %v2679
        %2810 = vmatpush1.msra.mxu0 %v2678
        %2811 = vmatprep.subr.mxu0 %v2677
        %2812 = vmatpush1.msra.mxu0 %v2676
        %2813 = vmatprep.subr.mxu0 %v2739
        %2814 = vmatpush2.msra.mxu0 %v2738
        %2815 = vmatprep.subr.mxu0 %v2737
        %2816 = vmatpush2.msra.mxu0 %v2736
        %2817 = vmatprep.subr.mxu0 %v2735
        %2818 = vmatpush2.msra.mxu0 %v2734
        %2819 = vmatprep.subr.mxu0 %v2733
        %2820 = vmatpush2.msra.mxu0 %v2732
        %2821 = vmatprep.subr.mxu0 %v2731
        %2822 = vmatpush2.msra.mxu0 %v2730
        %2823 = vmatprep.subr.mxu0 %v2729
        %2824 = vmatpush2.msra.mxu0 %v2728
        %2825 = vmatprep.subr.mxu0 %v2727
        %2826 = vmatpush2.msra.mxu0 %v2726
        %2827 = vmatprep.subr.mxu0 %v2725
        %2828 = vmatpush2.msra.mxu0 %v2724
        %2829 = vmatprep.subr.mxu0 %v2723
        %2830 = vmatpush2.msra.mxu0 %v2722
        %2831 = vmatprep.subr.mxu0 %v2721
        %2832 = vmatpush2.msra.mxu0 %v2720
        %2833 = vmatprep.subr.mxu0 %v2719
        %2834 = vmatpush2.msra.mxu0 %v2718
        %2835 = vmatprep.subr.mxu0 %v2717
        %2836 = vmatpush2.msra.mxu0 %v2716
        %2837 = vmatprep.subr.mxu0 %v2715
        %2838 = vmatpush2.msra.mxu0 %v2714
        %2839 = vmatprep.subr.mxu0 %v2713
        %2840 = vmatpush2.msra.mxu0 %v2712
        %2841 = vmatprep.subr.mxu0 %v2711
        %2842 = vmatpush2.msra.mxu0 %v2710
        %2843 = vmatprep.subr.mxu0 %v2709
        %2844 = vmatpush2.msra.mxu0 %v2708
        %2845 = vmatprep.mubr.f32.mxu0 %v2775
        %2846 = vmatmul.mubr.f32.gmra.mxu0 %v2774
        %v2847 = vpop.f32.mrf.mxu0
        %v2848 = vadd.f32 0.0, %v2847
        %v2849 = vpop.f32.mrf.mxu0
        %v2850 = vadd.f32 0.0, %v2849
        %2851 = vdwg.mxu0
        %2852 = vmatprep.subr.mxu0 %v2771
        %2853 = vmatpush1.msra.mxu0 %v2770
        %2854 = vmatprep.subr.mxu0 %v2769
        %2855 = vmatpush1.msra.mxu0 %v2768
        %2856 = vmatprep.subr.mxu0 %v2767
        %2857 = vmatpush1.msra.mxu0 %v2766
        %2858 = vmatprep.subr.mxu0 %v2765
        %2859 = vmatpush1.msra.mxu0 %v2764
        %2860 = vmatprep.subr.mxu0 %v2763
        %2861 = vmatpush1.msra.mxu0 %v2762
        %2862 = vmatprep.subr.mxu0 %v2761
        %2863 = vmatpush1.msra.mxu0 %v2760
        %2864 = vmatprep.subr.mxu0 %v2759
        %2865 = vmatpush1.msra.mxu0 %v2758
        %2866 = vmatprep.subr.mxu0 %v2757
        %2867 = vmatpush1.msra.mxu0 %v2756
        %2868 = vmatprep.subr.mxu0 %v2755
        %2869 = vmatpush1.msra.mxu0 %v2754
        %2870 = vmatprep.subr.mxu0 %v2753
        %2871 = vmatpush1.msra.mxu0 %v2752
        %2872 = vmatprep.subr.mxu0 %v2751
        %2873 = vmatpush1.msra.mxu0 %v2750
        %2874 = vmatprep.subr.mxu0 %v2749
        %2875 = vmatpush1.msra.mxu0 %v2748
        %2876 = vmatprep.subr.mxu0 %v2747
        %2877 = vmatpush1.msra.mxu0 %v2746
        %2878 = vmatprep.subr.mxu0 %v2745
        %2879 = vmatpush1.msra.mxu0 %v2744
        %2880 = vmatprep.subr.mxu0 %v2743
        %2881 = vmatpush1.msra.mxu0 %v2742
        %2882 = vmatprep.subr.mxu0 %v2741
        %2883 = vmatpush1.msra.mxu0 %v2740
        %2884 = vmatprep.subr.mxu0 0.0
        %2885 = vmatpush2.msra.mxu0 0.0
        %2886 = vmatprep.subr.mxu0 0.0
        %2887 = vmatpush2.msra.mxu0 0.0
        %2888 = vmatprep.subr.mxu0 0.0
        %2889 = vmatpush2.msra.mxu0 0.0
        %2890 = vmatprep.subr.mxu0 0.0
        %2891 = vmatpush2.msra.mxu0 0.0
        %2892 = vmatprep.subr.mxu0 0.0
        %2893 = vmatpush2.msra.mxu0 0.0
        %2894 = vmatprep.subr.mxu0 0.0
        %2895 = vmatpush2.msra.mxu0 0.0
        %2896 = vmatprep.subr.mxu0 0.0
        %2897 = vmatpush2.msra.mxu0 0.0
        %2898 = vmatprep.subr.mxu0 0.0
        %2899 = vmatpush2.msra.mxu0 0.0
        %2900 = vmatprep.subr.mxu0 0.0
        %2901 = vmatpush2.msra.mxu0 0.0
        %2902 = vmatprep.subr.mxu0 0.0
        %2903 = vmatpush2.msra.mxu0 0.0
        %2904 = vmatprep.subr.mxu0 0.0
        %2905 = vmatpush2.msra.mxu0 0.0
        %2906 = vmatprep.subr.mxu0 0.0
        %2907 = vmatpush2.msra.mxu0 0.0
        %2908 = vmatprep.subr.mxu0 0.0
        %2909 = vmatpush2.msra.mxu0 0.0
        %2910 = vmatprep.subr.mxu0 0.0
        %2911 = vmatpush2.msra.mxu0 0.0
        %2912 = vmatprep.subr.mxu0 0.0
        %2913 = vmatpush2.msra.mxu0 0.0
        %2914 = vmatprep.subr.mxu0 %v2773
        %2915 = vmatpush2.msra.mxu0 %v2772
        %2916 = vmatprep.mubr.f32.mxu0 %v2779
        %2917 = vmatmul.mubr.f32.gmra.mxu0 %v2776
        %v2918 = vpop.f32.mrf.mxu0
        %v2919 = vadd.f32 %v2848, %v2918
        %v2920 = vpop.f32.mrf.mxu0
        %v2921 = vadd.f32 %v2850, %v2920
        %2922 = vdwg.mxu0
        %v2923 = vld [vmem:[%s2] sm:$0xff]
        %v2924 = vld [vmem:[%s2 + $0x8] sm:$0xff]
        %v2925 = vmul.f32 %v2919, %v2923
        %v2926 = vmul.f32 %v2921, %v2924
        %v2927 = vld [vmem:[%s3] sm:$0xff]
        %v2928 = vld [vmem:[%s3 + $0x8] sm:$0xff]
        %v2929 = vadd.f32 %v2925, %v2927
        %v2930 = vadd.f32 %v2926, %v2928
        %v2931 = vmax.f32 %v2929, 0.0
        %v2932 = vmax.f32 %v2930, 0.0
        %2933 = vst [vmem:[#allocation3] sm:$0xff] %v2931
        %2934 = vst [vmem:[#allocation3 + $0x8] sm:$0xff] %v2932
        %2935 = vrot.lane.b32.xlu0 %v2931, 127
        %v2936 = vpop.permute.xlu0 %2935
        %2937 = vrot.lane.b32.xlu0 %v2932, 127
        %v2938 = vpop.permute.xlu0 %2937
        %v2939 = vsel %vm391, %v2936, %v2938
        %v2940 = vsel %vm391, %v2938, %v2936
        %2941 = vst [vmem:[#allocation3 + $0x10] sm:$0xff] %v2939
        %2942 = vst [vmem:[#allocation3 + $0x18] sm:$0xff] %v2940
        %2943 = vrot.lane.b32.xlu0 %v2931, 126
        %v2944 = vpop.permute.xlu0 %2943
        %2945 = vrot.lane.b32.xlu0 %v2932, 126
        %v2946 = vpop.permute.xlu0 %2945
        %v2947 = vsel %vm400, %v2944, %v2946
        %v2948 = vsel %vm400, %v2946, %v2944
        %2949 = vst [vmem:[#allocation3 + $0x20] sm:$0xff] %v2947
        %2950 = vst [vmem:[#allocation3 + $0x28] sm:$0xff] %v2948
        %2951 = vrot.lane.b32.xlu0 %v2931, 125
        %v2952 = vpop.permute.xlu0 %2951
        %2953 = vrot.lane.b32.xlu0 %v2932, 125
        %v2954 = vpop.permute.xlu0 %2953
        %v2955 = vsel %vm409, %v2952, %v2954
        %v2956 = vsel %vm409, %v2954, %v2952
        %2957 = vst [vmem:[#allocation3 + $0x30] sm:$0xff] %v2955
        %2958 = vst [vmem:[#allocation3 + $0x38] sm:$0xff] %v2956
        %2959 = vrot.lane.b32.xlu0 %v2931, 124
        %v2960 = vpop.permute.xlu0 %2959
        %2961 = vrot.lane.b32.xlu0 %v2932, 124
        %v2962 = vpop.permute.xlu0 %2961
        %v2963 = vsel %vm418, %v2960, %v2962
        %v2964 = vsel %vm418, %v2962, %v2960
        %2965 = vst [vmem:[#allocation3 + $0x40] sm:$0xff] %v2963
        %2966 = vst [vmem:[#allocation3 + $0x48] sm:$0xff] %v2964
        %2967 = vrot.lane.b32.xlu0 %v2931, 112
        %v2968 = vpop.permute.xlu0 %2967
        %2969 = vrot.lane.b32.xlu0 %v2932, 112
        %v2970 = vpop.permute.xlu0 %2969
        %v2971 = vsel %vm445, %v2968, %v2970
        %v2972 = vsel %vm445, %v2970, %v2968
        %2973 = vst [vmem:[#allocation3 + $0x50] sm:$0xff] %v2971
        %2974 = vst [vmem:[#allocation3 + $0x58] sm:$0xff] %v2972
        %2975 = vrot.lane.b32.xlu0 %v2931, 111
        %v2976 = vpop.permute.xlu0 %2975
        %2977 = vrot.lane.b32.xlu0 %v2932, 111
        %v2978 = vpop.permute.xlu0 %2977
        %v2979 = vsel %vm454, %v2976, %v2978
        %v2980 = vsel %vm454, %v2978, %v2976
        %2981 = vst [vmem:[#allocation3 + $0x60] sm:$0xff] %v2979
        %2982 = vst [vmem:[#allocation3 + $0x68] sm:$0xff] %v2980
        %2983 = vrot.lane.b32.xlu0 %v2931, 110
        %v2984 = vpop.permute.xlu0 %2983
        %2985 = vrot.lane.b32.xlu0 %v2932, 110
        %v2986 = vpop.permute.xlu0 %2985
        %v2987 = vsel %vm463, %v2984, %v2986
        %v2988 = vsel %vm463, %v2986, %v2984
        %2989 = vst [vmem:[#allocation3 + $0x70] sm:$0xff] %v2987
        %2990 = vst [vmem:[#allocation3 + $0x78] sm:$0xff] %v2988
        %2991 = vrot.lane.b32.xlu0 %v2931, 109
        %v2992 = vpop.permute.xlu0 %2991
        %2993 = vrot.lane.b32.xlu0 %v2932, 109
        %v2994 = vpop.permute.xlu0 %2993
        %v2995 = vsel %vm472, %v2992, %v2994
        %v2996 = vsel %vm472, %v2994, %v2992
        %2997 = vst [vmem:[#allocation3 + $0x80] sm:$0xff] %v2995
        %2998 = vst [vmem:[#allocation3 + $0x88] sm:$0xff] %v2996
        %2999 = vrot.lane.b32.xlu0 %v2931, 108
        %v3000 = vpop.permute.xlu0 %2999
        %3001 = vrot.lane.b32.xlu0 %v2932, 108
        %v3002 = vpop.permute.xlu0 %3001
        %v3003 = vsel %vm481, %v3000, %v3002
        %v3004 = vsel %vm481, %v3002, %v3000
        %3005 = vst [vmem:[#allocation3 + $0x90] sm:$0xff] %v3003
        %3006 = vst [vmem:[#allocation3 + $0x98] sm:$0xff] %v3004
        %3007 = vrot.lane.b32.xlu0 %v2931, 96
        %v3008 = vpop.permute.xlu0 %3007
        %3009 = vrot.lane.b32.xlu0 %v2932, 96
        %v3010 = vpop.permute.xlu0 %3009
        %v3011 = vsel %vm508, %v3008, %v3010
        %v3012 = vsel %vm508, %v3010, %v3008
        %3013 = vst [vmem:[#allocation3 + $0xa0] sm:$0xff] %v3011
        %3014 = vst [vmem:[#allocation3 + $0xa8] sm:$0xff] %v3012
        %3015 = vrot.lane.b32.xlu0 %v2931, 95
        %v3016 = vpop.permute.xlu0 %3015
        %3017 = vrot.lane.b32.xlu0 %v2932, 95
        %v3018 = vpop.permute.xlu0 %3017
        %v3019 = vsel %vm517, %v3016, %v3018
        %v3020 = vsel %vm517, %v3018, %v3016
        %3021 = vst [vmem:[#allocation3 + $0xb0] sm:$0xff] %v3019
        %3022 = vst [vmem:[#allocation3 + $0xb8] sm:$0xff] %v3020
        %3023 = vrot.lane.b32.xlu0 %v2931, 94
        %v3024 = vpop.permute.xlu0 %3023
        %3025 = vrot.lane.b32.xlu0 %v2932, 94
        %v3026 = vpop.permute.xlu0 %3025
        %v3027 = vsel %vm526, %v3024, %v3026
        %v3028 = vsel %vm526, %v3026, %v3024
        %3029 = vst [vmem:[#allocation3 + $0xc0] sm:$0xff] %v3027
        %3030 = vst [vmem:[#allocation3 + $0xc8] sm:$0xff] %v3028
        %3031 = vrot.lane.b32.xlu0 %v2931, 93
        %v3032 = vpop.permute.xlu0 %3031
        %3033 = vrot.lane.b32.xlu0 %v2932, 93
        %v3034 = vpop.permute.xlu0 %3033
        %v3035 = vsel %vm535, %v3032, %v3034
        %v3036 = vsel %vm535, %v3034, %v3032
        %3037 = vst [vmem:[#allocation3 + $0xd0] sm:$0xff] %v3035
        %3038 = vst [vmem:[#allocation3 + $0xd8] sm:$0xff] %v3036
        %3039 = vrot.lane.b32.xlu0 %v2931, 92
        %v3040 = vpop.permute.xlu0 %3039
        %3041 = vrot.lane.b32.xlu0 %v2932, 92
        %v3042 = vpop.permute.xlu0 %3041
        %v3043 = vsel %vm544, %v3040, %v3042
        %v3044 = vsel %vm544, %v3042, %v3040
        %3045 = vst [vmem:[#allocation3 + $0xe0] sm:$0xff] %v3043
        %3046 = vst [vmem:[#allocation3 + $0xe8] sm:$0xff] %v3044
        %3047 = vrot.lane.b32.xlu0 %v2931, 80
        %v3048 = vpop.permute.xlu0 %3047
        %3049 = vrot.lane.b32.xlu0 %v2932, 80
        %v3050 = vpop.permute.xlu0 %3049
        %v3051 = vsel %vm571, %v3048, %v3050
        %v3052 = vsel %vm571, %v3050, %v3048
        %3053 = vst [vmem:[#allocation3 + $0xf0] sm:$0xff] %v3051
        %3054 = vst [vmem:[#allocation3 + $0xf8] sm:$0xff] %v3052
        %3055 = vrot.lane.b32.xlu0 %v2931, 79
        %v3056 = vpop.permute.xlu0 %3055
        %3057 = vrot.lane.b32.xlu0 %v2932, 79
        %v3058 = vpop.permute.xlu0 %3057
        %v3059 = vsel %vm580, %v3056, %v3058
        %v3060 = vsel %vm580, %v3058, %v3056
        %3061 = vst [vmem:[#allocation3 + $0x100] sm:$0xff] %v3059
        %3062 = vst [vmem:[#allocation3 + $0x108] sm:$0xff] %v3060
        %3063 = vrot.lane.b32.xlu0 %v2931, 78
        %v3064 = vpop.permute.xlu0 %3063
        %3065 = vrot.lane.b32.xlu0 %v2932, 78
        %v3066 = vpop.permute.xlu0 %3065
        %v3067 = vsel %vm589, %v3064, %v3066
        %v3068 = vsel %vm589, %v3066, %v3064
        %3069 = vst [vmem:[#allocation3 + $0x110] sm:$0xff] %v3067
        %3070 = vst [vmem:[#allocation3 + $0x118] sm:$0xff] %v3068
        %3071 = vrot.lane.b32.xlu0 %v2931, 77
        %v3072 = vpop.permute.xlu0 %3071
        %3073 = vrot.lane.b32.xlu0 %v2932, 77
        %v3074 = vpop.permute.xlu0 %3073
        %v3075 = vsel %vm598, %v3072, %v3074
        %v3076 = vsel %vm598, %v3074, %v3072
        %3077 = vst [vmem:[#allocation3 + $0x120] sm:$0xff] %v3075
        %3078 = vst [vmem:[#allocation3 + $0x128] sm:$0xff] %v3076
        %3079 = vrot.lane.b32.xlu0 %v2931, 76
        %v3080 = vpop.permute.xlu0 %3079
        %3081 = vrot.lane.b32.xlu0 %v2932, 76
        %v3082 = vpop.permute.xlu0 %3081
        %v3083 = vsel %vm607, %v3080, %v3082
        %v3084 = vsel %vm607, %v3082, %v3080
        %3085 = vst [vmem:[#allocation3 + $0x130] sm:$0xff] %v3083
        %3086 = vst [vmem:[#allocation3 + $0x138] sm:$0xff] %v3084
        %3087 = vrot.lane.b32.xlu0 %v2931, 64
        %v3088 = vpop.permute.xlu0 %3087
        %3089 = vrot.lane.b32.xlu0 %v2932, 64
        %v3090 = vpop.permute.xlu0 %3089
        %v3091 = vsel %vm634, %v3088, %v3090
        %v3092 = vsel %vm634, %v3090, %v3088
        %3093 = vst [vmem:[#allocation3 + $0x140] sm:$0xff] %v3091
        %3094 = vst [vmem:[#allocation3 + $0x148] sm:$0xff] %v3092
        %3095 = vrot.lane.b32.xlu0 %v2931, 63
        %v3096 = vpop.permute.xlu0 %3095
        %3097 = vrot.lane.b32.xlu0 %v2932, 63
        %v3098 = vpop.permute.xlu0 %3097
        %v3099 = vsel %vm643, %v3096, %v3098
        %v3100 = vsel %vm643, %v3098, %v3096
        %3101 = vst [vmem:[#allocation3 + $0x150] sm:$0xff] %v3099
        %3102 = vst [vmem:[#allocation3 + $0x158] sm:$0xff] %v3100
        %3103 = vrot.lane.b32.xlu0 %v2931, 62
        %v3104 = vpop.permute.xlu0 %3103
        %3105 = vrot.lane.b32.xlu0 %v2932, 62
        %v3106 = vpop.permute.xlu0 %3105
        %v3107 = vsel %vm652, %v3104, %v3106
        %v3108 = vsel %vm652, %v3106, %v3104
        %3109 = vst [vmem:[#allocation3 + $0x160] sm:$0xff] %v3107
        %3110 = vst [vmem:[#allocation3 + $0x168] sm:$0xff] %v3108
        %3111 = vrot.lane.b32.xlu0 %v2931, 61
        %v3112 = vpop.permute.xlu0 %3111
        %3113 = vrot.lane.b32.xlu0 %v2932, 61
        %v3114 = vpop.permute.xlu0 %3113
        %v3115 = vsel %vm661, %v3112, %v3114
        %v3116 = vsel %vm661, %v3114, %v3112
        %3117 = vst [vmem:[#allocation3 + $0x170] sm:$0xff] %v3115
        %3118 = vst [vmem:[#allocation3 + $0x178] sm:$0xff] %v3116
        %3119 = vrot.lane.b32.xlu0 %v2931, 60
        %v3120 = vpop.permute.xlu0 %3119
        %3121 = vrot.lane.b32.xlu0 %v2932, 60
        %v3122 = vpop.permute.xlu0 %3121
        %v3123 = vsel %vm670, %v3120, %v3122
        %v3124 = vsel %vm670, %v3122, %v3120
        %3125 = vst [vmem:[#allocation3 + $0x180] sm:$0xff] %v3123
        %3126 = vst [vmem:[#allocation3 + $0x188] sm:$0xff] %v3124
        %v3127 = vld [vmem:[#allocation3] sm:$0xff]
        %v3128 = vld [vmem:[#allocation3 + $0x8] sm:$0xff]
        %v3129 = vld [vmem:[#allocation3 + $0x10] sm:$0xff]
        %v3130 = vld [vmem:[#allocation3 + $0x18] sm:$0xff]
        %v3131 = vld [vmem:[#allocation3 + $0x20] sm:$0xff]
        %v3132 = vld [vmem:[#allocation3 + $0x28] sm:$0xff]
        %v3133 = vld [vmem:[#allocation3 + $0x30] sm:$0xff]
        %v3134 = vld [vmem:[#allocation3 + $0x38] sm:$0xff]
        %v3135 = vld [vmem:[#allocation3 + $0x40] sm:$0xff]
        %v3136 = vld [vmem:[#allocation3 + $0x48] sm:$0xff]
        %v3137 = vld [vmem:[#allocation3 + $0x50] sm:$0xff]
        %v3138 = vld [vmem:[#allocation3 + $0x58] sm:$0xff]
        %v3139 = vld [vmem:[#allocation3 + $0x60] sm:$0xff]
        %v3140 = vld [vmem:[#allocation3 + $0x68] sm:$0xff]
        %v3141 = vld [vmem:[#allocation3 + $0x70] sm:$0xff]
        %v3142 = vld [vmem:[#allocation3 + $0x78] sm:$0xff]
        %v3143 = vld [vmem:[#allocation3 + $0x80] sm:$0xff]
        %v3144 = vld [vmem:[#allocation3 + $0x88] sm:$0xff]
        %v3145 = vld [vmem:[#allocation3 + $0x90] sm:$0xff]
        %v3146 = vld [vmem:[#allocation3 + $0x98] sm:$0xff]
        %v3147 = vld [vmem:[#allocation3 + $0xa0] sm:$0xff]
        %v3148 = vld [vmem:[#allocation3 + $0xa8] sm:$0xff]
        %v3149 = vld [vmem:[#allocation3 + $0xb0] sm:$0xff]
        %v3150 = vld [vmem:[#allocation3 + $0xb8] sm:$0xff]
        %v3151 = vld [vmem:[#allocation3 + $0xc0] sm:$0xff]
        %v3152 = vld [vmem:[#allocation3 + $0xc8] sm:$0xff]
        %v3153 = vld [vmem:[#allocation3 + $0xd0] sm:$0xff]
        %v3154 = vld [vmem:[#allocation3 + $0xd8] sm:$0xff]
        %v3155 = vld [vmem:[#allocation3 + $0xe0] sm:$0xff]
        %v3156 = vld [vmem:[#allocation3 + $0xe8] sm:$0xff]
        %v3157 = vld [vmem:[#allocation3 + $0xf0] sm:$0xff]
        %v3158 = vld [vmem:[#allocation3 + $0xf8] sm:$0xff]
        %v3159 = vld [vmem:[#allocation3 + $0x100] sm:$0xff]
        %v3160 = vld [vmem:[#allocation3 + $0x108] sm:$0xff]
        %v3161 = vld [vmem:[#allocation3 + $0x110] sm:$0xff]
        %v3162 = vld [vmem:[#allocation3 + $0x118] sm:$0xff]
        %v3163 = vld [vmem:[#allocation3 + $0x120] sm:$0xff]
        %v3164 = vld [vmem:[#allocation3 + $0x128] sm:$0xff]
        %v3165 = vld [vmem:[#allocation3 + $0x130] sm:$0xff]
        %v3166 = vld [vmem:[#allocation3 + $0x138] sm:$0xff]
        %v3167 = vld [vmem:[#allocation3 + $0x140] sm:$0xff]
        %v3168 = vld [vmem:[#allocation3 + $0x148] sm:$0xff]
        %v3169 = vld [vmem:[#allocation3 + $0x150] sm:$0xff]
        %v3170 = vld [vmem:[#allocation3 + $0x158] sm:$0xff]
        %v3171 = vld [vmem:[#allocation3 + $0x160] sm:$0xff]
        %v3172 = vld [vmem:[#allocation3 + $0x168] sm:$0xff]
        %v3173 = vld [vmem:[#allocation3 + $0x170] sm:$0xff]
        %v3174 = vld [vmem:[#allocation3 + $0x178] sm:$0xff]
        %v3175 = vld [vmem:[#allocation3 + $0x180] sm:$0xff]
        %v3176 = vld [vmem:[#allocation3 + $0x188] sm:$0xff]
        %v3177 = vld [vmem:[%s4] sm:$0xff]
        %v3178 = vld [vmem:[%s4 + $0x8] sm:$0xff]
        %v3180 = vsel %vm1323, %v3178, 0
        %3182 = vmatprep.subr.mxu0 %v3158
        %3183 = vmatpush1.msra.mxu0 %v3157
        %3184 = vmatprep.subr.mxu0 %v3156
        %3185 = vmatpush1.msra.mxu0 %v3155
        %3186 = vmatprep.subr.mxu0 %v3154
        %3187 = vmatpush1.msra.mxu0 %v3153
        %3188 = vmatprep.subr.mxu0 %v3152
        %3189 = vmatpush1.msra.mxu0 %v3151
        %3190 = vmatprep.subr.mxu0 %v3150
        %3191 = vmatpush1.msra.mxu0 %v3149
        %3192 = vmatprep.subr.mxu0 %v3148
        %3193 = vmatpush1.msra.mxu0 %v3147
        %3194 = vmatprep.subr.mxu0 %v3146
        %3195 = vmatpush1.msra.mxu0 %v3145
        %3196 = vmatprep.subr.mxu0 %v3144
        %3197 = vmatpush1.msra.mxu0 %v3143
        %3198 = vmatprep.subr.mxu0 %v3142
        %3199 = vmatpush1.msra.mxu0 %v3141
        %3200 = vmatprep.subr.mxu0 %v3140
        %3201 = vmatpush1.msra.mxu0 %v3139
        %3202 = vmatprep.subr.mxu0 %v3138
        %3203 = vmatpush1.msra.mxu0 %v3137
        %3204 = vmatprep.subr.mxu0 %v3136
        %3205 = vmatpush1.msra.mxu0 %v3135
        %3206 = vmatprep.subr.mxu0 %v3134
        %3207 = vmatpush1.msra.mxu0 %v3133
        %3208 = vmatprep.subr.mxu0 %v3132
        %3209 = vmatpush1.msra.mxu0 %v3131
        %3210 = vmatprep.subr.mxu0 %v3130
        %3211 = vmatpush1.msra.mxu0 %v3129
        %3212 = vmatprep.subr.mxu0 %v3128
        %3213 = vmatpush1.msra.mxu0 %v3127
        %3214 = vmatprep.subr.mxu0 0.0
        %3215 = vmatpush2.msra.mxu0 0.0
        %3216 = vmatprep.subr.mxu0 0.0
        %3217 = vmatpush2.msra.mxu0 0.0
        %3218 = vmatprep.subr.mxu0 0.0
        %3219 = vmatpush2.msra.mxu0 0.0
        %3220 = vmatprep.subr.mxu0 0.0
        %3221 = vmatpush2.msra.mxu0 0.0
        %3222 = vmatprep.subr.mxu0 0.0
        %3223 = vmatpush2.msra.mxu0 0.0
        %3224 = vmatprep.subr.mxu0 0.0
        %3225 = vmatpush2.msra.mxu0 0.0
        %3226 = vmatprep.subr.mxu0 0.0
        %3227 = vmatpush2.msra.mxu0 0.0
        %3228 = vmatprep.subr.mxu0 %v3176
        %3229 = vmatpush2.msra.mxu0 %v3175
        %3230 = vmatprep.subr.mxu0 %v3174
        %3231 = vmatpush2.msra.mxu0 %v3173
        %3232 = vmatprep.subr.mxu0 %v3172
        %3233 = vmatpush2.msra.mxu0 %v3171
        %3234 = vmatprep.subr.mxu0 %v3170
        %3235 = vmatpush2.msra.mxu0 %v3169
        %3236 = vmatprep.subr.mxu0 %v3168
        %3237 = vmatpush2.msra.mxu0 %v3167
        %3238 = vmatprep.subr.mxu0 %v3166
        %3239 = vmatpush2.msra.mxu0 %v3165
        %3240 = vmatprep.subr.mxu0 %v3164
        %3241 = vmatpush2.msra.mxu0 %v3163
        %3242 = vmatprep.subr.mxu0 %v3162
        %3243 = vmatpush2.msra.mxu0 %v3161
        %3244 = vmatprep.subr.mxu0 %v3160
        %3245 = vmatpush2.msra.mxu0 %v3159
        %3246 = vmatprep.mubr.f32.mxu0 %v3180
        %3247 = vmatmul.mubr.f32.gmra.mxu0 %v3177
        %v3248 = vpop.f32.mrf.mxu0
        %v3249 = vadd.f32 0.0, %v3248
        %v3250 = vpop.f32.mrf.mxu0
        %v3251 = vadd.f32 0.0, %v3250
        %3252 = vdwg.mxu0
        %v3253 = vld [vmem:[%s5] sm:$0xff]
        %v3254 = vld [vmem:[%s5 + $0x8] sm:$0xff]
        %v3255 = vmul.f32 %v3249, %v3253
        %v3256 = vmul.f32 %v3251, %v3254
        %v3257 = vld [vmem:[%s6] sm:$0xff]
        %v3258 = vld [vmem:[%s6 + $0x8] sm:$0xff]
        %v3259 = vadd.f32 %v3255, %v3257
        %v3260 = vadd.f32 %v3256, %v3258
        %v3261 = vmax.f32 %v3259, 0.0
        %v3262 = vmax.f32 %v3260, 0.0
        %v3263 = vld [vmem:[#allocation4] sm:$0xff]
        %v3264 = vld [vmem:[#allocation4 + $0x8] sm:$0xff]
        %v3265 = vld [vmem:[#allocation4 + $0x10] sm:$0xff]
        %v3266 = vld [vmem:[#allocation4 + $0x18] sm:$0xff]
        %v3267 = vld [vmem:[#allocation4 + $0x20] sm:$0xff]
        %v3268 = vld [vmem:[#allocation4 + $0x28] sm:$0xff]
        %v3269 = vld [vmem:[#allocation4 + $0x30] sm:$0xff]
        %v3270 = vld [vmem:[#allocation4 + $0x38] sm:$0xff]
        %v3271 = vld [vmem:[#allocation4 + $0x40] sm:$0xff]
        %v3272 = vld [vmem:[#allocation4 + $0x48] sm:$0xff]
        %v3273 = vld [vmem:[#allocation4 + $0x50] sm:$0xff]
        %v3274 = vld [vmem:[#allocation4 + $0x58] sm:$0xff]
        %v3275 = vld [vmem:[#allocation4 + $0x60] sm:$0xff]
        %v3276 = vld [vmem:[#allocation4 + $0x68] sm:$0xff]
        %v3277 = vld [vmem:[#allocation4 + $0x70] sm:$0xff]
        %v3278 = vld [vmem:[#allocation4 + $0x78] sm:$0xff]
        %v3279 = vld [vmem:[#allocation4 + $0x80] sm:$0xff]
        %v3280 = vld [vmem:[#allocation4 + $0x88] sm:$0xff]
        %v3281 = vld [vmem:[#allocation4 + $0x90] sm:$0xff]
        %v3282 = vld [vmem:[#allocation4 + $0x98] sm:$0xff]
        %v3283 = vld [vmem:[#allocation4 + $0xa0] sm:$0xff]
        %v3284 = vld [vmem:[#allocation4 + $0xa8] sm:$0xff]
        %v3285 = vld [vmem:[#allocation4 + $0xb0] sm:$0xff]
        %v3286 = vld [vmem:[#allocation4 + $0xb8] sm:$0xff]
        %v3287 = vld [vmem:[#allocation4 + $0xc0] sm:$0xff]
        %v3288 = vld [vmem:[#allocation4 + $0xc8] sm:$0xff]
        %v3289 = vld [vmem:[#allocation4 + $0xd0] sm:$0xff]
        %v3290 = vld [vmem:[#allocation4 + $0xd8] sm:$0xff]
        %v3291 = vld [vmem:[#allocation4 + $0xe0] sm:$0xff]
        %v3292 = vld [vmem:[#allocation4 + $0xe8] sm:$0xff]
        %v3293 = vld [vmem:[#allocation4 + $0xf0] sm:$0xff]
        %v3294 = vld [vmem:[#allocation4 + $0xf8] sm:$0xff]
        %3295 = vmatprep.subr.mxu0 0.0
        %3296 = vmatpush1.msra.mxu0 %v3278
        %3297 = vmatprep.subr.mxu0 0.0
        %3298 = vmatpush1.msra.mxu0 %v3277
        %3299 = vmatprep.subr.mxu0 0.0
        %3300 = vmatpush1.msra.mxu0 %v3276
        %3301 = vmatprep.subr.mxu0 0.0
        %3302 = vmatpush1.msra.mxu0 %v3275
        %3303 = vmatprep.subr.mxu0 0.0
        %3304 = vmatpush1.msra.mxu0 %v3274
        %3305 = vmatprep.subr.mxu0 0.0
        %3306 = vmatpush1.msra.mxu0 %v3273
        %3307 = vmatprep.subr.mxu0 0.0
        %3308 = vmatpush1.msra.mxu0 %v3272
        %3309 = vmatprep.subr.mxu0 0.0
        %3310 = vmatpush1.msra.mxu0 %v3271
        %3311 = vmatprep.subr.mxu0 0.0
        %3312 = vmatpush1.msra.mxu0 %v3270
        %3313 = vmatprep.subr.mxu0 0.0
        %3314 = vmatpush1.msra.mxu0 %v3269
        %3315 = vmatprep.subr.mxu0 0.0
        %3316 = vmatpush1.msra.mxu0 %v3268
        %3317 = vmatprep.subr.mxu0 0.0
        %3318 = vmatpush1.msra.mxu0 %v3267
        %3319 = vmatprep.subr.mxu0 0.0
        %3320 = vmatpush1.msra.mxu0 %v3266
        %3321 = vmatprep.subr.mxu0 0.0
        %3322 = vmatpush1.msra.mxu0 %v3265
        %3323 = vmatprep.subr.mxu0 0.0
        %3324 = vmatpush1.msra.mxu0 %v3264
        %3325 = vmatprep.subr.mxu0 0.0
        %3326 = vmatpush1.msra.mxu0 %v3263
        %3327 = vmatprep.subr.mxu0 0.0
        %3328 = vmatpush2.msra.mxu0 %v3294
        %3329 = vmatprep.subr.mxu0 0.0
        %3330 = vmatpush2.msra.mxu0 %v3293
        %3331 = vmatprep.subr.mxu0 0.0
        %3332 = vmatpush2.msra.mxu0 %v3292
        %3333 = vmatprep.subr.mxu0 0.0
        %3334 = vmatpush2.msra.mxu0 %v3291
        %3335 = vmatprep.subr.mxu0 0.0
        %3336 = vmatpush2.msra.mxu0 %v3290
        %3337 = vmatprep.subr.mxu0 0.0
        %3338 = vmatpush2.msra.mxu0 %v3289
        %3339 = vmatprep.subr.mxu0 0.0
        %3340 = vmatpush2.msra.mxu0 %v3288
        %3341 = vmatprep.subr.mxu0 0.0
        %3342 = vmatpush2.msra.mxu0 %v3287
        %3343 = vmatprep.subr.mxu0 0.0
        %3344 = vmatpush2.msra.mxu0 %v3286
        %3345 = vmatprep.subr.mxu0 0.0
        %3346 = vmatpush2.msra.mxu0 %v3285
        %3347 = vmatprep.subr.mxu0 0.0
        %3348 = vmatpush2.msra.mxu0 %v3284
        %3349 = vmatprep.subr.mxu0 0.0
        %3350 = vmatpush2.msra.mxu0 %v3283
        %3351 = vmatprep.subr.mxu0 0.0
        %3352 = vmatpush2.msra.mxu0 %v3282
        %3353 = vmatprep.subr.mxu0 0.0
        %3354 = vmatpush2.msra.mxu0 %v3281
        %3355 = vmatprep.subr.mxu0 0.0
        %3356 = vmatpush2.msra.mxu0 %v3280
        %3357 = vmatprep.subr.mxu0 0.0
        %3358 = vmatpush2.msra.mxu0 %v3279
        %3359 = vmatprep.mubr.f32.mxu0 %v3262
        %3360 = vmatmul.mubr.f32.gmra.mxu0 %v3261
        %v3361 = vpop.f32.mrf.mxu0
        %v3362 = vadd.f32 0.0, %v3361
        %v3363 = vpop.f32.mrf.mxu0
        %3364 = vdwg.mxu0
        %v3365 = vadd.f32 %v3362, 0.0
        %v3366 = vld [vmem:[%s1511] sm:$0xff]
        %v3367 = vld [vmem:[%s1511 + $0x8] sm:$0xff]
        %v3368 = vld [vmem:[%s1511 + $0x10] sm:$0xff]
        %v3369 = vld [vmem:[%s1511 + $0x18] sm:$0xff]
        %v3370 = vld [vmem:[%s1511 + $0x20] sm:$0xff]
        %v3371 = vld [vmem:[%s1511 + $0x28] sm:$0xff]
        %v3372 = vld [vmem:[%s1511 + $0x30] sm:$0xff]
        %v3373 = vld [vmem:[%s1511 + $0x38] sm:$0xff]
        %v3374 = vld [vmem:[%s1511 + $0x40] sm:$0xff]
        %v3375 = vld [vmem:[%s1511 + $0x48] sm:$0xff]
        %v3376 = vld [vmem:[%s1511 + $0x50] sm:$0xff]
        %v3377 = vld [vmem:[%s1511 + $0x58] sm:$0xff]
        %v3378 = vld [vmem:[%s1511 + $0x60] sm:$0xff]
        %v3379 = vld [vmem:[%s1511 + $0x68] sm:$0xff]
        %v3380 = vld [vmem:[%s1511 + $0x70] sm:$0xff]
        %v3381 = vld [vmem:[%s1511 + $0x78] sm:$0xff]
        %v3382 = vld [vmem:[%s1511 + $0x80] sm:$0xff]
        %v3383 = vld [vmem:[%s1511 + $0x88] sm:$0xff]
        %v3384 = vld [vmem:[%s1511 + $0x90] sm:$0xff]
        %v3385 = vld [vmem:[%s1511 + $0x98] sm:$0xff]
        %v3386 = vld [vmem:[%s1511 + $0xa0] sm:$0xff]
        %v3387 = vld [vmem:[%s1511 + $0xa8] sm:$0xff]
        %v3388 = vld [vmem:[%s1511 + $0xb0] sm:$0xff]
        %v3389 = vld [vmem:[%s1511 + $0xb8] sm:$0xff]
        %v3390 = vld [vmem:[%s1511 + $0xc0] sm:$0xff]
        %v3391 = vld [vmem:[%s1511 + $0xc8] sm:$0xff]
        %v3392 = vld [vmem:[%s1511 + $0xd0] sm:$0xff]
        %v3393 = vld [vmem:[%s1511 + $0xd8] sm:$0xff]
        %v3394 = vld [vmem:[%s1511 + $0xe0] sm:$0xff]
        %v3395 = vld [vmem:[%s1511 + $0xe8] sm:$0xff]
        %v3396 = vld [vmem:[%s1511 + $0xf0] sm:$0xff]
        %v3397 = vld [vmem:[%s1511 + $0xf8] sm:$0xff]
        %3398 = vmatprep.subr.mxu0 0.0
        %3399 = vmatpush1.msra.mxu0 %v3381
        %3400 = vmatprep.subr.mxu0 0.0
        %3401 = vmatpush1.msra.mxu0 %v3380
        %3402 = vmatprep.subr.mxu0 0.0
        %3403 = vmatpush1.msra.mxu0 %v3379
        %3404 = vmatprep.subr.mxu0 0.0
        %3405 = vmatpush1.msra.mxu0 %v3378
        %3406 = vmatprep.subr.mxu0 0.0
        %3407 = vmatpush1.msra.mxu0 %v3377
        %3408 = vmatprep.subr.mxu0 0.0
        %3409 = vmatpush1.msra.mxu0 %v3376
        %3410 = vmatprep.subr.mxu0 0.0
        %3411 = vmatpush1.msra.mxu0 %v3375
        %3412 = vmatprep.subr.mxu0 0.0
        %3413 = vmatpush1.msra.mxu0 %v3374
        %3414 = vmatprep.subr.mxu0 0.0
        %3415 = vmatpush1.msra.mxu0 %v3373
        %3416 = vmatprep.subr.mxu0 0.0
        %3417 = vmatpush1.msra.mxu0 %v3372
        %3418 = vmatprep.subr.mxu0 0.0
        %3419 = vmatpush1.msra.mxu0 %v3371
        %3420 = vmatprep.subr.mxu0 0.0
        %3421 = vmatpush1.msra.mxu0 %v3370
        %3422 = vmatprep.subr.mxu0 0.0
        %3423 = vmatpush1.msra.mxu0 %v3369
        %3424 = vmatprep.subr.mxu0 0.0
        %3425 = vmatpush1.msra.mxu0 %v3368
        %3426 = vmatprep.subr.mxu0 0.0
        %3427 = vmatpush1.msra.mxu0 %v3367
        %3428 = vmatprep.subr.mxu0 0.0
        %3429 = vmatpush1.msra.mxu0 %v3366
        %3430 = vmatprep.subr.mxu0 0.0
        %3431 = vmatpush2.msra.mxu0 %v3397
        %3432 = vmatprep.subr.mxu0 0.0
        %3433 = vmatpush2.msra.mxu0 %v3396
        %3434 = vmatprep.subr.mxu0 0.0
        %3435 = vmatpush2.msra.mxu0 %v3395
        %3436 = vmatprep.subr.mxu0 0.0
        %3437 = vmatpush2.msra.mxu0 %v3394
        %3438 = vmatprep.subr.mxu0 0.0
        %3439 = vmatpush2.msra.mxu0 %v3393
        %3440 = vmatprep.subr.mxu0 0.0
        %3441 = vmatpush2.msra.mxu0 %v3392
        %3442 = vmatprep.subr.mxu0 0.0
        %3443 = vmatpush2.msra.mxu0 %v3391
        %3444 = vmatprep.subr.mxu0 0.0
        %3445 = vmatpush2.msra.mxu0 %v3390
        %3446 = vmatprep.subr.mxu0 0.0
        %3447 = vmatpush2.msra.mxu0 %v3389
        %3448 = vmatprep.subr.mxu0 0.0
        %3449 = vmatpush2.msra.mxu0 %v3388
        %3450 = vmatprep.subr.mxu0 0.0
        %3451 = vmatpush2.msra.mxu0 %v3387
        %3452 = vmatprep.subr.mxu0 0.0
        %3453 = vmatpush2.msra.mxu0 %v3386
        %3454 = vmatprep.subr.mxu0 0.0
        %3455 = vmatpush2.msra.mxu0 %v3385
        %3456 = vmatprep.subr.mxu0 0.0
        %3457 = vmatpush2.msra.mxu0 %v3384
        %3458 = vmatprep.subr.mxu0 0.0
        %3459 = vmatpush2.msra.mxu0 %v3383
        %3460 = vmatprep.subr.mxu0 0.0
        %3461 = vmatpush2.msra.mxu0 %v3382
        %3462 = vmatprep.mubr.f32.mxu0 %v3262
        %3463 = vmatmul.mubr.f32.gmra.mxu0 %v3261
        %v3464 = vpop.f32.mrf.mxu0
        %v3465 = vadd.f32 0.0, %v3464
        %v3466 = vpop.f32.mrf.mxu0
        %3467 = vdwg.mxu0
        %v3469 = vrot.slane %v3465, 1
        %v3471 = vadd.f32 %v3365, %v3469
        %v3472 = vld [vmem:[%s1618] sm:$0xff]
        %v3473 = vld [vmem:[%s1618 + $0x8] sm:$0xff]
        %v3474 = vld [vmem:[%s1618 + $0x10] sm:$0xff]
        %v3475 = vld [vmem:[%s1618 + $0x18] sm:$0xff]
        %v3476 = vld [vmem:[%s1618 + $0x20] sm:$0xff]
        %v3477 = vld [vmem:[%s1618 + $0x28] sm:$0xff]
        %v3478 = vld [vmem:[%s1618 + $0x30] sm:$0xff]
        %v3479 = vld [vmem:[%s1618 + $0x38] sm:$0xff]
        %v3480 = vld [vmem:[%s1618 + $0x40] sm:$0xff]
        %v3481 = vld [vmem:[%s1618 + $0x48] sm:$0xff]
        %v3482 = vld [vmem:[%s1618 + $0x50] sm:$0xff]
        %v3483 = vld [vmem:[%s1618 + $0x58] sm:$0xff]
        %v3484 = vld [vmem:[%s1618 + $0x60] sm:$0xff]
        %v3485 = vld [vmem:[%s1618 + $0x68] sm:$0xff]
        %v3486 = vld [vmem:[%s1618 + $0x70] sm:$0xff]
        %v3487 = vld [vmem:[%s1618 + $0x78] sm:$0xff]
        %v3488 = vld [vmem:[%s1618 + $0x80] sm:$0xff]
        %v3489 = vld [vmem:[%s1618 + $0x88] sm:$0xff]
        %v3490 = vld [vmem:[%s1618 + $0x90] sm:$0xff]
        %v3491 = vld [vmem:[%s1618 + $0x98] sm:$0xff]
        %v3492 = vld [vmem:[%s1618 + $0xa0] sm:$0xff]
        %v3493 = vld [vmem:[%s1618 + $0xa8] sm:$0xff]
        %v3494 = vld [vmem:[%s1618 + $0xb0] sm:$0xff]
        %v3495 = vld [vmem:[%s1618 + $0xb8] sm:$0xff]
        %v3496 = vld [vmem:[%s1618 + $0xc0] sm:$0xff]
        %v3497 = vld [vmem:[%s1618 + $0xc8] sm:$0xff]
        %v3498 = vld [vmem:[%s1618 + $0xd0] sm:$0xff]
        %v3499 = vld [vmem:[%s1618 + $0xd8] sm:$0xff]
        %v3500 = vld [vmem:[%s1618 + $0xe0] sm:$0xff]
        %v3501 = vld [vmem:[%s1618 + $0xe8] sm:$0xff]
        %v3502 = vld [vmem:[%s1618 + $0xf0] sm:$0xff]
        %v3503 = vld [vmem:[%s1618 + $0xf8] sm:$0xff]
        %3504 = vmatprep.subr.mxu0 0.0
        %3505 = vmatpush1.msra.mxu0 %v3487
        %3506 = vmatprep.subr.mxu0 0.0
        %3507 = vmatpush1.msra.mxu0 %v3486
        %3508 = vmatprep.subr.mxu0 0.0
        %3509 = vmatpush1.msra.mxu0 %v3485
        %3510 = vmatprep.subr.mxu0 0.0
        %3511 = vmatpush1.msra.mxu0 %v3484
        %3512 = vmatprep.subr.mxu0 0.0
        %3513 = vmatpush1.msra.mxu0 %v3483
        %3514 = vmatprep.subr.mxu0 0.0
        %3515 = vmatpush1.msra.mxu0 %v3482
        %3516 = vmatprep.subr.mxu0 0.0
        %3517 = vmatpush1.msra.mxu0 %v3481
        %3518 = vmatprep.subr.mxu0 0.0
        %3519 = vmatpush1.msra.mxu0 %v3480
        %3520 = vmatprep.subr.mxu0 0.0
        %3521 = vmatpush1.msra.mxu0 %v3479
        %3522 = vmatprep.subr.mxu0 0.0
        %3523 = vmatpush1.msra.mxu0 %v3478
        %3524 = vmatprep.subr.mxu0 0.0
        %3525 = vmatpush1.msra.mxu0 %v3477
        %3526 = vmatprep.subr.mxu0 0.0
        %3527 = vmatpush1.msra.mxu0 %v3476
        %3528 = vmatprep.subr.mxu0 0.0
        %3529 = vmatpush1.msra.mxu0 %v3475
        %3530 = vmatprep.subr.mxu0 0.0
        %3531 = vmatpush1.msra.mxu0 %v3474
        %3532 = vmatprep.subr.mxu0 0.0
        %3533 = vmatpush1.msra.mxu0 %v3473
        %3534 = vmatprep.subr.mxu0 0.0
        %3535 = vmatpush1.msra.mxu0 %v3472
        %3536 = vmatprep.subr.mxu0 0.0
        %3537 = vmatpush2.msra.mxu0 %v3503
        %3538 = vmatprep.subr.mxu0 0.0
        %3539 = vmatpush2.msra.mxu0 %v3502
        %3540 = vmatprep.subr.mxu0 0.0
        %3541 = vmatpush2.msra.mxu0 %v3501
        %3542 = vmatprep.subr.mxu0 0.0
        %3543 = vmatpush2.msra.mxu0 %v3500
        %3544 = vmatprep.subr.mxu0 0.0
        %3545 = vmatpush2.msra.mxu0 %v3499
        %3546 = vmatprep.subr.mxu0 0.0
        %3547 = vmatpush2.msra.mxu0 %v3498
        %3548 = vmatprep.subr.mxu0 0.0
        %3549 = vmatpush2.msra.mxu0 %v3497
        %3550 = vmatprep.subr.mxu0 0.0
        %3551 = vmatpush2.msra.mxu0 %v3496
        %3552 = vmatprep.subr.mxu0 0.0
        %3553 = vmatpush2.msra.mxu0 %v3495
        %3554 = vmatprep.subr.mxu0 0.0
        %3555 = vmatpush2.msra.mxu0 %v3494
        %3556 = vmatprep.subr.mxu0 0.0
        %3557 = vmatpush2.msra.mxu0 %v3493
        %3558 = vmatprep.subr.mxu0 0.0
        %3559 = vmatpush2.msra.mxu0 %v3492
        %3560 = vmatprep.subr.mxu0 0.0
        %3561 = vmatpush2.msra.mxu0 %v3491
        %3562 = vmatprep.subr.mxu0 0.0
        %3563 = vmatpush2.msra.mxu0 %v3490
        %3564 = vmatprep.subr.mxu0 0.0
        %3565 = vmatpush2.msra.mxu0 %v3489
        %3566 = vmatprep.subr.mxu0 0.0
        %3567 = vmatpush2.msra.mxu0 %v3488
        %3568 = vmatprep.mubr.f32.mxu0 %v3262
        %3569 = vmatmul.mubr.f32.gmra.mxu0 %v3261
        %v3570 = vpop.f32.mrf.mxu0
        %v3571 = vadd.f32 0.0, %v3570
        %v3572 = vpop.f32.mrf.mxu0
        %3573 = vdwg.mxu0
        %v3575 = vrot.slane %v3571, 2
        %v3577 = vadd.f32 %v3471, %v3575
        %v3578 = vld [vmem:[%s1725] sm:$0xff]
        %v3579 = vld [vmem:[%s1725 + $0x8] sm:$0xff]
        %v3580 = vld [vmem:[%s1725 + $0x10] sm:$0xff]
        %v3581 = vld [vmem:[%s1725 + $0x18] sm:$0xff]
        %v3582 = vld [vmem:[%s1725 + $0x20] sm:$0xff]
        %v3583 = vld [vmem:[%s1725 + $0x28] sm:$0xff]
        %v3584 = vld [vmem:[%s1725 + $0x30] sm:$0xff]
        %v3585 = vld [vmem:[%s1725 + $0x38] sm:$0xff]
        %v3586 = vld [vmem:[%s1725 + $0x40] sm:$0xff]
        %v3587 = vld [vmem:[%s1725 + $0x48] sm:$0xff]
        %v3588 = vld [vmem:[%s1725 + $0x50] sm:$0xff]
        %v3589 = vld [vmem:[%s1725 + $0x58] sm:$0xff]
        %v3590 = vld [vmem:[%s1725 + $0x60] sm:$0xff]
        %v3591 = vld [vmem:[%s1725 + $0x68] sm:$0xff]
        %v3592 = vld [vmem:[%s1725 + $0x70] sm:$0xff]
        %v3593 = vld [vmem:[%s1725 + $0x78] sm:$0xff]
        %v3594 = vld [vmem:[%s1725 + $0x80] sm:$0xff]
        %v3595 = vld [vmem:[%s1725 + $0x88] sm:$0xff]
        %v3596 = vld [vmem:[%s1725 + $0x90] sm:$0xff]
        %v3597 = vld [vmem:[%s1725 + $0x98] sm:$0xff]
        %v3598 = vld [vmem:[%s1725 + $0xa0] sm:$0xff]
        %v3599 = vld [vmem:[%s1725 + $0xa8] sm:$0xff]
        %v3600 = vld [vmem:[%s1725 + $0xb0] sm:$0xff]
        %v3601 = vld [vmem:[%s1725 + $0xb8] sm:$0xff]
        %v3602 = vld [vmem:[%s1725 + $0xc0] sm:$0xff]
        %v3603 = vld [vmem:[%s1725 + $0xc8] sm:$0xff]
        %v3604 = vld [vmem:[%s1725 + $0xd0] sm:$0xff]
        %v3605 = vld [vmem:[%s1725 + $0xd8] sm:$0xff]
        %v3606 = vld [vmem:[%s1725 + $0xe0] sm:$0xff]
        %v3607 = vld [vmem:[%s1725 + $0xe8] sm:$0xff]
        %v3608 = vld [vmem:[%s1725 + $0xf0] sm:$0xff]
        %v3609 = vld [vmem:[%s1725 + $0xf8] sm:$0xff]
        %3610 = vmatprep.subr.mxu0 0.0
        %3611 = vmatpush1.msra.mxu0 %v3593
        %3612 = vmatprep.subr.mxu0 0.0
        %3613 = vmatpush1.msra.mxu0 %v3592
        %3614 = vmatprep.subr.mxu0 0.0
        %3615 = vmatpush1.msra.mxu0 %v3591
        %3616 = vmatprep.subr.mxu0 0.0
        %3617 = vmatpush1.msra.mxu0 %v3590
        %3618 = vmatprep.subr.mxu0 0.0
        %3619 = vmatpush1.msra.mxu0 %v3589
        %3620 = vmatprep.subr.mxu0 0.0
        %3621 = vmatpush1.msra.mxu0 %v3588
        %3622 = vmatprep.subr.mxu0 0.0
        %3623 = vmatpush1.msra.mxu0 %v3587
        %3624 = vmatprep.subr.mxu0 0.0
        %3625 = vmatpush1.msra.mxu0 %v3586
        %3626 = vmatprep.subr.mxu0 0.0
        %3627 = vmatpush1.msra.mxu0 %v3585
        %3628 = vmatprep.subr.mxu0 0.0
        %3629 = vmatpush1.msra.mxu0 %v3584
        %3630 = vmatprep.subr.mxu0 0.0
        %3631 = vmatpush1.msra.mxu0 %v3583
        %3632 = vmatprep.subr.mxu0 0.0
        %3633 = vmatpush1.msra.mxu0 %v3582
        %3634 = vmatprep.subr.mxu0 0.0
        %3635 = vmatpush1.msra.mxu0 %v3581
        %3636 = vmatprep.subr.mxu0 0.0
        %3637 = vmatpush1.msra.mxu0 %v3580
        %3638 = vmatprep.subr.mxu0 0.0
        %3639 = vmatpush1.msra.mxu0 %v3579
        %3640 = vmatprep.subr.mxu0 0.0
        %3641 = vmatpush1.msra.mxu0 %v3578
        %3642 = vmatprep.subr.mxu0 0.0
        %3643 = vmatpush2.msra.mxu0 %v3609
        %3644 = vmatprep.subr.mxu0 0.0
        %3645 = vmatpush2.msra.mxu0 %v3608
        %3646 = vmatprep.subr.mxu0 0.0
        %3647 = vmatpush2.msra.mxu0 %v3607
        %3648 = vmatprep.subr.mxu0 0.0
        %3649 = vmatpush2.msra.mxu0 %v3606
        %3650 = vmatprep.subr.mxu0 0.0
        %3651 = vmatpush2.msra.mxu0 %v3605
        %3652 = vmatprep.subr.mxu0 0.0
        %3653 = vmatpush2.msra.mxu0 %v3604
        %3654 = vmatprep.subr.mxu0 0.0
        %3655 = vmatpush2.msra.mxu0 %v3603
        %3656 = vmatprep.subr.mxu0 0.0
        %3657 = vmatpush2.msra.mxu0 %v3602
        %3658 = vmatprep.subr.mxu0 0.0
        %3659 = vmatpush2.msra.mxu0 %v3601
        %3660 = vmatprep.subr.mxu0 0.0
        %3661 = vmatpush2.msra.mxu0 %v3600
        %3662 = vmatprep.subr.mxu0 0.0
        %3663 = vmatpush2.msra.mxu0 %v3599
        %3664 = vmatprep.subr.mxu0 0.0
        %3665 = vmatpush2.msra.mxu0 %v3598
        %3666 = vmatprep.subr.mxu0 0.0
        %3667 = vmatpush2.msra.mxu0 %v3597
        %3668 = vmatprep.subr.mxu0 0.0
        %3669 = vmatpush2.msra.mxu0 %v3596
        %3670 = vmatprep.subr.mxu0 0.0
        %3671 = vmatpush2.msra.mxu0 %v3595
        %3672 = vmatprep.subr.mxu0 0.0
        %3673 = vmatpush2.msra.mxu0 %v3594
        %3674 = vmatprep.mubr.f32.mxu0 %v3262
        %3675 = vmatmul.mubr.f32.gmra.mxu0 %v3261
        %v3676 = vpop.f32.mrf.mxu0
        %v3677 = vadd.f32 0.0, %v3676
        %v3678 = vpop.f32.mrf.mxu0
        %3679 = vdwg.mxu0
        %v3681 = vrot.slane %v3677, 3
        %v3683 = vadd.f32 %v3577, %v3681
        %v3684 = vld [vmem:[%s1832] sm:$0xff]
        %v3685 = vld [vmem:[%s1832 + $0x8] sm:$0xff]
        %v3686 = vld [vmem:[%s1832 + $0x10] sm:$0xff]
        %v3687 = vld [vmem:[%s1832 + $0x18] sm:$0xff]
        %v3688 = vld [vmem:[%s1832 + $0x20] sm:$0xff]
        %v3689 = vld [vmem:[%s1832 + $0x28] sm:$0xff]
        %v3690 = vld [vmem:[%s1832 + $0x30] sm:$0xff]
        %v3691 = vld [vmem:[%s1832 + $0x38] sm:$0xff]
        %v3692 = vld [vmem:[%s1832 + $0x40] sm:$0xff]
        %v3693 = vld [vmem:[%s1832 + $0x48] sm:$0xff]
        %v3694 = vld [vmem:[%s1832 + $0x50] sm:$0xff]
        %v3695 = vld [vmem:[%s1832 + $0x58] sm:$0xff]
        %v3696 = vld [vmem:[%s1832 + $0x60] sm:$0xff]
        %v3697 = vld [vmem:[%s1832 + $0x68] sm:$0xff]
        %v3698 = vld [vmem:[%s1832 + $0x70] sm:$0xff]
        %v3699 = vld [vmem:[%s1832 + $0x78] sm:$0xff]
        %v3700 = vld [vmem:[%s1832 + $0x80] sm:$0xff]
        %v3701 = vld [vmem:[%s1832 + $0x88] sm:$0xff]
        %v3702 = vld [vmem:[%s1832 + $0x90] sm:$0xff]
        %v3703 = vld [vmem:[%s1832 + $0x98] sm:$0xff]
        %v3704 = vld [vmem:[%s1832 + $0xa0] sm:$0xff]
        %v3705 = vld [vmem:[%s1832 + $0xa8] sm:$0xff]
        %v3706 = vld [vmem:[%s1832 + $0xb0] sm:$0xff]
        %v3707 = vld [vmem:[%s1832 + $0xb8] sm:$0xff]
        %v3708 = vld [vmem:[%s1832 + $0xc0] sm:$0xff]
        %v3709 = vld [vmem:[%s1832 + $0xc8] sm:$0xff]
        %v3710 = vld [vmem:[%s1832 + $0xd0] sm:$0xff]
        %v3711 = vld [vmem:[%s1832 + $0xd8] sm:$0xff]
        %v3712 = vld [vmem:[%s1832 + $0xe0] sm:$0xff]
        %v3713 = vld [vmem:[%s1832 + $0xe8] sm:$0xff]
        %v3714 = vld [vmem:[%s1832 + $0xf0] sm:$0xff]
        %v3715 = vld [vmem:[%s1832 + $0xf8] sm:$0xff]
        %3716 = vmatprep.subr.mxu0 0.0
        %3717 = vmatpush1.msra.mxu0 %v3699
        %3718 = vmatprep.subr.mxu0 0.0
        %3719 = vmatpush1.msra.mxu0 %v3698
        %3720 = vmatprep.subr.mxu0 0.0
        %3721 = vmatpush1.msra.mxu0 %v3697
        %3722 = vmatprep.subr.mxu0 0.0
        %3723 = vmatpush1.msra.mxu0 %v3696
        %3724 = vmatprep.subr.mxu0 0.0
        %3725 = vmatpush1.msra.mxu0 %v3695
        %3726 = vmatprep.subr.mxu0 0.0
        %3727 = vmatpush1.msra.mxu0 %v3694
        %3728 = vmatprep.subr.mxu0 0.0
        %3729 = vmatpush1.msra.mxu0 %v3693
        %3730 = vmatprep.subr.mxu0 0.0
        %3731 = vmatpush1.msra.mxu0 %v3692
        %3732 = vmatprep.subr.mxu0 0.0
        %3733 = vmatpush1.msra.mxu0 %v3691
        %3734 = vmatprep.subr.mxu0 0.0
        %3735 = vmatpush1.msra.mxu0 %v3690
        %3736 = vmatprep.subr.mxu0 0.0
        %3737 = vmatpush1.msra.mxu0 %v3689
        %3738 = vmatprep.subr.mxu0 0.0
        %3739 = vmatpush1.msra.mxu0 %v3688
        %3740 = vmatprep.subr.mxu0 0.0
        %3741 = vmatpush1.msra.mxu0 %v3687
        %3742 = vmatprep.subr.mxu0 0.0
        %3743 = vmatpush1.msra.mxu0 %v3686
        %3744 = vmatprep.subr.mxu0 0.0
        %3745 = vmatpush1.msra.mxu0 %v3685
        %3746 = vmatprep.subr.mxu0 0.0
        %3747 = vmatpush1.msra.mxu0 %v3684
        %3748 = vmatprep.subr.mxu0 0.0
        %3749 = vmatpush2.msra.mxu0 %v3715
        %3750 = vmatprep.subr.mxu0 0.0
        %3751 = vmatpush2.msra.mxu0 %v3714
        %3752 = vmatprep.subr.mxu0 0.0
        %3753 = vmatpush2.msra.mxu0 %v3713
        %3754 = vmatprep.subr.mxu0 0.0
        %3755 = vmatpush2.msra.mxu0 %v3712
        %3756 = vmatprep.subr.mxu0 0.0
        %3757 = vmatpush2.msra.mxu0 %v3711
        %3758 = vmatprep.subr.mxu0 0.0
        %3759 = vmatpush2.msra.mxu0 %v3710
        %3760 = vmatprep.subr.mxu0 0.0
        %3761 = vmatpush2.msra.mxu0 %v3709
        %3762 = vmatprep.subr.mxu0 0.0
        %3763 = vmatpush2.msra.mxu0 %v3708
        %3764 = vmatprep.subr.mxu0 0.0
        %3765 = vmatpush2.msra.mxu0 %v3707
        %3766 = vmatprep.subr.mxu0 0.0
        %3767 = vmatpush2.msra.mxu0 %v3706
        %3768 = vmatprep.subr.mxu0 0.0
        %3769 = vmatpush2.msra.mxu0 %v3705
        %3770 = vmatprep.subr.mxu0 0.0
        %3771 = vmatpush2.msra.mxu0 %v3704
        %3772 = vmatprep.subr.mxu0 0.0
        %3773 = vmatpush2.msra.mxu0 %v3703
        %3774 = vmatprep.subr.mxu0 0.0
        %3775 = vmatpush2.msra.mxu0 %v3702
        %3776 = vmatprep.subr.mxu0 0.0
        %3777 = vmatpush2.msra.mxu0 %v3701
        %3778 = vmatprep.subr.mxu0 0.0
        %3779 = vmatpush2.msra.mxu0 %v3700
        %3780 = vmatprep.mubr.f32.mxu0 %v3262
        %3781 = vmatmul.mubr.f32.gmra.mxu0 %v3261
        %v3782 = vpop.f32.mrf.mxu0
        %v3783 = vadd.f32 0.0, %v3782
        %v3784 = vpop.f32.mrf.mxu0
        %3785 = vdwg.mxu0
        %v3787 = vrot.slane %v3783, 4
        %v3789 = vadd.f32 %v3683, %v3787
        %v3790 = vld [vmem:[%s1939] sm:$0xff]
        %v3791 = vld [vmem:[%s1939 + $0x8] sm:$0xff]
        %v3792 = vld [vmem:[%s1939 + $0x10] sm:$0xff]
        %v3793 = vld [vmem:[%s1939 + $0x18] sm:$0xff]
        %v3794 = vld [vmem:[%s1939 + $0x20] sm:$0xff]
        %v3795 = vld [vmem:[%s1939 + $0x28] sm:$0xff]
        %v3796 = vld [vmem:[%s1939 + $0x30] sm:$0xff]
        %v3797 = vld [vmem:[%s1939 + $0x38] sm:$0xff]
        %v3798 = vld [vmem:[%s1939 + $0x40] sm:$0xff]
        %v3799 = vld [vmem:[%s1939 + $0x48] sm:$0xff]
        %v3800 = vld [vmem:[%s1939 + $0x50] sm:$0xff]
        %v3801 = vld [vmem:[%s1939 + $0x58] sm:$0xff]
        %v3802 = vld [vmem:[%s1939 + $0x60] sm:$0xff]
        %v3803 = vld [vmem:[%s1939 + $0x68] sm:$0xff]
        %v3804 = vld [vmem:[%s1939 + $0x70] sm:$0xff]
        %v3805 = vld [vmem:[%s1939 + $0x78] sm:$0xff]
        %v3806 = vld [vmem:[%s1939 + $0x80] sm:$0xff]
        %v3807 = vld [vmem:[%s1939 + $0x88] sm:$0xff]
        %v3808 = vld [vmem:[%s1939 + $0x90] sm:$0xff]
        %v3809 = vld [vmem:[%s1939 + $0x98] sm:$0xff]
        %v3810 = vld [vmem:[%s1939 + $0xa0] sm:$0xff]
        %v3811 = vld [vmem:[%s1939 + $0xa8] sm:$0xff]
        %v3812 = vld [vmem:[%s1939 + $0xb0] sm:$0xff]
        %v3813 = vld [vmem:[%s1939 + $0xb8] sm:$0xff]
        %v3814 = vld [vmem:[%s1939 + $0xc0] sm:$0xff]
        %v3815 = vld [vmem:[%s1939 + $0xc8] sm:$0xff]
        %v3816 = vld [vmem:[%s1939 + $0xd0] sm:$0xff]
        %v3817 = vld [vmem:[%s1939 + $0xd8] sm:$0xff]
        %v3818 = vld [vmem:[%s1939 + $0xe0] sm:$0xff]
        %v3819 = vld [vmem:[%s1939 + $0xe8] sm:$0xff]
        %v3820 = vld [vmem:[%s1939 + $0xf0] sm:$0xff]
        %v3821 = vld [vmem:[%s1939 + $0xf8] sm:$0xff]
        %3822 = vmatprep.subr.mxu0 0.0
        %3823 = vmatpush1.msra.mxu0 %v3805
        %3824 = vmatprep.subr.mxu0 0.0
        %3825 = vmatpush1.msra.mxu0 %v3804
        %3826 = vmatprep.subr.mxu0 0.0
        %3827 = vmatpush1.msra.mxu0 %v3803
        %3828 = vmatprep.subr.mxu0 0.0
        %3829 = vmatpush1.msra.mxu0 %v3802
        %3830 = vmatprep.subr.mxu0 0.0
        %3831 = vmatpush1.msra.mxu0 %v3801
        %3832 = vmatprep.subr.mxu0 0.0
        %3833 = vmatpush1.msra.mxu0 %v3800
        %3834 = vmatprep.subr.mxu0 0.0
        %3835 = vmatpush1.msra.mxu0 %v3799
        %3836 = vmatprep.subr.mxu0 0.0
        %3837 = vmatpush1.msra.mxu0 %v3798
        %3838 = vmatprep.subr.mxu0 0.0
        %3839 = vmatpush1.msra.mxu0 %v3797
        %3840 = vmatprep.subr.mxu0 0.0
        %3841 = vmatpush1.msra.mxu0 %v3796
        %3842 = vmatprep.subr.mxu0 0.0
        %3843 = vmatpush1.msra.mxu0 %v3795
        %3844 = vmatprep.subr.mxu0 0.0
        %3845 = vmatpush1.msra.mxu0 %v3794
        %3846 = vmatprep.subr.mxu0 0.0
        %3847 = vmatpush1.msra.mxu0 %v3793
        %3848 = vmatprep.subr.mxu0 0.0
        %3849 = vmatpush1.msra.mxu0 %v3792
        %3850 = vmatprep.subr.mxu0 0.0
        %3851 = vmatpush1.msra.mxu0 %v3791
        %3852 = vmatprep.subr.mxu0 0.0
        %3853 = vmatpush1.msra.mxu0 %v3790
        %3854 = vmatprep.subr.mxu0 0.0
        %3855 = vmatpush2.msra.mxu0 %v3821
        %3856 = vmatprep.subr.mxu0 0.0
        %3857 = vmatpush2.msra.mxu0 %v3820
        %3858 = vmatprep.subr.mxu0 0.0
        %3859 = vmatpush2.msra.mxu0 %v3819
        %3860 = vmatprep.subr.mxu0 0.0
        %3861 = vmatpush2.msra.mxu0 %v3818
        %3862 = vmatprep.subr.mxu0 0.0
        %3863 = vmatpush2.msra.mxu0 %v3817
        %3864 = vmatprep.subr.mxu0 0.0
        %3865 = vmatpush2.msra.mxu0 %v3816
        %3866 = vmatprep.subr.mxu0 0.0
        %3867 = vmatpush2.msra.mxu0 %v3815
        %3868 = vmatprep.subr.mxu0 0.0
        %3869 = vmatpush2.msra.mxu0 %v3814
        %3870 = vmatprep.subr.mxu0 0.0
        %3871 = vmatpush2.msra.mxu0 %v3813
        %3872 = vmatprep.subr.mxu0 0.0
        %3873 = vmatpush2.msra.mxu0 %v3812
        %3874 = vmatprep.subr.mxu0 0.0
        %3875 = vmatpush2.msra.mxu0 %v3811
        %3876 = vmatprep.subr.mxu0 0.0
        %3877 = vmatpush2.msra.mxu0 %v3810
        %3878 = vmatprep.subr.mxu0 0.0
        %3879 = vmatpush2.msra.mxu0 %v3809
        %3880 = vmatprep.subr.mxu0 0.0
        %3881 = vmatpush2.msra.mxu0 %v3808
        %3882 = vmatprep.subr.mxu0 0.0
        %3883 = vmatpush2.msra.mxu0 %v3807
        %3884 = vmatprep.subr.mxu0 0.0
        %3885 = vmatpush2.msra.mxu0 %v3806
        %3886 = vmatprep.mubr.f32.mxu0 %v3262
        %3887 = vmatmul.mubr.f32.gmra.mxu0 %v3261
        %v3888 = vpop.f32.mrf.mxu0
        %v3889 = vadd.f32 0.0, %v3888
        %v3890 = vpop.f32.mrf.mxu0
        %3891 = vdwg.mxu0
        %v3893 = vrot.slane %v3889, 5
        %v3895 = vadd.f32 %v3789, %v3893
        %v3896 = vld [vmem:[%s2046] sm:$0xff]
        %v3897 = vld [vmem:[%s2046 + $0x8] sm:$0xff]
        %v3898 = vld [vmem:[%s2046 + $0x10] sm:$0xff]
        %v3899 = vld [vmem:[%s2046 + $0x18] sm:$0xff]
        %v3900 = vld [vmem:[%s2046 + $0x20] sm:$0xff]
        %v3901 = vld [vmem:[%s2046 + $0x28] sm:$0xff]
        %v3902 = vld [vmem:[%s2046 + $0x30] sm:$0xff]
        %v3903 = vld [vmem:[%s2046 + $0x38] sm:$0xff]
        %v3904 = vld [vmem:[%s2046 + $0x40] sm:$0xff]
        %v3905 = vld [vmem:[%s2046 + $0x48] sm:$0xff]
        %v3906 = vld [vmem:[%s2046 + $0x50] sm:$0xff]
        %v3907 = vld [vmem:[%s2046 + $0x58] sm:$0xff]
        %v3908 = vld [vmem:[%s2046 + $0x60] sm:$0xff]
        %v3909 = vld [vmem:[%s2046 + $0x68] sm:$0xff]
        %v3910 = vld [vmem:[%s2046 + $0x70] sm:$0xff]
        %v3911 = vld [vmem:[%s2046 + $0x78] sm:$0xff]
        %v3912 = vld [vmem:[%s2046 + $0x80] sm:$0xff]
        %v3913 = vld [vmem:[%s2046 + $0x88] sm:$0xff]
        %v3914 = vld [vmem:[%s2046 + $0x90] sm:$0xff]
        %v3915 = vld [vmem:[%s2046 + $0x98] sm:$0xff]
        %v3916 = vld [vmem:[%s2046 + $0xa0] sm:$0xff]
        %v3917 = vld [vmem:[%s2046 + $0xa8] sm:$0xff]
        %v3918 = vld [vmem:[%s2046 + $0xb0] sm:$0xff]
        %v3919 = vld [vmem:[%s2046 + $0xb8] sm:$0xff]
        %v3920 = vld [vmem:[%s2046 + $0xc0] sm:$0xff]
        %v3921 = vld [vmem:[%s2046 + $0xc8] sm:$0xff]
        %v3922 = vld [vmem:[%s2046 + $0xd0] sm:$0xff]
        %v3923 = vld [vmem:[%s2046 + $0xd8] sm:$0xff]
        %v3924 = vld [vmem:[%s2046 + $0xe0] sm:$0xff]
        %v3925 = vld [vmem:[%s2046 + $0xe8] sm:$0xff]
        %v3926 = vld [vmem:[%s2046 + $0xf0] sm:$0xff]
        %v3927 = vld [vmem:[%s2046 + $0xf8] sm:$0xff]
        %3928 = vmatprep.subr.mxu0 0.0
        %3929 = vmatpush1.msra.mxu0 %v3911
        %3930 = vmatprep.subr.mxu0 0.0
        %3931 = vmatpush1.msra.mxu0 %v3910
        %3932 = vmatprep.subr.mxu0 0.0
        %3933 = vmatpush1.msra.mxu0 %v3909
        %3934 = vmatprep.subr.mxu0 0.0
        %3935 = vmatpush1.msra.mxu0 %v3908
        %3936 = vmatprep.subr.mxu0 0.0
        %3937 = vmatpush1.msra.mxu0 %v3907
        %3938 = vmatprep.subr.mxu0 0.0
        %3939 = vmatpush1.msra.mxu0 %v3906
        %3940 = vmatprep.subr.mxu0 0.0
        %3941 = vmatpush1.msra.mxu0 %v3905
        %3942 = vmatprep.subr.mxu0 0.0
        %3943 = vmatpush1.msra.mxu0 %v3904
        %3944 = vmatprep.subr.mxu0 0.0
        %3945 = vmatpush1.msra.mxu0 %v3903
        %3946 = vmatprep.subr.mxu0 0.0
        %3947 = vmatpush1.msra.mxu0 %v3902
        %3948 = vmatprep.subr.mxu0 0.0
        %3949 = vmatpush1.msra.mxu0 %v3901
        %3950 = vmatprep.subr.mxu0 0.0
        %3951 = vmatpush1.msra.mxu0 %v3900
        %3952 = vmatprep.subr.mxu0 0.0
        %3953 = vmatpush1.msra.mxu0 %v3899
        %3954 = vmatprep.subr.mxu0 0.0
        %3955 = vmatpush1.msra.mxu0 %v3898
        %3956 = vmatprep.subr.mxu0 0.0
        %3957 = vmatpush1.msra.mxu0 %v3897
        %3958 = vmatprep.subr.mxu0 0.0
        %3959 = vmatpush1.msra.mxu0 %v3896
        %3960 = vmatprep.subr.mxu0 0.0
        %3961 = vmatpush2.msra.mxu0 %v3927
        %3962 = vmatprep.subr.mxu0 0.0
        %3963 = vmatpush2.msra.mxu0 %v3926
        %3964 = vmatprep.subr.mxu0 0.0
        %3965 = vmatpush2.msra.mxu0 %v3925
        %3966 = vmatprep.subr.mxu0 0.0
        %3967 = vmatpush2.msra.mxu0 %v3924
        %3968 = vmatprep.subr.mxu0 0.0
        %3969 = vmatpush2.msra.mxu0 %v3923
        %3970 = vmatprep.subr.mxu0 0.0
        %3971 = vmatpush2.msra.mxu0 %v3922
        %3972 = vmatprep.subr.mxu0 0.0
        %3973 = vmatpush2.msra.mxu0 %v3921
        %3974 = vmatprep.subr.mxu0 0.0
        %3975 = vmatpush2.msra.mxu0 %v3920
        %3976 = vmatprep.subr.mxu0 0.0
        %3977 = vmatpush2.msra.mxu0 %v3919
        %3978 = vmatprep.subr.mxu0 0.0
        %3979 = vmatpush2.msra.mxu0 %v3918
        %3980 = vmatprep.subr.mxu0 0.0
        %3981 = vmatpush2.msra.mxu0 %v3917
        %3982 = vmatprep.subr.mxu0 0.0
        %3983 = vmatpush2.msra.mxu0 %v3916
        %3984 = vmatprep.subr.mxu0 0.0
        %3985 = vmatpush2.msra.mxu0 %v3915
        %3986 = vmatprep.subr.mxu0 0.0
        %3987 = vmatpush2.msra.mxu0 %v3914
        %3988 = vmatprep.subr.mxu0 0.0
        %3989 = vmatpush2.msra.mxu0 %v3913
        %3990 = vmatprep.subr.mxu0 0.0
        %3991 = vmatpush2.msra.mxu0 %v3912
        %3992 = vmatprep.mubr.f32.mxu0 %v3262
        %3993 = vmatmul.mubr.f32.gmra.mxu0 %v3261
        %v3994 = vpop.f32.mrf.mxu0
        %v3995 = vadd.f32 0.0, %v3994
        %v3996 = vpop.f32.mrf.mxu0
        %3997 = vdwg.mxu0
        %v3999 = vrot.slane %v3995, 6
        %v4001 = vadd.f32 %v3895, %v3999
        %v4002 = vld [vmem:[%s2153] sm:$0xff]
        %v4003 = vld [vmem:[%s2153 + $0x8] sm:$0xff]
        %v4004 = vld [vmem:[%s2153 + $0x10] sm:$0xff]
        %v4005 = vld [vmem:[%s2153 + $0x18] sm:$0xff]
        %v4006 = vld [vmem:[%s2153 + $0x20] sm:$0xff]
        %v4007 = vld [vmem:[%s2153 + $0x28] sm:$0xff]
        %v4008 = vld [vmem:[%s2153 + $0x30] sm:$0xff]
        %v4009 = vld [vmem:[%s2153 + $0x38] sm:$0xff]
        %v4010 = vld [vmem:[%s2153 + $0x40] sm:$0xff]
        %v4011 = vld [vmem:[%s2153 + $0x48] sm:$0xff]
        %v4012 = vld [vmem:[%s2153 + $0x50] sm:$0xff]
        %v4013 = vld [vmem:[%s2153 + $0x58] sm:$0xff]
        %v4014 = vld [vmem:[%s2153 + $0x60] sm:$0xff]
        %v4015 = vld [vmem:[%s2153 + $0x68] sm:$0xff]
        %v4016 = vld [vmem:[%s2153 + $0x70] sm:$0xff]
        %v4017 = vld [vmem:[%s2153 + $0x78] sm:$0xff]
        %v4018 = vld [vmem:[%s2153 + $0x80] sm:$0xff]
        %v4019 = vld [vmem:[%s2153 + $0x88] sm:$0xff]
        %v4020 = vld [vmem:[%s2153 + $0x90] sm:$0xff]
        %v4021 = vld [vmem:[%s2153 + $0x98] sm:$0xff]
        %v4022 = vld [vmem:[%s2153 + $0xa0] sm:$0xff]
        %v4023 = vld [vmem:[%s2153 + $0xa8] sm:$0xff]
        %v4024 = vld [vmem:[%s2153 + $0xb0] sm:$0xff]
        %v4025 = vld [vmem:[%s2153 + $0xb8] sm:$0xff]
        %v4026 = vld [vmem:[%s2153 + $0xc0] sm:$0xff]
        %v4027 = vld [vmem:[%s2153 + $0xc8] sm:$0xff]
        %v4028 = vld [vmem:[%s2153 + $0xd0] sm:$0xff]
        %v4029 = vld [vmem:[%s2153 + $0xd8] sm:$0xff]
        %v4030 = vld [vmem:[%s2153 + $0xe0] sm:$0xff]
        %v4031 = vld [vmem:[%s2153 + $0xe8] sm:$0xff]
        %v4032 = vld [vmem:[%s2153 + $0xf0] sm:$0xff]
        %v4033 = vld [vmem:[%s2153 + $0xf8] sm:$0xff]
        %4034 = vmatprep.subr.mxu0 0.0
        %4035 = vmatpush1.msra.mxu0 %v4017
        %4036 = vmatprep.subr.mxu0 0.0
        %4037 = vmatpush1.msra.mxu0 %v4016
        %4038 = vmatprep.subr.mxu0 0.0
        %4039 = vmatpush1.msra.mxu0 %v4015
        %4040 = vmatprep.subr.mxu0 0.0
        %4041 = vmatpush1.msra.mxu0 %v4014
        %4042 = vmatprep.subr.mxu0 0.0
        %4043 = vmatpush1.msra.mxu0 %v4013
        %4044 = vmatprep.subr.mxu0 0.0
        %4045 = vmatpush1.msra.mxu0 %v4012
        %4046 = vmatprep.subr.mxu0 0.0
        %4047 = vmatpush1.msra.mxu0 %v4011
        %4048 = vmatprep.subr.mxu0 0.0
        %4049 = vmatpush1.msra.mxu0 %v4010
        %4050 = vmatprep.subr.mxu0 0.0
        %4051 = vmatpush1.msra.mxu0 %v4009
        %4052 = vmatprep.subr.mxu0 0.0
        %4053 = vmatpush1.msra.mxu0 %v4008
        %4054 = vmatprep.subr.mxu0 0.0
        %4055 = vmatpush1.msra.mxu0 %v4007
        %4056 = vmatprep.subr.mxu0 0.0
        %4057 = vmatpush1.msra.mxu0 %v4006
        %4058 = vmatprep.subr.mxu0 0.0
        %4059 = vmatpush1.msra.mxu0 %v4005
        %4060 = vmatprep.subr.mxu0 0.0
        %4061 = vmatpush1.msra.mxu0 %v4004
        %4062 = vmatprep.subr.mxu0 0.0
        %4063 = vmatpush1.msra.mxu0 %v4003
        %4064 = vmatprep.subr.mxu0 0.0
        %4065 = vmatpush1.msra.mxu0 %v4002
        %4066 = vmatprep.subr.mxu0 0.0
        %4067 = vmatpush2.msra.mxu0 %v4033
        %4068 = vmatprep.subr.mxu0 0.0
        %4069 = vmatpush2.msra.mxu0 %v4032
        %4070 = vmatprep.subr.mxu0 0.0
        %4071 = vmatpush2.msra.mxu0 %v4031
        %4072 = vmatprep.subr.mxu0 0.0
        %4073 = vmatpush2.msra.mxu0 %v4030
        %4074 = vmatprep.subr.mxu0 0.0
        %4075 = vmatpush2.msra.mxu0 %v4029
        %4076 = vmatprep.subr.mxu0 0.0
        %4077 = vmatpush2.msra.mxu0 %v4028
        %4078 = vmatprep.subr.mxu0 0.0
        %4079 = vmatpush2.msra.mxu0 %v4027
        %4080 = vmatprep.subr.mxu0 0.0
        %4081 = vmatpush2.msra.mxu0 %v4026
        %4082 = vmatprep.subr.mxu0 0.0
        %4083 = vmatpush2.msra.mxu0 %v4025
        %4084 = vmatprep.subr.mxu0 0.0
        %4085 = vmatpush2.msra.mxu0 %v4024
        %4086 = vmatprep.subr.mxu0 0.0
        %4087 = vmatpush2.msra.mxu0 %v4023
        %4088 = vmatprep.subr.mxu0 0.0
        %4089 = vmatpush2.msra.mxu0 %v4022
        %4090 = vmatprep.subr.mxu0 0.0
        %4091 = vmatpush2.msra.mxu0 %v4021
        %4092 = vmatprep.subr.mxu0 0.0
        %4093 = vmatpush2.msra.mxu0 %v4020
        %4094 = vmatprep.subr.mxu0 0.0
        %4095 = vmatpush2.msra.mxu0 %v4019
        %4096 = vmatprep.subr.mxu0 0.0
        %4097 = vmatpush2.msra.mxu0 %v4018
        %4098 = vmatprep.mubr.f32.mxu0 %v3262
        %4099 = vmatmul.mubr.f32.gmra.mxu0 %v3261
        %v4100 = vpop.f32.mrf.mxu0
        %v4101 = vadd.f32 0.0, %v4100
        %v4102 = vpop.f32.mrf.mxu0
        %4103 = vdwg.mxu0
        %v4105 = vrot.slane %v4101, 7
        %v4107 = vadd.f32 %v4001, %v4105
        %v4108 = vld [vmem:[%s8] sm:$0x1]
        %v4109 = vmul.f32 %v4107, %v4108
        %v4110 = vld [vmem:[%s9] sm:$0x1]
        %v4111 = vadd.f32 %v4109, %v4110
        %vm4112 = vcmp.gt.f32.partialorder %v4111, 20.0
        %v4113 = vmin.f32 %v4111, 20.0
        %v4114 = vmul.f32 %v4113, 1.442695
        %v4115 = vpow.pop %v4114
        %v4116 = vadd.f32 %v4115, 1.0
        %v4117 = vlog2.pop %v4116
        %v4118 = vmul.f32 %v4117, 0.6931472
        %v4119 = vmul.f32 -0.5, %v4115
        %v4120 = vadd.f32 %v4119, 1.0
        %v4121 = vmul.f32 %v4120, %v4115
        %v4122 = vand.u32 2147483647, %v4115
        %vm4123 = vcmp.lt.f32.partialorder %v4122, 0.0004427343
        %v4124 = vsel %vm4123, %v4121, %v4118
        %v4125 = vsel %vm4112, %v4111, %v4124
        %4126 = vst [vmem:[%s367 + $0x1] sm:$0x1] %v4125
        %s4127 = sand.u32 %s248, 1
        %s4128 = scalar_lea.sflag [#allocation6], %s4127
        %s4129 = sand.u32 %s248, 1
        %s4130 = smul.addr %s4129, 2
        %s4131 = scalar_lea.vmem [#allocation7], %s4130
        // Predicated region
        $region65: #{forward.1} parent=59 // pred_check
          %p4132 = pneg %p258
        $region66: #{forward.1} parent=59 // pred_check_branch
          %4134 = sbr.rel (%p4132) target = $region68
        $region67: #{forward.1} parent=59 // pred_region
          %s4136 = ssub.s32 32, 32
          %4137 = vsyncadd %s4128, %s4136
          %s4138 = smul.addr %s25, 32
          %s4139 = scalar_lea.hbm %s10, %s4138
          %s4141 = sshll.u32 %s4131, 4
          %s4142 = int_to_ptr.vmem [resolvable:$true] %s4141
          %4144 = dma.vmem_to_hbm [thread:$0]  %s4142, 32, %s4139, %s4128
        $region68: #{forward.1} parent=59 // pred_fallthru
          _
      $region60: #{forward.1} parent=5 // pred_fallthru
        _
      %p4145 = scmp.le.s32.totalorder 2, %s20
      // Predicated region
      $region69: #{forward.1} parent=5 // pred_check
        %p4146 = pneg %p4145
      $region70: #{forward.1} parent=5 // pred_check_branch
        %4148 = sbr.rel (%p4146) target = $region72
      $region71: #{forward.1} parent=5 // pred_region
        %s4149 = ssub.s32 %s20, 2
        // Predicated region
        $region73: #{forward.1} parent=71 // pred_check
          %p4150 = pneg %p264
        $region74: #{forward.1} parent=71 // pred_check_branch
          %4152 = sbr.rel (%p4150) target = $region76
        $region75: #{forward.1} parent=71 // pred_region
          %s4153 = sand.u32 %s249, 1
          %s4154 = scalar_lea.sflag [#allocation6], %s4153
          %s4155 = sand.u32 %s249, 1
          %s4156 = smul.addr %s4155, 2
          %s4157 = scalar_lea.vmem [#allocation7], %s4156
          %4158 = dma.done %s4154, 32
        $region76: #{forward.1} parent=71 // pred_fallthru
          _
      $region72: #{forward.1} parent=5 // pred_fallthru
        _
    $region6: #{forward.1} parent=1 // loop_footer
      %s24 = sadd.s32 1, %s20
    $region7: #{forward.1} parent=1 // loop_footer_branch
      %19 = sbr.rel target = $region3
    $region8: #{forward.1} parent=1 // loop_exit
      _
    %4159 = vsyncpa [#allocation5], 1
    %s4160 = scalar_lea.sflag [#allocation5], 1
    %4161 = vsyncpa %s4160, 1
    %4162 = vsyncpa [#allocation6], 1
    %s4163 = scalar_lea.sflag [#allocation6], 1
    %4164 = vsyncpa %s4163, 1

</llo_original>
